<compile_context>
chip_gen: v5e
topology: v5e:2x2
jax: 0.10.0
libtpu: 0.0.40
codegen_flags: <defaults>
</compile_context>

<pallas_src>
import functools
import math

import jax
import jax.numpy as jnp
from jax.experimental import pallas as pl
from jax.experimental.pallas import tpu as pltpu


def _round_up(x, m):
    return ((x + m - 1) // m) * m


def _apply_act(h, act):
    if act == "tanh":
        return jnp.tanh(h)          # EUP transcendental
    if act == "relu":
        return jnp.maximum(h, 0.0)
    return h


# ----------------------------------------------------------------------------
# Fused whole-encoder kernel
# ----------------------------------------------------------------------------
def _fused_encoder_kernel(*refs, layer_acts, lags):
    """One grid step processes `tb` final output rows == tb * prod(lags[1:]) leaf rows.

    refs = (x_ref, w_0_0, b_0_0, w_0_1, b_0_1, ..., o_ref)

    x_ref : (G, tb, in0_pad).  Leading index g enumerates the mixed-radix tuple
            (j_{L-1}, ..., j_1) of per-layer row slots, so the tb leaf rows needed
            for a given slot tuple are a single x_ref[g] read.
    For encoder layer ell >= 1 the first sub-GEMM weight is stored 3-D
    (lag_ell, d_prev_pad, h_pad): the concat-then-matmul of the PyTorch reshape is
    computed as  sum_j  prev_layer_out_j @ w[j]  -- no reshapes, no strided slices.
    """
    x_ref, o_ref = refs[0], refs[-1]
    w_refs = refs[1:-1]

    # Group (weight_ref, bias_ref, activation) per encoder layer / sub-layer.
    layers = []
    k = 0
    for acts in layer_acts:
        subs = []
        for act in acts:
            subs.append((w_refs[k], w_refs[k + 1], act))
            k += 2
        layers.append(subs)

    def compute(ell, base):
        """(tb, out_pad_ell) output of encoder layer `ell` for slot prefix `base`."""
        w0, b0, act0 = layers[ell][0]
        if ell == 0:
            pre = jnp.dot(x_ref[base], w0[...],
                          preferred_element_type=jnp.float32)
        else:
            lag = lags[ell]
            pre = None
            for j in range(lag):
                y = compute(ell - 1, base * lag + j)          # (tb, d_prev_pad)
                c = jnp.dot(y, w0[j], preferred_element_type=jnp.float32)
                pre = c if pre is None else pre + c
        h = _apply_act(pre + b0[...], act0)
        # TODO(synk): nn.Dropout is stochastic in training mode; this is the
        # inference/eval path (identity), matching module.eval().
        for w, b, act in layers[ell][1:]:
            h = _apply_act(
                jnp.dot(h, w[...], preferred_element_type=jnp.float32) + b[...],
                act)
        return h

    o_ref[...] = compute(len(layers) - 1, 0).astype(o_ref.dtype)


# ----------------------------------------------------------------------------
# Jitted forward wrapper (entry gymnastics + permute + one pallas_call + slice)
# ----------------------------------------------------------------------------
def _fused_forward(params, x, *, cfg):
    nh, nw = cfg["nh"], cfg["nw"]
    input_len, input_dim = cfg["input_len"], cfg["input_dim"]

    # --- KUNetEncoder.forward entry reshape/transpose gymnastics (verbatim) ---
    x = x.reshape((-1, nh, input_len, nw, 1, input_dim))
    x = jnp.swapaxes(x, 2, 4)
    x = x.reshape((-1, nh, nw, input_len, input_dim))
    x = jnp.swapaxes(x, 1, 2)
    x = x.reshape((-1, input_len * input_dim))            # (M0, in0)

    G, in0, in0_pad = cfg["G"], cfg["in0"], cfg["in0_pad"]
    M0 = x.shape[0]
    assert M0 % G == 0, (M0, G)
    B = M0 // G                                            # final output rows

    if in0_pad != in0:                                     # lane-pad features (no-op here)
        x = jnp.pad(x, ((0, 0), (0, in0_pad - in0)))

    # Rows are ordered r0 = m*G + g.  Bring g to the front so each leaf row-group
    # is a contiguous (tb, in0_pad) slab addressed by one leading-dim index.
    x = jnp.transpose(x.reshape(B, G, in0_pad), (1, 0, 2))  # (G, B, in0_pad)

    # Tile over the final-row dimension (megacore-parallel for large batches).
    B_pad = _round_up(B, 8)
    tb = min(B_pad, 64)
    B_pad = _round_up(B_pad, tb)
    if B_pad != B:
        x = jnp.pad(x, ((0, 0), (0, B_pad - B), (0, 0)))
    grid = (B_pad // tb,)

    out_size, out_pad = cfg["out_size"], cfg["out_pad"]

    in_specs = [pl.BlockSpec((G, tb, in0_pad), lambda i: (0, i, 0))]
    for p in params:   # weights/biases: full-array VMEM-resident blocks
        in_specs.append(pl.BlockSpec(p.shape, lambda i, _nd=p.ndim: (0,) * _nd))
    out_specs = pl.BlockSpec((tb, out_pad), lambda i: (i, 0))

    kernel = functools.partial(_fused_encoder_kernel,
                               layer_acts=cfg["layer_acts"], lags=cfg["lags"])

    cost = pl.CostEstimate(
        flops=int(cfg["flops_per_final_row"]) * int(B_pad),
        transcendentals=int(cfg["tanh_per_final_row"]) * int(B_pad),
        bytes_accessed=4 * (G * B_pad * in0_pad + B_pad * out_pad
                            + sum(int(p.size) for p in params)),
    )

    y = pl.pallas_call(
        kernel,
        out_shape=jax.ShapeDtypeStruct((B_pad, out_pad), x.dtype),
        grid_spec=pltpu.PrefetchScalarGridSpec(
            num_scalar_prefetch=0,
            grid=grid,
            in_specs=in_specs,
            out_specs=out_specs,
        ),
        compiler_params=pltpu.CompilerParams(
            dimension_semantics=("parallel",),
            vmem_limit_bytes=cfg["vmem_limit_bytes"],
        ),
        cost_estimate=cost,
    )(x, *params)

    y = y[:B, :out_size]
    return y.reshape(-1, cfg["output_len"], cfg["output_dim"])


# ----------------------------------------------------------------------------
# KUNetEncoder port (parameter construction mirrors kunlib.{KUNetEncoder,Linear})
# ----------------------------------------------------------------------------
class KUNetEncoder:
    def __init__(self, input_dim=128, input_len=4, n_width=(1,), n_height=(4, 4),
                 output_dim=128, output_len=1, hidden_dim_list=(128, 128, 128),
                 kernel_hidden_layer_list=(1, 1, 1), activation="tanh",
                 drop_out_p=0.01, key=None):
        if key is None:
            key = jax.random.PRNGKey(0)
        self.input_dim, self.input_len = input_dim, input_len
        self.n_width, self.n_height = list(n_width), list(n_height)
        self.output_dim, self.output_len = output_dim, output_len
        self.drop_out_p = drop_out_p          # eval path: dropout == identity
        hidden_dim_list = list(hidden_dim_list)
        khl_list = list(kernel_hidden_layer_list)

        # ---- lag_list construction — same logic as the PyTorch module ----
        self.lag_list = [input_len]
        if not (len(self.n_height) == 1 and self.n_height[0] == 1):
            self.lag_list += list(reversed(self.n_height))
        if not (len(self.n_width) == 1 and self.n_width[0] == 1):
            self.lag_list += list(reversed(self.n_width))
        if (len(self.n_width) == 1 or self.n_width[0] == 1) and \
           (len(self.n_height) == 1 or self.n_height[0] == 1):
            self.lag_list += list(reversed(self.n_width))

        # ---- per-KernelWrapper configuration, as in KUNetEncoder.__init__ ----
        cfgs = [dict(input_dim=input_dim, input_len=self.lag_list[0],
                     output_dim=hidden_dim_list[0], output_len=1, khl=khl_list[0])]
        for i, l in enumerate(self.lag_list[1:-1], 1):
            cfgs.append(dict(input_dim=hidden_dim_list[i - 1], input_len=l,
                             output_dim=hidden_dim_list[i], output_len=1,
                             khl=khl_list[i]))
        cfgs.append(dict(input_dim=hidden_dim_list[-1], input_len=self.lag_list[-1],
                         output_dim=output_dim, output_len=output_len,
                         khl=khl_list[-1]))
        self.layer_cfgs = cfgs

        # Fusion pre-condition (always true for KUNetEncoder as constructed):
        # each intermediate layer emits output_len==1 rows of width == next input_dim.
        for prev, nxt in zip(cfgs[:-1], cfgs[1:]):
            assert prev["output_len"] * prev["output_dim"] == nxt["input_dim"], \
                "fused kernel assumes out_size[l] == input_dim[l+1]"

        # ---- sample nn.Linear-style weights; pad / 3-D-block them ONCE here ----
        self.ref_layers = []        # per layer: [(W (in,out), b (out,), act), ...]
        kernel_params = []          # flat, kernel-arg order: w,b,w,b,...
        layer_acts = []
        flops = 0
        tanhs = 0
        L = len(cfgs)
        for ell, c in enumerate(cfgs):
            rows_ell = math.prod(self.lag_list[ell + 1:])   # layer rows per final row
            in_size = c["input_len"] * c["input_dim"]
            out_size = c["output_len"] * c["output_dim"]
            khl = c["khl"]
            is_in_encoder = c["input_len"] >= c["output_len"]
            if is_in_encoder:
                gap = int((in_size - out_size) / (khl + 1))
                hidden = [in_size - i * gap for i in range(1, khl + 1)]
            else:
                gap = int((out_size - in_size) / (khl + 1))
                hidden = [in_size + i * gap for i in range(1, khl + 1)]
            sizes = [in_size] + hidden + [out_size]

            subs_ref, acts = [], []
            for k in range(len(sizes) - 1):
                fin, fout = sizes[k], sizes[k + 1]
                key, kw, kb = jax.random.split(key, 3)
                bound = 1.0 / math.sqrt(fin)                # nn.Linear default init
                w = jax.random.uniform(kw, (fin, fout), jnp.float32, -bound, bound)
                b = jax.random.uniform(kb, (fout,), jnp.float32, -bound, bound)
                act = activation.lower() if k < len(sizes) - 2 else None
                subs_ref.append((w, b, act))
                acts.append(act)

                fin_pad = _round_up(fin, 128)
                fout_pad = _round_up(fout, 128)
                w_p = jnp.pad(w, ((0, fin_pad - fin), (0, fout_pad - fout)))
                b_p = jnp.pad(b, (0, fout_pad - fout)).reshape(1, fout_pad)
                if k == 0 and ell > 0:
                    # First sub-GEMM consumes the concat of `input_len` previous-layer
                    # rows: store 3-D (lag, d_prev_pad, fout_pad) so the kernel never
                    # reshapes activations — it sums per-slot matmuls instead.
                    lag, d_prev = c["input_len"], c["input_dim"]
                    d_prev_pad = _round_up(d_prev, 128)
                    w3 = w.reshape(lag, d_prev, fout)
                    w_p = jnp.pad(w3, ((0, 0), (0, d_prev_pad - d_prev),
                                       (0, fout_pad - fout)))
                kernel_params.extend([w_p, b_p])
                flops += 2 * rows_ell * int(w_p.size)
                if act == "tanh":
                    tanhs += rows_ell * fout_pad
            self.ref_layers.append(subs_ref)
            layer_acts.append(tuple(acts))

        self.kernel_params = tuple(kernel_params)

        in0 = self.lag_list[0] * input_dim
        in0_pad = _round_up(in0, 128)
        out_size = output_len * output_dim
        out_pad = _round_up(out_size, 128)
        G = math.prod(self.lag_list[1:])

        # VMEM budget: double-buffered weights + input block (tb<=64) + slack.
        param_bytes = sum(int(p.size) * 4 for p in kernel_params)
        x_blk_bytes = G * 64 * in0_pad * 4
        vmem_limit = min(96 * 2**20,
                         2 * param_bytes + 2 * x_blk_bytes + 2 * 64 * out_pad * 4
                         + 8 * 2**20)

        self._cfg = dict(
            nh=math.prod(self.n_height), nw=math.prod(self.n_width),
            input_len=input_len, input_dim=input_dim,
            output_len=output_len, output_dim=output_dim,
            G=G, in0=in0, in0_pad=in0_pad,
            out_size=out_size, out_pad=out_pad,
            lags=tuple(self.lag_list),
            layer_acts=tuple(layer_acts),
            flops_per_final_row=int(flops),
            tanh_per_final_row=int(tanhs),
            vmem_limit_bytes=int(vmem_limit),
        )
        # Entire forward (reshapes + permute + ONE pallas_call + final slice) is a
        # single jitted executable; params are pytree leaves.
        self._forward = jax.jit(functools.partial(_fused_forward, cfg=self._cfg))

    def __call__(self, x):
        return self._forward(self.kernel_params, x)


# ----------------------------------------------------------------------------
# Pure-JAX reference (same weights, plain high-precision matmuls)
# ----------------------------------------------------------------------------
def reference_forward(enc, x):
    nh = math.prod(enc.n_height)
    nw = math.prod(enc.n_width)
    x = x.reshape((-1, nh, enc.input_len, nw, 1, enc.input_dim))
    x = jnp.swapaxes(x, 2, 4)
    x = x.reshape((-1, nh, nw, enc.input_len, enc.input_dim))
    x = jnp.swapaxes(x, 1, 2)
    x = x.reshape((-1, enc.input_len, enc.input_dim))
    for cfg, subs in zip(enc.layer_cfgs, enc.ref_layers):
        h = x.reshape(-1, cfg["input_len"] * cfg["input_dim"])
        for w, b, act in subs:
            h = jnp.dot(h, w, precision=jax.lax.Precision.HIGHEST) + b
            h = _apply_act(h, act)
        x = h.reshape(-1, cfg["output_len"], cfg["output_dim"])
    return x.reshape((-1, enc.output_len, enc.output_dim))


if __name__ == "__main__":
    key = jax.random.PRNGKey(0)
    k_param, k_x = jax.random.split(key)

    # Default KUNetEncoder config: input (batch, prod(n_height)*input_len,
    # prod(n_width)*input_dim) = (2, 64, 128); output (2, 1, 128).
    batch = 2
    input_dim, input_len = 128, 4
    n_width, n_height = [1], [4, 4]
    output_dim, output_len = 128, 1

    enc = KUNetEncoder(input_dim=input_dim, input_len=input_len,
                       n_width=n_width, n_height=n_height,
                       output_dim=output_dim, output_len=output_len,
                       hidden_dim_list=[128, 128, 128],
                       kernel_hidden_layer_list=[1, 1, 1],
                       key=k_param)

    x = jax.random.normal(
        k_x,
        (batch, math.prod(n_height) * input_len, math.prod(n_width) * input_dim),
        dtype=jnp.float32)

    y = jax.block_until_ready(enc(x))
    assert y.shape == (batch, output_len, output_dim), y.shape

    y_ref = reference_forward(enc, x)
    err = float(jnp.max(jnp.abs(y - y_ref)))
    assert err < 1e-3, f"max abs err vs reference: {err}"

    print("KERNEL_OK")
</pallas_src>

<mosaic_0001>
module attributes {stable_mosaic.version = 11 : i64} {
  func.func @_fused_encoder_kernel(%arg0: i32, %arg1: memref<16x8x512xf32, #tpu.memory_space<vmem>>, %arg2: memref<512x384xf32, #tpu.memory_space<vmem>>, %arg3: memref<1x384xf32, #tpu.memory_space<vmem>>, %arg4: memref<384x128xf32, #tpu.memory_space<vmem>>, %arg5: memref<1x128xf32, #tpu.memory_space<vmem>>, %arg6: memref<4x128x384xf32, #tpu.memory_space<vmem>>, %arg7: memref<1x384xf32, #tpu.memory_space<vmem>>, %arg8: memref<384x128xf32, #tpu.memory_space<vmem>>, %arg9: memref<1x128xf32, #tpu.memory_space<vmem>>, %arg10: memref<4x128x384xf32, #tpu.memory_space<vmem>>, %arg11: memref<1x384xf32, #tpu.memory_space<vmem>>, %arg12: memref<384x128xf32, #tpu.memory_space<vmem>>, %arg13: memref<1x128xf32, #tpu.memory_space<vmem>>, %arg14: memref<8x128xf32, #tpu.memory_space<vmem>>) attributes {dimension_semantics = [#tpu.dimension_semantics<parallel>], iteration_bounds = array<i64: 1>, scalar_prefetch = 0 : i64, scratch_operands = 0 : i64, tpu.core_type = #tpu.core_type<tc>, window_params = [{transform_indices = @transform_0, window_bounds = array<i64: 16, 8, 512>}, {pipeline_mode = #tpu.pipeline_mode<synchronous>, transform_indices = @transform_1, window_bounds = array<i64: 512, 384>}, {pipeline_mode = #tpu.pipeline_mode<synchronous>, transform_indices = @transform_2, window_bounds = array<i64: 1, 384>}, {pipeline_mode = #tpu.pipeline_mode<synchronous>, transform_indices = @transform_3, window_bounds = array<i64: 384, 128>}, {pipeline_mode = #tpu.pipeline_mode<synchronous>, transform_indices = @transform_4, window_bounds = array<i64: 1, 128>}, {pipeline_mode = #tpu.pipeline_mode<synchronous>, transform_indices = @transform_5, window_bounds = array<i64: 4, 128, 384>}, {pipeline_mode = #tpu.pipeline_mode<synchronous>, transform_indices = @transform_6, window_bounds = array<i64: 1, 384>}, {pipeline_mode = #tpu.pipeline_mode<synchronous>, transform_indices = @transform_7, window_bounds = array<i64: 384, 128>}, {pipeline_mode = #tpu.pipeline_mode<synchronous>, transform_indices = @transform_8, window_bounds = array<i64: 1, 128>}, {pipeline_mode = #tpu.pipeline_mode<synchronous>, transform_indices = @transform_9, window_bounds = array<i64: 4, 128, 384>}, {pipeline_mode = #tpu.pipeline_mode<synchronous>, transform_indices = @transform_10, window_bounds = array<i64: 1, 384>}, {pipeline_mode = #tpu.pipeline_mode<synchronous>, transform_indices = @transform_11, window_bounds = array<i64: 384, 128>}, {pipeline_mode = #tpu.pipeline_mode<synchronous>, transform_indices = @transform_12, window_bounds = array<i64: 1, 128>}, {transform_indices = @transform_13, window_bounds = array<i64: 8, 128>}]} {
    %c0 = arith.constant 0 : index
    %c0_0 = arith.constant 0 : index
    %c0_1 = arith.constant 0 : index
    %0 = vector.load %arg1[%c0, %c0_0, %c0_1] : memref<16x8x512xf32, #tpu.memory_space<vmem>>, vector<1x8x512xf32>
    %1 = vector.shape_cast %0 : vector<1x8x512xf32> to vector<8x512xf32>
    %c0_2 = arith.constant 0 : index
    %c0_3 = arith.constant 0 : index
    %2 = vector.load %arg2[%c0_2, %c0_3] : memref<512x384xf32, #tpu.memory_space<vmem>>, vector<512x384xf32>
    %cst = arith.constant dense<0.000000e+00> : vector<8x384xf32>
    %3 = tpu.matmul %1, %2, %cst {dimension_numbers = #tpu.dot_dimension_numbers<[1], [0], [0], [1], [0, 0, 1, 1], [], []>} : vector<8x512xf32>, vector<512x384xf32>, vector<8x384xf32> -> vector<8x384xf32>
    %c0_4 = arith.constant 0 : index
    %c0_5 = arith.constant 0 : index
    %4 = vector.load %arg3[%c0_4, %c0_5] : memref<1x384xf32, #tpu.memory_space<vmem>>, vector<1x384xf32>
    %5 = vector.broadcast %4 : vector<1x384xf32> to vector<8x384xf32>
    %6 = arith.addf %3, %5 : vector<8x384xf32>
    %7 = math.tanh %6 : vector<8x384xf32>
    %c0_6 = arith.constant 0 : index
    %c0_7 = arith.constant 0 : index
    %8 = vector.load %arg4[%c0_6, %c0_7] : memref<384x128xf32, #tpu.memory_space<vmem>>, vector<384x128xf32>
    %cst_8 = arith.constant dense<0.000000e+00> : vector<8x128xf32>
    %9 = tpu.matmul %7, %8, %cst_8 {dimension_numbers = #tpu.dot_dimension_numbers<[1], [0], [0], [1], [0, 0, 1, 1], [], []>} : vector<8x384xf32>, vector<384x128xf32>, vector<8x128xf32> -> vector<8x128xf32>
    %c0_9 = arith.constant 0 : index
    %c0_10 = arith.constant 0 : index
    %10 = vector.load %arg5[%c0_9, %c0_10] : memref<1x128xf32, #tpu.memory_space<vmem>>, vector<1x128xf32>
    %11 = vector.broadcast %10 : vector<1x128xf32> to vector<8x128xf32>
    %12 = arith.addf %9, %11 : vector<8x128xf32>
    %c0_11 = arith.constant 0 : index
    %c0_12 = arith.constant 0 : index
    %c0_13 = arith.constant 0 : index
    %13 = vector.load %arg6[%c0_11, %c0_12, %c0_13] : memref<4x128x384xf32, #tpu.memory_space<vmem>>, vector<1x128x384xf32>
    %14 = vector.shape_cast %13 : vector<1x128x384xf32> to vector<128x384xf32>
    %cst_14 = arith.constant dense<0.000000e+00> : vector<8x384xf32>
    %15 = tpu.matmul %12, %14, %cst_14 {dimension_numbers = #tpu.dot_dimension_numbers<[1], [0], [0], [1], [0, 0, 1, 1], [], []>} : vector<8x128xf32>, vector<128x384xf32>, vector<8x384xf32> -> vector<8x384xf32>
    %c1 = arith.constant 1 : index
    %c0_15 = arith.constant 0 : index
    %c0_16 = arith.constant 0 : index
    %16 = vector.load %arg1[%c1, %c0_15, %c0_16] : memref<16x8x512xf32, #tpu.memory_space<vmem>>, vector<1x8x512xf32>
    %17 = vector.shape_cast %16 : vector<1x8x512xf32> to vector<8x512xf32>
    %c0_17 = arith.constant 0 : index
    %c0_18 = arith.constant 0 : index
    %18 = vector.load %arg2[%c0_17, %c0_18] : memref<512x384xf32, #tpu.memory_space<vmem>>, vector<512x384xf32>
    %cst_19 = arith.constant dense<0.000000e+00> : vector<8x384xf32>
    %19 = tpu.matmul %17, %18, %cst_19 {dimension_numbers = #tpu.dot_dimension_numbers<[1], [0], [0], [1], [0, 0, 1, 1], [], []>} : vector<8x512xf32>, vector<512x384xf32>, vector<8x384xf32> -> vector<8x384xf32>
    %c0_20 = arith.constant 0 : index
    %c0_21 = arith.constant 0 : index
    %20 = vector.load %arg3[%c0_20, %c0_21] : memref<1x384xf32, #tpu.memory_space<vmem>>, vector<1x384xf32>
    %21 = vector.broadcast %20 : vector<1x384xf32> to vector<8x384xf32>
    %22 = arith.addf %19, %21 : vector<8x384xf32>
    %23 = math.tanh %22 : vector<8x384xf32>
    %c0_22 = arith.constant 0 : index
    %c0_23 = arith.constant 0 : index
    %24 = vector.load %arg4[%c0_22, %c0_23] : memref<384x128xf32, #tpu.memory_space<vmem>>, vector<384x128xf32>
    %cst_24 = arith.constant dense<0.000000e+00> : vector<8x128xf32>
    %25 = tpu.matmul %23, %24, %cst_24 {dimension_numbers = #tpu.dot_dimension_numbers<[1], [0], [0], [1], [0, 0, 1, 1], [], []>} : vector<8x384xf32>, vector<384x128xf32>, vector<8x128xf32> -> vector<8x128xf32>
    %c0_25 = arith.constant 0 : index
    %c0_26 = arith.constant 0 : index
    %26 = vector.load %arg5[%c0_25, %c0_26] : memref<1x128xf32, #tpu.memory_space<vmem>>, vector<1x128xf32>
    %27 = vector.broadcast %26 : vector<1x128xf32> to vector<8x128xf32>
    %28 = arith.addf %25, %27 : vector<8x128xf32>
    %c1_27 = arith.constant 1 : index
    %c0_28 = arith.constant 0 : index
    %c0_29 = arith.constant 0 : index
    %29 = vector.load %arg6[%c1_27, %c0_28, %c0_29] : memref<4x128x384xf32, #tpu.memory_space<vmem>>, vector<1x128x384xf32>
    %30 = vector.shape_cast %29 : vector<1x128x384xf32> to vector<128x384xf32>
    %cst_30 = arith.constant dense<0.000000e+00> : vector<8x384xf32>
    %31 = tpu.matmul %28, %30, %cst_30 {dimension_numbers = #tpu.dot_dimension_numbers<[1], [0], [0], [1], [0, 0, 1, 1], [], []>} : vector<8x128xf32>, vector<128x384xf32>, vector<8x384xf32> -> vector<8x384xf32>
    %32 = arith.addf %15, %31 : vector<8x384xf32>
    %c2 = arith.constant 2 : index
    %c0_31 = arith.constant 0 : index
    %c0_32 = arith.constant 0 : index
    %33 = vector.load %arg1[%c2, %c0_31, %c0_32] : memref<16x8x512xf32, #tpu.memory_space<vmem>>, vector<1x8x512xf32>
    %34 = vector.shape_cast %33 : vector<1x8x512xf32> to vector<8x512xf32>
    %c0_33 = arith.constant 0 : index
    %c0_34 = arith.constant 0 : index
    %35 = vector.load %arg2[%c0_33, %c0_34] : memref<512x384xf32, #tpu.memory_space<vmem>>, vector<512x384xf32>
    %cst_35 = arith.constant dense<0.000000e+00> : vector<8x384xf32>
    %36 = tpu.matmul %34, %35, %cst_35 {dimension_numbers = #tpu.dot_dimension_numbers<[1], [0], [0], [1], [0, 0, 1, 1], [], []>} : vector<8x512xf32>, vector<512x384xf32>, vector<8x384xf32> -> vector<8x384xf32>
    %c0_36 = arith.constant 0 : index
    %c0_37 = arith.constant 0 : index
    %37 = vector.load %arg3[%c0_36, %c0_37] : memref<1x384xf32, #tpu.memory_space<vmem>>, vector<1x384xf32>
    %38 = vector.broadcast %37 : vector<1x384xf32> to vector<8x384xf32>
    %39 = arith.addf %36, %38 : vector<8x384xf32>
    %40 = math.tanh %39 : vector<8x384xf32>
    %c0_38 = arith.constant 0 : index
    %c0_39 = arith.constant 0 : index
    %41 = vector.load %arg4[%c0_38, %c0_39] : memref<384x128xf32, #tpu.memory_space<vmem>>, vector<384x128xf32>
    %cst_40 = arith.constant dense<0.000000e+00> : vector<8x128xf32>
    %42 = tpu.matmul %40, %41, %cst_40 {dimension_numbers = #tpu.dot_dimension_numbers<[1], [0], [0], [1], [0, 0, 1, 1], [], []>} : vector<8x384xf32>, vector<384x128xf32>, vector<8x128xf32> -> vector<8x128xf32>
    %c0_41 = arith.constant 0 : index
    %c0_42 = arith.constant 0 : index
    %43 = vector.load %arg5[%c0_41, %c0_42] : memref<1x128xf32, #tpu.memory_space<vmem>>, vector<1x128xf32>
    %44 = vector.broadcast %43 : vector<1x128xf32> to vector<8x128xf32>
    %45 = arith.addf %42, %44 : vector<8x128xf32>
    %c2_43 = arith.constant 2 : index
    %c0_44 = arith.constant 0 : index
    %c0_45 = arith.constant 0 : index
    %46 = vector.load %arg6[%c2_43, %c0_44, %c0_45] : memref<4x128x384xf32, #tpu.memory_space<vmem>>, vector<1x128x384xf32>
    %47 = vector.shape_cast %46 : vector<1x128x384xf32> to vector<128x384xf32>
    %cst_46 = arith.constant dense<0.000000e+00> : vector<8x384xf32>
    %48 = tpu.matmul %45, %47, %cst_46 {dimension_numbers = #tpu.dot_dimension_numbers<[1], [0], [0], [1], [0, 0, 1, 1], [], []>} : vector<8x128xf32>, vector<128x384xf32>, vector<8x384xf32> -> vector<8x384xf32>
    %49 = arith.addf %32, %48 : vector<8x384xf32>
    %c3 = arith.constant 3 : index
    %c0_47 = arith.constant 0 : index
    %c0_48 = arith.constant 0 : index
    %50 = vector.load %arg1[%c3, %c0_47, %c0_48] : memref<16x8x512xf32, #tpu.memory_space<vmem>>, vector<1x8x512xf32>
    %51 = vector.shape_cast %50 : vector<1x8x512xf32> to vector<8x512xf32>
    %c0_49 = arith.constant 0 : index
    %c0_50 = arith.constant 0 : index
    %52 = vector.load %arg2[%c0_49, %c0_50] : memref<512x384xf32, #tpu.memory_space<vmem>>, vector<512x384xf32>
    %cst_51 = arith.constant dense<0.000000e+00> : vector<8x384xf32>
    %53 = tpu.matmul %51, %52, %cst_51 {dimension_numbers = #tpu.dot_dimension_numbers<[1], [0], [0], [1], [0, 0, 1, 1], [], []>} : vector<8x512xf32>, vector<512x384xf32>, vector<8x384xf32> -> vector<8x384xf32>
    %c0_52 = arith.constant 0 : index
    %c0_53 = arith.constant 0 : index
    %54 = vector.load %arg3[%c0_52, %c0_53] : memref<1x384xf32, #tpu.memory_space<vmem>>, vector<1x384xf32>
    %55 = vector.broadcast %54 : vector<1x384xf32> to vector<8x384xf32>
    %56 = arith.addf %53, %55 : vector<8x384xf32>
    %57 = math.tanh %56 : vector<8x384xf32>
    %c0_54 = arith.constant 0 : index
    %c0_55 = arith.constant 0 : index
    %58 = vector.load %arg4[%c0_54, %c0_55] : memref<384x128xf32, #tpu.memory_space<vmem>>, vector<384x128xf32>
    %cst_56 = arith.constant dense<0.000000e+00> : vector<8x128xf32>
    %59 = tpu.matmul %57, %58, %cst_56 {dimension_numbers = #tpu.dot_dimension_numbers<[1], [0], [0], [1], [0, 0, 1, 1], [], []>} : vector<8x384xf32>, vector<384x128xf32>, vector<8x128xf32> -> vector<8x128xf32>
    %c0_57 = arith.constant 0 : index
    %c0_58 = arith.constant 0 : index
    %60 = vector.load %arg5[%c0_57, %c0_58] : memref<1x128xf32, #tpu.memory_space<vmem>>, vector<1x128xf32>
    %61 = vector.broadcast %60 : vector<1x128xf32> to vector<8x128xf32>
    %62 = arith.addf %59, %61 : vector<8x128xf32>
    %c3_59 = arith.constant 3 : index
    %c0_60 = arith.constant 0 : index
    %c0_61 = arith.constant 0 : index
    %63 = vector.load %arg6[%c3_59, %c0_60, %c0_61] : memref<4x128x384xf32, #tpu.memory_space<vmem>>, vector<1x128x384xf32>
    %64 = vector.shape_cast %63 : vector<1x128x384xf32> to vector<128x384xf32>
    %cst_62 = arith.constant dense<0.000000e+00> : vector<8x384xf32>
    %65 = tpu.matmul %62, %64, %cst_62 {dimension_numbers = #tpu.dot_dimension_numbers<[1], [0], [0], [1], [0, 0, 1, 1], [], []>} : vector<8x128xf32>, vector<128x384xf32>, vector<8x384xf32> -> vector<8x384xf32>
    %66 = arith.addf %49, %65 : vector<8x384xf32>
    %c0_63 = arith.constant 0 : index
    %c0_64 = arith.constant 0 : index
    %67 = vector.load %arg7[%c0_63, %c0_64] : memref<1x384xf32, #tpu.memory_space<vmem>>, vector<1x384xf32>
    %68 = vector.broadcast %67 : vector<1x384xf32> to vector<8x384xf32>
    %69 = arith.addf %66, %68 : vector<8x384xf32>
    %70 = math.tanh %69 : vector<8x384xf32>
    %c0_65 = arith.constant 0 : index
    %c0_66 = arith.constant 0 : index
    %71 = vector.load %arg8[%c0_65, %c0_66] : memref<384x128xf32, #tpu.memory_space<vmem>>, vector<384x128xf32>
    %cst_67 = arith.constant dense<0.000000e+00> : vector<8x128xf32>
    %72 = tpu.matmul %70, %71, %cst_67 {dimension_numbers = #tpu.dot_dimension_numbers<[1], [0], [0], [1], [0, 0, 1, 1], [], []>} : vector<8x384xf32>, vector<384x128xf32>, vector<8x128xf32> -> vector<8x128xf32>
    %c0_68 = arith.constant 0 : index
    %c0_69 = arith.constant 0 : index
    %73 = vector.load %arg9[%c0_68, %c0_69] : memref<1x128xf32, #tpu.memory_space<vmem>>, vector<1x128xf32>
    %74 = vector.broadcast %73 : vector<1x128xf32> to vector<8x128xf32>
    %75 = arith.addf %72, %74 : vector<8x128xf32>
    %c0_70 = arith.constant 0 : index
    %c0_71 = arith.constant 0 : index
    %c0_72 = arith.constant 0 : index
    %76 = vector.load %arg10[%c0_70, %c0_71, %c0_72] : memref<4x128x384xf32, #tpu.memory_space<vmem>>, vector<1x128x384xf32>
    %77 = vector.shape_cast %76 : vector<1x128x384xf32> to vector<128x384xf32>
    %cst_73 = arith.constant dense<0.000000e+00> : vector<8x384xf32>
    %78 = tpu.matmul %75, %77, %cst_73 {dimension_numbers = #tpu.dot_dimension_numbers<[1], [0], [0], [1], [0, 0, 1, 1], [], []>} : vector<8x128xf32>, vector<128x384xf32>, vector<8x384xf32> -> vector<8x384xf32>
    %c4 = arith.constant 4 : index
    %c0_74 = arith.constant 0 : index
    %c0_75 = arith.constant 0 : index
    %79 = vector.load %arg1[%c4, %c0_74, %c0_75] : memref<16x8x512xf32, #tpu.memory_space<vmem>>, vector<1x8x512xf32>
    %80 = vector.shape_cast %79 : vector<1x8x512xf32> to vector<8x512xf32>
    %c0_76 = arith.constant 0 : index
    %c0_77 = arith.constant 0 : index
    %81 = vector.load %arg2[%c0_76, %c0_77] : memref<512x384xf32, #tpu.memory_space<vmem>>, vector<512x384xf32>
    %cst_78 = arith.constant dense<0.000000e+00> : vector<8x384xf32>
    %82 = tpu.matmul %80, %81, %cst_78 {dimension_numbers = #tpu.dot_dimension_numbers<[1], [0], [0], [1], [0, 0, 1, 1], [], []>} : vector<8x512xf32>, vector<512x384xf32>, vector<8x384xf32> -> vector<8x384xf32>
    %c0_79 = arith.constant 0 : index
    %c0_80 = arith.constant 0 : index
    %83 = vector.load %arg3[%c0_79, %c0_80] : memref<1x384xf32, #tpu.memory_space<vmem>>, vector<1x384xf32>
    %84 = vector.broadcast %83 : vector<1x384xf32> to vector<8x384xf32>
    %85 = arith.addf %82, %84 : vector<8x384xf32>
    %86 = math.tanh %85 : vector<8x384xf32>
    %c0_81 = arith.constant 0 : index
    %c0_82 = arith.constant 0 : index
    %87 = vector.load %arg4[%c0_81, %c0_82] : memref<384x128xf32, #tpu.memory_space<vmem>>, vector<384x128xf32>
    %cst_83 = arith.constant dense<0.000000e+00> : vector<8x128xf32>
    %88 = tpu.matmul %86, %87, %cst_83 {dimension_numbers = #tpu.dot_dimension_numbers<[1], [0], [0], [1], [0, 0, 1, 1], [], []>} : vector<8x384xf32>, vector<384x128xf32>, vector<8x128xf32> -> vector<8x128xf32>
    %c0_84 = arith.constant 0 : index
    %c0_85 = arith.constant 0 : index
    %89 = vector.load %arg5[%c0_84, %c0_85] : memref<1x128xf32, #tpu.memory_space<vmem>>, vector<1x128xf32>
    %90 = vector.broadcast %89 : vector<1x128xf32> to vector<8x128xf32>
    %91 = arith.addf %88, %90 : vector<8x128xf32>
    %c0_86 = arith.constant 0 : index
    %c0_87 = arith.constant 0 : index
    %c0_88 = arith.constant 0 : index
    %92 = vector.load %arg6[%c0_86, %c0_87, %c0_88] : memref<4x128x384xf32, #tpu.memory_space<vmem>>, vector<1x128x384xf32>
    %93 = vector.shape_cast %92 : vector<1x128x384xf32> to vector<128x384xf32>
    %cst_89 = arith.constant dense<0.000000e+00> : vector<8x384xf32>
    %94 = tpu.matmul %91, %93, %cst_89 {dimension_numbers = #tpu.dot_dimension_numbers<[1], [0], [0], [1], [0, 0, 1, 1], [], []>} : vector<8x128xf32>, vector<128x384xf32>, vector<8x384xf32> -> vector<8x384xf32>
    %c5 = arith.constant 5 : index
    %c0_90 = arith.constant 0 : index
    %c0_91 = arith.constant 0 : index
    %95 = vector.load %arg1[%c5, %c0_90, %c0_91] : memref<16x8x512xf32, #tpu.memory_space<vmem>>, vector<1x8x512xf32>
    %96 = vector.shape_cast %95 : vector<1x8x512xf32> to vector<8x512xf32>
    %c0_92 = arith.constant 0 : index
    %c0_93 = arith.constant 0 : index
    %97 = vector.load %arg2[%c0_92, %c0_93] : memref<512x384xf32, #tpu.memory_space<vmem>>, vector<512x384xf32>
    %cst_94 = arith.constant dense<0.000000e+00> : vector<8x384xf32>
    %98 = tpu.matmul %96, %97, %cst_94 {dimension_numbers = #tpu.dot_dimension_numbers<[1], [0], [0], [1], [0, 0, 1, 1], [], []>} : vector<8x512xf32>, vector<512x384xf32>, vector<8x384xf32> -> vector<8x384xf32>
    %c0_95 = arith.constant 0 : index
    %c0_96 = arith.constant 0 : index
    %99 = vector.load %arg3[%c0_95, %c0_96] : memref<1x384xf32, #tpu.memory_space<vmem>>, vector<1x384xf32>
    %100 = vector.broadcast %99 : vector<1x384xf32> to vector<8x384xf32>
    %101 = arith.addf %98, %100 : vector<8x384xf32>
    %102 = math.tanh %101 : vector<8x384xf32>
    %c0_97 = arith.constant 0 : index
    %c0_98 = arith.constant 0 : index
    %103 = vector.load %arg4[%c0_97, %c0_98] : memref<384x128xf32, #tpu.memory_space<vmem>>, vector<384x128xf32>
    %cst_99 = arith.constant dense<0.000000e+00> : vector<8x128xf32>
    %104 = tpu.matmul %102, %103, %cst_99 {dimension_numbers = #tpu.dot_dimension_numbers<[1], [0], [0], [1], [0, 0, 1, 1], [], []>} : vector<8x384xf32>, vector<384x128xf32>, vector<8x128xf32> -> vector<8x128xf32>
    %c0_100 = arith.constant 0 : index
    %c0_101 = arith.constant 0 : index
    %105 = vector.load %arg5[%c0_100, %c0_101] : memref<1x128xf32, #tpu.memory_space<vmem>>, vector<1x128xf32>
    %106 = vector.broadcast %105 : vector<1x128xf32> to vector<8x128xf32>
    %107 = arith.addf %104, %106 : vector<8x128xf32>
    %c1_102 = arith.constant 1 : index
    %c0_103 = arith.constant 0 : index
    %c0_104 = arith.constant 0 : index
    %108 = vector.load %arg6[%c1_102, %c0_103, %c0_104] : memref<4x128x384xf32, #tpu.memory_space<vmem>>, vector<1x128x384xf32>
    %109 = vector.shape_cast %108 : vector<1x128x384xf32> to vector<128x384xf32>
    %cst_105 = arith.constant dense<0.000000e+00> : vector<8x384xf32>
    %110 = tpu.matmul %107, %109, %cst_105 {dimension_numbers = #tpu.dot_dimension_numbers<[1], [0], [0], [1], [0, 0, 1, 1], [], []>} : vector<8x128xf32>, vector<128x384xf32>, vector<8x384xf32> -> vector<8x384xf32>
    %111 = arith.addf %94, %110 : vector<8x384xf32>
    %c6 = arith.constant 6 : index
    %c0_106 = arith.constant 0 : index
    %c0_107 = arith.constant 0 : index
    %112 = vector.load %arg1[%c6, %c0_106, %c0_107] : memref<16x8x512xf32, #tpu.memory_space<vmem>>, vector<1x8x512xf32>
    %113 = vector.shape_cast %112 : vector<1x8x512xf32> to vector<8x512xf32>
    %c0_108 = arith.constant 0 : index
    %c0_109 = arith.constant 0 : index
    %114 = vector.load %arg2[%c0_108, %c0_109] : memref<512x384xf32, #tpu.memory_space<vmem>>, vector<512x384xf32>
    %cst_110 = arith.constant dense<0.000000e+00> : vector<8x384xf32>
    %115 = tpu.matmul %113, %114, %cst_110 {dimension_numbers = #tpu.dot_dimension_numbers<[1], [0], [0], [1], [0, 0, 1, 1], [], []>} : vector<8x512xf32>, vector<512x384xf32>, vector<8x384xf32> -> vector<8x384xf32>
    %c0_111 = arith.constant 0 : index
    %c0_112 = arith.constant 0 : index
    %116 = vector.load %arg3[%c0_111, %c0_112] : memref<1x384xf32, #tpu.memory_space<vmem>>, vector<1x384xf32>
    %117 = vector.broadcast %116 : vector<1x384xf32> to vector<8x384xf32>
    %118 = arith.addf %115, %117 : vector<8x384xf32>
    %119 = math.tanh %118 : vector<8x384xf32>
    %c0_113 = arith.constant 0 : index
    %c0_114 = arith.constant 0 : index
    %120 = vector.load %arg4[%c0_113, %c0_114] : memref<384x128xf32, #tpu.memory_space<vmem>>, vector<384x128xf32>
    %cst_115 = arith.constant dense<0.000000e+00> : vector<8x128xf32>
    %121 = tpu.matmul %119, %120, %cst_115 {dimension_numbers = #tpu.dot_dimension_numbers<[1], [0], [0], [1], [0, 0, 1, 1], [], []>} : vector<8x384xf32>, vector<384x128xf32>, vector<8x128xf32> -> vector<8x128xf32>
    %c0_116 = arith.constant 0 : index
    %c0_117 = arith.constant 0 : index
    %122 = vector.load %arg5[%c0_116, %c0_117] : memref<1x128xf32, #tpu.memory_space<vmem>>, vector<1x128xf32>
    %123 = vector.broadcast %122 : vector<1x128xf32> to vector<8x128xf32>
    %124 = arith.addf %121, %123 : vector<8x128xf32>
    %c2_118 = arith.constant 2 : index
    %c0_119 = arith.constant 0 : index
    %c0_120 = arith.constant 0 : index
    %125 = vector.load %arg6[%c2_118, %c0_119, %c0_120] : memref<4x128x384xf32, #tpu.memory_space<vmem>>, vector<1x128x384xf32>
    %126 = vector.shape_cast %125 : vector<1x128x384xf32> to vector<128x384xf32>
    %cst_121 = arith.constant dense<0.000000e+00> : vector<8x384xf32>
    %127 = tpu.matmul %124, %126, %cst_121 {dimension_numbers = #tpu.dot_dimension_numbers<[1], [0], [0], [1], [0, 0, 1, 1], [], []>} : vector<8x128xf32>, vector<128x384xf32>, vector<8x384xf32> -> vector<8x384xf32>
    %128 = arith.addf %111, %127 : vector<8x384xf32>
    %c7 = arith.constant 7 : index
    %c0_122 = arith.constant 0 : index
    %c0_123 = arith.constant 0 : index
    %129 = vector.load %arg1[%c7, %c0_122, %c0_123] : memref<16x8x512xf32, #tpu.memory_space<vmem>>, vector<1x8x512xf32>
    %130 = vector.shape_cast %129 : vector<1x8x512xf32> to vector<8x512xf32>
    %c0_124 = arith.constant 0 : index
    %c0_125 = arith.constant 0 : index
    %131 = vector.load %arg2[%c0_124, %c0_125] : memref<512x384xf32, #tpu.memory_space<vmem>>, vector<512x384xf32>
    %cst_126 = arith.constant dense<0.000000e+00> : vector<8x384xf32>
    %132 = tpu.matmul %130, %131, %cst_126 {dimension_numbers = #tpu.dot_dimension_numbers<[1], [0], [0], [1], [0, 0, 1, 1], [], []>} : vector<8x512xf32>, vector<512x384xf32>, vector<8x384xf32> -> vector<8x384xf32>
    %c0_127 = arith.constant 0 : index
    %c0_128 = arith.constant 0 : index
    %133 = vector.load %arg3[%c0_127, %c0_128] : memref<1x384xf32, #tpu.memory_space<vmem>>, vector<1x384xf32>
    %134 = vector.broadcast %133 : vector<1x384xf32> to vector<8x384xf32>
    %135 = arith.addf %132, %134 : vector<8x384xf32>
    %136 = math.tanh %135 : vector<8x384xf32>
    %c0_129 = arith.constant 0 : index
    %c0_130 = arith.constant 0 : index
    %137 = vector.load %arg4[%c0_129, %c0_130] : memref<384x128xf32, #tpu.memory_space<vmem>>, vector<384x128xf32>
    %cst_131 = arith.constant dense<0.000000e+00> : vector<8x128xf32>
    %138 = tpu.matmul %136, %137, %cst_131 {dimension_numbers = #tpu.dot_dimension_numbers<[1], [0], [0], [1], [0, 0, 1, 1], [], []>} : vector<8x384xf32>, vector<384x128xf32>, vector<8x128xf32> -> vector<8x128xf32>
    %c0_132 = arith.constant 0 : index
    %c0_133 = arith.constant 0 : index
    %139 = vector.load %arg5[%c0_132, %c0_133] : memref<1x128xf32, #tpu.memory_space<vmem>>, vector<1x128xf32>
    %140 = vector.broadcast %139 : vector<1x128xf32> to vector<8x128xf32>
    %141 = arith.addf %138, %140 : vector<8x128xf32>
    %c3_134 = arith.constant 3 : index
    %c0_135 = arith.constant 0 : index
    %c0_136 = arith.constant 0 : index
    %142 = vector.load %arg6[%c3_134, %c0_135, %c0_136] : memref<4x128x384xf32, #tpu.memory_space<vmem>>, vector<1x128x384xf32>
    %143 = vector.shape_cast %142 : vector<1x128x384xf32> to vector<128x384xf32>
    %cst_137 = arith.constant dense<0.000000e+00> : vector<8x384xf32>
    %144 = tpu.matmul %141, %143, %cst_137 {dimension_numbers = #tpu.dot_dimension_numbers<[1], [0], [0], [1], [0, 0, 1, 1], [], []>} : vector<8x128xf32>, vector<128x384xf32>, vector<8x384xf32> -> vector<8x384xf32>
    %145 = arith.addf %128, %144 : vector<8x384xf32>
    %c0_138 = arith.constant 0 : index
    %c0_139 = arith.constant 0 : index
    %146 = vector.load %arg7[%c0_138, %c0_139] : memref<1x384xf32, #tpu.memory_space<vmem>>, vector<1x384xf32>
    %147 = vector.broadcast %146 : vector<1x384xf32> to vector<8x384xf32>
    %148 = arith.addf %145, %147 : vector<8x384xf32>
    %149 = math.tanh %148 : vector<8x384xf32>
    %c0_140 = arith.constant 0 : index
    %c0_141 = arith.constant 0 : index
    %150 = vector.load %arg8[%c0_140, %c0_141] : memref<384x128xf32, #tpu.memory_space<vmem>>, vector<384x128xf32>
    %cst_142 = arith.constant dense<0.000000e+00> : vector<8x128xf32>
    %151 = tpu.matmul %149, %150, %cst_142 {dimension_numbers = #tpu.dot_dimension_numbers<[1], [0], [0], [1], [0, 0, 1, 1], [], []>} : vector<8x384xf32>, vector<384x128xf32>, vector<8x128xf32> -> vector<8x128xf32>
    %c0_143 = arith.constant 0 : index
    %c0_144 = arith.constant 0 : index
    %152 = vector.load %arg9[%c0_143, %c0_144] : memref<1x128xf32, #tpu.memory_space<vmem>>, vector<1x128xf32>
    %153 = vector.broadcast %152 : vector<1x128xf32> to vector<8x128xf32>
    %154 = arith.addf %151, %153 : vector<8x128xf32>
    %c1_145 = arith.constant 1 : index
    %c0_146 = arith.constant 0 : index
    %c0_147 = arith.constant 0 : index
    %155 = vector.load %arg10[%c1_145, %c0_146, %c0_147] : memref<4x128x384xf32, #tpu.memory_space<vmem>>, vector<1x128x384xf32>
    %156 = vector.shape_cast %155 : vector<1x128x384xf32> to vector<128x384xf32>
    %cst_148 = arith.constant dense<0.000000e+00> : vector<8x384xf32>
    %157 = tpu.matmul %154, %156, %cst_148 {dimension_numbers = #tpu.dot_dimension_numbers<[1], [0], [0], [1], [0, 0, 1, 1], [], []>} : vector<8x128xf32>, vector<128x384xf32>, vector<8x384xf32> -> vector<8x384xf32>
    %158 = arith.addf %78, %157 : vector<8x384xf32>
    %c8 = arith.constant 8 : index
    %c0_149 = arith.constant 0 : index
    %c0_150 = arith.constant 0 : index
    %159 = vector.load %arg1[%c8, %c0_149, %c0_150] : memref<16x8x512xf32, #tpu.memory_space<vmem>>, vector<1x8x512xf32>
    %160 = vector.shape_cast %159 : vector<1x8x512xf32> to vector<8x512xf32>
    %c0_151 = arith.constant 0 : index
    %c0_152 = arith.constant 0 : index
    %161 = vector.load %arg2[%c0_151, %c0_152] : memref<512x384xf32, #tpu.memory_space<vmem>>, vector<512x384xf32>
    %cst_153 = arith.constant dense<0.000000e+00> : vector<8x384xf32>
    %162 = tpu.matmul %160, %161, %cst_153 {dimension_numbers = #tpu.dot_dimension_numbers<[1], [0], [0], [1], [0, 0, 1, 1], [], []>} : vector<8x512xf32>, vector<512x384xf32>, vector<8x384xf32> -> vector<8x384xf32>
    %c0_154 = arith.constant 0 : index
    %c0_155 = arith.constant 0 : index
    %163 = vector.load %arg3[%c0_154, %c0_155] : memref<1x384xf32, #tpu.memory_space<vmem>>, vector<1x384xf32>
    %164 = vector.broadcast %163 : vector<1x384xf32> to vector<8x384xf32>
    %165 = arith.addf %162, %164 : vector<8x384xf32>
    %166 = math.tanh %165 : vector<8x384xf32>
    %c0_156 = arith.constant 0 : index
    %c0_157 = arith.constant 0 : index
    %167 = vector.load %arg4[%c0_156, %c0_157] : memref<384x128xf32, #tpu.memory_space<vmem>>, vector<384x128xf32>
    %cst_158 = arith.constant dense<0.000000e+00> : vector<8x128xf32>
    %168 = tpu.matmul %166, %167, %cst_158 {dimension_numbers = #tpu.dot_dimension_numbers<[1], [0], [0], [1], [0, 0, 1, 1], [], []>} : vector<8x384xf32>, vector<384x128xf32>, vector<8x128xf32> -> vector<8x128xf32>
    %c0_159 = arith.constant 0 : index
    %c0_160 = arith.constant 0 : index
    %169 = vector.load %arg5[%c0_159, %c0_160] : memref<1x128xf32, #tpu.memory_space<vmem>>, vector<1x128xf32>
    %170 = vector.broadcast %169 : vector<1x128xf32> to vector<8x128xf32>
    %171 = arith.addf %168, %170 : vector<8x128xf32>
    %c0_161 = arith.constant 0 : index
    %c0_162 = arith.constant 0 : index
    %c0_163 = arith.constant 0 : index
    %172 = vector.load %arg6[%c0_161, %c0_162, %c0_163] : memref<4x128x384xf32, #tpu.memory_space<vmem>>, vector<1x128x384xf32>
    %173 = vector.shape_cast %172 : vector<1x128x384xf32> to vector<128x384xf32>
    %cst_164 = arith.constant dense<0.000000e+00> : vector<8x384xf32>
    %174 = tpu.matmul %171, %173, %cst_164 {dimension_numbers = #tpu.dot_dimension_numbers<[1], [0], [0], [1], [0, 0, 1, 1], [], []>} : vector<8x128xf32>, vector<128x384xf32>, vector<8x384xf32> -> vector<8x384xf32>
    %c9 = arith.constant 9 : index
    %c0_165 = arith.constant 0 : index
    %c0_166 = arith.constant 0 : index
    %175 = vector.load %arg1[%c9, %c0_165, %c0_166] : memref<16x8x512xf32, #tpu.memory_space<vmem>>, vector<1x8x512xf32>
    %176 = vector.shape_cast %175 : vector<1x8x512xf32> to vector<8x512xf32>
    %c0_167 = arith.constant 0 : index
    %c0_168 = arith.constant 0 : index
    %177 = vector.load %arg2[%c0_167, %c0_168] : memref<512x384xf32, #tpu.memory_space<vmem>>, vector<512x384xf32>
    %cst_169 = arith.constant dense<0.000000e+00> : vector<8x384xf32>
    %178 = tpu.matmul %176, %177, %cst_169 {dimension_numbers = #tpu.dot_dimension_numbers<[1], [0], [0], [1], [0, 0, 1, 1], [], []>} : vector<8x512xf32>, vector<512x384xf32>, vector<8x384xf32> -> vector<8x384xf32>
    %c0_170 = arith.constant 0 : index
    %c0_171 = arith.constant 0 : index
    %179 = vector.load %arg3[%c0_170, %c0_171] : memref<1x384xf32, #tpu.memory_space<vmem>>, vector<1x384xf32>
    %180 = vector.broadcast %179 : vector<1x384xf32> to vector<8x384xf32>
    %181 = arith.addf %178, %180 : vector<8x384xf32>
    %182 = math.tanh %181 : vector<8x384xf32>
    %c0_172 = arith.constant 0 : index
    %c0_173 = arith.constant 0 : index
    %183 = vector.load %arg4[%c0_172, %c0_173] : memref<384x128xf32, #tpu.memory_space<vmem>>, vector<384x128xf32>
    %cst_174 = arith.constant dense<0.000000e+00> : vector<8x128xf32>
    %184 = tpu.matmul %182, %183, %cst_174 {dimension_numbers = #tpu.dot_dimension_numbers<[1], [0], [0], [1], [0, 0, 1, 1], [], []>} : vector<8x384xf32>, vector<384x128xf32>, vector<8x128xf32> -> vector<8x128xf32>
    %c0_175 = arith.constant 0 : index
    %c0_176 = arith.constant 0 : index
    %185 = vector.load %arg5[%c0_175, %c0_176] : memref<1x128xf32, #tpu.memory_space<vmem>>, vector<1x128xf32>
    %186 = vector.broadcast %185 : vector<1x128xf32> to vector<8x128xf32>
    %187 = arith.addf %184, %186 : vector<8x128xf32>
    %c1_177 = arith.constant 1 : index
    %c0_178 = arith.constant 0 : index
    %c0_179 = arith.constant 0 : index
    %188 = vector.load %arg6[%c1_177, %c0_178, %c0_179] : memref<4x128x384xf32, #tpu.memory_space<vmem>>, vector<1x128x384xf32>
    %189 = vector.shape_cast %188 : vector<1x128x384xf32> to vector<128x384xf32>
    %cst_180 = arith.constant dense<0.000000e+00> : vector<8x384xf32>
    %190 = tpu.matmul %187, %189, %cst_180 {dimension_numbers = #tpu.dot_dimension_numbers<[1], [0], [0], [1], [0, 0, 1, 1], [], []>} : vector<8x128xf32>, vector<128x384xf32>, vector<8x384xf32> -> vector<8x384xf32>
    %191 = arith.addf %174, %190 : vector<8x384xf32>
    %c10 = arith.constant 10 : index
    %c0_181 = arith.constant 0 : index
    %c0_182 = arith.constant 0 : index
    %192 = vector.load %arg1[%c10, %c0_181, %c0_182] : memref<16x8x512xf32, #tpu.memory_space<vmem>>, vector<1x8x512xf32>
    %193 = vector.shape_cast %192 : vector<1x8x512xf32> to vector<8x512xf32>
    %c0_183 = arith.constant 0 : index
    %c0_184 = arith.constant 0 : index
    %194 = vector.load %arg2[%c0_183, %c0_184] : memref<512x384xf32, #tpu.memory_space<vmem>>, vector<512x384xf32>
    %cst_185 = arith.constant dense<0.000000e+00> : vector<8x384xf32>
    %195 = tpu.matmul %193, %194, %cst_185 {dimension_numbers = #tpu.dot_dimension_numbers<[1], [0], [0], [1], [0, 0, 1, 1], [], []>} : vector<8x512xf32>, vector<512x384xf32>, vector<8x384xf32> -> vector<8x384xf32>
    %c0_186 = arith.constant 0 : index
    %c0_187 = arith.constant 0 : index
    %196 = vector.load %arg3[%c0_186, %c0_187] : memref<1x384xf32, #tpu.memory_space<vmem>>, vector<1x384xf32>
    %197 = vector.broadcast %196 : vector<1x384xf32> to vector<8x384xf32>
    %198 = arith.addf %195, %197 : vector<8x384xf32>
    %199 = math.tanh %198 : vector<8x384xf32>
    %c0_188 = arith.constant 0 : index
    %c0_189 = arith.constant 0 : index
    %200 = vector.load %arg4[%c0_188, %c0_189] : memref<384x128xf32, #tpu.memory_space<vmem>>, vector<384x128xf32>
    %cst_190 = arith.constant dense<0.000000e+00> : vector<8x128xf32>
    %201 = tpu.matmul %199, %200, %cst_190 {dimension_numbers = #tpu.dot_dimension_numbers<[1], [0], [0], [1], [0, 0, 1, 1], [], []>} : vector<8x384xf32>, vector<384x128xf32>, vector<8x128xf32> -> vector<8x128xf32>
    %c0_191 = arith.constant 0 : index
    %c0_192 = arith.constant 0 : index
    %202 = vector.load %arg5[%c0_191, %c0_192] : memref<1x128xf32, #tpu.memory_space<vmem>>, vector<1x128xf32>
    %203 = vector.broadcast %202 : vector<1x128xf32> to vector<8x128xf32>
    %204 = arith.addf %201, %203 : vector<8x128xf32>
    %c2_193 = arith.constant 2 : index
    %c0_194 = arith.constant 0 : index
    %c0_195 = arith.constant 0 : index
    %205 = vector.load %arg6[%c2_193, %c0_194, %c0_195] : memref<4x128x384xf32, #tpu.memory_space<vmem>>, vector<1x128x384xf32>
    %206 = vector.shape_cast %205 : vector<1x128x384xf32> to vector<128x384xf32>
    %cst_196 = arith.constant dense<0.000000e+00> : vector<8x384xf32>
    %207 = tpu.matmul %204, %206, %cst_196 {dimension_numbers = #tpu.dot_dimension_numbers<[1], [0], [0], [1], [0, 0, 1, 1], [], []>} : vector<8x128xf32>, vector<128x384xf32>, vector<8x384xf32> -> vector<8x384xf32>
    %208 = arith.addf %191, %207 : vector<8x384xf32>
    %c11 = arith.constant 11 : index
    %c0_197 = arith.constant 0 : index
    %c0_198 = arith.constant 0 : index
    %209 = vector.load %arg1[%c11, %c0_197, %c0_198] : memref<16x8x512xf32, #tpu.memory_space<vmem>>, vector<1x8x512xf32>
    %210 = vector.shape_cast %209 : vector<1x8x512xf32> to vector<8x512xf32>
    %c0_199 = arith.constant 0 : index
    %c0_200 = arith.constant 0 : index
    %211 = vector.load %arg2[%c0_199, %c0_200] : memref<512x384xf32, #tpu.memory_space<vmem>>, vector<512x384xf32>
    %cst_201 = arith.constant dense<0.000000e+00> : vector<8x384xf32>
    %212 = tpu.matmul %210, %211, %cst_201 {dimension_numbers = #tpu.dot_dimension_numbers<[1], [0], [0], [1], [0, 0, 1, 1], [], []>} : vector<8x512xf32>, vector<512x384xf32>, vector<8x384xf32> -> vector<8x384xf32>
    %c0_202 = arith.constant 0 : index
    %c0_203 = arith.constant 0 : index
    %213 = vector.load %arg3[%c0_202, %c0_203] : memref<1x384xf32, #tpu.memory_space<vmem>>, vector<1x384xf32>
    %214 = vector.broadcast %213 : vector<1x384xf32> to vector<8x384xf32>
    %215 = arith.addf %212, %214 : vector<8x384xf32>
    %216 = math.tanh %215 : vector<8x384xf32>
    %c0_204 = arith.constant 0 : index
    %c0_205 = arith.constant 0 : index
    %217 = vector.load %arg4[%c0_204, %c0_205] : memref<384x128xf32, #tpu.memory_space<vmem>>, vector<384x128xf32>
    %cst_206 = arith.constant dense<0.000000e+00> : vector<8x128xf32>
    %218 = tpu.matmul %216, %217, %cst_206 {dimension_numbers = #tpu.dot_dimension_numbers<[1], [0], [0], [1], [0, 0, 1, 1], [], []>} : vector<8x384xf32>, vector<384x128xf32>, vector<8x128xf32> -> vector<8x128xf32>
    %c0_207 = arith.constant 0 : index
    %c0_208 = arith.constant 0 : index
    %219 = vector.load %arg5[%c0_207, %c0_208] : memref<1x128xf32, #tpu.memory_space<vmem>>, vector<1x128xf32>
    %220 = vector.broadcast %219 : vector<1x128xf32> to vector<8x128xf32>
    %221 = arith.addf %218, %220 : vector<8x128xf32>
    %c3_209 = arith.constant 3 : index
    %c0_210 = arith.constant 0 : index
    %c0_211 = arith.constant 0 : index
    %222 = vector.load %arg6[%c3_209, %c0_210, %c0_211] : memref<4x128x384xf32, #tpu.memory_space<vmem>>, vector<1x128x384xf32>
    %223 = vector.shape_cast %222 : vector<1x128x384xf32> to vector<128x384xf32>
    %cst_212 = arith.constant dense<0.000000e+00> : vector<8x384xf32>
    %224 = tpu.matmul %221, %223, %cst_212 {dimension_numbers = #tpu.dot_dimension_numbers<[1], [0], [0], [1], [0, 0, 1, 1], [], []>} : vector<8x128xf32>, vector<128x384xf32>, vector<8x384xf32> -> vector<8x384xf32>
    %225 = arith.addf %208, %224 : vector<8x384xf32>
    %c0_213 = arith.constant 0 : index
    %c0_214 = arith.constant 0 : index
    %226 = vector.load %arg7[%c0_213, %c0_214] : memref<1x384xf32, #tpu.memory_space<vmem>>, vector<1x384xf32>
    %227 = vector.broadcast %226 : vector<1x384xf32> to vector<8x384xf32>
    %228 = arith.addf %225, %227 : vector<8x384xf32>
    %229 = math.tanh %228 : vector<8x384xf32>
    %c0_215 = arith.constant 0 : index
    %c0_216 = arith.constant 0 : index
    %230 = vector.load %arg8[%c0_215, %c0_216] : memref<384x128xf32, #tpu.memory_space<vmem>>, vector<384x128xf32>
    %cst_217 = arith.constant dense<0.000000e+00> : vector<8x128xf32>
    %231 = tpu.matmul %229, %230, %cst_217 {dimension_numbers = #tpu.dot_dimension_numbers<[1], [0], [0], [1], [0, 0, 1, 1], [], []>} : vector<8x384xf32>, vector<384x128xf32>, vector<8x128xf32> -> vector<8x128xf32>
    %c0_218 = arith.constant 0 : index
    %c0_219 = arith.constant 0 : index
    %232 = vector.load %arg9[%c0_218, %c0_219] : memref<1x128xf32, #tpu.memory_space<vmem>>, vector<1x128xf32>
    %233 = vector.broadcast %232 : vector<1x128xf32> to vector<8x128xf32>
    %234 = arith.addf %231, %233 : vector<8x128xf32>
    %c2_220 = arith.constant 2 : index
    %c0_221 = arith.constant 0 : index
    %c0_222 = arith.constant 0 : index
    %235 = vector.load %arg10[%c2_220, %c0_221, %c0_222] : memref<4x128x384xf32, #tpu.memory_space<vmem>>, vector<1x128x384xf32>
    %236 = vector.shape_cast %235 : vector<1x128x384xf32> to vector<128x384xf32>
    %cst_223 = arith.constant dense<0.000000e+00> : vector<8x384xf32>
    %237 = tpu.matmul %234, %236, %cst_223 {dimension_numbers = #tpu.dot_dimension_numbers<[1], [0], [0], [1], [0, 0, 1, 1], [], []>} : vector<8x128xf32>, vector<128x384xf32>, vector<8x384xf32> -> vector<8x384xf32>
    %238 = arith.addf %158, %237 : vector<8x384xf32>
    %c12 = arith.constant 12 : index
    %c0_224 = arith.constant 0 : index
    %c0_225 = arith.constant 0 : index
    %239 = vector.load %arg1[%c12, %c0_224, %c0_225] : memref<16x8x512xf32, #tpu.memory_space<vmem>>, vector<1x8x512xf32>
    %240 = vector.shape_cast %239 : vector<1x8x512xf32> to vector<8x512xf32>
    %c0_226 = arith.constant 0 : index
    %c0_227 = arith.constant 0 : index
    %241 = vector.load %arg2[%c0_226, %c0_227] : memref<512x384xf32, #tpu.memory_space<vmem>>, vector<512x384xf32>
    %cst_228 = arith.constant dense<0.000000e+00> : vector<8x384xf32>
    %242 = tpu.matmul %240, %241, %cst_228 {dimension_numbers = #tpu.dot_dimension_numbers<[1], [0], [0], [1], [0, 0, 1, 1], [], []>} : vector<8x512xf32>, vector<512x384xf32>, vector<8x384xf32> -> vector<8x384xf32>
    %c0_229 = arith.constant 0 : index
    %c0_230 = arith.constant 0 : index
    %243 = vector.load %arg3[%c0_229, %c0_230] : memref<1x384xf32, #tpu.memory_space<vmem>>, vector<1x384xf32>
    %244 = vector.broadcast %243 : vector<1x384xf32> to vector<8x384xf32>
    %245 = arith.addf %242, %244 : vector<8x384xf32>
    %246 = math.tanh %245 : vector<8x384xf32>
    %c0_231 = arith.constant 0 : index
    %c0_232 = arith.constant 0 : index
    %247 = vector.load %arg4[%c0_231, %c0_232] : memref<384x128xf32, #tpu.memory_space<vmem>>, vector<384x128xf32>
    %cst_233 = arith.constant dense<0.000000e+00> : vector<8x128xf32>
    %248 = tpu.matmul %246, %247, %cst_233 {dimension_numbers = #tpu.dot_dimension_numbers<[1], [0], [0], [1], [0, 0, 1, 1], [], []>} : vector<8x384xf32>, vector<384x128xf32>, vector<8x128xf32> -> vector<8x128xf32>
    %c0_234 = arith.constant 0 : index
    %c0_235 = arith.constant 0 : index
    %249 = vector.load %arg5[%c0_234, %c0_235] : memref<1x128xf32, #tpu.memory_space<vmem>>, vector<1x128xf32>
    %250 = vector.broadcast %249 : vector<1x128xf32> to vector<8x128xf32>
    %251 = arith.addf %248, %250 : vector<8x128xf32>
    %c0_236 = arith.constant 0 : index
    %c0_237 = arith.constant 0 : index
    %c0_238 = arith.constant 0 : index
    %252 = vector.load %arg6[%c0_236, %c0_237, %c0_238] : memref<4x128x384xf32, #tpu.memory_space<vmem>>, vector<1x128x384xf32>
    %253 = vector.shape_cast %252 : vector<1x128x384xf32> to vector<128x384xf32>
    %cst_239 = arith.constant dense<0.000000e+00> : vector<8x384xf32>
    %254 = tpu.matmul %251, %253, %cst_239 {dimension_numbers = #tpu.dot_dimension_numbers<[1], [0], [0], [1], [0, 0, 1, 1], [], []>} : vector<8x128xf32>, vector<128x384xf32>, vector<8x384xf32> -> vector<8x384xf32>
    %c13 = arith.constant 13 : index
    %c0_240 = arith.constant 0 : index
    %c0_241 = arith.constant 0 : index
    %255 = vector.load %arg1[%c13, %c0_240, %c0_241] : memref<16x8x512xf32, #tpu.memory_space<vmem>>, vector<1x8x512xf32>
    %256 = vector.shape_cast %255 : vector<1x8x512xf32> to vector<8x512xf32>
    %c0_242 = arith.constant 0 : index
    %c0_243 = arith.constant 0 : index
    %257 = vector.load %arg2[%c0_242, %c0_243] : memref<512x384xf32, #tpu.memory_space<vmem>>, vector<512x384xf32>
    %cst_244 = arith.constant dense<0.000000e+00> : vector<8x384xf32>
    %258 = tpu.matmul %256, %257, %cst_244 {dimension_numbers = #tpu.dot_dimension_numbers<[1], [0], [0], [1], [0, 0, 1, 1], [], []>} : vector<8x512xf32>, vector<512x384xf32>, vector<8x384xf32> -> vector<8x384xf32>
    %c0_245 = arith.constant 0 : index
    %c0_246 = arith.constant 0 : index
    %259 = vector.load %arg3[%c0_245, %c0_246] : memref<1x384xf32, #tpu.memory_space<vmem>>, vector<1x384xf32>
    %260 = vector.broadcast %259 : vector<1x384xf32> to vector<8x384xf32>
    %261 = arith.addf %258, %260 : vector<8x384xf32>
    %262 = math.tanh %261 : vector<8x384xf32>
    %c0_247 = arith.constant 0 : index
    %c0_248 = arith.constant 0 : index
    %263 = vector.load %arg4[%c0_247, %c0_248] : memref<384x128xf32, #tpu.memory_space<vmem>>, vector<384x128xf32>
    %cst_249 = arith.constant dense<0.000000e+00> : vector<8x128xf32>
    %264 = tpu.matmul %262, %263, %cst_249 {dimension_numbers = #tpu.dot_dimension_numbers<[1], [0], [0], [1], [0, 0, 1, 1], [], []>} : vector<8x384xf32>, vector<384x128xf32>, vector<8x128xf32> -> vector<8x128xf32>
    %c0_250 = arith.constant 0 : index
    %c0_251 = arith.constant 0 : index
    %265 = vector.load %arg5[%c0_250, %c0_251] : memref<1x128xf32, #tpu.memory_space<vmem>>, vector<1x128xf32>
    %266 = vector.broadcast %265 : vector<1x128xf32> to vector<8x128xf32>
    %267 = arith.addf %264, %266 : vector<8x128xf32>
    %c1_252 = arith.constant 1 : index
    %c0_253 = arith.constant 0 : index
    %c0_254 = arith.constant 0 : index
    %268 = vector.load %arg6[%c1_252, %c0_253, %c0_254] : memref<4x128x384xf32, #tpu.memory_space<vmem>>, vector<1x128x384xf32>
    %269 = vector.shape_cast %268 : vector<1x128x384xf32> to vector<128x384xf32>
    %cst_255 = arith.constant dense<0.000000e+00> : vector<8x384xf32>
    %270 = tpu.matmul %267, %269, %cst_255 {dimension_numbers = #tpu.dot_dimension_numbers<[1], [0], [0], [1], [0, 0, 1, 1], [], []>} : vector<8x128xf32>, vector<128x384xf32>, vector<8x384xf32> -> vector<8x384xf32>
    %271 = arith.addf %254, %270 : vector<8x384xf32>
    %c14 = arith.constant 14 : index
    %c0_256 = arith.constant 0 : index
    %c0_257 = arith.constant 0 : index
    %272 = vector.load %arg1[%c14, %c0_256, %c0_257] : memref<16x8x512xf32, #tpu.memory_space<vmem>>, vector<1x8x512xf32>
    %273 = vector.shape_cast %272 : vector<1x8x512xf32> to vector<8x512xf32>
    %c0_258 = arith.constant 0 : index
    %c0_259 = arith.constant 0 : index
    %274 = vector.load %arg2[%c0_258, %c0_259] : memref<512x384xf32, #tpu.memory_space<vmem>>, vector<512x384xf32>
    %cst_260 = arith.constant dense<0.000000e+00> : vector<8x384xf32>
    %275 = tpu.matmul %273, %274, %cst_260 {dimension_numbers = #tpu.dot_dimension_numbers<[1], [0], [0], [1], [0, 0, 1, 1], [], []>} : vector<8x512xf32>, vector<512x384xf32>, vector<8x384xf32> -> vector<8x384xf32>
    %c0_261 = arith.constant 0 : index
    %c0_262 = arith.constant 0 : index
    %276 = vector.load %arg3[%c0_261, %c0_262] : memref<1x384xf32, #tpu.memory_space<vmem>>, vector<1x384xf32>
    %277 = vector.broadcast %276 : vector<1x384xf32> to vector<8x384xf32>
    %278 = arith.addf %275, %277 : vector<8x384xf32>
    %279 = math.tanh %278 : vector<8x384xf32>
    %c0_263 = arith.constant 0 : index
    %c0_264 = arith.constant 0 : index
    %280 = vector.load %arg4[%c0_263, %c0_264] : memref<384x128xf32, #tpu.memory_space<vmem>>, vector<384x128xf32>
    %cst_265 = arith.constant dense<0.000000e+00> : vector<8x128xf32>
    %281 = tpu.matmul %279, %280, %cst_265 {dimension_numbers = #tpu.dot_dimension_numbers<[1], [0], [0], [1], [0, 0, 1, 1], [], []>} : vector<8x384xf32>, vector<384x128xf32>, vector<8x128xf32> -> vector<8x128xf32>
    %c0_266 = arith.constant 0 : index
    %c0_267 = arith.constant 0 : index
    %282 = vector.load %arg5[%c0_266, %c0_267] : memref<1x128xf32, #tpu.memory_space<vmem>>, vector<1x128xf32>
    %283 = vector.broadcast %282 : vector<1x128xf32> to vector<8x128xf32>
    %284 = arith.addf %281, %283 : vector<8x128xf32>
    %c2_268 = arith.constant 2 : index
    %c0_269 = arith.constant 0 : index
    %c0_270 = arith.constant 0 : index
    %285 = vector.load %arg6[%c2_268, %c0_269, %c0_270] : memref<4x128x384xf32, #tpu.memory_space<vmem>>, vector<1x128x384xf32>
    %286 = vector.shape_cast %285 : vector<1x128x384xf32> to vector<128x384xf32>
    %cst_271 = arith.constant dense<0.000000e+00> : vector<8x384xf32>
    %287 = tpu.matmul %284, %286, %cst_271 {dimension_numbers = #tpu.dot_dimension_numbers<[1], [0], [0], [1], [0, 0, 1, 1], [], []>} : vector<8x128xf32>, vector<128x384xf32>, vector<8x384xf32> -> vector<8x384xf32>
    %288 = arith.addf %271, %287 : vector<8x384xf32>
    %c15 = arith.constant 15 : index
    %c0_272 = arith.constant 0 : index
    %c0_273 = arith.constant 0 : index
    %289 = vector.load %arg1[%c15, %c0_272, %c0_273] : memref<16x8x512xf32, #tpu.memory_space<vmem>>, vector<1x8x512xf32>
    %290 = vector.shape_cast %289 : vector<1x8x512xf32> to vector<8x512xf32>
    %c0_274 = arith.constant 0 : index
    %c0_275 = arith.constant 0 : index
    %291 = vector.load %arg2[%c0_274, %c0_275] : memref<512x384xf32, #tpu.memory_space<vmem>>, vector<512x384xf32>
    %cst_276 = arith.constant dense<0.000000e+00> : vector<8x384xf32>
    %292 = tpu.matmul %290, %291, %cst_276 {dimension_numbers = #tpu.dot_dimension_numbers<[1], [0], [0], [1], [0, 0, 1, 1], [], []>} : vector<8x512xf32>, vector<512x384xf32>, vector<8x384xf32> -> vector<8x384xf32>
    %c0_277 = arith.constant 0 : index
    %c0_278 = arith.constant 0 : index
    %293 = vector.load %arg3[%c0_277, %c0_278] : memref<1x384xf32, #tpu.memory_space<vmem>>, vector<1x384xf32>
    %294 = vector.broadcast %293 : vector<1x384xf32> to vector<8x384xf32>
    %295 = arith.addf %292, %294 : vector<8x384xf32>
    %296 = math.tanh %295 : vector<8x384xf32>
    %c0_279 = arith.constant 0 : index
    %c0_280 = arith.constant 0 : index
    %297 = vector.load %arg4[%c0_279, %c0_280] : memref<384x128xf32, #tpu.memory_space<vmem>>, vector<384x128xf32>
    %cst_281 = arith.constant dense<0.000000e+00> : vector<8x128xf32>
    %298 = tpu.matmul %296, %297, %cst_281 {dimension_numbers = #tpu.dot_dimension_numbers<[1], [0], [0], [1], [0, 0, 1, 1], [], []>} : vector<8x384xf32>, vector<384x128xf32>, vector<8x128xf32> -> vector<8x128xf32>
    %c0_282 = arith.constant 0 : index
    %c0_283 = arith.constant 0 : index
    %299 = vector.load %arg5[%c0_282, %c0_283] : memref<1x128xf32, #tpu.memory_space<vmem>>, vector<1x128xf32>
    %300 = vector.broadcast %299 : vector<1x128xf32> to vector<8x128xf32>
    %301 = arith.addf %298, %300 : vector<8x128xf32>
    %c3_284 = arith.constant 3 : index
    %c0_285 = arith.constant 0 : index
    %c0_286 = arith.constant 0 : index
    %302 = vector.load %arg6[%c3_284, %c0_285, %c0_286] : memref<4x128x384xf32, #tpu.memory_space<vmem>>, vector<1x128x384xf32>
    %303 = vector.shape_cast %302 : vector<1x128x384xf32> to vector<128x384xf32>
    %cst_287 = arith.constant dense<0.000000e+00> : vector<8x384xf32>
    %304 = tpu.matmul %301, %303, %cst_287 {dimension_numbers = #tpu.dot_dimension_numbers<[1], [0], [0], [1], [0, 0, 1, 1], [], []>} : vector<8x128xf32>, vector<128x384xf32>, vector<8x384xf32> -> vector<8x384xf32>
    %305 = arith.addf %288, %304 : vector<8x384xf32>
    %c0_288 = arith.constant 0 : index
    %c0_289 = arith.constant 0 : index
    %306 = vector.load %arg7[%c0_288, %c0_289] : memref<1x384xf32, #tpu.memory_space<vmem>>, vector<1x384xf32>
    %307 = vector.broadcast %306 : vector<1x384xf32> to vector<8x384xf32>
    %308 = arith.addf %305, %307 : vector<8x384xf32>
    %309 = math.tanh %308 : vector<8x384xf32>
    %c0_290 = arith.constant 0 : index
    %c0_291 = arith.constant 0 : index
    %310 = vector.load %arg8[%c0_290, %c0_291] : memref<384x128xf32, #tpu.memory_space<vmem>>, vector<384x128xf32>
    %cst_292 = arith.constant dense<0.000000e+00> : vector<8x128xf32>
    %311 = tpu.matmul %309, %310, %cst_292 {dimension_numbers = #tpu.dot_dimension_numbers<[1], [0], [0], [1], [0, 0, 1, 1], [], []>} : vector<8x384xf32>, vector<384x128xf32>, vector<8x128xf32> -> vector<8x128xf32>
    %c0_293 = arith.constant 0 : index
    %c0_294 = arith.constant 0 : index
    %312 = vector.load %arg9[%c0_293, %c0_294] : memref<1x128xf32, #tpu.memory_space<vmem>>, vector<1x128xf32>
    %313 = vector.broadcast %312 : vector<1x128xf32> to vector<8x128xf32>
    %314 = arith.addf %311, %313 : vector<8x128xf32>
    %c3_295 = arith.constant 3 : index
    %c0_296 = arith.constant 0 : index
    %c0_297 = arith.constant 0 : index
    %315 = vector.load %arg10[%c3_295, %c0_296, %c0_297] : memref<4x128x384xf32, #tpu.memory_space<vmem>>, vector<1x128x384xf32>
    %316 = vector.shape_cast %315 : vector<1x128x384xf32> to vector<128x384xf32>
    %cst_298 = arith.constant dense<0.000000e+00> : vector<8x384xf32>
    %317 = tpu.matmul %314, %316, %cst_298 {dimension_numbers = #tpu.dot_dimension_numbers<[1], [0], [0], [1], [0, 0, 1, 1], [], []>} : vector<8x128xf32>, vector<128x384xf32>, vector<8x384xf32> -> vector<8x384xf32>
    %318 = arith.addf %238, %317 : vector<8x384xf32>
    %c0_299 = arith.constant 0 : index
    %c0_300 = arith.constant 0 : index
    %319 = vector.load %arg11[%c0_299, %c0_300] : memref<1x384xf32, #tpu.memory_space<vmem>>, vector<1x384xf32>
    %320 = vector.broadcast %319 : vector<1x384xf32> to vector<8x384xf32>
    %321 = arith.addf %318, %320 : vector<8x384xf32>
    %322 = math.tanh %321 : vector<8x384xf32>
    %c0_301 = arith.constant 0 : index
    %c0_302 = arith.constant 0 : index
    %323 = vector.load %arg12[%c0_301, %c0_302] : memref<384x128xf32, #tpu.memory_space<vmem>>, vector<384x128xf32>
    %cst_303 = arith.constant dense<0.000000e+00> : vector<8x128xf32>
    %324 = tpu.matmul %322, %323, %cst_303 {dimension_numbers = #tpu.dot_dimension_numbers<[1], [0], [0], [1], [0, 0, 1, 1], [], []>} : vector<8x384xf32>, vector<384x128xf32>, vector<8x128xf32> -> vector<8x128xf32>
    %c0_304 = arith.constant 0 : index
    %c0_305 = arith.constant 0 : index
    %325 = vector.load %arg13[%c0_304, %c0_305] : memref<1x128xf32, #tpu.memory_space<vmem>>, vector<1x128xf32>
    %326 = vector.broadcast %325 : vector<1x128xf32> to vector<8x128xf32>
    %327 = arith.addf %324, %326 : vector<8x128xf32>
    %c0_306 = arith.constant 0 : index
    %c0_307 = arith.constant 0 : index
    %328 = vector.load %arg14[%c0_306, %c0_307] : memref<8x128xf32, #tpu.memory_space<vmem>>, vector<8x128xf32>
    tpu.vector_store %arg14[%c0_306, %c0_307], %327 {strides = array<i32>} : memref<8x128xf32, #tpu.memory_space<vmem>>, vector<8x128xf32>,
    return
  }
  func.func @transform_0(%arg0: i32) -> (i32, i32, i32) {
    %c0_i32 = arith.constant 0 : i32
    %c0_i32_0 = arith.constant 0 : i32
    %c0_i32_1 = arith.constant 0 : i32
    return %c0_i32, %arg0, %c0_i32_0 : i32, i32, i32
  }
  func.func @transform_1(%arg0: i32) -> (i32, i32) {
    %c0_i32 = arith.constant 0 : i32
    %c0_i32_0 = arith.constant 0 : i32
    %c0_i32_1 = arith.constant 0 : i32
    return %c0_i32, %c0_i32_0 : i32, i32
  }
  func.func @transform_2(%arg0: i32) -> (i32, i32) {
    %c0_i32 = arith.constant 0 : i32
    %c0_i32_0 = arith.constant 0 : i32
    %c0_i32_1 = arith.constant 0 : i32
    return %c0_i32, %c0_i32_0 : i32, i32
  }
  func.func @transform_3(%arg0: i32) -> (i32, i32) {
    %c0_i32 = arith.constant 0 : i32
    %c0_i32_0 = arith.constant 0 : i32
    %c0_i32_1 = arith.constant 0 : i32
    return %c0_i32, %c0_i32_0 : i32, i32
  }
  func.func @transform_4(%arg0: i32) -> (i32, i32) {
    %c0_i32 = arith.constant 0 : i32
    %c0_i32_0 = arith.constant 0 : i32
    %c0_i32_1 = arith.constant 0 : i32
    return %c0_i32, %c0_i32_0 : i32, i32
  }
  func.func @transform_5(%arg0: i32) -> (i32, i32, i32) {
    %c0_i32 = arith.constant 0 : i32
    %c0_i32_0 = arith.constant 0 : i32
    %c0_i32_1 = arith.constant 0 : i32
    %c0_i32_2 = arith.constant 0 : i32
    return %c0_i32, %c0_i32_0, %c0_i32_1 : i32, i32, i32
  }
  func.func @transform_6(%arg0: i32) -> (i32, i32) {
    %c0_i32 = arith.constant 0 : i32
    %c0_i32_0 = arith.constant 0 : i32
    %c0_i32_1 = arith.constant 0 : i32
    return %c0_i32, %c0_i32_0 : i32, i32
  }
  func.func @transform_7(%arg0: i32) -> (i32, i32) {
    %c0_i32 = arith.constant 0 : i32
    %c0_i32_0 = arith.constant 0 : i32
    %c0_i32_1 = arith.constant 0 : i32
    return %c0_i32, %c0_i32_0 : i32, i32
  }
  func.func @transform_8(%arg0: i32) -> (i32, i32) {
    %c0_i32 = arith.constant 0 : i32
    %c0_i32_0 = arith.constant 0 : i32
    %c0_i32_1 = arith.constant 0 : i32
    return %c0_i32, %c0_i32_0 : i32, i32
  }
  func.func @transform_9(%arg0: i32) -> (i32, i32, i32) {
    %c0_i32 = arith.constant 0 : i32
    %c0_i32_0 = arith.constant 0 : i32
    %c0_i32_1 = arith.constant 0 : i32
    %c0_i32_2 = arith.constant 0 : i32
    return %c0_i32, %c0_i32_0, %c0_i32_1 : i32, i32, i32
  }
  func.func @transform_10(%arg0: i32) -> (i32, i32) {
    %c0_i32 = arith.constant 0 : i32
    %c0_i32_0 = arith.constant 0 : i32
    %c0_i32_1 = arith.constant 0 : i32
    return %c0_i32, %c0_i32_0 : i32, i32
  }
  func.func @transform_11(%arg0: i32) -> (i32, i32) {
    %c0_i32 = arith.constant 0 : i32
    %c0_i32_0 = arith.constant 0 : i32
    %c0_i32_1 = arith.constant 0 : i32
    return %c0_i32, %c0_i32_0 : i32, i32
  }
  func.func @transform_12(%arg0: i32) -> (i32, i32) {
    %c0_i32 = arith.constant 0 : i32
    %c0_i32_0 = arith.constant 0 : i32
    %c0_i32_1 = arith.constant 0 : i32
    return %c0_i32, %c0_i32_0 : i32, i32
  }
  func.func @transform_13(%arg0: i32) -> (i32, i32) {
    %c0_i32 = arith.constant 0 : i32
    %c0_i32_0 = arith.constant 0 : i32
    return %arg0, %c0_i32 : i32, i32
  }
}

</mosaic_0001>

<llo_original>
// kernel: _fused_forward.1
$region0: #{_fused_forward.1}
  #allocation0 [shape = 'u32[]', space=smem, size = 0x4, offset = 0x4, fixed_abs, tag = 'smem constant byte address 0x4 - core index']
  #allocation1 [shape = 'u32[72,128]{1,0:T(1,128)}', space=vmem, size = 0x9000, scoped, tag = 'internal scratch']
  %s0 = inlined_call_operand.vmem [shape: f32[16,8,512], index: 0, kind: input, shape index: {}]
  %s1 = inlined_call_operand.hbm [shape: f32[512,384], index: 1, kind: input, shape index: {}]
  %s2 = inlined_call_operand.hbm [shape: f32[1,384], index: 2, kind: input, shape index: {}]
  %s3 = inlined_call_operand.vmem [shape: f32[384,128], index: 3, kind: input, shape index: {}]
  %s4 = inlined_call_operand.vmem [shape: f32[1,128], index: 4, kind: input, shape index: {}]
  %s5 = inlined_call_operand.hbm [shape: f32[4,128,384], index: 5, kind: input, shape index: {}]
  %s6 = inlined_call_operand.hbm [shape: f32[1,384], index: 6, kind: input, shape index: {}]
  %s7 = inlined_call_operand.vmem [shape: f32[384,128], index: 7, kind: input, shape index: {}]
  %s8 = inlined_call_operand.hbm [shape: f32[1,128], index: 8, kind: input, shape index: {}]
  %s9 = inlined_call_operand.hbm [shape: f32[4,128,384], index: 9, kind: input, shape index: {}]
  %s10 = inlined_call_operand.hbm [shape: f32[1,384], index: 10, kind: input, shape index: {}]
  %s11 = inlined_call_operand.vmem [shape: f32[384,128], index: 11, kind: input, shape index: {}]
  %s12 = inlined_call_operand.hbm [shape: f32[1,128], index: 12, kind: input, shape index: {}]
  %s13 = inlined_call_operand.vmem [shape: f32[8,128], index: 13, kind: output, shape index: {}]
  %s14 = sld [smem:[#allocation0]]
  $region94: #{_fused_forward.1} parent=0
    _
  %s16 = ssub.s32 1, %s14
  %s17 = scalar_select 0, %s16, %s14
  $region1: #{_fused_forward.1} parent=0
    #allocation2 [shape = 'u8[786432]{0}', space=vmem, size = 0xc0000, scoped, tag = 'input window, operand 1, single buffered']
    #allocation3 [shape = 's32[1]{0}', space=sflag, size = 0x4, scoped, tag = 'scoped memory for _fused_forward.1']
    #allocation4 [shape = 'u8[1536]{0}', space=vmem, size = 0x800, scoped, tag = 'input window, operand 2, single buffered']
    #allocation5 [shape = 's32[1]{0}', space=sflag, size = 0x4, scoped, tag = 'scoped memory for _fused_forward.1']
    #allocation6 [shape = 'u8[786432]{0}', space=vmem, size = 0xc0000, scoped, tag = 'input window, operand 5, single buffered']
    #allocation7 [shape = 'u8[1536]{0}', space=vmem, size = 0x800, scoped, tag = 'input window, operand 6, single buffered']
    #allocation8 [shape = 's32[1]{0}', space=sflag, size = 0x4, scoped, tag = 'scoped memory for _fused_forward.1']
    #allocation9 [shape = 'u8[512]{0}', space=vmem, size = 0x400, scoped, tag = 'input window, operand 8, single buffered']
    #allocation10 [shape = 'u8[786432]{0}', space=vmem, size = 0xc0000, scoped, tag = 'input window, operand 9, single buffered']
    #allocation11 [shape = 's32[1]{0}', space=sflag, size = 0x4, scoped, tag = 'scoped memory for _fused_forward.1']
    #allocation12 [shape = 'u8[1536]{0}', space=vmem, size = 0x800, scoped, tag = 'input window, operand 10, single buffered']
    #allocation13 [shape = 'u8[512]{0}', space=vmem, size = 0x400, scoped, tag = 'input window, operand 12, single buffered']
    #allocation14 [shape = 's32[1]{0}', space=sflag, size = 0x4, scoped, tag = 'scoped memory for _fused_forward.1']
    %18 = vsyncpa [#allocation3], 0
    %19 = vsyncpa [#allocation5], 0
    %20 = vsyncpa [#allocation8], 0
    %21 = vsyncpa [#allocation11], 0
    %22 = vsyncpa [#allocation14], 0
    // Predicated region
    $region2: #{_fused_forward.1} parent=1 // pred_check
      _
    $region3: #{_fused_forward.1} parent=1 // pred_check_branch
      %24 = sbr.rel (0) target = $region5
    $region4: #{_fused_forward.1} parent=1 // pred_region
      _
    $region5: #{_fused_forward.1} parent=1 // pred_fallthru
      _
    // Predicated region
    $region6: #{_fused_forward.1} parent=1 // pred_check
      _
    $region7: #{_fused_forward.1} parent=1 // pred_check_branch
      %26 = sbr.rel (0) target = $region9
    $region8: #{_fused_forward.1} parent=1 // pred_region
      %28 = vsyncadd [#allocation3], 0
      %s29 = sshll.u32 %s1, 4
      %s30 = int_to_ptr.hbm [resolvable:$true] %s29
      %s31 = sshll.u32 [#allocation2], 4
      %s32 = int_to_ptr.vmem [resolvable:$true] %s31
      %37 = dma.hbm_to_vmem [thread:$0]  %s30, 24576, %s32, [#allocation3], 384, 384, 24
    $region9: #{_fused_forward.1} parent=1 // pred_fallthru
      _
    // Predicated region
    $region10: #{_fused_forward.1} parent=1 // pred_check
      _
    $region11: #{_fused_forward.1} parent=1 // pred_check_branch
      %39 = sbr.rel (0) target = $region13
    $region12: #{_fused_forward.1} parent=1 // pred_region
      %41 = vsyncadd [#allocation5], 0
      %s43 = sshll.u32 %s2, 4
      %s44 = int_to_ptr.hbm [resolvable:$true] %s43
      %s45 = sshll.u32 [#allocation4], 4
      %s46 = int_to_ptr.vmem [resolvable:$true] %s45
      %48 = dma.hbm_to_vmem [thread:$0]  %s44, 48, %s46, [#allocation5]
    $region13: #{_fused_forward.1} parent=1 // pred_fallthru
      _
    // Predicated region
    $region14: #{_fused_forward.1} parent=1 // pred_check
      _
    $region15: #{_fused_forward.1} parent=1 // pred_check_branch
      %50 = sbr.rel (0) target = $region17
    $region16: #{_fused_forward.1} parent=1 // pred_region
      _
    $region17: #{_fused_forward.1} parent=1 // pred_fallthru
      _
    // Predicated region
    $region18: #{_fused_forward.1} parent=1 // pred_check
      _
    $region19: #{_fused_forward.1} parent=1 // pred_check_branch
      %52 = sbr.rel (0) target = $region21
    $region20: #{_fused_forward.1} parent=1 // pred_region
      _
    $region21: #{_fused_forward.1} parent=1 // pred_fallthru
      _
    // Predicated region
    $region22: #{_fused_forward.1} parent=1 // pred_check
      _
    $region23: #{_fused_forward.1} parent=1 // pred_check_branch
      %54 = sbr.rel (0) target = $region25
    $region24: #{_fused_forward.1} parent=1 // pred_region
      %56 = vsyncadd [#allocation5], 0
      %s57 = sshll.u32 %s5, 4
      %s58 = int_to_ptr.hbm [resolvable:$true] %s57
      %s59 = sshll.u32 [#allocation6], 4
      %s60 = int_to_ptr.vmem [resolvable:$true] %s59
      %65 = dma.hbm_to_vmem [thread:$0]  %s58, 24576, %s60, [#allocation5], 384, 384, 24
    $region25: #{_fused_forward.1} parent=1 // pred_fallthru
      _
    // Predicated region
    $region26: #{_fused_forward.1} parent=1 // pred_check
      _
    $region27: #{_fused_forward.1} parent=1 // pred_check_branch
      %67 = sbr.rel (0) target = $region29
    $region28: #{_fused_forward.1} parent=1 // pred_region
      %69 = vsyncadd [#allocation8], 0
      %s71 = sshll.u32 %s6, 4
      %s72 = int_to_ptr.hbm [resolvable:$true] %s71
      %s73 = sshll.u32 [#allocation7], 4
      %s74 = int_to_ptr.vmem [resolvable:$true] %s73
      %76 = dma.hbm_to_vmem [thread:$0]  %s72, 48, %s74, [#allocation8]
    $region29: #{_fused_forward.1} parent=1 // pred_fallthru
      _
    // Predicated region
    $region30: #{_fused_forward.1} parent=1 // pred_check
      _
    $region31: #{_fused_forward.1} parent=1 // pred_check_branch
      %78 = sbr.rel (0) target = $region33
    $region32: #{_fused_forward.1} parent=1 // pred_region
      _
    $region33: #{_fused_forward.1} parent=1 // pred_fallthru
      _
    // Predicated region
    $region34: #{_fused_forward.1} parent=1 // pred_check
      _
    $region35: #{_fused_forward.1} parent=1 // pred_check_branch
      %80 = sbr.rel (0) target = $region37
    $region36: #{_fused_forward.1} parent=1 // pred_region
      %82 = vsyncadd [#allocation8], 0
      %s84 = sshll.u32 %s8, 4
      %s85 = int_to_ptr.hbm [resolvable:$true] %s84
      %s86 = sshll.u32 [#allocation9], 4
      %s87 = int_to_ptr.vmem [resolvable:$true] %s86
      %89 = dma.hbm_to_vmem [thread:$0]  %s85, 16, %s87, [#allocation8]
    $region37: #{_fused_forward.1} parent=1 // pred_fallthru
      _
    // Predicated region
    $region38: #{_fused_forward.1} parent=1 // pred_check
      _
    $region39: #{_fused_forward.1} parent=1 // pred_check_branch
      %91 = sbr.rel (0) target = $region41
    $region40: #{_fused_forward.1} parent=1 // pred_region
      %93 = vsyncadd [#allocation11], 0
      %s94 = sshll.u32 %s9, 4
      %s95 = int_to_ptr.hbm [resolvable:$true] %s94
      %s96 = sshll.u32 [#allocation10], 4
      %s97 = int_to_ptr.vmem [resolvable:$true] %s96
      %102 = dma.hbm_to_vmem [thread:$0]  %s95, 24576, %s97, [#allocation11], 384, 384, 24
    $region41: #{_fused_forward.1} parent=1 // pred_fallthru
      _
    // Predicated region
    $region42: #{_fused_forward.1} parent=1 // pred_check
      _
    $region43: #{_fused_forward.1} parent=1 // pred_check_branch
      %104 = sbr.rel (0) target = $region45
    $region44: #{_fused_forward.1} parent=1 // pred_region
      %106 = vsyncadd [#allocation11], 0
      %s108 = sshll.u32 %s10, 4
      %s109 = int_to_ptr.hbm [resolvable:$true] %s108
      %s110 = sshll.u32 [#allocation12], 4
      %s111 = int_to_ptr.vmem [resolvable:$true] %s110
      %113 = dma.hbm_to_vmem [thread:$0]  %s109, 48, %s111, [#allocation11]
    $region45: #{_fused_forward.1} parent=1 // pred_fallthru
      _
    // Predicated region
    $region46: #{_fused_forward.1} parent=1 // pred_check
      _
    $region47: #{_fused_forward.1} parent=1 // pred_check_branch
      %115 = sbr.rel (0) target = $region49
    $region48: #{_fused_forward.1} parent=1 // pred_region
      _
    $region49: #{_fused_forward.1} parent=1 // pred_fallthru
      _
    // Predicated region
    $region50: #{_fused_forward.1} parent=1 // pred_check
      _
    $region51: #{_fused_forward.1} parent=1 // pred_check_branch
      %117 = sbr.rel (0) target = $region53
    $region52: #{_fused_forward.1} parent=1 // pred_region
      %119 = vsyncadd [#allocation14], 0
      %s121 = sshll.u32 %s12, 4
      %s122 = int_to_ptr.hbm [resolvable:$true] %s121
      %s123 = sshll.u32 [#allocation13], 4
      %s124 = int_to_ptr.vmem [resolvable:$true] %s123
      %126 = dma.hbm_to_vmem [thread:$0]  %s122, 16, %s124, [#allocation14]
    $region53: #{_fused_forward.1} parent=1 // pred_fallthru
      _
    // Predicated region
    $region54: #{_fused_forward.1} parent=1 // pred_check
      _
    $region55: #{_fused_forward.1} parent=1 // pred_check_branch
      %128 = sbr.rel (0) target = $region57
    $region56: #{_fused_forward.1} parent=1 // pred_region
      %130 = dma.done [#allocation3], 24576
    $region57: #{_fused_forward.1} parent=1 // pred_fallthru
      _
    // Predicated region
    $region58: #{_fused_forward.1} parent=1 // pred_check
      _
    $region59: #{_fused_forward.1} parent=1 // pred_check_branch
      %132 = sbr.rel (0) target = $region61
    $region60: #{_fused_forward.1} parent=1 // pred_region
      %134 = dma.done [#allocation5], 48
    $region61: #{_fused_forward.1} parent=1 // pred_fallthru
      _
    // Predicated region
    $region62: #{_fused_forward.1} parent=1 // pred_check
      _
    $region63: #{_fused_forward.1} parent=1 // pred_check_branch
      %136 = sbr.rel (0) target = $region65
    $region64: #{_fused_forward.1} parent=1 // pred_region
      %138 = dma.done [#allocation5], 24576
    $region65: #{_fused_forward.1} parent=1 // pred_fallthru
      _
    // Predicated region
    $region66: #{_fused_forward.1} parent=1 // pred_check
      _
    $region67: #{_fused_forward.1} parent=1 // pred_check_branch
      %140 = sbr.rel (0) target = $region69
    $region68: #{_fused_forward.1} parent=1 // pred_region
      %142 = dma.done [#allocation8], 48
    $region69: #{_fused_forward.1} parent=1 // pred_fallthru
      _
    // Predicated region
    $region70: #{_fused_forward.1} parent=1 // pred_check
      _
    $region71: #{_fused_forward.1} parent=1 // pred_check_branch
      %144 = sbr.rel (0) target = $region73
    $region72: #{_fused_forward.1} parent=1 // pred_region
      %146 = dma.done [#allocation8], 16
    $region73: #{_fused_forward.1} parent=1 // pred_fallthru
      _
    // Predicated region
    $region74: #{_fused_forward.1} parent=1 // pred_check
      _
    $region75: #{_fused_forward.1} parent=1 // pred_check_branch
      %148 = sbr.rel (0) target = $region77
    $region76: #{_fused_forward.1} parent=1 // pred_region
      %150 = dma.done [#allocation11], 24576
    $region77: #{_fused_forward.1} parent=1 // pred_fallthru
      _
    // Predicated region
    $region78: #{_fused_forward.1} parent=1 // pred_check
      _
    $region79: #{_fused_forward.1} parent=1 // pred_check_branch
      %152 = sbr.rel (0) target = $region81
    $region80: #{_fused_forward.1} parent=1 // pred_region
      %154 = dma.done [#allocation11], 48
    $region81: #{_fused_forward.1} parent=1 // pred_fallthru
      _
    // Predicated region
    $region82: #{_fused_forward.1} parent=1 // pred_check
      _
    $region83: #{_fused_forward.1} parent=1 // pred_check_branch
      %156 = sbr.rel (0) target = $region85
    $region84: #{_fused_forward.1} parent=1 // pred_region
      %158 = dma.done [#allocation14], 16
    $region85: #{_fused_forward.1} parent=1 // pred_fallthru
      _
    %v159 = vld [vmem:[%s0] sm:$0xff]
    %v160 = vld [vmem:[%s0 + $0x8] sm:$0xff]
    %v161 = vld [vmem:[%s0 + $0x10] sm:$0xff]
    %v162 = vld [vmem:[%s0 + $0x18] sm:$0xff]
    %v163 = vld [vmem:[#allocation2] sm:$0xff]
    %v164 = vld [vmem:[#allocation2 + $0x8] sm:$0xff]
    %v165 = vld [vmem:[#allocation2 + $0x10] sm:$0xff]
    %v166 = vld [vmem:[#allocation2 + $0x18] sm:$0xff]
    %v167 = vld [vmem:[#allocation2 + $0x20] sm:$0xff]
    %v168 = vld [vmem:[#allocation2 + $0x28] sm:$0xff]
    %v169 = vld [vmem:[#allocation2 + $0x30] sm:$0xff]
    %v170 = vld [vmem:[#allocation2 + $0x38] sm:$0xff]
    %v171 = vld [vmem:[#allocation2 + $0x40] sm:$0xff]
    %v172 = vld [vmem:[#allocation2 + $0x48] sm:$0xff]
    %v173 = vld [vmem:[#allocation2 + $0x50] sm:$0xff]
    %v174 = vld [vmem:[#allocation2 + $0x58] sm:$0xff]
    %v175 = vld [vmem:[#allocation2 + $0x60] sm:$0xff]
    %v176 = vld [vmem:[#allocation2 + $0x68] sm:$0xff]
    %v177 = vld [vmem:[#allocation2 + $0x70] sm:$0xff]
    %v178 = vld [vmem:[#allocation2 + $0x78] sm:$0xff]
    %v179 = vld [vmem:[#allocation2 + $0x80] sm:$0xff]
    %v180 = vld [vmem:[#allocation2 + $0x88] sm:$0xff]
    %v181 = vld [vmem:[#allocation2 + $0x90] sm:$0xff]
    %v182 = vld [vmem:[#allocation2 + $0x98] sm:$0xff]
    %v183 = vld [vmem:[#allocation2 + $0xa0] sm:$0xff]
    %v184 = vld [vmem:[#allocation2 + $0xa8] sm:$0xff]
    %v185 = vld [vmem:[#allocation2 + $0xb0] sm:$0xff]
    %v186 = vld [vmem:[#allocation2 + $0xb8] sm:$0xff]
    %v187 = vld [vmem:[#allocation2 + $0xc0] sm:$0xff]
    %v188 = vld [vmem:[#allocation2 + $0xc8] sm:$0xff]
    %v189 = vld [vmem:[#allocation2 + $0xd0] sm:$0xff]
    %v190 = vld [vmem:[#allocation2 + $0xd8] sm:$0xff]
    %v191 = vld [vmem:[#allocation2 + $0xe0] sm:$0xff]
    %v192 = vld [vmem:[#allocation2 + $0xe8] sm:$0xff]
    %v193 = vld [vmem:[#allocation2 + $0xf0] sm:$0xff]
    %v194 = vld [vmem:[#allocation2 + $0xf8] sm:$0xff]
    %v195 = vld [vmem:[#allocation2 + $0x100] sm:$0xff]
    %v196 = vld [vmem:[#allocation2 + $0x108] sm:$0xff]
    %v197 = vld [vmem:[#allocation2 + $0x110] sm:$0xff]
    %v198 = vld [vmem:[#allocation2 + $0x118] sm:$0xff]
    %v199 = vld [vmem:[#allocation2 + $0x120] sm:$0xff]
    %v200 = vld [vmem:[#allocation2 + $0x128] sm:$0xff]
    %v201 = vld [vmem:[#allocation2 + $0x130] sm:$0xff]
    %v202 = vld [vmem:[#allocation2 + $0x138] sm:$0xff]
    %v203 = vld [vmem:[#allocation2 + $0x140] sm:$0xff]
    %v204 = vld [vmem:[#allocation2 + $0x148] sm:$0xff]
    %v205 = vld [vmem:[#allocation2 + $0x150] sm:$0xff]
    %v206 = vld [vmem:[#allocation2 + $0x158] sm:$0xff]
    %v207 = vld [vmem:[#allocation2 + $0x160] sm:$0xff]
    %v208 = vld [vmem:[#allocation2 + $0x168] sm:$0xff]
    %v209 = vld [vmem:[#allocation2 + $0x170] sm:$0xff]
    %v210 = vld [vmem:[#allocation2 + $0x178] sm:$0xff]
    %v211 = vld [vmem:[#allocation2 + $0x180] sm:$0xff]
    %v212 = vld [vmem:[#allocation2 + $0x188] sm:$0xff]
    %v213 = vld [vmem:[#allocation2 + $0x190] sm:$0xff]
    %v214 = vld [vmem:[#allocation2 + $0x198] sm:$0xff]
    %v215 = vld [vmem:[#allocation2 + $0x1a0] sm:$0xff]
    %v216 = vld [vmem:[#allocation2 + $0x1a8] sm:$0xff]
    %v217 = vld [vmem:[#allocation2 + $0x1b0] sm:$0xff]
    %v218 = vld [vmem:[#allocation2 + $0x1b8] sm:$0xff]
    %v219 = vld [vmem:[#allocation2 + $0x1c0] sm:$0xff]
    %v220 = vld [vmem:[#allocation2 + $0x1c8] sm:$0xff]
    %v221 = vld [vmem:[#allocation2 + $0x1d0] sm:$0xff]
    %v222 = vld [vmem:[#allocation2 + $0x1d8] sm:$0xff]
    %v223 = vld [vmem:[#allocation2 + $0x1e0] sm:$0xff]
    %v224 = vld [vmem:[#allocation2 + $0x1e8] sm:$0xff]
    %v225 = vld [vmem:[#allocation2 + $0x1f0] sm:$0xff]
    %v226 = vld [vmem:[#allocation2 + $0x1f8] sm:$0xff]
    %v227 = vld [vmem:[#allocation2 + $0x200] sm:$0xff]
    %v228 = vld [vmem:[#allocation2 + $0x208] sm:$0xff]
    %v229 = vld [vmem:[#allocation2 + $0x210] sm:$0xff]
    %v230 = vld [vmem:[#allocation2 + $0x218] sm:$0xff]
    %v231 = vld [vmem:[#allocation2 + $0x220] sm:$0xff]
    %v232 = vld [vmem:[#allocation2 + $0x228] sm:$0xff]
    %v233 = vld [vmem:[#allocation2 + $0x230] sm:$0xff]
    %v234 = vld [vmem:[#allocation2 + $0x238] sm:$0xff]
    %v235 = vld [vmem:[#allocation2 + $0x240] sm:$0xff]
    %v236 = vld [vmem:[#allocation2 + $0x248] sm:$0xff]
    %v237 = vld [vmem:[#allocation2 + $0x250] sm:$0xff]
    %v238 = vld [vmem:[#allocation2 + $0x258] sm:$0xff]
    %v239 = vld [vmem:[#allocation2 + $0x260] sm:$0xff]
    %v240 = vld [vmem:[#allocation2 + $0x268] sm:$0xff]
    %v241 = vld [vmem:[#allocation2 + $0x270] sm:$0xff]
    %v242 = vld [vmem:[#allocation2 + $0x278] sm:$0xff]
    %v243 = vld [vmem:[#allocation2 + $0x280] sm:$0xff]
    %v244 = vld [vmem:[#allocation2 + $0x288] sm:$0xff]
    %v245 = vld [vmem:[#allocation2 + $0x290] sm:$0xff]
    %v246 = vld [vmem:[#allocation2 + $0x298] sm:$0xff]
    %v247 = vld [vmem:[#allocation2 + $0x2a0] sm:$0xff]
    %v248 = vld [vmem:[#allocation2 + $0x2a8] sm:$0xff]
    %v249 = vld [vmem:[#allocation2 + $0x2b0] sm:$0xff]
    %v250 = vld [vmem:[#allocation2 + $0x2b8] sm:$0xff]
    %v251 = vld [vmem:[#allocation2 + $0x2c0] sm:$0xff]
    %v252 = vld [vmem:[#allocation2 + $0x2c8] sm:$0xff]
    %v253 = vld [vmem:[#allocation2 + $0x2d0] sm:$0xff]
    %v254 = vld [vmem:[#allocation2 + $0x2d8] sm:$0xff]
    %v255 = vld [vmem:[#allocation2 + $0x2e0] sm:$0xff]
    %v256 = vld [vmem:[#allocation2 + $0x2e8] sm:$0xff]
    %v257 = vld [vmem:[#allocation2 + $0x2f0] sm:$0xff]
    %v258 = vld [vmem:[#allocation2 + $0x2f8] sm:$0xff]
    %v259 = vld [vmem:[#allocation2 + $0x300] sm:$0xff]
    %v260 = vld [vmem:[#allocation2 + $0x308] sm:$0xff]
    %v261 = vld [vmem:[#allocation2 + $0x310] sm:$0xff]
    %v262 = vld [vmem:[#allocation2 + $0x318] sm:$0xff]
    %v263 = vld [vmem:[#allocation2 + $0x320] sm:$0xff]
    %v264 = vld [vmem:[#allocation2 + $0x328] sm:$0xff]
    %v265 = vld [vmem:[#allocation2 + $0x330] sm:$0xff]
    %v266 = vld [vmem:[#allocation2 + $0x338] sm:$0xff]
    %v267 = vld [vmem:[#allocation2 + $0x340] sm:$0xff]
    %v268 = vld [vmem:[#allocation2 + $0x348] sm:$0xff]
    %v269 = vld [vmem:[#allocation2 + $0x350] sm:$0xff]
    %v270 = vld [vmem:[#allocation2 + $0x358] sm:$0xff]
    %v271 = vld [vmem:[#allocation2 + $0x360] sm:$0xff]
    %v272 = vld [vmem:[#allocation2 + $0x368] sm:$0xff]
    %v273 = vld [vmem:[#allocation2 + $0x370] sm:$0xff]
    %v274 = vld [vmem:[#allocation2 + $0x378] sm:$0xff]
    %v275 = vld [vmem:[#allocation2 + $0x380] sm:$0xff]
    %v276 = vld [vmem:[#allocation2 + $0x388] sm:$0xff]
    %v277 = vld [vmem:[#allocation2 + $0x390] sm:$0xff]
    %v278 = vld [vmem:[#allocation2 + $0x398] sm:$0xff]
    %v279 = vld [vmem:[#allocation2 + $0x3a0] sm:$0xff]
    %v280 = vld [vmem:[#allocation2 + $0x3a8] sm:$0xff]
    %v281 = vld [vmem:[#allocation2 + $0x3b0] sm:$0xff]
    %v282 = vld [vmem:[#allocation2 + $0x3b8] sm:$0xff]
    %v283 = vld [vmem:[#allocation2 + $0x3c0] sm:$0xff]
    %v284 = vld [vmem:[#allocation2 + $0x3c8] sm:$0xff]
    %v285 = vld [vmem:[#allocation2 + $0x3d0] sm:$0xff]
    %v286 = vld [vmem:[#allocation2 + $0x3d8] sm:$0xff]
    %v287 = vld [vmem:[#allocation2 + $0x3e0] sm:$0xff]
    %v288 = vld [vmem:[#allocation2 + $0x3e8] sm:$0xff]
    %v289 = vld [vmem:[#allocation2 + $0x3f0] sm:$0xff]
    %v290 = vld [vmem:[#allocation2 + $0x3f8] sm:$0xff]
    %v291 = vld [vmem:[#allocation2 + $0x400] sm:$0xff]
    %v292 = vld [vmem:[#allocation2 + $0x408] sm:$0xff]
    %v293 = vld [vmem:[#allocation2 + $0x410] sm:$0xff]
    %v294 = vld [vmem:[#allocation2 + $0x418] sm:$0xff]
    %v295 = vld [vmem:[#allocation2 + $0x420] sm:$0xff]
    %v296 = vld [vmem:[#allocation2 + $0x428] sm:$0xff]
    %v297 = vld [vmem:[#allocation2 + $0x430] sm:$0xff]
    %v298 = vld [vmem:[#allocation2 + $0x438] sm:$0xff]
    %v299 = vld [vmem:[#allocation2 + $0x440] sm:$0xff]
    %v300 = vld [vmem:[#allocation2 + $0x448] sm:$0xff]
    %v301 = vld [vmem:[#allocation2 + $0x450] sm:$0xff]
    %v302 = vld [vmem:[#allocation2 + $0x458] sm:$0xff]
    %v303 = vld [vmem:[#allocation2 + $0x460] sm:$0xff]
    %v304 = vld [vmem:[#allocation2 + $0x468] sm:$0xff]
    %v305 = vld [vmem:[#allocation2 + $0x470] sm:$0xff]
    %v306 = vld [vmem:[#allocation2 + $0x478] sm:$0xff]
    %v307 = vld [vmem:[#allocation2 + $0x480] sm:$0xff]
    %v308 = vld [vmem:[#allocation2 + $0x488] sm:$0xff]
    %v309 = vld [vmem:[#allocation2 + $0x490] sm:$0xff]
    %v310 = vld [vmem:[#allocation2 + $0x498] sm:$0xff]
    %v311 = vld [vmem:[#allocation2 + $0x4a0] sm:$0xff]
    %v312 = vld [vmem:[#allocation2 + $0x4a8] sm:$0xff]
    %v313 = vld [vmem:[#allocation2 + $0x4b0] sm:$0xff]
    %v314 = vld [vmem:[#allocation2 + $0x4b8] sm:$0xff]
    %v315 = vld [vmem:[#allocation2 + $0x4c0] sm:$0xff]
    %v316 = vld [vmem:[#allocation2 + $0x4c8] sm:$0xff]
    %v317 = vld [vmem:[#allocation2 + $0x4d0] sm:$0xff]
    %v318 = vld [vmem:[#allocation2 + $0x4d8] sm:$0xff]
    %v319 = vld [vmem:[#allocation2 + $0x4e0] sm:$0xff]
    %v320 = vld [vmem:[#allocation2 + $0x4e8] sm:$0xff]
    %v321 = vld [vmem:[#allocation2 + $0x4f0] sm:$0xff]
    %v322 = vld [vmem:[#allocation2 + $0x4f8] sm:$0xff]
    %v323 = vld [vmem:[#allocation2 + $0x500] sm:$0xff]
    %v324 = vld [vmem:[#allocation2 + $0x508] sm:$0xff]
    %v325 = vld [vmem:[#allocation2 + $0x510] sm:$0xff]
    %v326 = vld [vmem:[#allocation2 + $0x518] sm:$0xff]
    %v327 = vld [vmem:[#allocation2 + $0x520] sm:$0xff]
    %v328 = vld [vmem:[#allocation2 + $0x528] sm:$0xff]
    %v329 = vld [vmem:[#allocation2 + $0x530] sm:$0xff]
    %v330 = vld [vmem:[#allocation2 + $0x538] sm:$0xff]
    %v331 = vld [vmem:[#allocation2 + $0x540] sm:$0xff]
    %v332 = vld [vmem:[#allocation2 + $0x548] sm:$0xff]
    %v333 = vld [vmem:[#allocation2 + $0x550] sm:$0xff]
    %v334 = vld [vmem:[#allocation2 + $0x558] sm:$0xff]
    %v335 = vld [vmem:[#allocation2 + $0x560] sm:$0xff]
    %v336 = vld [vmem:[#allocation2 + $0x568] sm:$0xff]
    %v337 = vld [vmem:[#allocation2 + $0x570] sm:$0xff]
    %v338 = vld [vmem:[#allocation2 + $0x578] sm:$0xff]
    %v339 = vld [vmem:[#allocation2 + $0x580] sm:$0xff]
    %v340 = vld [vmem:[#allocation2 + $0x588] sm:$0xff]
    %v341 = vld [vmem:[#allocation2 + $0x590] sm:$0xff]
    %v342 = vld [vmem:[#allocation2 + $0x598] sm:$0xff]
    %v343 = vld [vmem:[#allocation2 + $0x5a0] sm:$0xff]
    %v344 = vld [vmem:[#allocation2 + $0x5a8] sm:$0xff]
    %v345 = vld [vmem:[#allocation2 + $0x5b0] sm:$0xff]
    %v346 = vld [vmem:[#allocation2 + $0x5b8] sm:$0xff]
    %v347 = vld [vmem:[#allocation2 + $0x5c0] sm:$0xff]
    %v348 = vld [vmem:[#allocation2 + $0x5c8] sm:$0xff]
    %v349 = vld [vmem:[#allocation2 + $0x5d0] sm:$0xff]
    %v350 = vld [vmem:[#allocation2 + $0x5d8] sm:$0xff]
    %v351 = vld [vmem:[#allocation2 + $0x5e0] sm:$0xff]
    %v352 = vld [vmem:[#allocation2 + $0x5e8] sm:$0xff]
    %v353 = vld [vmem:[#allocation2 + $0x5f0] sm:$0xff]
    %v354 = vld [vmem:[#allocation2 + $0x5f8] sm:$0xff]
    %v355 = vld [vmem:[#allocation4] sm:$0x7]
    %v357 = vperm.slane %v355, 0
    %v358 = vperm.slane %v355, 1
    %v359 = vperm.slane %v355, 2
    %363 = vmatpush.msra.mxu0 %v208
    %364 = vmatpush.msra.mxu0 %v205
    %365 = vmatpush.msra.mxu0 %v202
    %366 = vmatpush.msra.mxu0 %v199
    %367 = vmatpush.msra.mxu0 %v196
    %368 = vmatpush.msra.mxu0 %v193
    %369 = vmatpush.msra.mxu0 %v190
    %370 = vmatpush.msra.mxu0 %v187
    %371 = vmatpush.msra.mxu0 %v184
    %372 = vmatpush.msra.mxu0 %v181
    %373 = vmatpush.msra.mxu0 %v178
    %374 = vmatpush.msra.mxu0 %v175
    %375 = vmatpush.msra.mxu0 %v172
    %376 = vmatpush.msra.mxu0 %v169
    %377 = vmatpush.msra.mxu0 %v166
    %378 = vmatpush.msra.mxu0 %v163
    %379 = vmatmul.f32.gmra.mxu0 %v159
    %v380 = vpop.f32.mrf.mxu0
    %v381 = vadd.f32 %v357, %v380
    %382 = vdwg.mxu0
    %383 = vmatpush.msra.mxu0 %v256
    %384 = vmatpush.msra.mxu0 %v253
    %385 = vmatpush.msra.mxu0 %v250
    %386 = vmatpush.msra.mxu0 %v247
    %387 = vmatpush.msra.mxu0 %v244
    %388 = vmatpush.msra.mxu0 %v241
    %389 = vmatpush.msra.mxu0 %v238
    %390 = vmatpush.msra.mxu0 %v235
    %391 = vmatpush.msra.mxu0 %v232
    %392 = vmatpush.msra.mxu0 %v229
    %393 = vmatpush.msra.mxu0 %v226
    %394 = vmatpush.msra.mxu0 %v223
    %395 = vmatpush.msra.mxu0 %v220
    %396 = vmatpush.msra.mxu0 %v217
    %397 = vmatpush.msra.mxu0 %v214
    %398 = vmatpush.msra.mxu0 %v211
    %399 = vmatmul.f32.gmra.mxu0 %v160
    %v400 = vpop.f32.mrf.mxu0
    %v401 = vadd.f32 %v381, %v400
    %402 = vdwg.mxu0
    %403 = vmatpush.msra.mxu0 %v304
    %404 = vmatpush.msra.mxu0 %v301
    %405 = vmatpush.msra.mxu0 %v298
    %406 = vmatpush.msra.mxu0 %v295
    %407 = vmatpush.msra.mxu0 %v292
    %408 = vmatpush.msra.mxu0 %v289
    %409 = vmatpush.msra.mxu0 %v286
    %410 = vmatpush.msra.mxu0 %v283
    %411 = vmatpush.msra.mxu0 %v280
    %412 = vmatpush.msra.mxu0 %v277
    %413 = vmatpush.msra.mxu0 %v274
    %414 = vmatpush.msra.mxu0 %v271
    %415 = vmatpush.msra.mxu0 %v268
    %416 = vmatpush.msra.mxu0 %v265
    %417 = vmatpush.msra.mxu0 %v262
    %418 = vmatpush.msra.mxu0 %v259
    %419 = vmatmul.f32.gmra.mxu0 %v161
    %v420 = vpop.f32.mrf.mxu0
    %v421 = vadd.f32 %v401, %v420
    %422 = vdwg.mxu0
    %423 = vmatpush.msra.mxu0 %v352
    %424 = vmatpush.msra.mxu0 %v349
    %425 = vmatpush.msra.mxu0 %v346
    %426 = vmatpush.msra.mxu0 %v343
    %427 = vmatpush.msra.mxu0 %v340
    %428 = vmatpush.msra.mxu0 %v337
    %429 = vmatpush.msra.mxu0 %v334
    %430 = vmatpush.msra.mxu0 %v331
    %431 = vmatpush.msra.mxu0 %v328
    %432 = vmatpush.msra.mxu0 %v325
    %433 = vmatpush.msra.mxu0 %v322
    %434 = vmatpush.msra.mxu0 %v319
    %435 = vmatpush.msra.mxu0 %v316
    %436 = vmatpush.msra.mxu0 %v313
    %437 = vmatpush.msra.mxu0 %v310
    %438 = vmatpush.msra.mxu0 %v307
    %439 = vmatmul.f32.gmra.mxu0 %v162
    %v440 = vpop.f32.mrf.mxu0
    %v441 = vadd.f32 %v421, %v440
    %442 = vdwg.mxu0
    %443 = vmatpush.msra.mxu0 %v209
    %444 = vmatpush.msra.mxu0 %v206
    %445 = vmatpush.msra.mxu0 %v203
    %446 = vmatpush.msra.mxu0 %v200
    %447 = vmatpush.msra.mxu0 %v197
    %448 = vmatpush.msra.mxu0 %v194
    %449 = vmatpush.msra.mxu0 %v191
    %450 = vmatpush.msra.mxu0 %v188
    %451 = vmatpush.msra.mxu0 %v185
    %452 = vmatpush.msra.mxu0 %v182
    %453 = vmatpush.msra.mxu0 %v179
    %454 = vmatpush.msra.mxu0 %v176
    %455 = vmatpush.msra.mxu0 %v173
    %456 = vmatpush.msra.mxu0 %v170
    %457 = vmatpush.msra.mxu0 %v167
    %458 = vmatpush.msra.mxu0 %v164
    %459 = vmatmul.f32.gmra.mxu0 %v159
    %v460 = vpop.f32.mrf.mxu0
    %v461 = vadd.f32 %v358, %v460
    %462 = vdwg.mxu0
    %463 = vmatpush.msra.mxu0 %v257
    %464 = vmatpush.msra.mxu0 %v254
    %465 = vmatpush.msra.mxu0 %v251
    %466 = vmatpush.msra.mxu0 %v248
    %467 = vmatpush.msra.mxu0 %v245
    %468 = vmatpush.msra.mxu0 %v242
    %469 = vmatpush.msra.mxu0 %v239
    %470 = vmatpush.msra.mxu0 %v236
    %471 = vmatpush.msra.mxu0 %v233
    %472 = vmatpush.msra.mxu0 %v230
    %473 = vmatpush.msra.mxu0 %v227
    %474 = vmatpush.msra.mxu0 %v224
    %475 = vmatpush.msra.mxu0 %v221
    %476 = vmatpush.msra.mxu0 %v218
    %477 = vmatpush.msra.mxu0 %v215
    %478 = vmatpush.msra.mxu0 %v212
    %479 = vmatmul.f32.gmra.mxu0 %v160
    %v480 = vpop.f32.mrf.mxu0
    %v481 = vadd.f32 %v461, %v480
    %482 = vdwg.mxu0
    %483 = vmatpush.msra.mxu0 %v305
    %484 = vmatpush.msra.mxu0 %v302
    %485 = vmatpush.msra.mxu0 %v299
    %486 = vmatpush.msra.mxu0 %v296
    %487 = vmatpush.msra.mxu0 %v293
    %488 = vmatpush.msra.mxu0 %v290
    %489 = vmatpush.msra.mxu0 %v287
    %490 = vmatpush.msra.mxu0 %v284
    %491 = vmatpush.msra.mxu0 %v281
    %492 = vmatpush.msra.mxu0 %v278
    %493 = vmatpush.msra.mxu0 %v275
    %494 = vmatpush.msra.mxu0 %v272
    %495 = vmatpush.msra.mxu0 %v269
    %496 = vmatpush.msra.mxu0 %v266
    %497 = vmatpush.msra.mxu0 %v263
    %498 = vmatpush.msra.mxu0 %v260
    %499 = vmatmul.f32.gmra.mxu0 %v161
    %v500 = vpop.f32.mrf.mxu0
    %v501 = vadd.f32 %v481, %v500
    %502 = vdwg.mxu0
    %503 = vmatpush.msra.mxu0 %v353
    %504 = vmatpush.msra.mxu0 %v350
    %505 = vmatpush.msra.mxu0 %v347
    %506 = vmatpush.msra.mxu0 %v344
    %507 = vmatpush.msra.mxu0 %v341
    %508 = vmatpush.msra.mxu0 %v338
    %509 = vmatpush.msra.mxu0 %v335
    %510 = vmatpush.msra.mxu0 %v332
    %511 = vmatpush.msra.mxu0 %v329
    %512 = vmatpush.msra.mxu0 %v326
    %513 = vmatpush.msra.mxu0 %v323
    %514 = vmatpush.msra.mxu0 %v320
    %515 = vmatpush.msra.mxu0 %v317
    %516 = vmatpush.msra.mxu0 %v314
    %517 = vmatpush.msra.mxu0 %v311
    %518 = vmatpush.msra.mxu0 %v308
    %519 = vmatmul.f32.gmra.mxu0 %v162
    %v520 = vpop.f32.mrf.mxu0
    %v521 = vadd.f32 %v501, %v520
    %522 = vdwg.mxu0
    %523 = vmatpush.msra.mxu0 %v210
    %524 = vmatpush.msra.mxu0 %v207
    %525 = vmatpush.msra.mxu0 %v204
    %526 = vmatpush.msra.mxu0 %v201
    %527 = vmatpush.msra.mxu0 %v198
    %528 = vmatpush.msra.mxu0 %v195
    %529 = vmatpush.msra.mxu0 %v192
    %530 = vmatpush.msra.mxu0 %v189
    %531 = vmatpush.msra.mxu0 %v186
    %532 = vmatpush.msra.mxu0 %v183
    %533 = vmatpush.msra.mxu0 %v180
    %534 = vmatpush.msra.mxu0 %v177
    %535 = vmatpush.msra.mxu0 %v174
    %536 = vmatpush.msra.mxu0 %v171
    %537 = vmatpush.msra.mxu0 %v168
    %538 = vmatpush.msra.mxu0 %v165
    %539 = vmatmul.f32.gmra.mxu0 %v159
    %v540 = vpop.f32.mrf.mxu0
    %v541 = vadd.f32 %v359, %v540
    %542 = vdwg.mxu0
    %543 = vmatpush.msra.mxu0 %v258
    %544 = vmatpush.msra.mxu0 %v255
    %545 = vmatpush.msra.mxu0 %v252
    %546 = vmatpush.msra.mxu0 %v249
    %547 = vmatpush.msra.mxu0 %v246
    %548 = vmatpush.msra.mxu0 %v243
    %549 = vmatpush.msra.mxu0 %v240
    %550 = vmatpush.msra.mxu0 %v237
    %551 = vmatpush.msra.mxu0 %v234
    %552 = vmatpush.msra.mxu0 %v231
    %553 = vmatpush.msra.mxu0 %v228
    %554 = vmatpush.msra.mxu0 %v225
    %555 = vmatpush.msra.mxu0 %v222
    %556 = vmatpush.msra.mxu0 %v219
    %557 = vmatpush.msra.mxu0 %v216
    %558 = vmatpush.msra.mxu0 %v213
    %559 = vmatmul.f32.gmra.mxu0 %v160
    %v560 = vpop.f32.mrf.mxu0
    %v561 = vadd.f32 %v541, %v560
    %562 = vdwg.mxu0
    %563 = vmatpush.msra.mxu0 %v306
    %564 = vmatpush.msra.mxu0 %v303
    %565 = vmatpush.msra.mxu0 %v300
    %566 = vmatpush.msra.mxu0 %v297
    %567 = vmatpush.msra.mxu0 %v294
    %568 = vmatpush.msra.mxu0 %v291
    %569 = vmatpush.msra.mxu0 %v288
    %570 = vmatpush.msra.mxu0 %v285
    %571 = vmatpush.msra.mxu0 %v282
    %572 = vmatpush.msra.mxu0 %v279
    %573 = vmatpush.msra.mxu0 %v276
    %574 = vmatpush.msra.mxu0 %v273
    %575 = vmatpush.msra.mxu0 %v270
    %576 = vmatpush.msra.mxu0 %v267
    %577 = vmatpush.msra.mxu0 %v264
    %578 = vmatpush.msra.mxu0 %v261
    %579 = vmatmul.f32.gmra.mxu0 %v161
    %v580 = vpop.f32.mrf.mxu0
    %v581 = vadd.f32 %v561, %v580
    %582 = vdwg.mxu0
    %583 = vmatpush.msra.mxu0 %v354
    %584 = vmatpush.msra.mxu0 %v351
    %585 = vmatpush.msra.mxu0 %v348
    %586 = vmatpush.msra.mxu0 %v345
    %587 = vmatpush.msra.mxu0 %v342
    %588 = vmatpush.msra.mxu0 %v339
    %589 = vmatpush.msra.mxu0 %v336
    %590 = vmatpush.msra.mxu0 %v333
    %591 = vmatpush.msra.mxu0 %v330
    %592 = vmatpush.msra.mxu0 %v327
    %593 = vmatpush.msra.mxu0 %v324
    %594 = vmatpush.msra.mxu0 %v321
    %595 = vmatpush.msra.mxu0 %v318
    %596 = vmatpush.msra.mxu0 %v315
    %597 = vmatpush.msra.mxu0 %v312
    %598 = vmatpush.msra.mxu0 %v309
    %599 = vmatmul.f32.gmra.mxu0 %v162
    %v600 = vpop.f32.mrf.mxu0
    %v601 = vadd.f32 %v581, %v600
    %602 = vdwg.mxu0
    %v603 = vtanh.pop %v441
    %v604 = vtanh.pop %v521
    %v605 = vtanh.pop %v601
    %v606 = vld [vmem:[%s3] sm:$0xff]
    %v607 = vld [vmem:[%s3 + $0x8] sm:$0xff]
    %v608 = vld [vmem:[%s3 + $0x10] sm:$0xff]
    %v609 = vld [vmem:[%s3 + $0x18] sm:$0xff]
    %v610 = vld [vmem:[%s3 + $0x20] sm:$0xff]
    %v611 = vld [vmem:[%s3 + $0x28] sm:$0xff]
    %v612 = vld [vmem:[%s3 + $0x30] sm:$0xff]
    %v613 = vld [vmem:[%s3 + $0x38] sm:$0xff]
    %v614 = vld [vmem:[%s3 + $0x40] sm:$0xff]
    %v615 = vld [vmem:[%s3 + $0x48] sm:$0xff]
    %v616 = vld [vmem:[%s3 + $0x50] sm:$0xff]
    %v617 = vld [vmem:[%s3 + $0x58] sm:$0xff]
    %v618 = vld [vmem:[%s3 + $0x60] sm:$0xff]
    %v619 = vld [vmem:[%s3 + $0x68] sm:$0xff]
    %v620 = vld [vmem:[%s3 + $0x70] sm:$0xff]
    %v621 = vld [vmem:[%s3 + $0x78] sm:$0xff]
    %v622 = vld [vmem:[%s3 + $0x80] sm:$0xff]
    %v623 = vld [vmem:[%s3 + $0x88] sm:$0xff]
    %v624 = vld [vmem:[%s3 + $0x90] sm:$0xff]
    %v625 = vld [vmem:[%s3 + $0x98] sm:$0xff]
    %v626 = vld [vmem:[%s3 + $0xa0] sm:$0xff]
    %v627 = vld [vmem:[%s3 + $0xa8] sm:$0xff]
    %v628 = vld [vmem:[%s3 + $0xb0] sm:$0xff]
    %v629 = vld [vmem:[%s3 + $0xb8] sm:$0xff]
    %v630 = vld [vmem:[%s3 + $0xc0] sm:$0xff]
    %v631 = vld [vmem:[%s3 + $0xc8] sm:$0xff]
    %v632 = vld [vmem:[%s3 + $0xd0] sm:$0xff]
    %v633 = vld [vmem:[%s3 + $0xd8] sm:$0xff]
    %v634 = vld [vmem:[%s3 + $0xe0] sm:$0xff]
    %v635 = vld [vmem:[%s3 + $0xe8] sm:$0xff]
    %v636 = vld [vmem:[%s3 + $0xf0] sm:$0xff]
    %v637 = vld [vmem:[%s3 + $0xf8] sm:$0xff]
    %v638 = vld [vmem:[%s3 + $0x100] sm:$0xff]
    %v639 = vld [vmem:[%s3 + $0x108] sm:$0xff]
    %v640 = vld [vmem:[%s3 + $0x110] sm:$0xff]
    %v641 = vld [vmem:[%s3 + $0x118] sm:$0xff]
    %v642 = vld [vmem:[%s3 + $0x120] sm:$0xff]
    %v643 = vld [vmem:[%s3 + $0x128] sm:$0xff]
    %v644 = vld [vmem:[%s3 + $0x130] sm:$0xff]
    %v645 = vld [vmem:[%s3 + $0x138] sm:$0xff]
    %v646 = vld [vmem:[%s3 + $0x140] sm:$0xff]
    %v647 = vld [vmem:[%s3 + $0x148] sm:$0xff]
    %v648 = vld [vmem:[%s3 + $0x150] sm:$0xff]
    %v649 = vld [vmem:[%s3 + $0x158] sm:$0xff]
    %v650 = vld [vmem:[%s3 + $0x160] sm:$0xff]
    %v651 = vld [vmem:[%s3 + $0x168] sm:$0xff]
    %v652 = vld [vmem:[%s3 + $0x170] sm:$0xff]
    %v653 = vld [vmem:[%s3 + $0x178] sm:$0xff]
    %v654 = vld [vmem:[%s4] sm:$0x1]
    %v656 = vperm.slane %v654, 0
    %658 = vmatpush.msra.mxu0 %v621
    %659 = vmatpush.msra.mxu0 %v620
    %660 = vmatpush.msra.mxu0 %v619
    %661 = vmatpush.msra.mxu0 %v618
    %662 = vmatpush.msra.mxu0 %v617
    %663 = vmatpush.msra.mxu0 %v616
    %664 = vmatpush.msra.mxu0 %v615
    %665 = vmatpush.msra.mxu0 %v614
    %666 = vmatpush.msra.mxu0 %v613
    %667 = vmatpush.msra.mxu0 %v612
    %668 = vmatpush.msra.mxu0 %v611
    %669 = vmatpush.msra.mxu0 %v610
    %670 = vmatpush.msra.mxu0 %v609
    %671 = vmatpush.msra.mxu0 %v608
    %672 = vmatpush.msra.mxu0 %v607
    %673 = vmatpush.msra.mxu0 %v606
    %674 = vmatmul.f32.gmra.mxu0 %v603
    %v675 = vpop.f32.mrf.mxu0
    %v676 = vadd.f32 %v656, %v675
    %677 = vdwg.mxu0
    %678 = vmatpush.msra.mxu0 %v637
    %679 = vmatpush.msra.mxu0 %v636
    %680 = vmatpush.msra.mxu0 %v635
    %681 = vmatpush.msra.mxu0 %v634
    %682 = vmatpush.msra.mxu0 %v633
    %683 = vmatpush.msra.mxu0 %v632
    %684 = vmatpush.msra.mxu0 %v631
    %685 = vmatpush.msra.mxu0 %v630
    %686 = vmatpush.msra.mxu0 %v629
    %687 = vmatpush.msra.mxu0 %v628
    %688 = vmatpush.msra.mxu0 %v627
    %689 = vmatpush.msra.mxu0 %v626
    %690 = vmatpush.msra.mxu0 %v625
    %691 = vmatpush.msra.mxu0 %v624
    %692 = vmatpush.msra.mxu0 %v623
    %693 = vmatpush.msra.mxu0 %v622
    %694 = vmatmul.f32.gmra.mxu0 %v604
    %v695 = vpop.f32.mrf.mxu0
    %v696 = vadd.f32 %v676, %v695
    %697 = vdwg.mxu0
    %698 = vmatpush.msra.mxu0 %v653
    %699 = vmatpush.msra.mxu0 %v652
    %700 = vmatpush.msra.mxu0 %v651
    %701 = vmatpush.msra.mxu0 %v650
    %702 = vmatpush.msra.mxu0 %v649
    %703 = vmatpush.msra.mxu0 %v648
    %704 = vmatpush.msra.mxu0 %v647
    %705 = vmatpush.msra.mxu0 %v646
    %706 = vmatpush.msra.mxu0 %v645
    %707 = vmatpush.msra.mxu0 %v644
    %708 = vmatpush.msra.mxu0 %v643
    %709 = vmatpush.msra.mxu0 %v642
    %710 = vmatpush.msra.mxu0 %v641
    %711 = vmatpush.msra.mxu0 %v640
    %712 = vmatpush.msra.mxu0 %v639
    %713 = vmatpush.msra.mxu0 %v638
    %714 = vmatmul.f32.gmra.mxu0 %v605
    %v715 = vpop.f32.mrf.mxu0
    %v716 = vadd.f32 %v696, %v715
    %717 = vdwg.mxu0
    %v718 = vld [vmem:[#allocation6] sm:$0xff]
    %v719 = vld [vmem:[#allocation6 + $0x8] sm:$0xff]
    %v720 = vld [vmem:[#allocation6 + $0x10] sm:$0xff]
    %v721 = vld [vmem:[#allocation6 + $0x18] sm:$0xff]
    %v722 = vld [vmem:[#allocation6 + $0x20] sm:$0xff]
    %v723 = vld [vmem:[#allocation6 + $0x28] sm:$0xff]
    %v724 = vld [vmem:[#allocation6 + $0x30] sm:$0xff]
    %v725 = vld [vmem:[#allocation6 + $0x38] sm:$0xff]
    %v726 = vld [vmem:[#allocation6 + $0x40] sm:$0xff]
    %v727 = vld [vmem:[#allocation6 + $0x48] sm:$0xff]
    %v728 = vld [vmem:[#allocation6 + $0x50] sm:$0xff]
    %v729 = vld [vmem:[#allocation6 + $0x58] sm:$0xff]
    %v730 = vld [vmem:[#allocation6 + $0x60] sm:$0xff]
    %v731 = vld [vmem:[#allocation6 + $0x68] sm:$0xff]
    %v732 = vld [vmem:[#allocation6 + $0x70] sm:$0xff]
    %v733 = vld [vmem:[#allocation6 + $0x78] sm:$0xff]
    %v734 = vld [vmem:[#allocation6 + $0x80] sm:$0xff]
    %v735 = vld [vmem:[#allocation6 + $0x88] sm:$0xff]
    %v736 = vld [vmem:[#allocation6 + $0x90] sm:$0xff]
    %v737 = vld [vmem:[#allocation6 + $0x98] sm:$0xff]
    %v738 = vld [vmem:[#allocation6 + $0xa0] sm:$0xff]
    %v739 = vld [vmem:[#allocation6 + $0xa8] sm:$0xff]
    %v740 = vld [vmem:[#allocation6 + $0xb0] sm:$0xff]
    %v741 = vld [vmem:[#allocation6 + $0xb8] sm:$0xff]
    %v742 = vld [vmem:[#allocation6 + $0xc0] sm:$0xff]
    %v743 = vld [vmem:[#allocation6 + $0xc8] sm:$0xff]
    %v744 = vld [vmem:[#allocation6 + $0xd0] sm:$0xff]
    %v745 = vld [vmem:[#allocation6 + $0xd8] sm:$0xff]
    %v746 = vld [vmem:[#allocation6 + $0xe0] sm:$0xff]
    %v747 = vld [vmem:[#allocation6 + $0xe8] sm:$0xff]
    %v748 = vld [vmem:[#allocation6 + $0xf0] sm:$0xff]
    %v749 = vld [vmem:[#allocation6 + $0xf8] sm:$0xff]
    %v750 = vld [vmem:[#allocation6 + $0x100] sm:$0xff]
    %v751 = vld [vmem:[#allocation6 + $0x108] sm:$0xff]
    %v752 = vld [vmem:[#allocation6 + $0x110] sm:$0xff]
    %v753 = vld [vmem:[#allocation6 + $0x118] sm:$0xff]
    %v754 = vld [vmem:[#allocation6 + $0x120] sm:$0xff]
    %v755 = vld [vmem:[#allocation6 + $0x128] sm:$0xff]
    %v756 = vld [vmem:[#allocation6 + $0x130] sm:$0xff]
    %v757 = vld [vmem:[#allocation6 + $0x138] sm:$0xff]
    %v758 = vld [vmem:[#allocation6 + $0x140] sm:$0xff]
    %v759 = vld [vmem:[#allocation6 + $0x148] sm:$0xff]
    %v760 = vld [vmem:[#allocation6 + $0x150] sm:$0xff]
    %v761 = vld [vmem:[#allocation6 + $0x158] sm:$0xff]
    %v762 = vld [vmem:[#allocation6 + $0x160] sm:$0xff]
    %v763 = vld [vmem:[#allocation6 + $0x168] sm:$0xff]
    %v764 = vld [vmem:[#allocation6 + $0x170] sm:$0xff]
    %v765 = vld [vmem:[#allocation6 + $0x178] sm:$0xff]
    %s766 = scalar_lea.vmem %s0, 32
    %v767 = vld [vmem:[%s766] sm:$0xff]
    %v768 = vld [vmem:[%s766 + $0x8] sm:$0xff]
    %v769 = vld [vmem:[%s766 + $0x10] sm:$0xff]
    %v770 = vld [vmem:[%s766 + $0x18] sm:$0xff]
    %771 = vmatpush.msra.mxu0 %v208
    %772 = vmatpush.msra.mxu0 %v205
    %773 = vmatpush.msra.mxu0 %v202
    %774 = vmatpush.msra.mxu0 %v199
    %775 = vmatpush.msra.mxu0 %v196
    %776 = vmatpush.msra.mxu0 %v193
    %777 = vmatpush.msra.mxu0 %v190
    %778 = vmatpush.msra.mxu0 %v187
    %779 = vmatpush.msra.mxu0 %v184
    %780 = vmatpush.msra.mxu0 %v181
    %781 = vmatpush.msra.mxu0 %v178
    %782 = vmatpush.msra.mxu0 %v175
    %783 = vmatpush.msra.mxu0 %v172
    %784 = vmatpush.msra.mxu0 %v169
    %785 = vmatpush.msra.mxu0 %v166
    %786 = vmatpush.msra.mxu0 %v163
    %787 = vmatmul.f32.gmra.mxu0 %v767
    %v788 = vpop.f32.mrf.mxu0
    %v789 = vadd.f32 %v357, %v788
    %790 = vdwg.mxu0
    %791 = vmatpush.msra.mxu0 %v256
    %792 = vmatpush.msra.mxu0 %v253
    %793 = vmatpush.msra.mxu0 %v250
    %794 = vmatpush.msra.mxu0 %v247
    %795 = vmatpush.msra.mxu0 %v244
    %796 = vmatpush.msra.mxu0 %v241
    %797 = vmatpush.msra.mxu0 %v238
    %798 = vmatpush.msra.mxu0 %v235
    %799 = vmatpush.msra.mxu0 %v232
    %800 = vmatpush.msra.mxu0 %v229
    %801 = vmatpush.msra.mxu0 %v226
    %802 = vmatpush.msra.mxu0 %v223
    %803 = vmatpush.msra.mxu0 %v220
    %804 = vmatpush.msra.mxu0 %v217
    %805 = vmatpush.msra.mxu0 %v214
    %806 = vmatpush.msra.mxu0 %v211
    %807 = vmatmul.f32.gmra.mxu0 %v768
    %v808 = vpop.f32.mrf.mxu0
    %v809 = vadd.f32 %v789, %v808
    %810 = vdwg.mxu0
    %811 = vmatpush.msra.mxu0 %v304
    %812 = vmatpush.msra.mxu0 %v301
    %813 = vmatpush.msra.mxu0 %v298
    %814 = vmatpush.msra.mxu0 %v295
    %815 = vmatpush.msra.mxu0 %v292
    %816 = vmatpush.msra.mxu0 %v289
    %817 = vmatpush.msra.mxu0 %v286
    %818 = vmatpush.msra.mxu0 %v283
    %819 = vmatpush.msra.mxu0 %v280
    %820 = vmatpush.msra.mxu0 %v277
    %821 = vmatpush.msra.mxu0 %v274
    %822 = vmatpush.msra.mxu0 %v271
    %823 = vmatpush.msra.mxu0 %v268
    %824 = vmatpush.msra.mxu0 %v265
    %825 = vmatpush.msra.mxu0 %v262
    %826 = vmatpush.msra.mxu0 %v259
    %827 = vmatmul.f32.gmra.mxu0 %v769
    %v828 = vpop.f32.mrf.mxu0
    %v829 = vadd.f32 %v809, %v828
    %830 = vdwg.mxu0
    %831 = vmatpush.msra.mxu0 %v352
    %832 = vmatpush.msra.mxu0 %v349
    %833 = vmatpush.msra.mxu0 %v346
    %834 = vmatpush.msra.mxu0 %v343
    %835 = vmatpush.msra.mxu0 %v340
    %836 = vmatpush.msra.mxu0 %v337
    %837 = vmatpush.msra.mxu0 %v334
    %838 = vmatpush.msra.mxu0 %v331
    %839 = vmatpush.msra.mxu0 %v328
    %840 = vmatpush.msra.mxu0 %v325
    %841 = vmatpush.msra.mxu0 %v322
    %842 = vmatpush.msra.mxu0 %v319
    %843 = vmatpush.msra.mxu0 %v316
    %844 = vmatpush.msra.mxu0 %v313
    %845 = vmatpush.msra.mxu0 %v310
    %846 = vmatpush.msra.mxu0 %v307
    %847 = vmatmul.f32.gmra.mxu0 %v770
    %v848 = vpop.f32.mrf.mxu0
    %v849 = vadd.f32 %v829, %v848
    %850 = vdwg.mxu0
    %851 = vmatpush.msra.mxu0 %v209
    %852 = vmatpush.msra.mxu0 %v206
    %853 = vmatpush.msra.mxu0 %v203
    %854 = vmatpush.msra.mxu0 %v200
    %855 = vmatpush.msra.mxu0 %v197
    %856 = vmatpush.msra.mxu0 %v194
    %857 = vmatpush.msra.mxu0 %v191
    %858 = vmatpush.msra.mxu0 %v188
    %859 = vmatpush.msra.mxu0 %v185
    %860 = vmatpush.msra.mxu0 %v182
    %861 = vmatpush.msra.mxu0 %v179
    %862 = vmatpush.msra.mxu0 %v176
    %863 = vmatpush.msra.mxu0 %v173
    %864 = vmatpush.msra.mxu0 %v170
    %865 = vmatpush.msra.mxu0 %v167
    %866 = vmatpush.msra.mxu0 %v164
    %867 = vmatmul.f32.gmra.mxu0 %v767
    %v868 = vpop.f32.mrf.mxu0
    %v869 = vadd.f32 %v358, %v868
    %870 = vdwg.mxu0
    %871 = vmatpush.msra.mxu0 %v257
    %872 = vmatpush.msra.mxu0 %v254
    %873 = vmatpush.msra.mxu0 %v251
    %874 = vmatpush.msra.mxu0 %v248
    %875 = vmatpush.msra.mxu0 %v245
    %876 = vmatpush.msra.mxu0 %v242
    %877 = vmatpush.msra.mxu0 %v239
    %878 = vmatpush.msra.mxu0 %v236
    %879 = vmatpush.msra.mxu0 %v233
    %880 = vmatpush.msra.mxu0 %v230
    %881 = vmatpush.msra.mxu0 %v227
    %882 = vmatpush.msra.mxu0 %v224
    %883 = vmatpush.msra.mxu0 %v221
    %884 = vmatpush.msra.mxu0 %v218
    %885 = vmatpush.msra.mxu0 %v215
    %886 = vmatpush.msra.mxu0 %v212
    %887 = vmatmul.f32.gmra.mxu0 %v768
    %v888 = vpop.f32.mrf.mxu0
    %v889 = vadd.f32 %v869, %v888
    %890 = vdwg.mxu0
    %891 = vmatpush.msra.mxu0 %v305
    %892 = vmatpush.msra.mxu0 %v302
    %893 = vmatpush.msra.mxu0 %v299
    %894 = vmatpush.msra.mxu0 %v296
    %895 = vmatpush.msra.mxu0 %v293
    %896 = vmatpush.msra.mxu0 %v290
    %897 = vmatpush.msra.mxu0 %v287
    %898 = vmatpush.msra.mxu0 %v284
    %899 = vmatpush.msra.mxu0 %v281
    %900 = vmatpush.msra.mxu0 %v278
    %901 = vmatpush.msra.mxu0 %v275
    %902 = vmatpush.msra.mxu0 %v272
    %903 = vmatpush.msra.mxu0 %v269
    %904 = vmatpush.msra.mxu0 %v266
    %905 = vmatpush.msra.mxu0 %v263
    %906 = vmatpush.msra.mxu0 %v260
    %907 = vmatmul.f32.gmra.mxu0 %v769
    %v908 = vpop.f32.mrf.mxu0
    %v909 = vadd.f32 %v889, %v908
    %910 = vdwg.mxu0
    %911 = vmatpush.msra.mxu0 %v353
    %912 = vmatpush.msra.mxu0 %v350
    %913 = vmatpush.msra.mxu0 %v347
    %914 = vmatpush.msra.mxu0 %v344
    %915 = vmatpush.msra.mxu0 %v341
    %916 = vmatpush.msra.mxu0 %v338
    %917 = vmatpush.msra.mxu0 %v335
    %918 = vmatpush.msra.mxu0 %v332
    %919 = vmatpush.msra.mxu0 %v329
    %920 = vmatpush.msra.mxu0 %v326
    %921 = vmatpush.msra.mxu0 %v323
    %922 = vmatpush.msra.mxu0 %v320
    %923 = vmatpush.msra.mxu0 %v317
    %924 = vmatpush.msra.mxu0 %v314
    %925 = vmatpush.msra.mxu0 %v311
    %926 = vmatpush.msra.mxu0 %v308
    %927 = vmatmul.f32.gmra.mxu0 %v770
    %v928 = vpop.f32.mrf.mxu0
    %v929 = vadd.f32 %v909, %v928
    %930 = vdwg.mxu0
    %931 = vmatpush.msra.mxu0 %v210
    %932 = vmatpush.msra.mxu0 %v207
    %933 = vmatpush.msra.mxu0 %v204
    %934 = vmatpush.msra.mxu0 %v201
    %935 = vmatpush.msra.mxu0 %v198
    %936 = vmatpush.msra.mxu0 %v195
    %937 = vmatpush.msra.mxu0 %v192
    %938 = vmatpush.msra.mxu0 %v189
    %939 = vmatpush.msra.mxu0 %v186
    %940 = vmatpush.msra.mxu0 %v183
    %941 = vmatpush.msra.mxu0 %v180
    %942 = vmatpush.msra.mxu0 %v177
    %943 = vmatpush.msra.mxu0 %v174
    %944 = vmatpush.msra.mxu0 %v171
    %945 = vmatpush.msra.mxu0 %v168
    %946 = vmatpush.msra.mxu0 %v165
    %947 = vmatmul.f32.gmra.mxu0 %v767
    %v948 = vpop.f32.mrf.mxu0
    %v949 = vadd.f32 %v359, %v948
    %950 = vdwg.mxu0
    %951 = vmatpush.msra.mxu0 %v258
    %952 = vmatpush.msra.mxu0 %v255
    %953 = vmatpush.msra.mxu0 %v252
    %954 = vmatpush.msra.mxu0 %v249
    %955 = vmatpush.msra.mxu0 %v246
    %956 = vmatpush.msra.mxu0 %v243
    %957 = vmatpush.msra.mxu0 %v240
    %958 = vmatpush.msra.mxu0 %v237
    %959 = vmatpush.msra.mxu0 %v234
    %960 = vmatpush.msra.mxu0 %v231
    %961 = vmatpush.msra.mxu0 %v228
    %962 = vmatpush.msra.mxu0 %v225
    %963 = vmatpush.msra.mxu0 %v222
    %964 = vmatpush.msra.mxu0 %v219
    %965 = vmatpush.msra.mxu0 %v216
    %966 = vmatpush.msra.mxu0 %v213
    %967 = vmatmul.f32.gmra.mxu0 %v768
    %v968 = vpop.f32.mrf.mxu0
    %v969 = vadd.f32 %v949, %v968
    %970 = vdwg.mxu0
    %971 = vmatpush.msra.mxu0 %v306
    %972 = vmatpush.msra.mxu0 %v303
    %973 = vmatpush.msra.mxu0 %v300
    %974 = vmatpush.msra.mxu0 %v297
    %975 = vmatpush.msra.mxu0 %v294
    %976 = vmatpush.msra.mxu0 %v291
    %977 = vmatpush.msra.mxu0 %v288
    %978 = vmatpush.msra.mxu0 %v285
    %979 = vmatpush.msra.mxu0 %v282
    %980 = vmatpush.msra.mxu0 %v279
    %981 = vmatpush.msra.mxu0 %v276
    %982 = vmatpush.msra.mxu0 %v273
    %983 = vmatpush.msra.mxu0 %v270
    %984 = vmatpush.msra.mxu0 %v267
    %985 = vmatpush.msra.mxu0 %v264
    %986 = vmatpush.msra.mxu0 %v261
    %987 = vmatmul.f32.gmra.mxu0 %v769
    %v988 = vpop.f32.mrf.mxu0
    %v989 = vadd.f32 %v969, %v988
    %990 = vdwg.mxu0
    %991 = vmatpush.msra.mxu0 %v354
    %992 = vmatpush.msra.mxu0 %v351
    %993 = vmatpush.msra.mxu0 %v348
    %994 = vmatpush.msra.mxu0 %v345
    %995 = vmatpush.msra.mxu0 %v342
    %996 = vmatpush.msra.mxu0 %v339
    %997 = vmatpush.msra.mxu0 %v336
    %998 = vmatpush.msra.mxu0 %v333
    %999 = vmatpush.msra.mxu0 %v330
    %1000 = vmatpush.msra.mxu0 %v327
    %1001 = vmatpush.msra.mxu0 %v324
    %1002 = vmatpush.msra.mxu0 %v321
    %1003 = vmatpush.msra.mxu0 %v318
    %1004 = vmatpush.msra.mxu0 %v315
    %1005 = vmatpush.msra.mxu0 %v312
    %1006 = vmatpush.msra.mxu0 %v309
    %1007 = vmatmul.f32.gmra.mxu0 %v770
    %v1008 = vpop.f32.mrf.mxu0
    %v1009 = vadd.f32 %v989, %v1008
    %1010 = vdwg.mxu0
    %v1011 = vtanh.pop %v849
    %v1012 = vtanh.pop %v929
    %v1013 = vtanh.pop %v1009
    %1014 = vmatpush.msra.mxu0 %v621
    %1015 = vmatpush.msra.mxu0 %v620
    %1016 = vmatpush.msra.mxu0 %v619
    %1017 = vmatpush.msra.mxu0 %v618
    %1018 = vmatpush.msra.mxu0 %v617
    %1019 = vmatpush.msra.mxu0 %v616
    %1020 = vmatpush.msra.mxu0 %v615
    %1021 = vmatpush.msra.mxu0 %v614
    %1022 = vmatpush.msra.mxu0 %v613
    %1023 = vmatpush.msra.mxu0 %v612
    %1024 = vmatpush.msra.mxu0 %v611
    %1025 = vmatpush.msra.mxu0 %v610
    %1026 = vmatpush.msra.mxu0 %v609
    %1027 = vmatpush.msra.mxu0 %v608
    %1028 = vmatpush.msra.mxu0 %v607
    %1029 = vmatpush.msra.mxu0 %v606
    %1030 = vmatmul.f32.gmra.mxu0 %v1011
    %v1031 = vpop.f32.mrf.mxu0
    %v1032 = vadd.f32 %v656, %v1031
    %1033 = vdwg.mxu0
    %1034 = vmatpush.msra.mxu0 %v637
    %1035 = vmatpush.msra.mxu0 %v636
    %1036 = vmatpush.msra.mxu0 %v635
    %1037 = vmatpush.msra.mxu0 %v634
    %1038 = vmatpush.msra.mxu0 %v633
    %1039 = vmatpush.msra.mxu0 %v632
    %1040 = vmatpush.msra.mxu0 %v631
    %1041 = vmatpush.msra.mxu0 %v630
    %1042 = vmatpush.msra.mxu0 %v629
    %1043 = vmatpush.msra.mxu0 %v628
    %1044 = vmatpush.msra.mxu0 %v627
    %1045 = vmatpush.msra.mxu0 %v626
    %1046 = vmatpush.msra.mxu0 %v625
    %1047 = vmatpush.msra.mxu0 %v624
    %1048 = vmatpush.msra.mxu0 %v623
    %1049 = vmatpush.msra.mxu0 %v622
    %1050 = vmatmul.f32.gmra.mxu0 %v1012
    %v1051 = vpop.f32.mrf.mxu0
    %v1052 = vadd.f32 %v1032, %v1051
    %1053 = vdwg.mxu0
    %1054 = vmatpush.msra.mxu0 %v653
    %1055 = vmatpush.msra.mxu0 %v652
    %1056 = vmatpush.msra.mxu0 %v651
    %1057 = vmatpush.msra.mxu0 %v650
    %1058 = vmatpush.msra.mxu0 %v649
    %1059 = vmatpush.msra.mxu0 %v648
    %1060 = vmatpush.msra.mxu0 %v647
    %1061 = vmatpush.msra.mxu0 %v646
    %1062 = vmatpush.msra.mxu0 %v645
    %1063 = vmatpush.msra.mxu0 %v644
    %1064 = vmatpush.msra.mxu0 %v643
    %1065 = vmatpush.msra.mxu0 %v642
    %1066 = vmatpush.msra.mxu0 %v641
    %1067 = vmatpush.msra.mxu0 %v640
    %1068 = vmatpush.msra.mxu0 %v639
    %1069 = vmatpush.msra.mxu0 %v638
    %1070 = vmatmul.f32.gmra.mxu0 %v1013
    %v1071 = vpop.f32.mrf.mxu0
    %v1072 = vadd.f32 %v1052, %v1071
    %1073 = vdwg.mxu0
    %s1074 = scalar_lea.vmem [#allocation6], 384
    %v1075 = vld [vmem:[%s1074] sm:$0xff]
    %v1076 = vld [vmem:[%s1074 + $0x8] sm:$0xff]
    %v1077 = vld [vmem:[%s1074 + $0x10] sm:$0xff]
    %v1078 = vld [vmem:[%s1074 + $0x18] sm:$0xff]
    %v1079 = vld [vmem:[%s1074 + $0x20] sm:$0xff]
    %v1080 = vld [vmem:[%s1074 + $0x28] sm:$0xff]
    %v1081 = vld [vmem:[%s1074 + $0x30] sm:$0xff]
    %v1082 = vld [vmem:[%s1074 + $0x38] sm:$0xff]
    %v1083 = vld [vmem:[%s1074 + $0x40] sm:$0xff]
    %v1084 = vld [vmem:[%s1074 + $0x48] sm:$0xff]
    %v1085 = vld [vmem:[%s1074 + $0x50] sm:$0xff]
    %v1086 = vld [vmem:[%s1074 + $0x58] sm:$0xff]
    %v1087 = vld [vmem:[%s1074 + $0x60] sm:$0xff]
    %v1088 = vld [vmem:[%s1074 + $0x68] sm:$0xff]
    %v1089 = vld [vmem:[%s1074 + $0x70] sm:$0xff]
    %v1090 = vld [vmem:[%s1074 + $0x78] sm:$0xff]
    %v1091 = vld [vmem:[%s1074 + $0x80] sm:$0xff]
    %v1092 = vld [vmem:[%s1074 + $0x88] sm:$0xff]
    %v1093 = vld [vmem:[%s1074 + $0x90] sm:$0xff]
    %v1094 = vld [vmem:[%s1074 + $0x98] sm:$0xff]
    %v1095 = vld [vmem:[%s1074 + $0xa0] sm:$0xff]
    %v1096 = vld [vmem:[%s1074 + $0xa8] sm:$0xff]
    %v1097 = vld [vmem:[%s1074 + $0xb0] sm:$0xff]
    %v1098 = vld [vmem:[%s1074 + $0xb8] sm:$0xff]
    %v1099 = vld [vmem:[%s1074 + $0xc0] sm:$0xff]
    %v1100 = vld [vmem:[%s1074 + $0xc8] sm:$0xff]
    %v1101 = vld [vmem:[%s1074 + $0xd0] sm:$0xff]
    %v1102 = vld [vmem:[%s1074 + $0xd8] sm:$0xff]
    %v1103 = vld [vmem:[%s1074 + $0xe0] sm:$0xff]
    %v1104 = vld [vmem:[%s1074 + $0xe8] sm:$0xff]
    %v1105 = vld [vmem:[%s1074 + $0xf0] sm:$0xff]
    %v1106 = vld [vmem:[%s1074 + $0xf8] sm:$0xff]
    %v1107 = vld [vmem:[%s1074 + $0x100] sm:$0xff]
    %v1108 = vld [vmem:[%s1074 + $0x108] sm:$0xff]
    %v1109 = vld [vmem:[%s1074 + $0x110] sm:$0xff]
    %v1110 = vld [vmem:[%s1074 + $0x118] sm:$0xff]
    %v1111 = vld [vmem:[%s1074 + $0x120] sm:$0xff]
    %v1112 = vld [vmem:[%s1074 + $0x128] sm:$0xff]
    %v1113 = vld [vmem:[%s1074 + $0x130] sm:$0xff]
    %v1114 = vld [vmem:[%s1074 + $0x138] sm:$0xff]
    %v1115 = vld [vmem:[%s1074 + $0x140] sm:$0xff]
    %v1116 = vld [vmem:[%s1074 + $0x148] sm:$0xff]
    %v1117 = vld [vmem:[%s1074 + $0x150] sm:$0xff]
    %v1118 = vld [vmem:[%s1074 + $0x158] sm:$0xff]
    %v1119 = vld [vmem:[%s1074 + $0x160] sm:$0xff]
    %v1120 = vld [vmem:[%s1074 + $0x168] sm:$0xff]
    %v1121 = vld [vmem:[%s1074 + $0x170] sm:$0xff]
    %v1122 = vld [vmem:[%s1074 + $0x178] sm:$0xff]
    %1123 = vmatpush.msra.mxu0 %v1120
    %1124 = vmatpush.msra.mxu0 %v1117
    %1125 = vmatpush.msra.mxu0 %v1114
    %1126 = vmatpush.msra.mxu0 %v1111
    %1127 = vmatpush.msra.mxu0 %v1108
    %1128 = vmatpush.msra.mxu0 %v1105
    %1129 = vmatpush.msra.mxu0 %v1102
    %1130 = vmatpush.msra.mxu0 %v1099
    %1131 = vmatpush.msra.mxu0 %v1096
    %1132 = vmatpush.msra.mxu0 %v1093
    %1133 = vmatpush.msra.mxu0 %v1090
    %1134 = vmatpush.msra.mxu0 %v1087
    %1135 = vmatpush.msra.mxu0 %v1084
    %1136 = vmatpush.msra.mxu0 %v1081
    %1137 = vmatpush.msra.mxu0 %v1078
    %1138 = vmatpush.msra.mxu0 %v1075
    %1139 = vmatmul.f32.gmra.mxu0 %v1072
    %v1140 = vpop.f32.mrf.mxu0
    %v1141 = vadd.f32 0.0, %v1140
    %1142 = vdwg.mxu0
    %1143 = vmatpush.msra.mxu0 %v1121
    %1144 = vmatpush.msra.mxu0 %v1118
    %1145 = vmatpush.msra.mxu0 %v1115
    %1146 = vmatpush.msra.mxu0 %v1112
    %1147 = vmatpush.msra.mxu0 %v1109
    %1148 = vmatpush.msra.mxu0 %v1106
    %1149 = vmatpush.msra.mxu0 %v1103
    %1150 = vmatpush.msra.mxu0 %v1100
    %1151 = vmatpush.msra.mxu0 %v1097
    %1152 = vmatpush.msra.mxu0 %v1094
    %1153 = vmatpush.msra.mxu0 %v1091
    %1154 = vmatpush.msra.mxu0 %v1088
    %1155 = vmatpush.msra.mxu0 %v1085
    %1156 = vmatpush.msra.mxu0 %v1082
    %1157 = vmatpush.msra.mxu0 %v1079
    %1158 = vmatpush.msra.mxu0 %v1076
    %1159 = vmatmul.f32.gmra.mxu0 %v1072
    %v1160 = vpop.f32.mrf.mxu0
    %v1161 = vadd.f32 0.0, %v1160
    %1162 = vdwg.mxu0
    %1163 = vmatpush.msra.mxu0 %v1122
    %1164 = vmatpush.msra.mxu0 %v1119
    %1165 = vmatpush.msra.mxu0 %v1116
    %1166 = vmatpush.msra.mxu0 %v1113
    %1167 = vmatpush.msra.mxu0 %v1110
    %1168 = vmatpush.msra.mxu0 %v1107
    %1169 = vmatpush.msra.mxu0 %v1104
    %1170 = vmatpush.msra.mxu0 %v1101
    %1171 = vmatpush.msra.mxu0 %v1098
    %1172 = vmatpush.msra.mxu0 %v1095
    %1173 = vmatpush.msra.mxu0 %v1092
    %1174 = vmatpush.msra.mxu0 %v1089
    %1175 = vmatpush.msra.mxu0 %v1086
    %1176 = vmatpush.msra.mxu0 %v1083
    %1177 = vmatpush.msra.mxu0 %v1080
    %1178 = vmatpush.msra.mxu0 %v1077
    %1179 = vmatmul.f32.gmra.mxu0 %v1072
    %v1180 = vpop.f32.mrf.mxu0
    %v1181 = vadd.f32 0.0, %v1180
    %1182 = vdwg.mxu0
    %1183 = vmatpush.msra.mxu0 %v763
    %1184 = vmatpush.msra.mxu0 %v760
    %1185 = vmatpush.msra.mxu0 %v757
    %1186 = vmatpush.msra.mxu0 %v754
    %1187 = vmatpush.msra.mxu0 %v751
    %1188 = vmatpush.msra.mxu0 %v748
    %1189 = vmatpush.msra.mxu0 %v745
    %1190 = vmatpush.msra.mxu0 %v742
    %1191 = vmatpush.msra.mxu0 %v739
    %1192 = vmatpush.msra.mxu0 %v736
    %1193 = vmatpush.msra.mxu0 %v733
    %1194 = vmatpush.msra.mxu0 %v730
    %1195 = vmatpush.msra.mxu0 %v727
    %1196 = vmatpush.msra.mxu0 %v724
    %1197 = vmatpush.msra.mxu0 %v721
    %1198 = vmatpush.msra.mxu0 %v718
    %1199 = vmatmul.f32.gmra.mxu0 %v716
    %v1200 = vpop.f32.mrf.mxu0
    %v1201 = vadd.f32 %v1141, %v1200
    %1202 = vdwg.mxu0
    %1203 = vmatpush.msra.mxu0 %v764
    %1204 = vmatpush.msra.mxu0 %v761
    %1205 = vmatpush.msra.mxu0 %v758
    %1206 = vmatpush.msra.mxu0 %v755
    %1207 = vmatpush.msra.mxu0 %v752
    %1208 = vmatpush.msra.mxu0 %v749
    %1209 = vmatpush.msra.mxu0 %v746
    %1210 = vmatpush.msra.mxu0 %v743
    %1211 = vmatpush.msra.mxu0 %v740
    %1212 = vmatpush.msra.mxu0 %v737
    %1213 = vmatpush.msra.mxu0 %v734
    %1214 = vmatpush.msra.mxu0 %v731
    %1215 = vmatpush.msra.mxu0 %v728
    %1216 = vmatpush.msra.mxu0 %v725
    %1217 = vmatpush.msra.mxu0 %v722
    %1218 = vmatpush.msra.mxu0 %v719
    %1219 = vmatmul.f32.gmra.mxu0 %v716
    %v1220 = vpop.f32.mrf.mxu0
    %v1221 = vadd.f32 %v1161, %v1220
    %1222 = vdwg.mxu0
    %1223 = vmatpush.msra.mxu0 %v765
    %1224 = vmatpush.msra.mxu0 %v762
    %1225 = vmatpush.msra.mxu0 %v759
    %1226 = vmatpush.msra.mxu0 %v756
    %1227 = vmatpush.msra.mxu0 %v753
    %1228 = vmatpush.msra.mxu0 %v750
    %1229 = vmatpush.msra.mxu0 %v747
    %1230 = vmatpush.msra.mxu0 %v744
    %1231 = vmatpush.msra.mxu0 %v741
    %1232 = vmatpush.msra.mxu0 %v738
    %1233 = vmatpush.msra.mxu0 %v735
    %1234 = vmatpush.msra.mxu0 %v732
    %1235 = vmatpush.msra.mxu0 %v729
    %1236 = vmatpush.msra.mxu0 %v726
    %1237 = vmatpush.msra.mxu0 %v723
    %1238 = vmatpush.msra.mxu0 %v720
    %1239 = vmatmul.f32.gmra.mxu0 %v716
    %v1240 = vpop.f32.mrf.mxu0
    %v1241 = vadd.f32 %v1181, %v1240
    %1242 = vdwg.mxu0
    %s1243 = scalar_lea.vmem %s0, 64
    %v1244 = vld [vmem:[%s1243] sm:$0xff]
    %v1245 = vld [vmem:[%s1243 + $0x8] sm:$0xff]
    %v1246 = vld [vmem:[%s1243 + $0x10] sm:$0xff]
    %v1247 = vld [vmem:[%s1243 + $0x18] sm:$0xff]
    %1248 = vmatpush.msra.mxu0 %v208
    %1249 = vmatpush.msra.mxu0 %v205
    %1250 = vmatpush.msra.mxu0 %v202
    %1251 = vmatpush.msra.mxu0 %v199
    %1252 = vmatpush.msra.mxu0 %v196
    %1253 = vmatpush.msra.mxu0 %v193
    %1254 = vmatpush.msra.mxu0 %v190
    %1255 = vmatpush.msra.mxu0 %v187
    %1256 = vmatpush.msra.mxu0 %v184
    %1257 = vmatpush.msra.mxu0 %v181
    %1258 = vmatpush.msra.mxu0 %v178
    %1259 = vmatpush.msra.mxu0 %v175
    %1260 = vmatpush.msra.mxu0 %v172
    %1261 = vmatpush.msra.mxu0 %v169
    %1262 = vmatpush.msra.mxu0 %v166
    %1263 = vmatpush.msra.mxu0 %v163
    %1264 = vmatmul.f32.gmra.mxu0 %v1244
    %v1265 = vpop.f32.mrf.mxu0
    %v1266 = vadd.f32 %v357, %v1265
    %1267 = vdwg.mxu0
    %1268 = vmatpush.msra.mxu0 %v256
    %1269 = vmatpush.msra.mxu0 %v253
    %1270 = vmatpush.msra.mxu0 %v250
    %1271 = vmatpush.msra.mxu0 %v247
    %1272 = vmatpush.msra.mxu0 %v244
    %1273 = vmatpush.msra.mxu0 %v241
    %1274 = vmatpush.msra.mxu0 %v238
    %1275 = vmatpush.msra.mxu0 %v235
    %1276 = vmatpush.msra.mxu0 %v232
    %1277 = vmatpush.msra.mxu0 %v229
    %1278 = vmatpush.msra.mxu0 %v226
    %1279 = vmatpush.msra.mxu0 %v223
    %1280 = vmatpush.msra.mxu0 %v220
    %1281 = vmatpush.msra.mxu0 %v217
    %1282 = vmatpush.msra.mxu0 %v214
    %1283 = vmatpush.msra.mxu0 %v211
    %1284 = vmatmul.f32.gmra.mxu0 %v1245
    %v1285 = vpop.f32.mrf.mxu0
    %v1286 = vadd.f32 %v1266, %v1285
    %1287 = vdwg.mxu0
    %1288 = vmatpush.msra.mxu0 %v304
    %1289 = vmatpush.msra.mxu0 %v301
    %1290 = vmatpush.msra.mxu0 %v298
    %1291 = vmatpush.msra.mxu0 %v295
    %1292 = vmatpush.msra.mxu0 %v292
    %1293 = vmatpush.msra.mxu0 %v289
    %1294 = vmatpush.msra.mxu0 %v286
    %1295 = vmatpush.msra.mxu0 %v283
    %1296 = vmatpush.msra.mxu0 %v280
    %1297 = vmatpush.msra.mxu0 %v277
    %1298 = vmatpush.msra.mxu0 %v274
    %1299 = vmatpush.msra.mxu0 %v271
    %1300 = vmatpush.msra.mxu0 %v268
    %1301 = vmatpush.msra.mxu0 %v265
    %1302 = vmatpush.msra.mxu0 %v262
    %1303 = vmatpush.msra.mxu0 %v259
    %1304 = vmatmul.f32.gmra.mxu0 %v1246
    %v1305 = vpop.f32.mrf.mxu0
    %v1306 = vadd.f32 %v1286, %v1305
    %1307 = vdwg.mxu0
    %1308 = vmatpush.msra.mxu0 %v352
    %1309 = vmatpush.msra.mxu0 %v349
    %1310 = vmatpush.msra.mxu0 %v346
    %1311 = vmatpush.msra.mxu0 %v343
    %1312 = vmatpush.msra.mxu0 %v340
    %1313 = vmatpush.msra.mxu0 %v337
    %1314 = vmatpush.msra.mxu0 %v334
    %1315 = vmatpush.msra.mxu0 %v331
    %1316 = vmatpush.msra.mxu0 %v328
    %1317 = vmatpush.msra.mxu0 %v325
    %1318 = vmatpush.msra.mxu0 %v322
    %1319 = vmatpush.msra.mxu0 %v319
    %1320 = vmatpush.msra.mxu0 %v316
    %1321 = vmatpush.msra.mxu0 %v313
    %1322 = vmatpush.msra.mxu0 %v310
    %1323 = vmatpush.msra.mxu0 %v307
    %1324 = vmatmul.f32.gmra.mxu0 %v1247
    %v1325 = vpop.f32.mrf.mxu0
    %v1326 = vadd.f32 %v1306, %v1325
    %1327 = vdwg.mxu0
    %1328 = vmatpush.msra.mxu0 %v209
    %1329 = vmatpush.msra.mxu0 %v206
    %1330 = vmatpush.msra.mxu0 %v203
    %1331 = vmatpush.msra.mxu0 %v200
    %1332 = vmatpush.msra.mxu0 %v197
    %1333 = vmatpush.msra.mxu0 %v194
    %1334 = vmatpush.msra.mxu0 %v191
    %1335 = vmatpush.msra.mxu0 %v188
    %1336 = vmatpush.msra.mxu0 %v185
    %1337 = vmatpush.msra.mxu0 %v182
    %1338 = vmatpush.msra.mxu0 %v179
    %1339 = vmatpush.msra.mxu0 %v176
    %1340 = vmatpush.msra.mxu0 %v173
    %1341 = vmatpush.msra.mxu0 %v170
    %1342 = vmatpush.msra.mxu0 %v167
    %1343 = vmatpush.msra.mxu0 %v164
    %1344 = vmatmul.f32.gmra.mxu0 %v1244
    %v1345 = vpop.f32.mrf.mxu0
    %v1346 = vadd.f32 %v358, %v1345
    %1347 = vdwg.mxu0
    %1348 = vmatpush.msra.mxu0 %v257
    %1349 = vmatpush.msra.mxu0 %v254
    %1350 = vmatpush.msra.mxu0 %v251
    %1351 = vmatpush.msra.mxu0 %v248
    %1352 = vmatpush.msra.mxu0 %v245
    %1353 = vmatpush.msra.mxu0 %v242
    %1354 = vmatpush.msra.mxu0 %v239
    %1355 = vmatpush.msra.mxu0 %v236
    %1356 = vmatpush.msra.mxu0 %v233
    %1357 = vmatpush.msra.mxu0 %v230
    %1358 = vmatpush.msra.mxu0 %v227
    %1359 = vmatpush.msra.mxu0 %v224
    %1360 = vmatpush.msra.mxu0 %v221
    %1361 = vmatpush.msra.mxu0 %v218
    %1362 = vmatpush.msra.mxu0 %v215
    %1363 = vmatpush.msra.mxu0 %v212
    %1364 = vmatmul.f32.gmra.mxu0 %v1245
    %v1365 = vpop.f32.mrf.mxu0
    %v1366 = vadd.f32 %v1346, %v1365
    %1367 = vdwg.mxu0
    %1368 = vmatpush.msra.mxu0 %v305
    %1369 = vmatpush.msra.mxu0 %v302
    %1370 = vmatpush.msra.mxu0 %v299
    %1371 = vmatpush.msra.mxu0 %v296
    %1372 = vmatpush.msra.mxu0 %v293
    %1373 = vmatpush.msra.mxu0 %v290
    %1374 = vmatpush.msra.mxu0 %v287
    %1375 = vmatpush.msra.mxu0 %v284
    %1376 = vmatpush.msra.mxu0 %v281
    %1377 = vmatpush.msra.mxu0 %v278
    %1378 = vmatpush.msra.mxu0 %v275
    %1379 = vmatpush.msra.mxu0 %v272
    %1380 = vmatpush.msra.mxu0 %v269
    %1381 = vmatpush.msra.mxu0 %v266
    %1382 = vmatpush.msra.mxu0 %v263
    %1383 = vmatpush.msra.mxu0 %v260
    %1384 = vmatmul.f32.gmra.mxu0 %v1246
    %v1385 = vpop.f32.mrf.mxu0
    %v1386 = vadd.f32 %v1366, %v1385
    %1387 = vdwg.mxu0
    %1388 = vmatpush.msra.mxu0 %v353
    %1389 = vmatpush.msra.mxu0 %v350
    %1390 = vmatpush.msra.mxu0 %v347
    %1391 = vmatpush.msra.mxu0 %v344
    %1392 = vmatpush.msra.mxu0 %v341
    %1393 = vmatpush.msra.mxu0 %v338
    %1394 = vmatpush.msra.mxu0 %v335
    %1395 = vmatpush.msra.mxu0 %v332
    %1396 = vmatpush.msra.mxu0 %v329
    %1397 = vmatpush.msra.mxu0 %v326
    %1398 = vmatpush.msra.mxu0 %v323
    %1399 = vmatpush.msra.mxu0 %v320
    %1400 = vmatpush.msra.mxu0 %v317
    %1401 = vmatpush.msra.mxu0 %v314
    %1402 = vmatpush.msra.mxu0 %v311
    %1403 = vmatpush.msra.mxu0 %v308
    %1404 = vmatmul.f32.gmra.mxu0 %v1247
    %v1405 = vpop.f32.mrf.mxu0
    %v1406 = vadd.f32 %v1386, %v1405
    %1407 = vdwg.mxu0
    %1408 = vmatpush.msra.mxu0 %v210
    %1409 = vmatpush.msra.mxu0 %v207
    %1410 = vmatpush.msra.mxu0 %v204
    %1411 = vmatpush.msra.mxu0 %v201
    %1412 = vmatpush.msra.mxu0 %v198
    %1413 = vmatpush.msra.mxu0 %v195
    %1414 = vmatpush.msra.mxu0 %v192
    %1415 = vmatpush.msra.mxu0 %v189
    %1416 = vmatpush.msra.mxu0 %v186
    %1417 = vmatpush.msra.mxu0 %v183
    %1418 = vmatpush.msra.mxu0 %v180
    %1419 = vmatpush.msra.mxu0 %v177
    %1420 = vmatpush.msra.mxu0 %v174
    %1421 = vmatpush.msra.mxu0 %v171
    %1422 = vmatpush.msra.mxu0 %v168
    %1423 = vmatpush.msra.mxu0 %v165
    %1424 = vmatmul.f32.gmra.mxu0 %v1244
    %v1425 = vpop.f32.mrf.mxu0
    %v1426 = vadd.f32 %v359, %v1425
    %1427 = vdwg.mxu0
    %1428 = vmatpush.msra.mxu0 %v258
    %1429 = vmatpush.msra.mxu0 %v255
    %1430 = vmatpush.msra.mxu0 %v252
    %1431 = vmatpush.msra.mxu0 %v249
    %1432 = vmatpush.msra.mxu0 %v246
    %1433 = vmatpush.msra.mxu0 %v243
    %1434 = vmatpush.msra.mxu0 %v240
    %1435 = vmatpush.msra.mxu0 %v237
    %1436 = vmatpush.msra.mxu0 %v234
    %1437 = vmatpush.msra.mxu0 %v231
    %1438 = vmatpush.msra.mxu0 %v228
    %1439 = vmatpush.msra.mxu0 %v225
    %1440 = vmatpush.msra.mxu0 %v222
    %1441 = vmatpush.msra.mxu0 %v219
    %1442 = vmatpush.msra.mxu0 %v216
    %1443 = vmatpush.msra.mxu0 %v213
    %1444 = vmatmul.f32.gmra.mxu0 %v1245
    %v1445 = vpop.f32.mrf.mxu0
    %v1446 = vadd.f32 %v1426, %v1445
    %1447 = vdwg.mxu0
    %1448 = vmatpush.msra.mxu0 %v306
    %1449 = vmatpush.msra.mxu0 %v303
    %1450 = vmatpush.msra.mxu0 %v300
    %1451 = vmatpush.msra.mxu0 %v297
    %1452 = vmatpush.msra.mxu0 %v294
    %1453 = vmatpush.msra.mxu0 %v291
    %1454 = vmatpush.msra.mxu0 %v288
    %1455 = vmatpush.msra.mxu0 %v285
    %1456 = vmatpush.msra.mxu0 %v282
    %1457 = vmatpush.msra.mxu0 %v279
    %1458 = vmatpush.msra.mxu0 %v276
    %1459 = vmatpush.msra.mxu0 %v273
    %1460 = vmatpush.msra.mxu0 %v270
    %1461 = vmatpush.msra.mxu0 %v267
    %1462 = vmatpush.msra.mxu0 %v264
    %1463 = vmatpush.msra.mxu0 %v261
    %1464 = vmatmul.f32.gmra.mxu0 %v1246
    %v1465 = vpop.f32.mrf.mxu0
    %v1466 = vadd.f32 %v1446, %v1465
    %1467 = vdwg.mxu0
    %1468 = vmatpush.msra.mxu0 %v354
    %1469 = vmatpush.msra.mxu0 %v351
    %1470 = vmatpush.msra.mxu0 %v348
    %1471 = vmatpush.msra.mxu0 %v345
    %1472 = vmatpush.msra.mxu0 %v342
    %1473 = vmatpush.msra.mxu0 %v339
    %1474 = vmatpush.msra.mxu0 %v336
    %1475 = vmatpush.msra.mxu0 %v333
    %1476 = vmatpush.msra.mxu0 %v330
    %1477 = vmatpush.msra.mxu0 %v327
    %1478 = vmatpush.msra.mxu0 %v324
    %1479 = vmatpush.msra.mxu0 %v321
    %1480 = vmatpush.msra.mxu0 %v318
    %1481 = vmatpush.msra.mxu0 %v315
    %1482 = vmatpush.msra.mxu0 %v312
    %1483 = vmatpush.msra.mxu0 %v309
    %1484 = vmatmul.f32.gmra.mxu0 %v1247
    %v1485 = vpop.f32.mrf.mxu0
    %v1486 = vadd.f32 %v1466, %v1485
    %1487 = vdwg.mxu0
    %v1488 = vtanh.pop %v1326
    %v1489 = vtanh.pop %v1406
    %v1490 = vtanh.pop %v1486
    %1491 = vmatpush.msra.mxu0 %v621
    %1492 = vmatpush.msra.mxu0 %v620
    %1493 = vmatpush.msra.mxu0 %v619
    %1494 = vmatpush.msra.mxu0 %v618
    %1495 = vmatpush.msra.mxu0 %v617
    %1496 = vmatpush.msra.mxu0 %v616
    %1497 = vmatpush.msra.mxu0 %v615
    %1498 = vmatpush.msra.mxu0 %v614
    %1499 = vmatpush.msra.mxu0 %v613
    %1500 = vmatpush.msra.mxu0 %v612
    %1501 = vmatpush.msra.mxu0 %v611
    %1502 = vmatpush.msra.mxu0 %v610
    %1503 = vmatpush.msra.mxu0 %v609
    %1504 = vmatpush.msra.mxu0 %v608
    %1505 = vmatpush.msra.mxu0 %v607
    %1506 = vmatpush.msra.mxu0 %v606
    %1507 = vmatmul.f32.gmra.mxu0 %v1488
    %v1508 = vpop.f32.mrf.mxu0
    %v1509 = vadd.f32 %v656, %v1508
    %1510 = vdwg.mxu0
    %1511 = vmatpush.msra.mxu0 %v637
    %1512 = vmatpush.msra.mxu0 %v636
    %1513 = vmatpush.msra.mxu0 %v635
    %1514 = vmatpush.msra.mxu0 %v634
    %1515 = vmatpush.msra.mxu0 %v633
    %1516 = vmatpush.msra.mxu0 %v632
    %1517 = vmatpush.msra.mxu0 %v631
    %1518 = vmatpush.msra.mxu0 %v630
    %1519 = vmatpush.msra.mxu0 %v629
    %1520 = vmatpush.msra.mxu0 %v628
    %1521 = vmatpush.msra.mxu0 %v627
    %1522 = vmatpush.msra.mxu0 %v626
    %1523 = vmatpush.msra.mxu0 %v625
    %1524 = vmatpush.msra.mxu0 %v624
    %1525 = vmatpush.msra.mxu0 %v623
    %1526 = vmatpush.msra.mxu0 %v622
    %1527 = vmatmul.f32.gmra.mxu0 %v1489
    %v1528 = vpop.f32.mrf.mxu0
    %v1529 = vadd.f32 %v1509, %v1528
    %1530 = vdwg.mxu0
    %1531 = vmatpush.msra.mxu0 %v653
    %1532 = vmatpush.msra.mxu0 %v652
    %1533 = vmatpush.msra.mxu0 %v651
    %1534 = vmatpush.msra.mxu0 %v650
    %1535 = vmatpush.msra.mxu0 %v649
    %1536 = vmatpush.msra.mxu0 %v648
    %1537 = vmatpush.msra.mxu0 %v647
    %1538 = vmatpush.msra.mxu0 %v646
    %1539 = vmatpush.msra.mxu0 %v645
    %1540 = vmatpush.msra.mxu0 %v644
    %1541 = vmatpush.msra.mxu0 %v643
    %1542 = vmatpush.msra.mxu0 %v642
    %1543 = vmatpush.msra.mxu0 %v641
    %1544 = vmatpush.msra.mxu0 %v640
    %1545 = vmatpush.msra.mxu0 %v639
    %1546 = vmatpush.msra.mxu0 %v638
    %1547 = vmatmul.f32.gmra.mxu0 %v1490
    %v1548 = vpop.f32.mrf.mxu0
    %v1549 = vadd.f32 %v1529, %v1548
    %1550 = vdwg.mxu0
    %s1551 = scalar_lea.vmem [#allocation6], 768
    %v1552 = vld [vmem:[%s1551] sm:$0xff]
    %v1553 = vld [vmem:[%s1551 + $0x8] sm:$0xff]
    %v1554 = vld [vmem:[%s1551 + $0x10] sm:$0xff]
    %v1555 = vld [vmem:[%s1551 + $0x18] sm:$0xff]
    %v1556 = vld [vmem:[%s1551 + $0x20] sm:$0xff]
    %v1557 = vld [vmem:[%s1551 + $0x28] sm:$0xff]
    %v1558 = vld [vmem:[%s1551 + $0x30] sm:$0xff]
    %v1559 = vld [vmem:[%s1551 + $0x38] sm:$0xff]
    %v1560 = vld [vmem:[%s1551 + $0x40] sm:$0xff]
    %v1561 = vld [vmem:[%s1551 + $0x48] sm:$0xff]
    %v1562 = vld [vmem:[%s1551 + $0x50] sm:$0xff]
    %v1563 = vld [vmem:[%s1551 + $0x58] sm:$0xff]
    %v1564 = vld [vmem:[%s1551 + $0x60] sm:$0xff]
    %v1565 = vld [vmem:[%s1551 + $0x68] sm:$0xff]
    %v1566 = vld [vmem:[%s1551 + $0x70] sm:$0xff]
    %v1567 = vld [vmem:[%s1551 + $0x78] sm:$0xff]
    %v1568 = vld [vmem:[%s1551 + $0x80] sm:$0xff]
    %v1569 = vld [vmem:[%s1551 + $0x88] sm:$0xff]
    %v1570 = vld [vmem:[%s1551 + $0x90] sm:$0xff]
    %v1571 = vld [vmem:[%s1551 + $0x98] sm:$0xff]
    %v1572 = vld [vmem:[%s1551 + $0xa0] sm:$0xff]
    %v1573 = vld [vmem:[%s1551 + $0xa8] sm:$0xff]
    %v1574 = vld [vmem:[%s1551 + $0xb0] sm:$0xff]
    %v1575 = vld [vmem:[%s1551 + $0xb8] sm:$0xff]
    %v1576 = vld [vmem:[%s1551 + $0xc0] sm:$0xff]
    %v1577 = vld [vmem:[%s1551 + $0xc8] sm:$0xff]
    %v1578 = vld [vmem:[%s1551 + $0xd0] sm:$0xff]
    %v1579 = vld [vmem:[%s1551 + $0xd8] sm:$0xff]
    %v1580 = vld [vmem:[%s1551 + $0xe0] sm:$0xff]
    %v1581 = vld [vmem:[%s1551 + $0xe8] sm:$0xff]
    %v1582 = vld [vmem:[%s1551 + $0xf0] sm:$0xff]
    %v1583 = vld [vmem:[%s1551 + $0xf8] sm:$0xff]
    %v1584 = vld [vmem:[%s1551 + $0x100] sm:$0xff]
    %v1585 = vld [vmem:[%s1551 + $0x108] sm:$0xff]
    %v1586 = vld [vmem:[%s1551 + $0x110] sm:$0xff]
    %v1587 = vld [vmem:[%s1551 + $0x118] sm:$0xff]
    %v1588 = vld [vmem:[%s1551 + $0x120] sm:$0xff]
    %v1589 = vld [vmem:[%s1551 + $0x128] sm:$0xff]
    %v1590 = vld [vmem:[%s1551 + $0x130] sm:$0xff]
    %v1591 = vld [vmem:[%s1551 + $0x138] sm:$0xff]
    %v1592 = vld [vmem:[%s1551 + $0x140] sm:$0xff]
    %v1593 = vld [vmem:[%s1551 + $0x148] sm:$0xff]
    %v1594 = vld [vmem:[%s1551 + $0x150] sm:$0xff]
    %v1595 = vld [vmem:[%s1551 + $0x158] sm:$0xff]
    %v1596 = vld [vmem:[%s1551 + $0x160] sm:$0xff]
    %v1597 = vld [vmem:[%s1551 + $0x168] sm:$0xff]
    %v1598 = vld [vmem:[%s1551 + $0x170] sm:$0xff]
    %v1599 = vld [vmem:[%s1551 + $0x178] sm:$0xff]
    %1600 = vmatpush.msra.mxu0 %v1597
    %1601 = vmatpush.msra.mxu0 %v1594
    %1602 = vmatpush.msra.mxu0 %v1591
    %1603 = vmatpush.msra.mxu0 %v1588
    %1604 = vmatpush.msra.mxu0 %v1585
    %1605 = vmatpush.msra.mxu0 %v1582
    %1606 = vmatpush.msra.mxu0 %v1579
    %1607 = vmatpush.msra.mxu0 %v1576
    %1608 = vmatpush.msra.mxu0 %v1573
    %1609 = vmatpush.msra.mxu0 %v1570
    %1610 = vmatpush.msra.mxu0 %v1567
    %1611 = vmatpush.msra.mxu0 %v1564
    %1612 = vmatpush.msra.mxu0 %v1561
    %1613 = vmatpush.msra.mxu0 %v1558
    %1614 = vmatpush.msra.mxu0 %v1555
    %1615 = vmatpush.msra.mxu0 %v1552
    %1616 = vmatmul.f32.gmra.mxu0 %v1549
    %v1617 = vpop.f32.mrf.mxu0
    %v1618 = vadd.f32 0.0, %v1617
    %1619 = vdwg.mxu0
    %1620 = vmatpush.msra.mxu0 %v1598
    %1621 = vmatpush.msra.mxu0 %v1595
    %1622 = vmatpush.msra.mxu0 %v1592
    %1623 = vmatpush.msra.mxu0 %v1589
    %1624 = vmatpush.msra.mxu0 %v1586
    %1625 = vmatpush.msra.mxu0 %v1583
    %1626 = vmatpush.msra.mxu0 %v1580
    %1627 = vmatpush.msra.mxu0 %v1577
    %1628 = vmatpush.msra.mxu0 %v1574
    %1629 = vmatpush.msra.mxu0 %v1571
    %1630 = vmatpush.msra.mxu0 %v1568
    %1631 = vmatpush.msra.mxu0 %v1565
    %1632 = vmatpush.msra.mxu0 %v1562
    %1633 = vmatpush.msra.mxu0 %v1559
    %1634 = vmatpush.msra.mxu0 %v1556
    %1635 = vmatpush.msra.mxu0 %v1553
    %1636 = vmatmul.f32.gmra.mxu0 %v1549
    %v1637 = vpop.f32.mrf.mxu0
    %v1638 = vadd.f32 0.0, %v1637
    %1639 = vdwg.mxu0
    %1640 = vmatpush.msra.mxu0 %v1599
    %1641 = vmatpush.msra.mxu0 %v1596
    %1642 = vmatpush.msra.mxu0 %v1593
    %1643 = vmatpush.msra.mxu0 %v1590
    %1644 = vmatpush.msra.mxu0 %v1587
    %1645 = vmatpush.msra.mxu0 %v1584
    %1646 = vmatpush.msra.mxu0 %v1581
    %1647 = vmatpush.msra.mxu0 %v1578
    %1648 = vmatpush.msra.mxu0 %v1575
    %1649 = vmatpush.msra.mxu0 %v1572
    %1650 = vmatpush.msra.mxu0 %v1569
    %1651 = vmatpush.msra.mxu0 %v1566
    %1652 = vmatpush.msra.mxu0 %v1563
    %1653 = vmatpush.msra.mxu0 %v1560
    %1654 = vmatpush.msra.mxu0 %v1557
    %1655 = vmatpush.msra.mxu0 %v1554
    %1656 = vmatmul.f32.gmra.mxu0 %v1549
    %v1657 = vpop.f32.mrf.mxu0
    %v1658 = vadd.f32 0.0, %v1657
    %1659 = vdwg.mxu0
    %v1660 = vadd.f32 %v1201, %v1618
    %v1661 = vadd.f32 %v1221, %v1638
    %v1662 = vadd.f32 %v1241, %v1658
    %s1663 = scalar_lea.vmem %s0, 96
    %v1664 = vld [vmem:[%s1663] sm:$0xff]
    %v1665 = vld [vmem:[%s1663 + $0x8] sm:$0xff]
    %v1666 = vld [vmem:[%s1663 + $0x10] sm:$0xff]
    %v1667 = vld [vmem:[%s1663 + $0x18] sm:$0xff]
    %1668 = vmatpush.msra.mxu0 %v208
    %1669 = vmatpush.msra.mxu0 %v205
    %1670 = vmatpush.msra.mxu0 %v202
    %1671 = vmatpush.msra.mxu0 %v199
    %1672 = vmatpush.msra.mxu0 %v196
    %1673 = vmatpush.msra.mxu0 %v193
    %1674 = vmatpush.msra.mxu0 %v190
    %1675 = vmatpush.msra.mxu0 %v187
    %1676 = vmatpush.msra.mxu0 %v184
    %1677 = vmatpush.msra.mxu0 %v181
    %1678 = vmatpush.msra.mxu0 %v178
    %1679 = vmatpush.msra.mxu0 %v175
    %1680 = vmatpush.msra.mxu0 %v172
    %1681 = vmatpush.msra.mxu0 %v169
    %1682 = vmatpush.msra.mxu0 %v166
    %1683 = vmatpush.msra.mxu0 %v163
    %1684 = vmatmul.f32.gmra.mxu0 %v1664
    %v1685 = vpop.f32.mrf.mxu0
    %v1686 = vadd.f32 %v357, %v1685
    %1687 = vdwg.mxu0
    %1688 = vmatpush.msra.mxu0 %v256
    %1689 = vmatpush.msra.mxu0 %v253
    %1690 = vmatpush.msra.mxu0 %v250
    %1691 = vmatpush.msra.mxu0 %v247
    %1692 = vmatpush.msra.mxu0 %v244
    %1693 = vmatpush.msra.mxu0 %v241
    %1694 = vmatpush.msra.mxu0 %v238
    %1695 = vmatpush.msra.mxu0 %v235
    %1696 = vmatpush.msra.mxu0 %v232
    %1697 = vmatpush.msra.mxu0 %v229
    %1698 = vmatpush.msra.mxu0 %v226
    %1699 = vmatpush.msra.mxu0 %v223
    %1700 = vmatpush.msra.mxu0 %v220
    %1701 = vmatpush.msra.mxu0 %v217
    %1702 = vmatpush.msra.mxu0 %v214
    %1703 = vmatpush.msra.mxu0 %v211
    %1704 = vmatmul.f32.gmra.mxu0 %v1665
    %v1705 = vpop.f32.mrf.mxu0
    %v1706 = vadd.f32 %v1686, %v1705
    %1707 = vdwg.mxu0
    %1708 = vmatpush.msra.mxu0 %v304
    %1709 = vmatpush.msra.mxu0 %v301
    %1710 = vmatpush.msra.mxu0 %v298
    %1711 = vmatpush.msra.mxu0 %v295
    %1712 = vmatpush.msra.mxu0 %v292
    %1713 = vmatpush.msra.mxu0 %v289
    %1714 = vmatpush.msra.mxu0 %v286
    %1715 = vmatpush.msra.mxu0 %v283
    %1716 = vmatpush.msra.mxu0 %v280
    %1717 = vmatpush.msra.mxu0 %v277
    %1718 = vmatpush.msra.mxu0 %v274
    %1719 = vmatpush.msra.mxu0 %v271
    %1720 = vmatpush.msra.mxu0 %v268
    %1721 = vmatpush.msra.mxu0 %v265
    %1722 = vmatpush.msra.mxu0 %v262
    %1723 = vmatpush.msra.mxu0 %v259
    %1724 = vmatmul.f32.gmra.mxu0 %v1666
    %v1725 = vpop.f32.mrf.mxu0
    %v1726 = vadd.f32 %v1706, %v1725
    %1727 = vdwg.mxu0
    %1728 = vmatpush.msra.mxu0 %v352
    %1729 = vmatpush.msra.mxu0 %v349
    %1730 = vmatpush.msra.mxu0 %v346
    %1731 = vmatpush.msra.mxu0 %v343
    %1732 = vmatpush.msra.mxu0 %v340
    %1733 = vmatpush.msra.mxu0 %v337
    %1734 = vmatpush.msra.mxu0 %v334
    %1735 = vmatpush.msra.mxu0 %v331
    %1736 = vmatpush.msra.mxu0 %v328
    %1737 = vmatpush.msra.mxu0 %v325
    %1738 = vmatpush.msra.mxu0 %v322
    %1739 = vmatpush.msra.mxu0 %v319
    %1740 = vmatpush.msra.mxu0 %v316
    %1741 = vmatpush.msra.mxu0 %v313
    %1742 = vmatpush.msra.mxu0 %v310
    %1743 = vmatpush.msra.mxu0 %v307
    %1744 = vmatmul.f32.gmra.mxu0 %v1667
    %v1745 = vpop.f32.mrf.mxu0
    %v1746 = vadd.f32 %v1726, %v1745
    %1747 = vdwg.mxu0
    %1748 = vmatpush.msra.mxu0 %v209
    %1749 = vmatpush.msra.mxu0 %v206
    %1750 = vmatpush.msra.mxu0 %v203
    %1751 = vmatpush.msra.mxu0 %v200
    %1752 = vmatpush.msra.mxu0 %v197
    %1753 = vmatpush.msra.mxu0 %v194
    %1754 = vmatpush.msra.mxu0 %v191
    %1755 = vmatpush.msra.mxu0 %v188
    %1756 = vmatpush.msra.mxu0 %v185
    %1757 = vmatpush.msra.mxu0 %v182
    %1758 = vmatpush.msra.mxu0 %v179
    %1759 = vmatpush.msra.mxu0 %v176
    %1760 = vmatpush.msra.mxu0 %v173
    %1761 = vmatpush.msra.mxu0 %v170
    %1762 = vmatpush.msra.mxu0 %v167
    %1763 = vmatpush.msra.mxu0 %v164
    %1764 = vmatmul.f32.gmra.mxu0 %v1664
    %v1765 = vpop.f32.mrf.mxu0
    %v1766 = vadd.f32 %v358, %v1765
    %1767 = vdwg.mxu0
    %1768 = vmatpush.msra.mxu0 %v257
    %1769 = vmatpush.msra.mxu0 %v254
    %1770 = vmatpush.msra.mxu0 %v251
    %1771 = vmatpush.msra.mxu0 %v248
    %1772 = vmatpush.msra.mxu0 %v245
    %1773 = vmatpush.msra.mxu0 %v242
    %1774 = vmatpush.msra.mxu0 %v239
    %1775 = vmatpush.msra.mxu0 %v236
    %1776 = vmatpush.msra.mxu0 %v233
    %1777 = vmatpush.msra.mxu0 %v230
    %1778 = vmatpush.msra.mxu0 %v227
    %1779 = vmatpush.msra.mxu0 %v224
    %1780 = vmatpush.msra.mxu0 %v221
    %1781 = vmatpush.msra.mxu0 %v218
    %1782 = vmatpush.msra.mxu0 %v215
    %1783 = vmatpush.msra.mxu0 %v212
    %1784 = vmatmul.f32.gmra.mxu0 %v1665
    %v1785 = vpop.f32.mrf.mxu0
    %v1786 = vadd.f32 %v1766, %v1785
    %1787 = vdwg.mxu0
    %1788 = vmatpush.msra.mxu0 %v305
    %1789 = vmatpush.msra.mxu0 %v302
    %1790 = vmatpush.msra.mxu0 %v299
    %1791 = vmatpush.msra.mxu0 %v296
    %1792 = vmatpush.msra.mxu0 %v293
    %1793 = vmatpush.msra.mxu0 %v290
    %1794 = vmatpush.msra.mxu0 %v287
    %1795 = vmatpush.msra.mxu0 %v284
    %1796 = vmatpush.msra.mxu0 %v281
    %1797 = vmatpush.msra.mxu0 %v278
    %1798 = vmatpush.msra.mxu0 %v275
    %1799 = vmatpush.msra.mxu0 %v272
    %1800 = vmatpush.msra.mxu0 %v269
    %1801 = vmatpush.msra.mxu0 %v266
    %1802 = vmatpush.msra.mxu0 %v263
    %1803 = vmatpush.msra.mxu0 %v260
    %1804 = vmatmul.f32.gmra.mxu0 %v1666
    %v1805 = vpop.f32.mrf.mxu0
    %v1806 = vadd.f32 %v1786, %v1805
    %1807 = vdwg.mxu0
    %1808 = vmatpush.msra.mxu0 %v353
    %1809 = vmatpush.msra.mxu0 %v350
    %1810 = vmatpush.msra.mxu0 %v347
    %1811 = vmatpush.msra.mxu0 %v344
    %1812 = vmatpush.msra.mxu0 %v341
    %1813 = vmatpush.msra.mxu0 %v338
    %1814 = vmatpush.msra.mxu0 %v335
    %1815 = vmatpush.msra.mxu0 %v332
    %1816 = vmatpush.msra.mxu0 %v329
    %1817 = vmatpush.msra.mxu0 %v326
    %1818 = vmatpush.msra.mxu0 %v323
    %1819 = vmatpush.msra.mxu0 %v320
    %1820 = vmatpush.msra.mxu0 %v317
    %1821 = vmatpush.msra.mxu0 %v314
    %1822 = vmatpush.msra.mxu0 %v311
    %1823 = vmatpush.msra.mxu0 %v308
    %1824 = vmatmul.f32.gmra.mxu0 %v1667
    %v1825 = vpop.f32.mrf.mxu0
    %v1826 = vadd.f32 %v1806, %v1825
    %1827 = vdwg.mxu0
    %1828 = vmatpush.msra.mxu0 %v210
    %1829 = vmatpush.msra.mxu0 %v207
    %1830 = vmatpush.msra.mxu0 %v204
    %1831 = vmatpush.msra.mxu0 %v201
    %1832 = vmatpush.msra.mxu0 %v198
    %1833 = vmatpush.msra.mxu0 %v195
    %1834 = vmatpush.msra.mxu0 %v192
    %1835 = vmatpush.msra.mxu0 %v189
    %1836 = vmatpush.msra.mxu0 %v186
    %1837 = vmatpush.msra.mxu0 %v183
    %1838 = vmatpush.msra.mxu0 %v180
    %1839 = vmatpush.msra.mxu0 %v177
    %1840 = vmatpush.msra.mxu0 %v174
    %1841 = vmatpush.msra.mxu0 %v171
    %1842 = vmatpush.msra.mxu0 %v168
    %1843 = vmatpush.msra.mxu0 %v165
    %1844 = vmatmul.f32.gmra.mxu0 %v1664
    %v1845 = vpop.f32.mrf.mxu0
    %v1846 = vadd.f32 %v359, %v1845
    %1847 = vdwg.mxu0
    %1848 = vmatpush.msra.mxu0 %v258
    %1849 = vmatpush.msra.mxu0 %v255
    %1850 = vmatpush.msra.mxu0 %v252
    %1851 = vmatpush.msra.mxu0 %v249
    %1852 = vmatpush.msra.mxu0 %v246
    %1853 = vmatpush.msra.mxu0 %v243
    %1854 = vmatpush.msra.mxu0 %v240
    %1855 = vmatpush.msra.mxu0 %v237
    %1856 = vmatpush.msra.mxu0 %v234
    %1857 = vmatpush.msra.mxu0 %v231
    %1858 = vmatpush.msra.mxu0 %v228
    %1859 = vmatpush.msra.mxu0 %v225
    %1860 = vmatpush.msra.mxu0 %v222
    %1861 = vmatpush.msra.mxu0 %v219
    %1862 = vmatpush.msra.mxu0 %v216
    %1863 = vmatpush.msra.mxu0 %v213
    %1864 = vmatmul.f32.gmra.mxu0 %v1665
    %v1865 = vpop.f32.mrf.mxu0
    %v1866 = vadd.f32 %v1846, %v1865
    %1867 = vdwg.mxu0
    %1868 = vmatpush.msra.mxu0 %v306
    %1869 = vmatpush.msra.mxu0 %v303
    %1870 = vmatpush.msra.mxu0 %v300
    %1871 = vmatpush.msra.mxu0 %v297
    %1872 = vmatpush.msra.mxu0 %v294
    %1873 = vmatpush.msra.mxu0 %v291
    %1874 = vmatpush.msra.mxu0 %v288
    %1875 = vmatpush.msra.mxu0 %v285
    %1876 = vmatpush.msra.mxu0 %v282
    %1877 = vmatpush.msra.mxu0 %v279
    %1878 = vmatpush.msra.mxu0 %v276
    %1879 = vmatpush.msra.mxu0 %v273
    %1880 = vmatpush.msra.mxu0 %v270
    %1881 = vmatpush.msra.mxu0 %v267
    %1882 = vmatpush.msra.mxu0 %v264
    %1883 = vmatpush.msra.mxu0 %v261
    %1884 = vmatmul.f32.gmra.mxu0 %v1666
    %v1885 = vpop.f32.mrf.mxu0
    %v1886 = vadd.f32 %v1866, %v1885
    %1887 = vdwg.mxu0
    %1888 = vmatpush.msra.mxu0 %v354
    %1889 = vmatpush.msra.mxu0 %v351
    %1890 = vmatpush.msra.mxu0 %v348
    %1891 = vmatpush.msra.mxu0 %v345
    %1892 = vmatpush.msra.mxu0 %v342
    %1893 = vmatpush.msra.mxu0 %v339
    %1894 = vmatpush.msra.mxu0 %v336
    %1895 = vmatpush.msra.mxu0 %v333
    %1896 = vmatpush.msra.mxu0 %v330
    %1897 = vmatpush.msra.mxu0 %v327
    %1898 = vmatpush.msra.mxu0 %v324
    %1899 = vmatpush.msra.mxu0 %v321
    %1900 = vmatpush.msra.mxu0 %v318
    %1901 = vmatpush.msra.mxu0 %v315
    %1902 = vmatpush.msra.mxu0 %v312
    %1903 = vmatpush.msra.mxu0 %v309
    %1904 = vmatmul.f32.gmra.mxu0 %v1667
    %v1905 = vpop.f32.mrf.mxu0
    %v1906 = vadd.f32 %v1886, %v1905
    %1907 = vdwg.mxu0
    %v1908 = vtanh.pop %v1746
    %v1909 = vtanh.pop %v1826
    %v1910 = vtanh.pop %v1906
    %1911 = vmatpush.msra.mxu0 %v621
    %1912 = vmatpush.msra.mxu0 %v620
    %1913 = vmatpush.msra.mxu0 %v619
    %1914 = vmatpush.msra.mxu0 %v618
    %1915 = vmatpush.msra.mxu0 %v617
    %1916 = vmatpush.msra.mxu0 %v616
    %1917 = vmatpush.msra.mxu0 %v615
    %1918 = vmatpush.msra.mxu0 %v614
    %1919 = vmatpush.msra.mxu0 %v613
    %1920 = vmatpush.msra.mxu0 %v612
    %1921 = vmatpush.msra.mxu0 %v611
    %1922 = vmatpush.msra.mxu0 %v610
    %1923 = vmatpush.msra.mxu0 %v609
    %1924 = vmatpush.msra.mxu0 %v608
    %1925 = vmatpush.msra.mxu0 %v607
    %1926 = vmatpush.msra.mxu0 %v606
    %1927 = vmatmul.f32.gmra.mxu0 %v1908
    %v1928 = vpop.f32.mrf.mxu0
    %v1929 = vadd.f32 %v656, %v1928
    %1930 = vdwg.mxu0
    %1931 = vmatpush.msra.mxu0 %v637
    %1932 = vmatpush.msra.mxu0 %v636
    %1933 = vmatpush.msra.mxu0 %v635
    %1934 = vmatpush.msra.mxu0 %v634
    %1935 = vmatpush.msra.mxu0 %v633
    %1936 = vmatpush.msra.mxu0 %v632
    %1937 = vmatpush.msra.mxu0 %v631
    %1938 = vmatpush.msra.mxu0 %v630
    %1939 = vmatpush.msra.mxu0 %v629
    %1940 = vmatpush.msra.mxu0 %v628
    %1941 = vmatpush.msra.mxu0 %v627
    %1942 = vmatpush.msra.mxu0 %v626
    %1943 = vmatpush.msra.mxu0 %v625
    %1944 = vmatpush.msra.mxu0 %v624
    %1945 = vmatpush.msra.mxu0 %v623
    %1946 = vmatpush.msra.mxu0 %v622
    %1947 = vmatmul.f32.gmra.mxu0 %v1909
    %v1948 = vpop.f32.mrf.mxu0
    %v1949 = vadd.f32 %v1929, %v1948
    %1950 = vdwg.mxu0
    %1951 = vmatpush.msra.mxu0 %v653
    %1952 = vmatpush.msra.mxu0 %v652
    %1953 = vmatpush.msra.mxu0 %v651
    %1954 = vmatpush.msra.mxu0 %v650
    %1955 = vmatpush.msra.mxu0 %v649
    %1956 = vmatpush.msra.mxu0 %v648
    %1957 = vmatpush.msra.mxu0 %v647
    %1958 = vmatpush.msra.mxu0 %v646
    %1959 = vmatpush.msra.mxu0 %v645
    %1960 = vmatpush.msra.mxu0 %v644
    %1961 = vmatpush.msra.mxu0 %v643
    %1962 = vmatpush.msra.mxu0 %v642
    %1963 = vmatpush.msra.mxu0 %v641
    %1964 = vmatpush.msra.mxu0 %v640
    %1965 = vmatpush.msra.mxu0 %v639
    %1966 = vmatpush.msra.mxu0 %v638
    %1967 = vmatmul.f32.gmra.mxu0 %v1910
    %v1968 = vpop.f32.mrf.mxu0
    %v1969 = vadd.f32 %v1949, %v1968
    %1970 = vdwg.mxu0
    %s1971 = scalar_lea.vmem [#allocation6], 1152
    %v1972 = vld [vmem:[%s1971] sm:$0xff]
    %v1973 = vld [vmem:[%s1971 + $0x8] sm:$0xff]
    %v1974 = vld [vmem:[%s1971 + $0x10] sm:$0xff]
    %v1975 = vld [vmem:[%s1971 + $0x18] sm:$0xff]
    %v1976 = vld [vmem:[%s1971 + $0x20] sm:$0xff]
    %v1977 = vld [vmem:[%s1971 + $0x28] sm:$0xff]
    %v1978 = vld [vmem:[%s1971 + $0x30] sm:$0xff]
    %v1979 = vld [vmem:[%s1971 + $0x38] sm:$0xff]
    %v1980 = vld [vmem:[%s1971 + $0x40] sm:$0xff]
    %v1981 = vld [vmem:[%s1971 + $0x48] sm:$0xff]
    %v1982 = vld [vmem:[%s1971 + $0x50] sm:$0xff]
    %v1983 = vld [vmem:[%s1971 + $0x58] sm:$0xff]
    %v1984 = vld [vmem:[%s1971 + $0x60] sm:$0xff]
    %v1985 = vld [vmem:[%s1971 + $0x68] sm:$0xff]
    %v1986 = vld [vmem:[%s1971 + $0x70] sm:$0xff]
    %v1987 = vld [vmem:[%s1971 + $0x78] sm:$0xff]
    %v1988 = vld [vmem:[%s1971 + $0x80] sm:$0xff]
    %v1989 = vld [vmem:[%s1971 + $0x88] sm:$0xff]
    %v1990 = vld [vmem:[%s1971 + $0x90] sm:$0xff]
    %v1991 = vld [vmem:[%s1971 + $0x98] sm:$0xff]
    %v1992 = vld [vmem:[%s1971 + $0xa0] sm:$0xff]
    %v1993 = vld [vmem:[%s1971 + $0xa8] sm:$0xff]
    %v1994 = vld [vmem:[%s1971 + $0xb0] sm:$0xff]
    %v1995 = vld [vmem:[%s1971 + $0xb8] sm:$0xff]
    %v1996 = vld [vmem:[%s1971 + $0xc0] sm:$0xff]
    %v1997 = vld [vmem:[%s1971 + $0xc8] sm:$0xff]
    %v1998 = vld [vmem:[%s1971 + $0xd0] sm:$0xff]
    %v1999 = vld [vmem:[%s1971 + $0xd8] sm:$0xff]
    %v2000 = vld [vmem:[%s1971 + $0xe0] sm:$0xff]
    %v2001 = vld [vmem:[%s1971 + $0xe8] sm:$0xff]
    %v2002 = vld [vmem:[%s1971 + $0xf0] sm:$0xff]
    %v2003 = vld [vmem:[%s1971 + $0xf8] sm:$0xff]
    %v2004 = vld [vmem:[%s1971 + $0x100] sm:$0xff]
    %v2005 = vld [vmem:[%s1971 + $0x108] sm:$0xff]
    %v2006 = vld [vmem:[%s1971 + $0x110] sm:$0xff]
    %v2007 = vld [vmem:[%s1971 + $0x118] sm:$0xff]
    %v2008 = vld [vmem:[%s1971 + $0x120] sm:$0xff]
    %v2009 = vld [vmem:[%s1971 + $0x128] sm:$0xff]
    %v2010 = vld [vmem:[%s1971 + $0x130] sm:$0xff]
    %v2011 = vld [vmem:[%s1971 + $0x138] sm:$0xff]
    %v2012 = vld [vmem:[%s1971 + $0x140] sm:$0xff]
    %v2013 = vld [vmem:[%s1971 + $0x148] sm:$0xff]
    %v2014 = vld [vmem:[%s1971 + $0x150] sm:$0xff]
    %v2015 = vld [vmem:[%s1971 + $0x158] sm:$0xff]
    %v2016 = vld [vmem:[%s1971 + $0x160] sm:$0xff]
    %v2017 = vld [vmem:[%s1971 + $0x168] sm:$0xff]
    %v2018 = vld [vmem:[%s1971 + $0x170] sm:$0xff]
    %v2019 = vld [vmem:[%s1971 + $0x178] sm:$0xff]
    %2020 = vmatpush.msra.mxu0 %v2017
    %2021 = vmatpush.msra.mxu0 %v2014
    %2022 = vmatpush.msra.mxu0 %v2011
    %2023 = vmatpush.msra.mxu0 %v2008
    %2024 = vmatpush.msra.mxu0 %v2005
    %2025 = vmatpush.msra.mxu0 %v2002
    %2026 = vmatpush.msra.mxu0 %v1999
    %2027 = vmatpush.msra.mxu0 %v1996
    %2028 = vmatpush.msra.mxu0 %v1993
    %2029 = vmatpush.msra.mxu0 %v1990
    %2030 = vmatpush.msra.mxu0 %v1987
    %2031 = vmatpush.msra.mxu0 %v1984
    %2032 = vmatpush.msra.mxu0 %v1981
    %2033 = vmatpush.msra.mxu0 %v1978
    %2034 = vmatpush.msra.mxu0 %v1975
    %2035 = vmatpush.msra.mxu0 %v1972
    %2036 = vmatmul.f32.gmra.mxu0 %v1969
    %v2037 = vpop.f32.mrf.mxu0
    %v2038 = vadd.f32 0.0, %v2037
    %2039 = vdwg.mxu0
    %2040 = vmatpush.msra.mxu0 %v2018
    %2041 = vmatpush.msra.mxu0 %v2015
    %2042 = vmatpush.msra.mxu0 %v2012
    %2043 = vmatpush.msra.mxu0 %v2009
    %2044 = vmatpush.msra.mxu0 %v2006
    %2045 = vmatpush.msra.mxu0 %v2003
    %2046 = vmatpush.msra.mxu0 %v2000
    %2047 = vmatpush.msra.mxu0 %v1997
    %2048 = vmatpush.msra.mxu0 %v1994
    %2049 = vmatpush.msra.mxu0 %v1991
    %2050 = vmatpush.msra.mxu0 %v1988
    %2051 = vmatpush.msra.mxu0 %v1985
    %2052 = vmatpush.msra.mxu0 %v1982
    %2053 = vmatpush.msra.mxu0 %v1979
    %2054 = vmatpush.msra.mxu0 %v1976
    %2055 = vmatpush.msra.mxu0 %v1973
    %2056 = vmatmul.f32.gmra.mxu0 %v1969
    %v2057 = vpop.f32.mrf.mxu0
    %v2058 = vadd.f32 0.0, %v2057
    %2059 = vdwg.mxu0
    %2060 = vmatpush.msra.mxu0 %v2019
    %2061 = vmatpush.msra.mxu0 %v2016
    %2062 = vmatpush.msra.mxu0 %v2013
    %2063 = vmatpush.msra.mxu0 %v2010
    %2064 = vmatpush.msra.mxu0 %v2007
    %2065 = vmatpush.msra.mxu0 %v2004
    %2066 = vmatpush.msra.mxu0 %v2001
    %2067 = vmatpush.msra.mxu0 %v1998
    %2068 = vmatpush.msra.mxu0 %v1995
    %2069 = vmatpush.msra.mxu0 %v1992
    %2070 = vmatpush.msra.mxu0 %v1989
    %2071 = vmatpush.msra.mxu0 %v1986
    %2072 = vmatpush.msra.mxu0 %v1983
    %2073 = vmatpush.msra.mxu0 %v1980
    %2074 = vmatpush.msra.mxu0 %v1977
    %2075 = vmatpush.msra.mxu0 %v1974
    %2076 = vmatmul.f32.gmra.mxu0 %v1969
    %v2077 = vpop.f32.mrf.mxu0
    %v2078 = vadd.f32 0.0, %v2077
    %2079 = vdwg.mxu0
    %v2080 = vadd.f32 %v1660, %v2038
    %v2081 = vadd.f32 %v1661, %v2058
    %v2082 = vadd.f32 %v1662, %v2078
    %v2083 = vld [vmem:[#allocation7] sm:$0x7]
    %v2085 = vperm.slane %v2083, 0
    %v2086 = vperm.slane %v2083, 1
    %v2087 = vperm.slane %v2083, 2
    %v2091 = vadd.f32 %v2080, %v2085
    %v2092 = vadd.f32 %v2081, %v2086
    %v2093 = vadd.f32 %v2082, %v2087
    %v2094 = vtanh.pop %v2091
    %v2095 = vtanh.pop %v2092
    %v2096 = vtanh.pop %v2093
    %v2097 = vld [vmem:[%s7] sm:$0xff]
    %v2098 = vld [vmem:[%s7 + $0x8] sm:$0xff]
    %v2099 = vld [vmem:[%s7 + $0x10] sm:$0xff]
    %v2100 = vld [vmem:[%s7 + $0x18] sm:$0xff]
    %v2101 = vld [vmem:[%s7 + $0x20] sm:$0xff]
    %v2102 = vld [vmem:[%s7 + $0x28] sm:$0xff]
    %v2103 = vld [vmem:[%s7 + $0x30] sm:$0xff]
    %v2104 = vld [vmem:[%s7 + $0x38] sm:$0xff]
    %v2105 = vld [vmem:[%s7 + $0x40] sm:$0xff]
    %v2106 = vld [vmem:[%s7 + $0x48] sm:$0xff]
    %v2107 = vld [vmem:[%s7 + $0x50] sm:$0xff]
    %v2108 = vld [vmem:[%s7 + $0x58] sm:$0xff]
    %v2109 = vld [vmem:[%s7 + $0x60] sm:$0xff]
    %v2110 = vld [vmem:[%s7 + $0x68] sm:$0xff]
    %v2111 = vld [vmem:[%s7 + $0x70] sm:$0xff]
    %v2112 = vld [vmem:[%s7 + $0x78] sm:$0xff]
    %v2113 = vld [vmem:[%s7 + $0x80] sm:$0xff]
    %v2114 = vld [vmem:[%s7 + $0x88] sm:$0xff]
    %v2115 = vld [vmem:[%s7 + $0x90] sm:$0xff]
    %v2116 = vld [vmem:[%s7 + $0x98] sm:$0xff]
    %v2117 = vld [vmem:[%s7 + $0xa0] sm:$0xff]
    %v2118 = vld [vmem:[%s7 + $0xa8] sm:$0xff]
    %v2119 = vld [vmem:[%s7 + $0xb0] sm:$0xff]
    %v2120 = vld [vmem:[%s7 + $0xb8] sm:$0xff]
    %v2121 = vld [vmem:[%s7 + $0xc0] sm:$0xff]
    %v2122 = vld [vmem:[%s7 + $0xc8] sm:$0xff]
    %v2123 = vld [vmem:[%s7 + $0xd0] sm:$0xff]
    %v2124 = vld [vmem:[%s7 + $0xd8] sm:$0xff]
    %v2125 = vld [vmem:[%s7 + $0xe0] sm:$0xff]
    %v2126 = vld [vmem:[%s7 + $0xe8] sm:$0xff]
    %v2127 = vld [vmem:[%s7 + $0xf0] sm:$0xff]
    %v2128 = vld [vmem:[%s7 + $0xf8] sm:$0xff]
    %v2129 = vld [vmem:[%s7 + $0x100] sm:$0xff]
    %v2130 = vld [vmem:[%s7 + $0x108] sm:$0xff]
    %v2131 = vld [vmem:[%s7 + $0x110] sm:$0xff]
    %v2132 = vld [vmem:[%s7 + $0x118] sm:$0xff]
    %v2133 = vld [vmem:[%s7 + $0x120] sm:$0xff]
    %v2134 = vld [vmem:[%s7 + $0x128] sm:$0xff]
    %v2135 = vld [vmem:[%s7 + $0x130] sm:$0xff]
    %v2136 = vld [vmem:[%s7 + $0x138] sm:$0xff]
    %v2137 = vld [vmem:[%s7 + $0x140] sm:$0xff]
    %v2138 = vld [vmem:[%s7 + $0x148] sm:$0xff]
    %v2139 = vld [vmem:[%s7 + $0x150] sm:$0xff]
    %v2140 = vld [vmem:[%s7 + $0x158] sm:$0xff]
    %v2141 = vld [vmem:[%s7 + $0x160] sm:$0xff]
    %v2142 = vld [vmem:[%s7 + $0x168] sm:$0xff]
    %v2143 = vld [vmem:[%s7 + $0x170] sm:$0xff]
    %v2144 = vld [vmem:[%s7 + $0x178] sm:$0xff]
    %v2145 = vld [vmem:[#allocation9] sm:$0x1]
    %v2147 = vperm.slane %v2145, 0
    %2149 = vmatpush.msra.mxu0 %v2112
    %2150 = vmatpush.msra.mxu0 %v2111
    %2151 = vmatpush.msra.mxu0 %v2110
    %2152 = vmatpush.msra.mxu0 %v2109
    %2153 = vmatpush.msra.mxu0 %v2108
    %2154 = vmatpush.msra.mxu0 %v2107
    %2155 = vmatpush.msra.mxu0 %v2106
    %2156 = vmatpush.msra.mxu0 %v2105
    %2157 = vmatpush.msra.mxu0 %v2104
    %2158 = vmatpush.msra.mxu0 %v2103
    %2159 = vmatpush.msra.mxu0 %v2102
    %2160 = vmatpush.msra.mxu0 %v2101
    %2161 = vmatpush.msra.mxu0 %v2100
    %2162 = vmatpush.msra.mxu0 %v2099
    %2163 = vmatpush.msra.mxu0 %v2098
    %2164 = vmatpush.msra.mxu0 %v2097
    %2165 = vmatmul.f32.gmra.mxu0 %v2094
    %v2166 = vpop.f32.mrf.mxu0
    %v2167 = vadd.f32 %v2147, %v2166
    %2168 = vdwg.mxu0
    %2169 = vmatpush.msra.mxu0 %v2128
    %2170 = vmatpush.msra.mxu0 %v2127
    %2171 = vmatpush.msra.mxu0 %v2126
    %2172 = vmatpush.msra.mxu0 %v2125
    %2173 = vmatpush.msra.mxu0 %v2124
    %2174 = vmatpush.msra.mxu0 %v2123
    %2175 = vmatpush.msra.mxu0 %v2122
    %2176 = vmatpush.msra.mxu0 %v2121
    %2177 = vmatpush.msra.mxu0 %v2120
    %2178 = vmatpush.msra.mxu0 %v2119
    %2179 = vmatpush.msra.mxu0 %v2118
    %2180 = vmatpush.msra.mxu0 %v2117
    %2181 = vmatpush.msra.mxu0 %v2116
    %2182 = vmatpush.msra.mxu0 %v2115
    %2183 = vmatpush.msra.mxu0 %v2114
    %2184 = vmatpush.msra.mxu0 %v2113
    %2185 = vmatmul.f32.gmra.mxu0 %v2095
    %v2186 = vpop.f32.mrf.mxu0
    %v2187 = vadd.f32 %v2167, %v2186
    %2188 = vdwg.mxu0
    %2189 = vmatpush.msra.mxu0 %v2144
    %2190 = vmatpush.msra.mxu0 %v2143
    %2191 = vmatpush.msra.mxu0 %v2142
    %2192 = vmatpush.msra.mxu0 %v2141
    %2193 = vmatpush.msra.mxu0 %v2140
    %2194 = vmatpush.msra.mxu0 %v2139
    %2195 = vmatpush.msra.mxu0 %v2138
    %2196 = vmatpush.msra.mxu0 %v2137
    %2197 = vmatpush.msra.mxu0 %v2136
    %2198 = vmatpush.msra.mxu0 %v2135
    %2199 = vmatpush.msra.mxu0 %v2134
    %2200 = vmatpush.msra.mxu0 %v2133
    %2201 = vmatpush.msra.mxu0 %v2132
    %2202 = vmatpush.msra.mxu0 %v2131
    %2203 = vmatpush.msra.mxu0 %v2130
    %2204 = vmatpush.msra.mxu0 %v2129
    %2205 = vmatmul.f32.gmra.mxu0 %v2096
    %v2206 = vpop.f32.mrf.mxu0
    %v2207 = vadd.f32 %v2187, %v2206
    %2208 = vdwg.mxu0
    %v2209 = vld [vmem:[#allocation10] sm:$0xff]
    %v2210 = vld [vmem:[#allocation10 + $0x8] sm:$0xff]
    %v2211 = vld [vmem:[#allocation10 + $0x10] sm:$0xff]
    %v2212 = vld [vmem:[#allocation10 + $0x18] sm:$0xff]
    %v2213 = vld [vmem:[#allocation10 + $0x20] sm:$0xff]
    %v2214 = vld [vmem:[#allocation10 + $0x28] sm:$0xff]
    %v2215 = vld [vmem:[#allocation10 + $0x30] sm:$0xff]
    %v2216 = vld [vmem:[#allocation10 + $0x38] sm:$0xff]
    %v2217 = vld [vmem:[#allocation10 + $0x40] sm:$0xff]
    %v2218 = vld [vmem:[#allocation10 + $0x48] sm:$0xff]
    %v2219 = vld [vmem:[#allocation10 + $0x50] sm:$0xff]
    %v2220 = vld [vmem:[#allocation10 + $0x58] sm:$0xff]
    %v2221 = vld [vmem:[#allocation10 + $0x60] sm:$0xff]
    %v2222 = vld [vmem:[#allocation10 + $0x68] sm:$0xff]
    %v2223 = vld [vmem:[#allocation10 + $0x70] sm:$0xff]
    %v2224 = vld [vmem:[#allocation10 + $0x78] sm:$0xff]
    %v2225 = vld [vmem:[#allocation10 + $0x80] sm:$0xff]
    %v2226 = vld [vmem:[#allocation10 + $0x88] sm:$0xff]
    %v2227 = vld [vmem:[#allocation10 + $0x90] sm:$0xff]
    %v2228 = vld [vmem:[#allocation10 + $0x98] sm:$0xff]
    %v2229 = vld [vmem:[#allocation10 + $0xa0] sm:$0xff]
    %v2230 = vld [vmem:[#allocation10 + $0xa8] sm:$0xff]
    %v2231 = vld [vmem:[#allocation10 + $0xb0] sm:$0xff]
    %v2232 = vld [vmem:[#allocation10 + $0xb8] sm:$0xff]
    %v2233 = vld [vmem:[#allocation10 + $0xc0] sm:$0xff]
    %v2234 = vld [vmem:[#allocation10 + $0xc8] sm:$0xff]
    %v2235 = vld [vmem:[#allocation10 + $0xd0] sm:$0xff]
    %v2236 = vld [vmem:[#allocation10 + $0xd8] sm:$0xff]
    %v2237 = vld [vmem:[#allocation10 + $0xe0] sm:$0xff]
    %v2238 = vld [vmem:[#allocation10 + $0xe8] sm:$0xff]
    %v2239 = vld [vmem:[#allocation10 + $0xf0] sm:$0xff]
    %v2240 = vld [vmem:[#allocation10 + $0xf8] sm:$0xff]
    %v2241 = vld [vmem:[#allocation10 + $0x100] sm:$0xff]
    %v2242 = vld [vmem:[#allocation10 + $0x108] sm:$0xff]
    %v2243 = vld [vmem:[#allocation10 + $0x110] sm:$0xff]
    %v2244 = vld [vmem:[#allocation10 + $0x118] sm:$0xff]
    %v2245 = vld [vmem:[#allocation10 + $0x120] sm:$0xff]
    %v2246 = vld [vmem:[#allocation10 + $0x128] sm:$0xff]
    %v2247 = vld [vmem:[#allocation10 + $0x130] sm:$0xff]
    %v2248 = vld [vmem:[#allocation10 + $0x138] sm:$0xff]
    %v2249 = vld [vmem:[#allocation10 + $0x140] sm:$0xff]
    %v2250 = vld [vmem:[#allocation10 + $0x148] sm:$0xff]
    %v2251 = vld [vmem:[#allocation10 + $0x150] sm:$0xff]
    %v2252 = vld [vmem:[#allocation10 + $0x158] sm:$0xff]
    %v2253 = vld [vmem:[#allocation10 + $0x160] sm:$0xff]
    %v2254 = vld [vmem:[#allocation10 + $0x168] sm:$0xff]
    %v2255 = vld [vmem:[#allocation10 + $0x170] sm:$0xff]
    %v2256 = vld [vmem:[#allocation10 + $0x178] sm:$0xff]
    %s2257 = scalar_lea.vmem %s0, 128
    %v2258 = vld [vmem:[%s2257] sm:$0xff]
    %v2259 = vld [vmem:[%s2257 + $0x8] sm:$0xff]
    %v2260 = vld [vmem:[%s2257 + $0x10] sm:$0xff]
    %v2261 = vld [vmem:[%s2257 + $0x18] sm:$0xff]
    %2262 = vmatpush.msra.mxu0 %v208
    %2263 = vmatpush.msra.mxu0 %v205
    %2264 = vmatpush.msra.mxu0 %v202
    %2265 = vmatpush.msra.mxu0 %v199
    %2266 = vmatpush.msra.mxu0 %v196
    %2267 = vmatpush.msra.mxu0 %v193
    %2268 = vmatpush.msra.mxu0 %v190
    %2269 = vmatpush.msra.mxu0 %v187
    %2270 = vmatpush.msra.mxu0 %v184
    %2271 = vmatpush.msra.mxu0 %v181
    %2272 = vmatpush.msra.mxu0 %v178
    %2273 = vmatpush.msra.mxu0 %v175
    %2274 = vmatpush.msra.mxu0 %v172
    %2275 = vmatpush.msra.mxu0 %v169
    %2276 = vmatpush.msra.mxu0 %v166
    %2277 = vmatpush.msra.mxu0 %v163
    %2278 = vmatmul.f32.gmra.mxu0 %v2258
    %v2279 = vpop.f32.mrf.mxu0
    %v2280 = vadd.f32 %v357, %v2279
    %2281 = vdwg.mxu0
    %2282 = vmatpush.msra.mxu0 %v256
    %2283 = vmatpush.msra.mxu0 %v253
    %2284 = vmatpush.msra.mxu0 %v250
    %2285 = vmatpush.msra.mxu0 %v247
    %2286 = vmatpush.msra.mxu0 %v244
    %2287 = vmatpush.msra.mxu0 %v241
    %2288 = vmatpush.msra.mxu0 %v238
    %2289 = vmatpush.msra.mxu0 %v235
    %2290 = vmatpush.msra.mxu0 %v232
    %2291 = vmatpush.msra.mxu0 %v229
    %2292 = vmatpush.msra.mxu0 %v226
    %2293 = vmatpush.msra.mxu0 %v223
    %2294 = vmatpush.msra.mxu0 %v220
    %2295 = vmatpush.msra.mxu0 %v217
    %2296 = vmatpush.msra.mxu0 %v214
    %2297 = vmatpush.msra.mxu0 %v211
    %2298 = vmatmul.f32.gmra.mxu0 %v2259
    %v2299 = vpop.f32.mrf.mxu0
    %v2300 = vadd.f32 %v2280, %v2299
    %2301 = vdwg.mxu0
    %2302 = vmatpush.msra.mxu0 %v304
    %2303 = vmatpush.msra.mxu0 %v301
    %2304 = vmatpush.msra.mxu0 %v298
    %2305 = vmatpush.msra.mxu0 %v295
    %2306 = vmatpush.msra.mxu0 %v292
    %2307 = vmatpush.msra.mxu0 %v289
    %2308 = vmatpush.msra.mxu0 %v286
    %2309 = vmatpush.msra.mxu0 %v283
    %2310 = vmatpush.msra.mxu0 %v280
    %2311 = vmatpush.msra.mxu0 %v277
    %2312 = vmatpush.msra.mxu0 %v274
    %2313 = vmatpush.msra.mxu0 %v271
    %2314 = vmatpush.msra.mxu0 %v268
    %2315 = vmatpush.msra.mxu0 %v265
    %2316 = vmatpush.msra.mxu0 %v262
    %2317 = vmatpush.msra.mxu0 %v259
    %2318 = vmatmul.f32.gmra.mxu0 %v2260
    %v2319 = vpop.f32.mrf.mxu0
    %v2320 = vadd.f32 %v2300, %v2319
    %2321 = vdwg.mxu0
    %2322 = vmatpush.msra.mxu0 %v352
    %2323 = vmatpush.msra.mxu0 %v349
    %2324 = vmatpush.msra.mxu0 %v346
    %2325 = vmatpush.msra.mxu0 %v343
    %2326 = vmatpush.msra.mxu0 %v340
    %2327 = vmatpush.msra.mxu0 %v337
    %2328 = vmatpush.msra.mxu0 %v334
    %2329 = vmatpush.msra.mxu0 %v331
    %2330 = vmatpush.msra.mxu0 %v328
    %2331 = vmatpush.msra.mxu0 %v325
    %2332 = vmatpush.msra.mxu0 %v322
    %2333 = vmatpush.msra.mxu0 %v319
    %2334 = vmatpush.msra.mxu0 %v316
    %2335 = vmatpush.msra.mxu0 %v313
    %2336 = vmatpush.msra.mxu0 %v310
    %2337 = vmatpush.msra.mxu0 %v307
    %2338 = vmatmul.f32.gmra.mxu0 %v2261
    %v2339 = vpop.f32.mrf.mxu0
    %v2340 = vadd.f32 %v2320, %v2339
    %2341 = vdwg.mxu0
    %2342 = vmatpush.msra.mxu0 %v209
    %2343 = vmatpush.msra.mxu0 %v206
    %2344 = vmatpush.msra.mxu0 %v203
    %2345 = vmatpush.msra.mxu0 %v200
    %2346 = vmatpush.msra.mxu0 %v197
    %2347 = vmatpush.msra.mxu0 %v194
    %2348 = vmatpush.msra.mxu0 %v191
    %2349 = vmatpush.msra.mxu0 %v188
    %2350 = vmatpush.msra.mxu0 %v185
    %2351 = vmatpush.msra.mxu0 %v182
    %2352 = vmatpush.msra.mxu0 %v179
    %2353 = vmatpush.msra.mxu0 %v176
    %2354 = vmatpush.msra.mxu0 %v173
    %2355 = vmatpush.msra.mxu0 %v170
    %2356 = vmatpush.msra.mxu0 %v167
    %2357 = vmatpush.msra.mxu0 %v164
    %2358 = vmatmul.f32.gmra.mxu0 %v2258
    %v2359 = vpop.f32.mrf.mxu0
    %v2360 = vadd.f32 %v358, %v2359
    %2361 = vdwg.mxu0
    %2362 = vmatpush.msra.mxu0 %v257
    %2363 = vmatpush.msra.mxu0 %v254
    %2364 = vmatpush.msra.mxu0 %v251
    %2365 = vmatpush.msra.mxu0 %v248
    %2366 = vmatpush.msra.mxu0 %v245
    %2367 = vmatpush.msra.mxu0 %v242
    %2368 = vmatpush.msra.mxu0 %v239
    %2369 = vmatpush.msra.mxu0 %v236
    %2370 = vmatpush.msra.mxu0 %v233
    %2371 = vmatpush.msra.mxu0 %v230
    %2372 = vmatpush.msra.mxu0 %v227
    %2373 = vmatpush.msra.mxu0 %v224
    %2374 = vmatpush.msra.mxu0 %v221
    %2375 = vmatpush.msra.mxu0 %v218
    %2376 = vmatpush.msra.mxu0 %v215
    %2377 = vmatpush.msra.mxu0 %v212
    %2378 = vmatmul.f32.gmra.mxu0 %v2259
    %v2379 = vpop.f32.mrf.mxu0
    %v2380 = vadd.f32 %v2360, %v2379
    %2381 = vdwg.mxu0
    %2382 = vmatpush.msra.mxu0 %v305
    %2383 = vmatpush.msra.mxu0 %v302
    %2384 = vmatpush.msra.mxu0 %v299
    %2385 = vmatpush.msra.mxu0 %v296
    %2386 = vmatpush.msra.mxu0 %v293
    %2387 = vmatpush.msra.mxu0 %v290
    %2388 = vmatpush.msra.mxu0 %v287
    %2389 = vmatpush.msra.mxu0 %v284
    %2390 = vmatpush.msra.mxu0 %v281
    %2391 = vmatpush.msra.mxu0 %v278
    %2392 = vmatpush.msra.mxu0 %v275
    %2393 = vmatpush.msra.mxu0 %v272
    %2394 = vmatpush.msra.mxu0 %v269
    %2395 = vmatpush.msra.mxu0 %v266
    %2396 = vmatpush.msra.mxu0 %v263
    %2397 = vmatpush.msra.mxu0 %v260
    %2398 = vmatmul.f32.gmra.mxu0 %v2260
    %v2399 = vpop.f32.mrf.mxu0
    %v2400 = vadd.f32 %v2380, %v2399
    %2401 = vdwg.mxu0
    %2402 = vmatpush.msra.mxu0 %v353
    %2403 = vmatpush.msra.mxu0 %v350
    %2404 = vmatpush.msra.mxu0 %v347
    %2405 = vmatpush.msra.mxu0 %v344
    %2406 = vmatpush.msra.mxu0 %v341
    %2407 = vmatpush.msra.mxu0 %v338
    %2408 = vmatpush.msra.mxu0 %v335
    %2409 = vmatpush.msra.mxu0 %v332
    %2410 = vmatpush.msra.mxu0 %v329
    %2411 = vmatpush.msra.mxu0 %v326
    %2412 = vmatpush.msra.mxu0 %v323
    %2413 = vmatpush.msra.mxu0 %v320
    %2414 = vmatpush.msra.mxu0 %v317
    %2415 = vmatpush.msra.mxu0 %v314
    %2416 = vmatpush.msra.mxu0 %v311
    %2417 = vmatpush.msra.mxu0 %v308
    %2418 = vmatmul.f32.gmra.mxu0 %v2261
    %v2419 = vpop.f32.mrf.mxu0
    %v2420 = vadd.f32 %v2400, %v2419
    %2421 = vdwg.mxu0
    %2422 = vmatpush.msra.mxu0 %v210
    %2423 = vmatpush.msra.mxu0 %v207
    %2424 = vmatpush.msra.mxu0 %v204
    %2425 = vmatpush.msra.mxu0 %v201
    %2426 = vmatpush.msra.mxu0 %v198
    %2427 = vmatpush.msra.mxu0 %v195
    %2428 = vmatpush.msra.mxu0 %v192
    %2429 = vmatpush.msra.mxu0 %v189
    %2430 = vmatpush.msra.mxu0 %v186
    %2431 = vmatpush.msra.mxu0 %v183
    %2432 = vmatpush.msra.mxu0 %v180
    %2433 = vmatpush.msra.mxu0 %v177
    %2434 = vmatpush.msra.mxu0 %v174
    %2435 = vmatpush.msra.mxu0 %v171
    %2436 = vmatpush.msra.mxu0 %v168
    %2437 = vmatpush.msra.mxu0 %v165
    %2438 = vmatmul.f32.gmra.mxu0 %v2258
    %v2439 = vpop.f32.mrf.mxu0
    %v2440 = vadd.f32 %v359, %v2439
    %2441 = vdwg.mxu0
    %2442 = vmatpush.msra.mxu0 %v258
    %2443 = vmatpush.msra.mxu0 %v255
    %2444 = vmatpush.msra.mxu0 %v252
    %2445 = vmatpush.msra.mxu0 %v249
    %2446 = vmatpush.msra.mxu0 %v246
    %2447 = vmatpush.msra.mxu0 %v243
    %2448 = vmatpush.msra.mxu0 %v240
    %2449 = vmatpush.msra.mxu0 %v237
    %2450 = vmatpush.msra.mxu0 %v234
    %2451 = vmatpush.msra.mxu0 %v231
    %2452 = vmatpush.msra.mxu0 %v228
    %2453 = vmatpush.msra.mxu0 %v225
    %2454 = vmatpush.msra.mxu0 %v222
    %2455 = vmatpush.msra.mxu0 %v219
    %2456 = vmatpush.msra.mxu0 %v216
    %2457 = vmatpush.msra.mxu0 %v213
    %2458 = vmatmul.f32.gmra.mxu0 %v2259
    %v2459 = vpop.f32.mrf.mxu0
    %v2460 = vadd.f32 %v2440, %v2459
    %2461 = vdwg.mxu0
    %2462 = vmatpush.msra.mxu0 %v306
    %2463 = vmatpush.msra.mxu0 %v303
    %2464 = vmatpush.msra.mxu0 %v300
    %2465 = vmatpush.msra.mxu0 %v297
    %2466 = vmatpush.msra.mxu0 %v294
    %2467 = vmatpush.msra.mxu0 %v291
    %2468 = vmatpush.msra.mxu0 %v288
    %2469 = vmatpush.msra.mxu0 %v285
    %2470 = vmatpush.msra.mxu0 %v282
    %2471 = vmatpush.msra.mxu0 %v279
    %2472 = vmatpush.msra.mxu0 %v276
    %2473 = vmatpush.msra.mxu0 %v273
    %2474 = vmatpush.msra.mxu0 %v270
    %2475 = vmatpush.msra.mxu0 %v267
    %2476 = vmatpush.msra.mxu0 %v264
    %2477 = vmatpush.msra.mxu0 %v261
    %2478 = vmatmul.f32.gmra.mxu0 %v2260
    %v2479 = vpop.f32.mrf.mxu0
    %v2480 = vadd.f32 %v2460, %v2479
    %2481 = vdwg.mxu0
    %2482 = vmatpush.msra.mxu0 %v354
    %2483 = vmatpush.msra.mxu0 %v351
    %2484 = vmatpush.msra.mxu0 %v348
    %2485 = vmatpush.msra.mxu0 %v345
    %2486 = vmatpush.msra.mxu0 %v342
    %2487 = vmatpush.msra.mxu0 %v339
    %2488 = vmatpush.msra.mxu0 %v336
    %2489 = vmatpush.msra.mxu0 %v333
    %2490 = vmatpush.msra.mxu0 %v330
    %2491 = vmatpush.msra.mxu0 %v327
    %2492 = vmatpush.msra.mxu0 %v324
    %2493 = vmatpush.msra.mxu0 %v321
    %2494 = vmatpush.msra.mxu0 %v318
    %2495 = vmatpush.msra.mxu0 %v315
    %2496 = vmatpush.msra.mxu0 %v312
    %2497 = vmatpush.msra.mxu0 %v309
    %2498 = vmatmul.f32.gmra.mxu0 %v2261
    %v2499 = vpop.f32.mrf.mxu0
    %v2500 = vadd.f32 %v2480, %v2499
    %2501 = vdwg.mxu0
    %v2502 = vtanh.pop %v2340
    %v2503 = vtanh.pop %v2420
    %v2504 = vtanh.pop %v2500
    %2505 = vmatpush.msra.mxu0 %v621
    %2506 = vmatpush.msra.mxu0 %v620
    %2507 = vmatpush.msra.mxu0 %v619
    %2508 = vmatpush.msra.mxu0 %v618
    %2509 = vmatpush.msra.mxu0 %v617
    %2510 = vmatpush.msra.mxu0 %v616
    %2511 = vmatpush.msra.mxu0 %v615
    %2512 = vmatpush.msra.mxu0 %v614
    %2513 = vmatpush.msra.mxu0 %v613
    %2514 = vmatpush.msra.mxu0 %v612
    %2515 = vmatpush.msra.mxu0 %v611
    %2516 = vmatpush.msra.mxu0 %v610
    %2517 = vmatpush.msra.mxu0 %v609
    %2518 = vmatpush.msra.mxu0 %v608
    %2519 = vmatpush.msra.mxu0 %v607
    %2520 = vmatpush.msra.mxu0 %v606
    %2521 = vmatmul.f32.gmra.mxu0 %v2502
    %v2522 = vpop.f32.mrf.mxu0
    %v2523 = vadd.f32 %v656, %v2522
    %2524 = vdwg.mxu0
    %2525 = vmatpush.msra.mxu0 %v637
    %2526 = vmatpush.msra.mxu0 %v636
    %2527 = vmatpush.msra.mxu0 %v635
    %2528 = vmatpush.msra.mxu0 %v634
    %2529 = vmatpush.msra.mxu0 %v633
    %2530 = vmatpush.msra.mxu0 %v632
    %2531 = vmatpush.msra.mxu0 %v631
    %2532 = vmatpush.msra.mxu0 %v630
    %2533 = vmatpush.msra.mxu0 %v629
    %2534 = vmatpush.msra.mxu0 %v628
    %2535 = vmatpush.msra.mxu0 %v627
    %2536 = vmatpush.msra.mxu0 %v626
    %2537 = vmatpush.msra.mxu0 %v625
    %2538 = vmatpush.msra.mxu0 %v624
    %2539 = vmatpush.msra.mxu0 %v623
    %2540 = vmatpush.msra.mxu0 %v622
    %2541 = vmatmul.f32.gmra.mxu0 %v2503
    %v2542 = vpop.f32.mrf.mxu0
    %v2543 = vadd.f32 %v2523, %v2542
    %2544 = vdwg.mxu0
    %2545 = vmatpush.msra.mxu0 %v653
    %2546 = vmatpush.msra.mxu0 %v652
    %2547 = vmatpush.msra.mxu0 %v651
    %2548 = vmatpush.msra.mxu0 %v650
    %2549 = vmatpush.msra.mxu0 %v649
    %2550 = vmatpush.msra.mxu0 %v648
    %2551 = vmatpush.msra.mxu0 %v647
    %2552 = vmatpush.msra.mxu0 %v646
    %2553 = vmatpush.msra.mxu0 %v645
    %2554 = vmatpush.msra.mxu0 %v644
    %2555 = vmatpush.msra.mxu0 %v643
    %2556 = vmatpush.msra.mxu0 %v642
    %2557 = vmatpush.msra.mxu0 %v641
    %2558 = vmatpush.msra.mxu0 %v640
    %2559 = vmatpush.msra.mxu0 %v639
    %2560 = vmatpush.msra.mxu0 %v638
    %2561 = vmatmul.f32.gmra.mxu0 %v2504
    %v2562 = vpop.f32.mrf.mxu0
    %v2563 = vadd.f32 %v2543, %v2562
    %2564 = vdwg.mxu0
    %s2565 = scalar_lea.vmem %s0, 160
    %v2566 = vld [vmem:[%s2565] sm:$0xff]
    %v2567 = vld [vmem:[%s2565 + $0x8] sm:$0xff]
    %v2568 = vld [vmem:[%s2565 + $0x10] sm:$0xff]
    %v2569 = vld [vmem:[%s2565 + $0x18] sm:$0xff]
    %2570 = vmatpush.msra.mxu0 %v208
    %2571 = vmatpush.msra.mxu0 %v205
    %2572 = vmatpush.msra.mxu0 %v202
    %2573 = vmatpush.msra.mxu0 %v199
    %2574 = vmatpush.msra.mxu0 %v196
    %2575 = vmatpush.msra.mxu0 %v193
    %2576 = vmatpush.msra.mxu0 %v190
    %2577 = vmatpush.msra.mxu0 %v187
    %2578 = vmatpush.msra.mxu0 %v184
    %2579 = vmatpush.msra.mxu0 %v181
    %2580 = vmatpush.msra.mxu0 %v178
    %2581 = vmatpush.msra.mxu0 %v175
    %2582 = vmatpush.msra.mxu0 %v172
    %2583 = vmatpush.msra.mxu0 %v169
    %2584 = vmatpush.msra.mxu0 %v166
    %2585 = vmatpush.msra.mxu0 %v163
    %2586 = vmatmul.f32.gmra.mxu0 %v2566
    %v2587 = vpop.f32.mrf.mxu0
    %v2588 = vadd.f32 %v357, %v2587
    %2589 = vdwg.mxu0
    %2590 = vmatpush.msra.mxu0 %v256
    %2591 = vmatpush.msra.mxu0 %v253
    %2592 = vmatpush.msra.mxu0 %v250
    %2593 = vmatpush.msra.mxu0 %v247
    %2594 = vmatpush.msra.mxu0 %v244
    %2595 = vmatpush.msra.mxu0 %v241
    %2596 = vmatpush.msra.mxu0 %v238
    %2597 = vmatpush.msra.mxu0 %v235
    %2598 = vmatpush.msra.mxu0 %v232
    %2599 = vmatpush.msra.mxu0 %v229
    %2600 = vmatpush.msra.mxu0 %v226
    %2601 = vmatpush.msra.mxu0 %v223
    %2602 = vmatpush.msra.mxu0 %v220
    %2603 = vmatpush.msra.mxu0 %v217
    %2604 = vmatpush.msra.mxu0 %v214
    %2605 = vmatpush.msra.mxu0 %v211
    %2606 = vmatmul.f32.gmra.mxu0 %v2567
    %v2607 = vpop.f32.mrf.mxu0
    %v2608 = vadd.f32 %v2588, %v2607
    %2609 = vdwg.mxu0
    %2610 = vmatpush.msra.mxu0 %v304
    %2611 = vmatpush.msra.mxu0 %v301
    %2612 = vmatpush.msra.mxu0 %v298
    %2613 = vmatpush.msra.mxu0 %v295
    %2614 = vmatpush.msra.mxu0 %v292
    %2615 = vmatpush.msra.mxu0 %v289
    %2616 = vmatpush.msra.mxu0 %v286
    %2617 = vmatpush.msra.mxu0 %v283
    %2618 = vmatpush.msra.mxu0 %v280
    %2619 = vmatpush.msra.mxu0 %v277
    %2620 = vmatpush.msra.mxu0 %v274
    %2621 = vmatpush.msra.mxu0 %v271
    %2622 = vmatpush.msra.mxu0 %v268
    %2623 = vmatpush.msra.mxu0 %v265
    %2624 = vmatpush.msra.mxu0 %v262
    %2625 = vmatpush.msra.mxu0 %v259
    %2626 = vmatmul.f32.gmra.mxu0 %v2568
    %v2627 = vpop.f32.mrf.mxu0
    %v2628 = vadd.f32 %v2608, %v2627
    %2629 = vdwg.mxu0
    %2630 = vmatpush.msra.mxu0 %v352
    %2631 = vmatpush.msra.mxu0 %v349
    %2632 = vmatpush.msra.mxu0 %v346
    %2633 = vmatpush.msra.mxu0 %v343
    %2634 = vmatpush.msra.mxu0 %v340
    %2635 = vmatpush.msra.mxu0 %v337
    %2636 = vmatpush.msra.mxu0 %v334
    %2637 = vmatpush.msra.mxu0 %v331
    %2638 = vmatpush.msra.mxu0 %v328
    %2639 = vmatpush.msra.mxu0 %v325
    %2640 = vmatpush.msra.mxu0 %v322
    %2641 = vmatpush.msra.mxu0 %v319
    %2642 = vmatpush.msra.mxu0 %v316
    %2643 = vmatpush.msra.mxu0 %v313
    %2644 = vmatpush.msra.mxu0 %v310
    %2645 = vmatpush.msra.mxu0 %v307
    %2646 = vmatmul.f32.gmra.mxu0 %v2569
    %v2647 = vpop.f32.mrf.mxu0
    %v2648 = vadd.f32 %v2628, %v2647
    %2649 = vdwg.mxu0
    %2650 = vmatpush.msra.mxu0 %v209
    %2651 = vmatpush.msra.mxu0 %v206
    %2652 = vmatpush.msra.mxu0 %v203
    %2653 = vmatpush.msra.mxu0 %v200
    %2654 = vmatpush.msra.mxu0 %v197
    %2655 = vmatpush.msra.mxu0 %v194
    %2656 = vmatpush.msra.mxu0 %v191
    %2657 = vmatpush.msra.mxu0 %v188
    %2658 = vmatpush.msra.mxu0 %v185
    %2659 = vmatpush.msra.mxu0 %v182
    %2660 = vmatpush.msra.mxu0 %v179
    %2661 = vmatpush.msra.mxu0 %v176
    %2662 = vmatpush.msra.mxu0 %v173
    %2663 = vmatpush.msra.mxu0 %v170
    %2664 = vmatpush.msra.mxu0 %v167
    %2665 = vmatpush.msra.mxu0 %v164
    %2666 = vmatmul.f32.gmra.mxu0 %v2566
    %v2667 = vpop.f32.mrf.mxu0
    %v2668 = vadd.f32 %v358, %v2667
    %2669 = vdwg.mxu0
    %2670 = vmatpush.msra.mxu0 %v257
    %2671 = vmatpush.msra.mxu0 %v254
    %2672 = vmatpush.msra.mxu0 %v251
    %2673 = vmatpush.msra.mxu0 %v248
    %2674 = vmatpush.msra.mxu0 %v245
    %2675 = vmatpush.msra.mxu0 %v242
    %2676 = vmatpush.msra.mxu0 %v239
    %2677 = vmatpush.msra.mxu0 %v236
    %2678 = vmatpush.msra.mxu0 %v233
    %2679 = vmatpush.msra.mxu0 %v230
    %2680 = vmatpush.msra.mxu0 %v227
    %2681 = vmatpush.msra.mxu0 %v224
    %2682 = vmatpush.msra.mxu0 %v221
    %2683 = vmatpush.msra.mxu0 %v218
    %2684 = vmatpush.msra.mxu0 %v215
    %2685 = vmatpush.msra.mxu0 %v212
    %2686 = vmatmul.f32.gmra.mxu0 %v2567
    %v2687 = vpop.f32.mrf.mxu0
    %v2688 = vadd.f32 %v2668, %v2687
    %2689 = vdwg.mxu0
    %2690 = vmatpush.msra.mxu0 %v305
    %2691 = vmatpush.msra.mxu0 %v302
    %2692 = vmatpush.msra.mxu0 %v299
    %2693 = vmatpush.msra.mxu0 %v296
    %2694 = vmatpush.msra.mxu0 %v293
    %2695 = vmatpush.msra.mxu0 %v290
    %2696 = vmatpush.msra.mxu0 %v287
    %2697 = vmatpush.msra.mxu0 %v284
    %2698 = vmatpush.msra.mxu0 %v281
    %2699 = vmatpush.msra.mxu0 %v278
    %2700 = vmatpush.msra.mxu0 %v275
    %2701 = vmatpush.msra.mxu0 %v272
    %2702 = vmatpush.msra.mxu0 %v269
    %2703 = vmatpush.msra.mxu0 %v266
    %2704 = vmatpush.msra.mxu0 %v263
    %2705 = vmatpush.msra.mxu0 %v260
    %2706 = vmatmul.f32.gmra.mxu0 %v2568
    %v2707 = vpop.f32.mrf.mxu0
    %v2708 = vadd.f32 %v2688, %v2707
    %2709 = vdwg.mxu0
    %2710 = vmatpush.msra.mxu0 %v353
    %2711 = vmatpush.msra.mxu0 %v350
    %2712 = vmatpush.msra.mxu0 %v347
    %2713 = vmatpush.msra.mxu0 %v344
    %2714 = vmatpush.msra.mxu0 %v341
    %2715 = vmatpush.msra.mxu0 %v338
    %2716 = vmatpush.msra.mxu0 %v335
    %2717 = vmatpush.msra.mxu0 %v332
    %2718 = vmatpush.msra.mxu0 %v329
    %2719 = vmatpush.msra.mxu0 %v326
    %2720 = vmatpush.msra.mxu0 %v323
    %2721 = vmatpush.msra.mxu0 %v320
    %2722 = vmatpush.msra.mxu0 %v317
    %2723 = vmatpush.msra.mxu0 %v314
    %2724 = vmatpush.msra.mxu0 %v311
    %2725 = vmatpush.msra.mxu0 %v308
    %2726 = vmatmul.f32.gmra.mxu0 %v2569
    %v2727 = vpop.f32.mrf.mxu0
    %v2728 = vadd.f32 %v2708, %v2727
    %2729 = vdwg.mxu0
    %2730 = vmatpush.msra.mxu0 %v210
    %2731 = vmatpush.msra.mxu0 %v207
    %2732 = vmatpush.msra.mxu0 %v204
    %2733 = vmatpush.msra.mxu0 %v201
    %2734 = vmatpush.msra.mxu0 %v198
    %2735 = vmatpush.msra.mxu0 %v195
    %2736 = vmatpush.msra.mxu0 %v192
    %2737 = vmatpush.msra.mxu0 %v189
    %2738 = vmatpush.msra.mxu0 %v186
    %2739 = vmatpush.msra.mxu0 %v183
    %2740 = vmatpush.msra.mxu0 %v180
    %2741 = vmatpush.msra.mxu0 %v177
    %2742 = vmatpush.msra.mxu0 %v174
    %2743 = vmatpush.msra.mxu0 %v171
    %2744 = vmatpush.msra.mxu0 %v168
    %2745 = vmatpush.msra.mxu0 %v165
    %2746 = vmatmul.f32.gmra.mxu0 %v2566
    %v2747 = vpop.f32.mrf.mxu0
    %v2748 = vadd.f32 %v359, %v2747
    %2749 = vdwg.mxu0
    %2750 = vmatpush.msra.mxu0 %v258
    %2751 = vmatpush.msra.mxu0 %v255
    %2752 = vmatpush.msra.mxu0 %v252
    %2753 = vmatpush.msra.mxu0 %v249
    %2754 = vmatpush.msra.mxu0 %v246
    %2755 = vmatpush.msra.mxu0 %v243
    %2756 = vmatpush.msra.mxu0 %v240
    %2757 = vmatpush.msra.mxu0 %v237
    %2758 = vmatpush.msra.mxu0 %v234
    %2759 = vmatpush.msra.mxu0 %v231
    %2760 = vmatpush.msra.mxu0 %v228
    %2761 = vmatpush.msra.mxu0 %v225
    %2762 = vmatpush.msra.mxu0 %v222
    %2763 = vmatpush.msra.mxu0 %v219
    %2764 = vmatpush.msra.mxu0 %v216
    %2765 = vmatpush.msra.mxu0 %v213
    %2766 = vmatmul.f32.gmra.mxu0 %v2567
    %v2767 = vpop.f32.mrf.mxu0
    %v2768 = vadd.f32 %v2748, %v2767
    %2769 = vdwg.mxu0
    %2770 = vmatpush.msra.mxu0 %v306
    %2771 = vmatpush.msra.mxu0 %v303
    %2772 = vmatpush.msra.mxu0 %v300
    %2773 = vmatpush.msra.mxu0 %v297
    %2774 = vmatpush.msra.mxu0 %v294
    %2775 = vmatpush.msra.mxu0 %v291
    %2776 = vmatpush.msra.mxu0 %v288
    %2777 = vmatpush.msra.mxu0 %v285
    %2778 = vmatpush.msra.mxu0 %v282
    %2779 = vmatpush.msra.mxu0 %v279
    %2780 = vmatpush.msra.mxu0 %v276
    %2781 = vmatpush.msra.mxu0 %v273
    %2782 = vmatpush.msra.mxu0 %v270
    %2783 = vmatpush.msra.mxu0 %v267
    %2784 = vmatpush.msra.mxu0 %v264
    %2785 = vmatpush.msra.mxu0 %v261
    %2786 = vmatmul.f32.gmra.mxu0 %v2568
    %v2787 = vpop.f32.mrf.mxu0
    %v2788 = vadd.f32 %v2768, %v2787
    %2789 = vdwg.mxu0
    %2790 = vmatpush.msra.mxu0 %v354
    %2791 = vmatpush.msra.mxu0 %v351
    %2792 = vmatpush.msra.mxu0 %v348
    %2793 = vmatpush.msra.mxu0 %v345
    %2794 = vmatpush.msra.mxu0 %v342
    %2795 = vmatpush.msra.mxu0 %v339
    %2796 = vmatpush.msra.mxu0 %v336
    %2797 = vmatpush.msra.mxu0 %v333
    %2798 = vmatpush.msra.mxu0 %v330
    %2799 = vmatpush.msra.mxu0 %v327
    %2800 = vmatpush.msra.mxu0 %v324
    %2801 = vmatpush.msra.mxu0 %v321
    %2802 = vmatpush.msra.mxu0 %v318
    %2803 = vmatpush.msra.mxu0 %v315
    %2804 = vmatpush.msra.mxu0 %v312
    %2805 = vmatpush.msra.mxu0 %v309
    %2806 = vmatmul.f32.gmra.mxu0 %v2569
    %v2807 = vpop.f32.mrf.mxu0
    %v2808 = vadd.f32 %v2788, %v2807
    %2809 = vdwg.mxu0
    %v2810 = vtanh.pop %v2648
    %v2811 = vtanh.pop %v2728
    %v2812 = vtanh.pop %v2808
    %2813 = vmatpush.msra.mxu0 %v621
    %2814 = vmatpush.msra.mxu0 %v620
    %2815 = vmatpush.msra.mxu0 %v619
    %2816 = vmatpush.msra.mxu0 %v618
    %2817 = vmatpush.msra.mxu0 %v617
    %2818 = vmatpush.msra.mxu0 %v616
    %2819 = vmatpush.msra.mxu0 %v615
    %2820 = vmatpush.msra.mxu0 %v614
    %2821 = vmatpush.msra.mxu0 %v613
    %2822 = vmatpush.msra.mxu0 %v612
    %2823 = vmatpush.msra.mxu0 %v611
    %2824 = vmatpush.msra.mxu0 %v610
    %2825 = vmatpush.msra.mxu0 %v609
    %2826 = vmatpush.msra.mxu0 %v608
    %2827 = vmatpush.msra.mxu0 %v607
    %2828 = vmatpush.msra.mxu0 %v606
    %2829 = vmatmul.f32.gmra.mxu0 %v2810
    %v2830 = vpop.f32.mrf.mxu0
    %v2831 = vadd.f32 %v656, %v2830
    %2832 = vdwg.mxu0
    %2833 = vmatpush.msra.mxu0 %v637
    %2834 = vmatpush.msra.mxu0 %v636
    %2835 = vmatpush.msra.mxu0 %v635
    %2836 = vmatpush.msra.mxu0 %v634
    %2837 = vmatpush.msra.mxu0 %v633
    %2838 = vmatpush.msra.mxu0 %v632
    %2839 = vmatpush.msra.mxu0 %v631
    %2840 = vmatpush.msra.mxu0 %v630
    %2841 = vmatpush.msra.mxu0 %v629
    %2842 = vmatpush.msra.mxu0 %v628
    %2843 = vmatpush.msra.mxu0 %v627
    %2844 = vmatpush.msra.mxu0 %v626
    %2845 = vmatpush.msra.mxu0 %v625
    %2846 = vmatpush.msra.mxu0 %v624
    %2847 = vmatpush.msra.mxu0 %v623
    %2848 = vmatpush.msra.mxu0 %v622
    %2849 = vmatmul.f32.gmra.mxu0 %v2811
    %v2850 = vpop.f32.mrf.mxu0
    %v2851 = vadd.f32 %v2831, %v2850
    %2852 = vdwg.mxu0
    %2853 = vmatpush.msra.mxu0 %v653
    %2854 = vmatpush.msra.mxu0 %v652
    %2855 = vmatpush.msra.mxu0 %v651
    %2856 = vmatpush.msra.mxu0 %v650
    %2857 = vmatpush.msra.mxu0 %v649
    %2858 = vmatpush.msra.mxu0 %v648
    %2859 = vmatpush.msra.mxu0 %v647
    %2860 = vmatpush.msra.mxu0 %v646
    %2861 = vmatpush.msra.mxu0 %v645
    %2862 = vmatpush.msra.mxu0 %v644
    %2863 = vmatpush.msra.mxu0 %v643
    %2864 = vmatpush.msra.mxu0 %v642
    %2865 = vmatpush.msra.mxu0 %v641
    %2866 = vmatpush.msra.mxu0 %v640
    %2867 = vmatpush.msra.mxu0 %v639
    %2868 = vmatpush.msra.mxu0 %v638
    %2869 = vmatmul.f32.gmra.mxu0 %v2812
    %v2870 = vpop.f32.mrf.mxu0
    %v2871 = vadd.f32 %v2851, %v2870
    %2872 = vdwg.mxu0
    %2873 = vmatpush.msra.mxu0 %v1120
    %2874 = vmatpush.msra.mxu0 %v1117
    %2875 = vmatpush.msra.mxu0 %v1114
    %2876 = vmatpush.msra.mxu0 %v1111
    %2877 = vmatpush.msra.mxu0 %v1108
    %2878 = vmatpush.msra.mxu0 %v1105
    %2879 = vmatpush.msra.mxu0 %v1102
    %2880 = vmatpush.msra.mxu0 %v1099
    %2881 = vmatpush.msra.mxu0 %v1096
    %2882 = vmatpush.msra.mxu0 %v1093
    %2883 = vmatpush.msra.mxu0 %v1090
    %2884 = vmatpush.msra.mxu0 %v1087
    %2885 = vmatpush.msra.mxu0 %v1084
    %2886 = vmatpush.msra.mxu0 %v1081
    %2887 = vmatpush.msra.mxu0 %v1078
    %2888 = vmatpush.msra.mxu0 %v1075
    %2889 = vmatmul.f32.gmra.mxu0 %v2871
    %v2890 = vpop.f32.mrf.mxu0
    %v2891 = vadd.f32 0.0, %v2890
    %2892 = vdwg.mxu0
    %2893 = vmatpush.msra.mxu0 %v1121
    %2894 = vmatpush.msra.mxu0 %v1118
    %2895 = vmatpush.msra.mxu0 %v1115
    %2896 = vmatpush.msra.mxu0 %v1112
    %2897 = vmatpush.msra.mxu0 %v1109
    %2898 = vmatpush.msra.mxu0 %v1106
    %2899 = vmatpush.msra.mxu0 %v1103
    %2900 = vmatpush.msra.mxu0 %v1100
    %2901 = vmatpush.msra.mxu0 %v1097
    %2902 = vmatpush.msra.mxu0 %v1094
    %2903 = vmatpush.msra.mxu0 %v1091
    %2904 = vmatpush.msra.mxu0 %v1088
    %2905 = vmatpush.msra.mxu0 %v1085
    %2906 = vmatpush.msra.mxu0 %v1082
    %2907 = vmatpush.msra.mxu0 %v1079
    %2908 = vmatpush.msra.mxu0 %v1076
    %2909 = vmatmul.f32.gmra.mxu0 %v2871
    %v2910 = vpop.f32.mrf.mxu0
    %v2911 = vadd.f32 0.0, %v2910
    %2912 = vdwg.mxu0
    %2913 = vmatpush.msra.mxu0 %v1122
    %2914 = vmatpush.msra.mxu0 %v1119
    %2915 = vmatpush.msra.mxu0 %v1116
    %2916 = vmatpush.msra.mxu0 %v1113
    %2917 = vmatpush.msra.mxu0 %v1110
    %2918 = vmatpush.msra.mxu0 %v1107
    %2919 = vmatpush.msra.mxu0 %v1104
    %2920 = vmatpush.msra.mxu0 %v1101
    %2921 = vmatpush.msra.mxu0 %v1098
    %2922 = vmatpush.msra.mxu0 %v1095
    %2923 = vmatpush.msra.mxu0 %v1092
    %2924 = vmatpush.msra.mxu0 %v1089
    %2925 = vmatpush.msra.mxu0 %v1086
    %2926 = vmatpush.msra.mxu0 %v1083
    %2927 = vmatpush.msra.mxu0 %v1080
    %2928 = vmatpush.msra.mxu0 %v1077
    %2929 = vmatmul.f32.gmra.mxu0 %v2871
    %v2930 = vpop.f32.mrf.mxu0
    %v2931 = vadd.f32 0.0, %v2930
    %2932 = vdwg.mxu0
    %2933 = vmatpush.msra.mxu0 %v763
    %2934 = vmatpush.msra.mxu0 %v760
    %2935 = vmatpush.msra.mxu0 %v757
    %2936 = vmatpush.msra.mxu0 %v754
    %2937 = vmatpush.msra.mxu0 %v751
    %2938 = vmatpush.msra.mxu0 %v748
    %2939 = vmatpush.msra.mxu0 %v745
    %2940 = vmatpush.msra.mxu0 %v742
    %2941 = vmatpush.msra.mxu0 %v739
    %2942 = vmatpush.msra.mxu0 %v736
    %2943 = vmatpush.msra.mxu0 %v733
    %2944 = vmatpush.msra.mxu0 %v730
    %2945 = vmatpush.msra.mxu0 %v727
    %2946 = vmatpush.msra.mxu0 %v724
    %2947 = vmatpush.msra.mxu0 %v721
    %2948 = vmatpush.msra.mxu0 %v718
    %2949 = vmatmul.f32.gmra.mxu0 %v2563
    %v2950 = vpop.f32.mrf.mxu0
    %v2951 = vadd.f32 %v2891, %v2950
    %2952 = vdwg.mxu0
    %2953 = vmatpush.msra.mxu0 %v764
    %2954 = vmatpush.msra.mxu0 %v761
    %2955 = vmatpush.msra.mxu0 %v758
    %2956 = vmatpush.msra.mxu0 %v755
    %2957 = vmatpush.msra.mxu0 %v752
    %2958 = vmatpush.msra.mxu0 %v749
    %2959 = vmatpush.msra.mxu0 %v746
    %2960 = vmatpush.msra.mxu0 %v743
    %2961 = vmatpush.msra.mxu0 %v740
    %2962 = vmatpush.msra.mxu0 %v737
    %2963 = vmatpush.msra.mxu0 %v734
    %2964 = vmatpush.msra.mxu0 %v731
    %2965 = vmatpush.msra.mxu0 %v728
    %2966 = vmatpush.msra.mxu0 %v725
    %2967 = vmatpush.msra.mxu0 %v722
    %2968 = vmatpush.msra.mxu0 %v719
    %2969 = vmatmul.f32.gmra.mxu0 %v2563
    %v2970 = vpop.f32.mrf.mxu0
    %v2971 = vadd.f32 %v2911, %v2970
    %2972 = vdwg.mxu0
    %2973 = vmatpush.msra.mxu0 %v765
    %2974 = vmatpush.msra.mxu0 %v762
    %2975 = vmatpush.msra.mxu0 %v759
    %2976 = vmatpush.msra.mxu0 %v756
    %2977 = vmatpush.msra.mxu0 %v753
    %2978 = vmatpush.msra.mxu0 %v750
    %2979 = vmatpush.msra.mxu0 %v747
    %2980 = vmatpush.msra.mxu0 %v744
    %2981 = vmatpush.msra.mxu0 %v741
    %2982 = vmatpush.msra.mxu0 %v738
    %2983 = vmatpush.msra.mxu0 %v735
    %2984 = vmatpush.msra.mxu0 %v732
    %2985 = vmatpush.msra.mxu0 %v729
    %2986 = vmatpush.msra.mxu0 %v726
    %2987 = vmatpush.msra.mxu0 %v723
    %2988 = vmatpush.msra.mxu0 %v720
    %2989 = vmatmul.f32.gmra.mxu0 %v2563
    %v2990 = vpop.f32.mrf.mxu0
    %v2991 = vadd.f32 %v2931, %v2990
    %2992 = vdwg.mxu0
    %s2993 = scalar_lea.vmem %s0, 192
    %v2994 = vld [vmem:[%s2993] sm:$0xff]
    %v2995 = vld [vmem:[%s2993 + $0x8] sm:$0xff]
    %v2996 = vld [vmem:[%s2993 + $0x10] sm:$0xff]
    %v2997 = vld [vmem:[%s2993 + $0x18] sm:$0xff]
    %2998 = vmatpush.msra.mxu0 %v208
    %2999 = vmatpush.msra.mxu0 %v205
    %3000 = vmatpush.msra.mxu0 %v202
    %3001 = vmatpush.msra.mxu0 %v199
    %3002 = vmatpush.msra.mxu0 %v196
    %3003 = vmatpush.msra.mxu0 %v193
    %3004 = vmatpush.msra.mxu0 %v190
    %3005 = vmatpush.msra.mxu0 %v187
    %3006 = vmatpush.msra.mxu0 %v184
    %3007 = vmatpush.msra.mxu0 %v181
    %3008 = vmatpush.msra.mxu0 %v178
    %3009 = vmatpush.msra.mxu0 %v175
    %3010 = vmatpush.msra.mxu0 %v172
    %3011 = vmatpush.msra.mxu0 %v169
    %3012 = vmatpush.msra.mxu0 %v166
    %3013 = vmatpush.msra.mxu0 %v163
    %3014 = vmatmul.f32.gmra.mxu0 %v2994
    %v3015 = vpop.f32.mrf.mxu0
    %v3016 = vadd.f32 %v357, %v3015
    %3017 = vdwg.mxu0
    %3018 = vmatpush.msra.mxu0 %v256
    %3019 = vmatpush.msra.mxu0 %v253
    %3020 = vmatpush.msra.mxu0 %v250
    %3021 = vmatpush.msra.mxu0 %v247
    %3022 = vmatpush.msra.mxu0 %v244
    %3023 = vmatpush.msra.mxu0 %v241
    %3024 = vmatpush.msra.mxu0 %v238
    %3025 = vmatpush.msra.mxu0 %v235
    %3026 = vmatpush.msra.mxu0 %v232
    %3027 = vmatpush.msra.mxu0 %v229
    %3028 = vmatpush.msra.mxu0 %v226
    %3029 = vmatpush.msra.mxu0 %v223
    %3030 = vmatpush.msra.mxu0 %v220
    %3031 = vmatpush.msra.mxu0 %v217
    %3032 = vmatpush.msra.mxu0 %v214
    %3033 = vmatpush.msra.mxu0 %v211
    %3034 = vmatmul.f32.gmra.mxu0 %v2995
    %v3035 = vpop.f32.mrf.mxu0
    %v3036 = vadd.f32 %v3016, %v3035
    %3037 = vdwg.mxu0
    %3038 = vmatpush.msra.mxu0 %v304
    %3039 = vmatpush.msra.mxu0 %v301
    %3040 = vmatpush.msra.mxu0 %v298
    %3041 = vmatpush.msra.mxu0 %v295
    %3042 = vmatpush.msra.mxu0 %v292
    %3043 = vmatpush.msra.mxu0 %v289
    %3044 = vmatpush.msra.mxu0 %v286
    %3045 = vmatpush.msra.mxu0 %v283
    %3046 = vmatpush.msra.mxu0 %v280
    %3047 = vmatpush.msra.mxu0 %v277
    %3048 = vmatpush.msra.mxu0 %v274
    %3049 = vmatpush.msra.mxu0 %v271
    %3050 = vmatpush.msra.mxu0 %v268
    %3051 = vmatpush.msra.mxu0 %v265
    %3052 = vmatpush.msra.mxu0 %v262
    %3053 = vmatpush.msra.mxu0 %v259
    %3054 = vmatmul.f32.gmra.mxu0 %v2996
    %v3055 = vpop.f32.mrf.mxu0
    %v3056 = vadd.f32 %v3036, %v3055
    %3057 = vdwg.mxu0
    %3058 = vmatpush.msra.mxu0 %v352
    %3059 = vmatpush.msra.mxu0 %v349
    %3060 = vmatpush.msra.mxu0 %v346
    %3061 = vmatpush.msra.mxu0 %v343
    %3062 = vmatpush.msra.mxu0 %v340
    %3063 = vmatpush.msra.mxu0 %v337
    %3064 = vmatpush.msra.mxu0 %v334
    %3065 = vmatpush.msra.mxu0 %v331
    %3066 = vmatpush.msra.mxu0 %v328
    %3067 = vmatpush.msra.mxu0 %v325
    %3068 = vmatpush.msra.mxu0 %v322
    %3069 = vmatpush.msra.mxu0 %v319
    %3070 = vmatpush.msra.mxu0 %v316
    %3071 = vmatpush.msra.mxu0 %v313
    %3072 = vmatpush.msra.mxu0 %v310
    %3073 = vmatpush.msra.mxu0 %v307
    %3074 = vmatmul.f32.gmra.mxu0 %v2997
    %v3075 = vpop.f32.mrf.mxu0
    %v3076 = vadd.f32 %v3056, %v3075
    %3077 = vdwg.mxu0
    %3078 = vmatpush.msra.mxu0 %v209
    %3079 = vmatpush.msra.mxu0 %v206
    %3080 = vmatpush.msra.mxu0 %v203
    %3081 = vmatpush.msra.mxu0 %v200
    %3082 = vmatpush.msra.mxu0 %v197
    %3083 = vmatpush.msra.mxu0 %v194
    %3084 = vmatpush.msra.mxu0 %v191
    %3085 = vmatpush.msra.mxu0 %v188
    %3086 = vmatpush.msra.mxu0 %v185
    %3087 = vmatpush.msra.mxu0 %v182
    %3088 = vmatpush.msra.mxu0 %v179
    %3089 = vmatpush.msra.mxu0 %v176
    %3090 = vmatpush.msra.mxu0 %v173
    %3091 = vmatpush.msra.mxu0 %v170
    %3092 = vmatpush.msra.mxu0 %v167
    %3093 = vmatpush.msra.mxu0 %v164
    %3094 = vmatmul.f32.gmra.mxu0 %v2994
    %v3095 = vpop.f32.mrf.mxu0
    %v3096 = vadd.f32 %v358, %v3095
    %3097 = vdwg.mxu0
    %3098 = vmatpush.msra.mxu0 %v257
    %3099 = vmatpush.msra.mxu0 %v254
    %3100 = vmatpush.msra.mxu0 %v251
    %3101 = vmatpush.msra.mxu0 %v248
    %3102 = vmatpush.msra.mxu0 %v245
    %3103 = vmatpush.msra.mxu0 %v242
    %3104 = vmatpush.msra.mxu0 %v239
    %3105 = vmatpush.msra.mxu0 %v236
    %3106 = vmatpush.msra.mxu0 %v233
    %3107 = vmatpush.msra.mxu0 %v230
    %3108 = vmatpush.msra.mxu0 %v227
    %3109 = vmatpush.msra.mxu0 %v224
    %3110 = vmatpush.msra.mxu0 %v221
    %3111 = vmatpush.msra.mxu0 %v218
    %3112 = vmatpush.msra.mxu0 %v215
    %3113 = vmatpush.msra.mxu0 %v212
    %3114 = vmatmul.f32.gmra.mxu0 %v2995
    %v3115 = vpop.f32.mrf.mxu0
    %v3116 = vadd.f32 %v3096, %v3115
    %3117 = vdwg.mxu0
    %3118 = vmatpush.msra.mxu0 %v305
    %3119 = vmatpush.msra.mxu0 %v302
    %3120 = vmatpush.msra.mxu0 %v299
    %3121 = vmatpush.msra.mxu0 %v296
    %3122 = vmatpush.msra.mxu0 %v293
    %3123 = vmatpush.msra.mxu0 %v290
    %3124 = vmatpush.msra.mxu0 %v287
    %3125 = vmatpush.msra.mxu0 %v284
    %3126 = vmatpush.msra.mxu0 %v281
    %3127 = vmatpush.msra.mxu0 %v278
    %3128 = vmatpush.msra.mxu0 %v275
    %3129 = vmatpush.msra.mxu0 %v272
    %3130 = vmatpush.msra.mxu0 %v269
    %3131 = vmatpush.msra.mxu0 %v266
    %3132 = vmatpush.msra.mxu0 %v263
    %3133 = vmatpush.msra.mxu0 %v260
    %3134 = vmatmul.f32.gmra.mxu0 %v2996
    %v3135 = vpop.f32.mrf.mxu0
    %v3136 = vadd.f32 %v3116, %v3135
    %3137 = vdwg.mxu0
    %3138 = vmatpush.msra.mxu0 %v353
    %3139 = vmatpush.msra.mxu0 %v350
    %3140 = vmatpush.msra.mxu0 %v347
    %3141 = vmatpush.msra.mxu0 %v344
    %3142 = vmatpush.msra.mxu0 %v341
    %3143 = vmatpush.msra.mxu0 %v338
    %3144 = vmatpush.msra.mxu0 %v335
    %3145 = vmatpush.msra.mxu0 %v332
    %3146 = vmatpush.msra.mxu0 %v329
    %3147 = vmatpush.msra.mxu0 %v326
    %3148 = vmatpush.msra.mxu0 %v323
    %3149 = vmatpush.msra.mxu0 %v320
    %3150 = vmatpush.msra.mxu0 %v317
    %3151 = vmatpush.msra.mxu0 %v314
    %3152 = vmatpush.msra.mxu0 %v311
    %3153 = vmatpush.msra.mxu0 %v308
    %3154 = vmatmul.f32.gmra.mxu0 %v2997
    %v3155 = vpop.f32.mrf.mxu0
    %v3156 = vadd.f32 %v3136, %v3155
    %3157 = vdwg.mxu0
    %3158 = vmatpush.msra.mxu0 %v210
    %3159 = vmatpush.msra.mxu0 %v207
    %3160 = vmatpush.msra.mxu0 %v204
    %3161 = vmatpush.msra.mxu0 %v201
    %3162 = vmatpush.msra.mxu0 %v198
    %3163 = vmatpush.msra.mxu0 %v195
    %3164 = vmatpush.msra.mxu0 %v192
    %3165 = vmatpush.msra.mxu0 %v189
    %3166 = vmatpush.msra.mxu0 %v186
    %3167 = vmatpush.msra.mxu0 %v183
    %3168 = vmatpush.msra.mxu0 %v180
    %3169 = vmatpush.msra.mxu0 %v177
    %3170 = vmatpush.msra.mxu0 %v174
    %3171 = vmatpush.msra.mxu0 %v171
    %3172 = vmatpush.msra.mxu0 %v168
    %3173 = vmatpush.msra.mxu0 %v165
    %3174 = vmatmul.f32.gmra.mxu0 %v2994
    %v3175 = vpop.f32.mrf.mxu0
    %v3176 = vadd.f32 %v359, %v3175
    %3177 = vdwg.mxu0
    %3178 = vmatpush.msra.mxu0 %v258
    %3179 = vmatpush.msra.mxu0 %v255
    %3180 = vmatpush.msra.mxu0 %v252
    %3181 = vmatpush.msra.mxu0 %v249
    %3182 = vmatpush.msra.mxu0 %v246
    %3183 = vmatpush.msra.mxu0 %v243
    %3184 = vmatpush.msra.mxu0 %v240
    %3185 = vmatpush.msra.mxu0 %v237
    %3186 = vmatpush.msra.mxu0 %v234
    %3187 = vmatpush.msra.mxu0 %v231
    %3188 = vmatpush.msra.mxu0 %v228
    %3189 = vmatpush.msra.mxu0 %v225
    %3190 = vmatpush.msra.mxu0 %v222
    %3191 = vmatpush.msra.mxu0 %v219
    %3192 = vmatpush.msra.mxu0 %v216
    %3193 = vmatpush.msra.mxu0 %v213
    %3194 = vmatmul.f32.gmra.mxu0 %v2995
    %v3195 = vpop.f32.mrf.mxu0
    %v3196 = vadd.f32 %v3176, %v3195
    %3197 = vdwg.mxu0
    %3198 = vmatpush.msra.mxu0 %v306
    %3199 = vmatpush.msra.mxu0 %v303
    %3200 = vmatpush.msra.mxu0 %v300
    %3201 = vmatpush.msra.mxu0 %v297
    %3202 = vmatpush.msra.mxu0 %v294
    %3203 = vmatpush.msra.mxu0 %v291
    %3204 = vmatpush.msra.mxu0 %v288
    %3205 = vmatpush.msra.mxu0 %v285
    %3206 = vmatpush.msra.mxu0 %v282
    %3207 = vmatpush.msra.mxu0 %v279
    %3208 = vmatpush.msra.mxu0 %v276
    %3209 = vmatpush.msra.mxu0 %v273
    %3210 = vmatpush.msra.mxu0 %v270
    %3211 = vmatpush.msra.mxu0 %v267
    %3212 = vmatpush.msra.mxu0 %v264
    %3213 = vmatpush.msra.mxu0 %v261
    %3214 = vmatmul.f32.gmra.mxu0 %v2996
    %v3215 = vpop.f32.mrf.mxu0
    %v3216 = vadd.f32 %v3196, %v3215
    %3217 = vdwg.mxu0
    %3218 = vmatpush.msra.mxu0 %v354
    %3219 = vmatpush.msra.mxu0 %v351
    %3220 = vmatpush.msra.mxu0 %v348
    %3221 = vmatpush.msra.mxu0 %v345
    %3222 = vmatpush.msra.mxu0 %v342
    %3223 = vmatpush.msra.mxu0 %v339
    %3224 = vmatpush.msra.mxu0 %v336
    %3225 = vmatpush.msra.mxu0 %v333
    %3226 = vmatpush.msra.mxu0 %v330
    %3227 = vmatpush.msra.mxu0 %v327
    %3228 = vmatpush.msra.mxu0 %v324
    %3229 = vmatpush.msra.mxu0 %v321
    %3230 = vmatpush.msra.mxu0 %v318
    %3231 = vmatpush.msra.mxu0 %v315
    %3232 = vmatpush.msra.mxu0 %v312
    %3233 = vmatpush.msra.mxu0 %v309
    %3234 = vmatmul.f32.gmra.mxu0 %v2997
    %v3235 = vpop.f32.mrf.mxu0
    %v3236 = vadd.f32 %v3216, %v3235
    %3237 = vdwg.mxu0
    %v3238 = vtanh.pop %v3076
    %v3239 = vtanh.pop %v3156
    %v3240 = vtanh.pop %v3236
    %3241 = vmatpush.msra.mxu0 %v621
    %3242 = vmatpush.msra.mxu0 %v620
    %3243 = vmatpush.msra.mxu0 %v619
    %3244 = vmatpush.msra.mxu0 %v618
    %3245 = vmatpush.msra.mxu0 %v617
    %3246 = vmatpush.msra.mxu0 %v616
    %3247 = vmatpush.msra.mxu0 %v615
    %3248 = vmatpush.msra.mxu0 %v614
    %3249 = vmatpush.msra.mxu0 %v613
    %3250 = vmatpush.msra.mxu0 %v612
    %3251 = vmatpush.msra.mxu0 %v611
    %3252 = vmatpush.msra.mxu0 %v610
    %3253 = vmatpush.msra.mxu0 %v609
    %3254 = vmatpush.msra.mxu0 %v608
    %3255 = vmatpush.msra.mxu0 %v607
    %3256 = vmatpush.msra.mxu0 %v606
    %3257 = vmatmul.f32.gmra.mxu0 %v3238
    %v3258 = vpop.f32.mrf.mxu0
    %v3259 = vadd.f32 %v656, %v3258
    %3260 = vdwg.mxu0
    %3261 = vmatpush.msra.mxu0 %v637
    %3262 = vmatpush.msra.mxu0 %v636
    %3263 = vmatpush.msra.mxu0 %v635
    %3264 = vmatpush.msra.mxu0 %v634
    %3265 = vmatpush.msra.mxu0 %v633
    %3266 = vmatpush.msra.mxu0 %v632
    %3267 = vmatpush.msra.mxu0 %v631
    %3268 = vmatpush.msra.mxu0 %v630
    %3269 = vmatpush.msra.mxu0 %v629
    %3270 = vmatpush.msra.mxu0 %v628
    %3271 = vmatpush.msra.mxu0 %v627
    %3272 = vmatpush.msra.mxu0 %v626
    %3273 = vmatpush.msra.mxu0 %v625
    %3274 = vmatpush.msra.mxu0 %v624
    %3275 = vmatpush.msra.mxu0 %v623
    %3276 = vmatpush.msra.mxu0 %v622
    %3277 = vmatmul.f32.gmra.mxu0 %v3239
    %v3278 = vpop.f32.mrf.mxu0
    %v3279 = vadd.f32 %v3259, %v3278
    %3280 = vdwg.mxu0
    %3281 = vmatpush.msra.mxu0 %v653
    %3282 = vmatpush.msra.mxu0 %v652
    %3283 = vmatpush.msra.mxu0 %v651
    %3284 = vmatpush.msra.mxu0 %v650
    %3285 = vmatpush.msra.mxu0 %v649
    %3286 = vmatpush.msra.mxu0 %v648
    %3287 = vmatpush.msra.mxu0 %v647
    %3288 = vmatpush.msra.mxu0 %v646
    %3289 = vmatpush.msra.mxu0 %v645
    %3290 = vmatpush.msra.mxu0 %v644
    %3291 = vmatpush.msra.mxu0 %v643
    %3292 = vmatpush.msra.mxu0 %v642
    %3293 = vmatpush.msra.mxu0 %v641
    %3294 = vmatpush.msra.mxu0 %v640
    %3295 = vmatpush.msra.mxu0 %v639
    %3296 = vmatpush.msra.mxu0 %v638
    %3297 = vmatmul.f32.gmra.mxu0 %v3240
    %v3298 = vpop.f32.mrf.mxu0
    %v3299 = vadd.f32 %v3279, %v3298
    %3300 = vdwg.mxu0
    %3301 = vmatpush.msra.mxu0 %v1597
    %3302 = vmatpush.msra.mxu0 %v1594
    %3303 = vmatpush.msra.mxu0 %v1591
    %3304 = vmatpush.msra.mxu0 %v1588
    %3305 = vmatpush.msra.mxu0 %v1585
    %3306 = vmatpush.msra.mxu0 %v1582
    %3307 = vmatpush.msra.mxu0 %v1579
    %3308 = vmatpush.msra.mxu0 %v1576
    %3309 = vmatpush.msra.mxu0 %v1573
    %3310 = vmatpush.msra.mxu0 %v1570
    %3311 = vmatpush.msra.mxu0 %v1567
    %3312 = vmatpush.msra.mxu0 %v1564
    %3313 = vmatpush.msra.mxu0 %v1561
    %3314 = vmatpush.msra.mxu0 %v1558
    %3315 = vmatpush.msra.mxu0 %v1555
    %3316 = vmatpush.msra.mxu0 %v1552
    %3317 = vmatmul.f32.gmra.mxu0 %v3299
    %v3318 = vpop.f32.mrf.mxu0
    %v3319 = vadd.f32 0.0, %v3318
    %3320 = vdwg.mxu0
    %3321 = vmatpush.msra.mxu0 %v1598
    %3322 = vmatpush.msra.mxu0 %v1595
    %3323 = vmatpush.msra.mxu0 %v1592
    %3324 = vmatpush.msra.mxu0 %v1589
    %3325 = vmatpush.msra.mxu0 %v1586
    %3326 = vmatpush.msra.mxu0 %v1583
    %3327 = vmatpush.msra.mxu0 %v1580
    %3328 = vmatpush.msra.mxu0 %v1577
    %3329 = vmatpush.msra.mxu0 %v1574
    %3330 = vmatpush.msra.mxu0 %v1571
    %3331 = vmatpush.msra.mxu0 %v1568
    %3332 = vmatpush.msra.mxu0 %v1565
    %3333 = vmatpush.msra.mxu0 %v1562
    %3334 = vmatpush.msra.mxu0 %v1559
    %3335 = vmatpush.msra.mxu0 %v1556
    %3336 = vmatpush.msra.mxu0 %v1553
    %3337 = vmatmul.f32.gmra.mxu0 %v3299
    %v3338 = vpop.f32.mrf.mxu0
    %v3339 = vadd.f32 0.0, %v3338
    %3340 = vdwg.mxu0
    %3341 = vmatpush.msra.mxu0 %v1599
    %3342 = vmatpush.msra.mxu0 %v1596
    %3343 = vmatpush.msra.mxu0 %v1593
    %3344 = vmatpush.msra.mxu0 %v1590
    %3345 = vmatpush.msra.mxu0 %v1587
    %3346 = vmatpush.msra.mxu0 %v1584
    %3347 = vmatpush.msra.mxu0 %v1581
    %3348 = vmatpush.msra.mxu0 %v1578
    %3349 = vmatpush.msra.mxu0 %v1575
    %3350 = vmatpush.msra.mxu0 %v1572
    %3351 = vmatpush.msra.mxu0 %v1569
    %3352 = vmatpush.msra.mxu0 %v1566
    %3353 = vmatpush.msra.mxu0 %v1563
    %3354 = vmatpush.msra.mxu0 %v1560
    %3355 = vmatpush.msra.mxu0 %v1557
    %3356 = vmatpush.msra.mxu0 %v1554
    %3357 = vmatmul.f32.gmra.mxu0 %v3299
    %v3358 = vpop.f32.mrf.mxu0
    %v3359 = vadd.f32 0.0, %v3358
    %3360 = vdwg.mxu0
    %v3361 = vadd.f32 %v2951, %v3319
    %v3362 = vadd.f32 %v2971, %v3339
    %v3363 = vadd.f32 %v2991, %v3359
    %s3364 = scalar_lea.vmem %s0, 224
    %v3365 = vld [vmem:[%s3364] sm:$0xff]
    %v3366 = vld [vmem:[%s3364 + $0x8] sm:$0xff]
    %v3367 = vld [vmem:[%s3364 + $0x10] sm:$0xff]
    %v3368 = vld [vmem:[%s3364 + $0x18] sm:$0xff]
    %3369 = vmatpush.msra.mxu0 %v208
    %3370 = vmatpush.msra.mxu0 %v205
    %3371 = vmatpush.msra.mxu0 %v202
    %3372 = vmatpush.msra.mxu0 %v199
    %3373 = vmatpush.msra.mxu0 %v196
    %3374 = vmatpush.msra.mxu0 %v193
    %3375 = vmatpush.msra.mxu0 %v190
    %3376 = vmatpush.msra.mxu0 %v187
    %3377 = vmatpush.msra.mxu0 %v184
    %3378 = vmatpush.msra.mxu0 %v181
    %3379 = vmatpush.msra.mxu0 %v178
    %3380 = vmatpush.msra.mxu0 %v175
    %3381 = vmatpush.msra.mxu0 %v172
    %3382 = vmatpush.msra.mxu0 %v169
    %3383 = vmatpush.msra.mxu0 %v166
    %3384 = vmatpush.msra.mxu0 %v163
    %3385 = vmatmul.f32.gmra.mxu0 %v3365
    %v3386 = vpop.f32.mrf.mxu0
    %v3387 = vadd.f32 %v357, %v3386
    %3388 = vdwg.mxu0
    %3389 = vmatpush.msra.mxu0 %v256
    %3390 = vmatpush.msra.mxu0 %v253
    %3391 = vmatpush.msra.mxu0 %v250
    %3392 = vmatpush.msra.mxu0 %v247
    %3393 = vmatpush.msra.mxu0 %v244
    %3394 = vmatpush.msra.mxu0 %v241
    %3395 = vmatpush.msra.mxu0 %v238
    %3396 = vmatpush.msra.mxu0 %v235
    %3397 = vmatpush.msra.mxu0 %v232
    %3398 = vmatpush.msra.mxu0 %v229
    %3399 = vmatpush.msra.mxu0 %v226
    %3400 = vmatpush.msra.mxu0 %v223
    %3401 = vmatpush.msra.mxu0 %v220
    %3402 = vmatpush.msra.mxu0 %v217
    %3403 = vmatpush.msra.mxu0 %v214
    %3404 = vmatpush.msra.mxu0 %v211
    %3405 = vmatmul.f32.gmra.mxu0 %v3366
    %v3406 = vpop.f32.mrf.mxu0
    %v3407 = vadd.f32 %v3387, %v3406
    %3408 = vdwg.mxu0
    %3409 = vmatpush.msra.mxu0 %v304
    %3410 = vmatpush.msra.mxu0 %v301
    %3411 = vmatpush.msra.mxu0 %v298
    %3412 = vmatpush.msra.mxu0 %v295
    %3413 = vmatpush.msra.mxu0 %v292
    %3414 = vmatpush.msra.mxu0 %v289
    %3415 = vmatpush.msra.mxu0 %v286
    %3416 = vmatpush.msra.mxu0 %v283
    %3417 = vmatpush.msra.mxu0 %v280
    %3418 = vmatpush.msra.mxu0 %v277
    %3419 = vmatpush.msra.mxu0 %v274
    %3420 = vmatpush.msra.mxu0 %v271
    %3421 = vmatpush.msra.mxu0 %v268
    %3422 = vmatpush.msra.mxu0 %v265
    %3423 = vmatpush.msra.mxu0 %v262
    %3424 = vmatpush.msra.mxu0 %v259
    %3425 = vmatmul.f32.gmra.mxu0 %v3367
    %v3426 = vpop.f32.mrf.mxu0
    %v3427 = vadd.f32 %v3407, %v3426
    %3428 = vdwg.mxu0
    %3429 = vmatpush.msra.mxu0 %v352
    %3430 = vmatpush.msra.mxu0 %v349
    %3431 = vmatpush.msra.mxu0 %v346
    %3432 = vmatpush.msra.mxu0 %v343
    %3433 = vmatpush.msra.mxu0 %v340
    %3434 = vmatpush.msra.mxu0 %v337
    %3435 = vmatpush.msra.mxu0 %v334
    %3436 = vmatpush.msra.mxu0 %v331
    %3437 = vmatpush.msra.mxu0 %v328
    %3438 = vmatpush.msra.mxu0 %v325
    %3439 = vmatpush.msra.mxu0 %v322
    %3440 = vmatpush.msra.mxu0 %v319
    %3441 = vmatpush.msra.mxu0 %v316
    %3442 = vmatpush.msra.mxu0 %v313
    %3443 = vmatpush.msra.mxu0 %v310
    %3444 = vmatpush.msra.mxu0 %v307
    %3445 = vmatmul.f32.gmra.mxu0 %v3368
    %v3446 = vpop.f32.mrf.mxu0
    %v3447 = vadd.f32 %v3427, %v3446
    %3448 = vdwg.mxu0
    %3449 = vmatpush.msra.mxu0 %v209
    %3450 = vmatpush.msra.mxu0 %v206
    %3451 = vmatpush.msra.mxu0 %v203
    %3452 = vmatpush.msra.mxu0 %v200
    %3453 = vmatpush.msra.mxu0 %v197
    %3454 = vmatpush.msra.mxu0 %v194
    %3455 = vmatpush.msra.mxu0 %v191
    %3456 = vmatpush.msra.mxu0 %v188
    %3457 = vmatpush.msra.mxu0 %v185
    %3458 = vmatpush.msra.mxu0 %v182
    %3459 = vmatpush.msra.mxu0 %v179
    %3460 = vmatpush.msra.mxu0 %v176
    %3461 = vmatpush.msra.mxu0 %v173
    %3462 = vmatpush.msra.mxu0 %v170
    %3463 = vmatpush.msra.mxu0 %v167
    %3464 = vmatpush.msra.mxu0 %v164
    %3465 = vmatmul.f32.gmra.mxu0 %v3365
    %v3466 = vpop.f32.mrf.mxu0
    %v3467 = vadd.f32 %v358, %v3466
    %3468 = vdwg.mxu0
    %3469 = vmatpush.msra.mxu0 %v257
    %3470 = vmatpush.msra.mxu0 %v254
    %3471 = vmatpush.msra.mxu0 %v251
    %3472 = vmatpush.msra.mxu0 %v248
    %3473 = vmatpush.msra.mxu0 %v245
    %3474 = vmatpush.msra.mxu0 %v242
    %3475 = vmatpush.msra.mxu0 %v239
    %3476 = vmatpush.msra.mxu0 %v236
    %3477 = vmatpush.msra.mxu0 %v233
    %3478 = vmatpush.msra.mxu0 %v230
    %3479 = vmatpush.msra.mxu0 %v227
    %3480 = vmatpush.msra.mxu0 %v224
    %3481 = vmatpush.msra.mxu0 %v221
    %3482 = vmatpush.msra.mxu0 %v218
    %3483 = vmatpush.msra.mxu0 %v215
    %3484 = vmatpush.msra.mxu0 %v212
    %3485 = vmatmul.f32.gmra.mxu0 %v3366
    %v3486 = vpop.f32.mrf.mxu0
    %v3487 = vadd.f32 %v3467, %v3486
    %3488 = vdwg.mxu0
    %3489 = vmatpush.msra.mxu0 %v305
    %3490 = vmatpush.msra.mxu0 %v302
    %3491 = vmatpush.msra.mxu0 %v299
    %3492 = vmatpush.msra.mxu0 %v296
    %3493 = vmatpush.msra.mxu0 %v293
    %3494 = vmatpush.msra.mxu0 %v290
    %3495 = vmatpush.msra.mxu0 %v287
    %3496 = vmatpush.msra.mxu0 %v284
    %3497 = vmatpush.msra.mxu0 %v281
    %3498 = vmatpush.msra.mxu0 %v278
    %3499 = vmatpush.msra.mxu0 %v275
    %3500 = vmatpush.msra.mxu0 %v272
    %3501 = vmatpush.msra.mxu0 %v269
    %3502 = vmatpush.msra.mxu0 %v266
    %3503 = vmatpush.msra.mxu0 %v263
    %3504 = vmatpush.msra.mxu0 %v260
    %3505 = vmatmul.f32.gmra.mxu0 %v3367
    %v3506 = vpop.f32.mrf.mxu0
    %v3507 = vadd.f32 %v3487, %v3506
    %3508 = vdwg.mxu0
    %3509 = vmatpush.msra.mxu0 %v353
    %3510 = vmatpush.msra.mxu0 %v350
    %3511 = vmatpush.msra.mxu0 %v347
    %3512 = vmatpush.msra.mxu0 %v344
    %3513 = vmatpush.msra.mxu0 %v341
    %3514 = vmatpush.msra.mxu0 %v338
    %3515 = vmatpush.msra.mxu0 %v335
    %3516 = vmatpush.msra.mxu0 %v332
    %3517 = vmatpush.msra.mxu0 %v329
    %3518 = vmatpush.msra.mxu0 %v326
    %3519 = vmatpush.msra.mxu0 %v323
    %3520 = vmatpush.msra.mxu0 %v320
    %3521 = vmatpush.msra.mxu0 %v317
    %3522 = vmatpush.msra.mxu0 %v314
    %3523 = vmatpush.msra.mxu0 %v311
    %3524 = vmatpush.msra.mxu0 %v308
    %3525 = vmatmul.f32.gmra.mxu0 %v3368
    %v3526 = vpop.f32.mrf.mxu0
    %v3527 = vadd.f32 %v3507, %v3526
    %3528 = vdwg.mxu0
    %3529 = vmatpush.msra.mxu0 %v210
    %3530 = vmatpush.msra.mxu0 %v207
    %3531 = vmatpush.msra.mxu0 %v204
    %3532 = vmatpush.msra.mxu0 %v201
    %3533 = vmatpush.msra.mxu0 %v198
    %3534 = vmatpush.msra.mxu0 %v195
    %3535 = vmatpush.msra.mxu0 %v192
    %3536 = vmatpush.msra.mxu0 %v189
    %3537 = vmatpush.msra.mxu0 %v186
    %3538 = vmatpush.msra.mxu0 %v183
    %3539 = vmatpush.msra.mxu0 %v180
    %3540 = vmatpush.msra.mxu0 %v177
    %3541 = vmatpush.msra.mxu0 %v174
    %3542 = vmatpush.msra.mxu0 %v171
    %3543 = vmatpush.msra.mxu0 %v168
    %3544 = vmatpush.msra.mxu0 %v165
    %3545 = vmatmul.f32.gmra.mxu0 %v3365
    %v3546 = vpop.f32.mrf.mxu0
    %v3547 = vadd.f32 %v359, %v3546
    %3548 = vdwg.mxu0
    %3549 = vmatpush.msra.mxu0 %v258
    %3550 = vmatpush.msra.mxu0 %v255
    %3551 = vmatpush.msra.mxu0 %v252
    %3552 = vmatpush.msra.mxu0 %v249
    %3553 = vmatpush.msra.mxu0 %v246
    %3554 = vmatpush.msra.mxu0 %v243
    %3555 = vmatpush.msra.mxu0 %v240
    %3556 = vmatpush.msra.mxu0 %v237
    %3557 = vmatpush.msra.mxu0 %v234
    %3558 = vmatpush.msra.mxu0 %v231
    %3559 = vmatpush.msra.mxu0 %v228
    %3560 = vmatpush.msra.mxu0 %v225
    %3561 = vmatpush.msra.mxu0 %v222
    %3562 = vmatpush.msra.mxu0 %v219
    %3563 = vmatpush.msra.mxu0 %v216
    %3564 = vmatpush.msra.mxu0 %v213
    %3565 = vmatmul.f32.gmra.mxu0 %v3366
    %v3566 = vpop.f32.mrf.mxu0
    %v3567 = vadd.f32 %v3547, %v3566
    %3568 = vdwg.mxu0
    %3569 = vmatpush.msra.mxu0 %v306
    %3570 = vmatpush.msra.mxu0 %v303
    %3571 = vmatpush.msra.mxu0 %v300
    %3572 = vmatpush.msra.mxu0 %v297
    %3573 = vmatpush.msra.mxu0 %v294
    %3574 = vmatpush.msra.mxu0 %v291
    %3575 = vmatpush.msra.mxu0 %v288
    %3576 = vmatpush.msra.mxu0 %v285
    %3577 = vmatpush.msra.mxu0 %v282
    %3578 = vmatpush.msra.mxu0 %v279
    %3579 = vmatpush.msra.mxu0 %v276
    %3580 = vmatpush.msra.mxu0 %v273
    %3581 = vmatpush.msra.mxu0 %v270
    %3582 = vmatpush.msra.mxu0 %v267
    %3583 = vmatpush.msra.mxu0 %v264
    %3584 = vmatpush.msra.mxu0 %v261
    %3585 = vmatmul.f32.gmra.mxu0 %v3367
    %v3586 = vpop.f32.mrf.mxu0
    %v3587 = vadd.f32 %v3567, %v3586
    %3588 = vdwg.mxu0
    %3589 = vmatpush.msra.mxu0 %v354
    %3590 = vmatpush.msra.mxu0 %v351
    %3591 = vmatpush.msra.mxu0 %v348
    %3592 = vmatpush.msra.mxu0 %v345
    %3593 = vmatpush.msra.mxu0 %v342
    %3594 = vmatpush.msra.mxu0 %v339
    %3595 = vmatpush.msra.mxu0 %v336
    %3596 = vmatpush.msra.mxu0 %v333
    %3597 = vmatpush.msra.mxu0 %v330
    %3598 = vmatpush.msra.mxu0 %v327
    %3599 = vmatpush.msra.mxu0 %v324
    %3600 = vmatpush.msra.mxu0 %v321
    %3601 = vmatpush.msra.mxu0 %v318
    %3602 = vmatpush.msra.mxu0 %v315
    %3603 = vmatpush.msra.mxu0 %v312
    %3604 = vmatpush.msra.mxu0 %v309
    %3605 = vmatmul.f32.gmra.mxu0 %v3368
    %v3606 = vpop.f32.mrf.mxu0
    %v3607 = vadd.f32 %v3587, %v3606
    %3608 = vdwg.mxu0
    %v3609 = vtanh.pop %v3447
    %v3610 = vtanh.pop %v3527
    %v3611 = vtanh.pop %v3607
    %3612 = vmatpush.msra.mxu0 %v621
    %3613 = vmatpush.msra.mxu0 %v620
    %3614 = vmatpush.msra.mxu0 %v619
    %3615 = vmatpush.msra.mxu0 %v618
    %3616 = vmatpush.msra.mxu0 %v617
    %3617 = vmatpush.msra.mxu0 %v616
    %3618 = vmatpush.msra.mxu0 %v615
    %3619 = vmatpush.msra.mxu0 %v614
    %3620 = vmatpush.msra.mxu0 %v613
    %3621 = vmatpush.msra.mxu0 %v612
    %3622 = vmatpush.msra.mxu0 %v611
    %3623 = vmatpush.msra.mxu0 %v610
    %3624 = vmatpush.msra.mxu0 %v609
    %3625 = vmatpush.msra.mxu0 %v608
    %3626 = vmatpush.msra.mxu0 %v607
    %3627 = vmatpush.msra.mxu0 %v606
    %3628 = vmatmul.f32.gmra.mxu0 %v3609
    %v3629 = vpop.f32.mrf.mxu0
    %v3630 = vadd.f32 %v656, %v3629
    %3631 = vdwg.mxu0
    %3632 = vmatpush.msra.mxu0 %v637
    %3633 = vmatpush.msra.mxu0 %v636
    %3634 = vmatpush.msra.mxu0 %v635
    %3635 = vmatpush.msra.mxu0 %v634
    %3636 = vmatpush.msra.mxu0 %v633
    %3637 = vmatpush.msra.mxu0 %v632
    %3638 = vmatpush.msra.mxu0 %v631
    %3639 = vmatpush.msra.mxu0 %v630
    %3640 = vmatpush.msra.mxu0 %v629
    %3641 = vmatpush.msra.mxu0 %v628
    %3642 = vmatpush.msra.mxu0 %v627
    %3643 = vmatpush.msra.mxu0 %v626
    %3644 = vmatpush.msra.mxu0 %v625
    %3645 = vmatpush.msra.mxu0 %v624
    %3646 = vmatpush.msra.mxu0 %v623
    %3647 = vmatpush.msra.mxu0 %v622
    %3648 = vmatmul.f32.gmra.mxu0 %v3610
    %v3649 = vpop.f32.mrf.mxu0
    %v3650 = vadd.f32 %v3630, %v3649
    %3651 = vdwg.mxu0
    %3652 = vmatpush.msra.mxu0 %v653
    %3653 = vmatpush.msra.mxu0 %v652
    %3654 = vmatpush.msra.mxu0 %v651
    %3655 = vmatpush.msra.mxu0 %v650
    %3656 = vmatpush.msra.mxu0 %v649
    %3657 = vmatpush.msra.mxu0 %v648
    %3658 = vmatpush.msra.mxu0 %v647
    %3659 = vmatpush.msra.mxu0 %v646
    %3660 = vmatpush.msra.mxu0 %v645
    %3661 = vmatpush.msra.mxu0 %v644
    %3662 = vmatpush.msra.mxu0 %v643
    %3663 = vmatpush.msra.mxu0 %v642
    %3664 = vmatpush.msra.mxu0 %v641
    %3665 = vmatpush.msra.mxu0 %v640
    %3666 = vmatpush.msra.mxu0 %v639
    %3667 = vmatpush.msra.mxu0 %v638
    %3668 = vmatmul.f32.gmra.mxu0 %v3611
    %v3669 = vpop.f32.mrf.mxu0
    %v3670 = vadd.f32 %v3650, %v3669
    %3671 = vdwg.mxu0
    %3672 = vmatpush.msra.mxu0 %v2017
    %3673 = vmatpush.msra.mxu0 %v2014
    %3674 = vmatpush.msra.mxu0 %v2011
    %3675 = vmatpush.msra.mxu0 %v2008
    %3676 = vmatpush.msra.mxu0 %v2005
    %3677 = vmatpush.msra.mxu0 %v2002
    %3678 = vmatpush.msra.mxu0 %v1999
    %3679 = vmatpush.msra.mxu0 %v1996
    %3680 = vmatpush.msra.mxu0 %v1993
    %3681 = vmatpush.msra.mxu0 %v1990
    %3682 = vmatpush.msra.mxu0 %v1987
    %3683 = vmatpush.msra.mxu0 %v1984
    %3684 = vmatpush.msra.mxu0 %v1981
    %3685 = vmatpush.msra.mxu0 %v1978
    %3686 = vmatpush.msra.mxu0 %v1975
    %3687 = vmatpush.msra.mxu0 %v1972
    %3688 = vmatmul.f32.gmra.mxu0 %v3670
    %v3689 = vpop.f32.mrf.mxu0
    %v3690 = vadd.f32 0.0, %v3689
    %3691 = vdwg.mxu0
    %3692 = vmatpush.msra.mxu0 %v2018
    %3693 = vmatpush.msra.mxu0 %v2015
    %3694 = vmatpush.msra.mxu0 %v2012
    %3695 = vmatpush.msra.mxu0 %v2009
    %3696 = vmatpush.msra.mxu0 %v2006
    %3697 = vmatpush.msra.mxu0 %v2003
    %3698 = vmatpush.msra.mxu0 %v2000
    %3699 = vmatpush.msra.mxu0 %v1997
    %3700 = vmatpush.msra.mxu0 %v1994
    %3701 = vmatpush.msra.mxu0 %v1991
    %3702 = vmatpush.msra.mxu0 %v1988
    %3703 = vmatpush.msra.mxu0 %v1985
    %3704 = vmatpush.msra.mxu0 %v1982
    %3705 = vmatpush.msra.mxu0 %v1979
    %3706 = vmatpush.msra.mxu0 %v1976
    %3707 = vmatpush.msra.mxu0 %v1973
    %3708 = vmatmul.f32.gmra.mxu0 %v3670
    %v3709 = vpop.f32.mrf.mxu0
    %v3710 = vadd.f32 0.0, %v3709
    %3711 = vdwg.mxu0
    %3712 = vmatpush.msra.mxu0 %v2019
    %3713 = vmatpush.msra.mxu0 %v2016
    %3714 = vmatpush.msra.mxu0 %v2013
    %3715 = vmatpush.msra.mxu0 %v2010
    %3716 = vmatpush.msra.mxu0 %v2007
    %3717 = vmatpush.msra.mxu0 %v2004
    %3718 = vmatpush.msra.mxu0 %v2001
    %3719 = vmatpush.msra.mxu0 %v1998
    %3720 = vmatpush.msra.mxu0 %v1995
    %3721 = vmatpush.msra.mxu0 %v1992
    %3722 = vmatpush.msra.mxu0 %v1989
    %3723 = vmatpush.msra.mxu0 %v1986
    %3724 = vmatpush.msra.mxu0 %v1983
    %3725 = vmatpush.msra.mxu0 %v1980
    %3726 = vmatpush.msra.mxu0 %v1977
    %3727 = vmatpush.msra.mxu0 %v1974
    %3728 = vmatmul.f32.gmra.mxu0 %v3670
    %v3729 = vpop.f32.mrf.mxu0
    %v3730 = vadd.f32 0.0, %v3729
    %3731 = vdwg.mxu0
    %v3732 = vadd.f32 %v3361, %v3690
    %v3733 = vadd.f32 %v3362, %v3710
    %v3734 = vadd.f32 %v3363, %v3730
    %v3735 = vadd.f32 %v3732, %v2085
    %v3736 = vadd.f32 %v3733, %v2086
    %v3737 = vadd.f32 %v3734, %v2087
    %v3738 = vtanh.pop %v3735
    %v3739 = vtanh.pop %v3736
    %v3740 = vtanh.pop %v3737
    %3741 = vmatpush.msra.mxu0 %v2112
    %3742 = vmatpush.msra.mxu0 %v2111
    %3743 = vmatpush.msra.mxu0 %v2110
    %3744 = vmatpush.msra.mxu0 %v2109
    %3745 = vmatpush.msra.mxu0 %v2108
    %3746 = vmatpush.msra.mxu0 %v2107
    %3747 = vmatpush.msra.mxu0 %v2106
    %3748 = vmatpush.msra.mxu0 %v2105
    %3749 = vmatpush.msra.mxu0 %v2104
    %3750 = vmatpush.msra.mxu0 %v2103
    %3751 = vmatpush.msra.mxu0 %v2102
    %3752 = vmatpush.msra.mxu0 %v2101
    %3753 = vmatpush.msra.mxu0 %v2100
    %3754 = vmatpush.msra.mxu0 %v2099
    %3755 = vmatpush.msra.mxu0 %v2098
    %3756 = vmatpush.msra.mxu0 %v2097
    %3757 = vmatmul.f32.gmra.mxu0 %v3738
    %v3758 = vpop.f32.mrf.mxu0
    %v3759 = vadd.f32 %v2147, %v3758
    %3760 = vdwg.mxu0
    %3761 = vmatpush.msra.mxu0 %v2128
    %3762 = vmatpush.msra.mxu0 %v2127
    %3763 = vmatpush.msra.mxu0 %v2126
    %3764 = vmatpush.msra.mxu0 %v2125
    %3765 = vmatpush.msra.mxu0 %v2124
    %3766 = vmatpush.msra.mxu0 %v2123
    %3767 = vmatpush.msra.mxu0 %v2122
    %3768 = vmatpush.msra.mxu0 %v2121
    %3769 = vmatpush.msra.mxu0 %v2120
    %3770 = vmatpush.msra.mxu0 %v2119
    %3771 = vmatpush.msra.mxu0 %v2118
    %3772 = vmatpush.msra.mxu0 %v2117
    %3773 = vmatpush.msra.mxu0 %v2116
    %3774 = vmatpush.msra.mxu0 %v2115
    %3775 = vmatpush.msra.mxu0 %v2114
    %3776 = vmatpush.msra.mxu0 %v2113
    %3777 = vmatmul.f32.gmra.mxu0 %v3739
    %v3778 = vpop.f32.mrf.mxu0
    %v3779 = vadd.f32 %v3759, %v3778
    %3780 = vdwg.mxu0
    %3781 = vmatpush.msra.mxu0 %v2144
    %3782 = vmatpush.msra.mxu0 %v2143
    %3783 = vmatpush.msra.mxu0 %v2142
    %3784 = vmatpush.msra.mxu0 %v2141
    %3785 = vmatpush.msra.mxu0 %v2140
    %3786 = vmatpush.msra.mxu0 %v2139
    %3787 = vmatpush.msra.mxu0 %v2138
    %3788 = vmatpush.msra.mxu0 %v2137
    %3789 = vmatpush.msra.mxu0 %v2136
    %3790 = vmatpush.msra.mxu0 %v2135
    %3791 = vmatpush.msra.mxu0 %v2134
    %3792 = vmatpush.msra.mxu0 %v2133
    %3793 = vmatpush.msra.mxu0 %v2132
    %3794 = vmatpush.msra.mxu0 %v2131
    %3795 = vmatpush.msra.mxu0 %v2130
    %3796 = vmatpush.msra.mxu0 %v2129
    %3797 = vmatmul.f32.gmra.mxu0 %v3740
    %v3798 = vpop.f32.mrf.mxu0
    %v3799 = vadd.f32 %v3779, %v3798
    %3800 = vdwg.mxu0
    %s3801 = scalar_lea.vmem [#allocation10], 384
    %v3802 = vld [vmem:[%s3801] sm:$0xff]
    %v3803 = vld [vmem:[%s3801 + $0x8] sm:$0xff]
    %v3804 = vld [vmem:[%s3801 + $0x10] sm:$0xff]
    %v3805 = vld [vmem:[%s3801 + $0x18] sm:$0xff]
    %v3806 = vld [vmem:[%s3801 + $0x20] sm:$0xff]
    %v3807 = vld [vmem:[%s3801 + $0x28] sm:$0xff]
    %v3808 = vld [vmem:[%s3801 + $0x30] sm:$0xff]
    %v3809 = vld [vmem:[%s3801 + $0x38] sm:$0xff]
    %v3810 = vld [vmem:[%s3801 + $0x40] sm:$0xff]
    %v3811 = vld [vmem:[%s3801 + $0x48] sm:$0xff]
    %v3812 = vld [vmem:[%s3801 + $0x50] sm:$0xff]
    %v3813 = vld [vmem:[%s3801 + $0x58] sm:$0xff]
    %v3814 = vld [vmem:[%s3801 + $0x60] sm:$0xff]
    %v3815 = vld [vmem:[%s3801 + $0x68] sm:$0xff]
    %v3816 = vld [vmem:[%s3801 + $0x70] sm:$0xff]
    %v3817 = vld [vmem:[%s3801 + $0x78] sm:$0xff]
    %v3818 = vld [vmem:[%s3801 + $0x80] sm:$0xff]
    %v3819 = vld [vmem:[%s3801 + $0x88] sm:$0xff]
    %v3820 = vld [vmem:[%s3801 + $0x90] sm:$0xff]
    %v3821 = vld [vmem:[%s3801 + $0x98] sm:$0xff]
    %v3822 = vld [vmem:[%s3801 + $0xa0] sm:$0xff]
    %v3823 = vld [vmem:[%s3801 + $0xa8] sm:$0xff]
    %v3824 = vld [vmem:[%s3801 + $0xb0] sm:$0xff]
    %v3825 = vld [vmem:[%s3801 + $0xb8] sm:$0xff]
    %v3826 = vld [vmem:[%s3801 + $0xc0] sm:$0xff]
    %v3827 = vld [vmem:[%s3801 + $0xc8] sm:$0xff]
    %v3828 = vld [vmem:[%s3801 + $0xd0] sm:$0xff]
    %v3829 = vld [vmem:[%s3801 + $0xd8] sm:$0xff]
    %v3830 = vld [vmem:[%s3801 + $0xe0] sm:$0xff]
    %v3831 = vld [vmem:[%s3801 + $0xe8] sm:$0xff]
    %v3832 = vld [vmem:[%s3801 + $0xf0] sm:$0xff]
    %v3833 = vld [vmem:[%s3801 + $0xf8] sm:$0xff]
    %v3834 = vld [vmem:[%s3801 + $0x100] sm:$0xff]
    %v3835 = vld [vmem:[%s3801 + $0x108] sm:$0xff]
    %v3836 = vld [vmem:[%s3801 + $0x110] sm:$0xff]
    %v3837 = vld [vmem:[%s3801 + $0x118] sm:$0xff]
    %v3838 = vld [vmem:[%s3801 + $0x120] sm:$0xff]
    %v3839 = vld [vmem:[%s3801 + $0x128] sm:$0xff]
    %v3840 = vld [vmem:[%s3801 + $0x130] sm:$0xff]
    %v3841 = vld [vmem:[%s3801 + $0x138] sm:$0xff]
    %v3842 = vld [vmem:[%s3801 + $0x140] sm:$0xff]
    %v3843 = vld [vmem:[%s3801 + $0x148] sm:$0xff]
    %v3844 = vld [vmem:[%s3801 + $0x150] sm:$0xff]
    %v3845 = vld [vmem:[%s3801 + $0x158] sm:$0xff]
    %v3846 = vld [vmem:[%s3801 + $0x160] sm:$0xff]
    %v3847 = vld [vmem:[%s3801 + $0x168] sm:$0xff]
    %v3848 = vld [vmem:[%s3801 + $0x170] sm:$0xff]
    %v3849 = vld [vmem:[%s3801 + $0x178] sm:$0xff]
    %3850 = vmatpush.msra.mxu0 %v3847
    %3851 = vmatpush.msra.mxu0 %v3844
    %3852 = vmatpush.msra.mxu0 %v3841
    %3853 = vmatpush.msra.mxu0 %v3838
    %3854 = vmatpush.msra.mxu0 %v3835
    %3855 = vmatpush.msra.mxu0 %v3832
    %3856 = vmatpush.msra.mxu0 %v3829
    %3857 = vmatpush.msra.mxu0 %v3826
    %3858 = vmatpush.msra.mxu0 %v3823
    %3859 = vmatpush.msra.mxu0 %v3820
    %3860 = vmatpush.msra.mxu0 %v3817
    %3861 = vmatpush.msra.mxu0 %v3814
    %3862 = vmatpush.msra.mxu0 %v3811
    %3863 = vmatpush.msra.mxu0 %v3808
    %3864 = vmatpush.msra.mxu0 %v3805
    %3865 = vmatpush.msra.mxu0 %v3802
    %3866 = vmatmul.f32.gmra.mxu0 %v3799
    %v3867 = vpop.f32.mrf.mxu0
    %v3868 = vadd.f32 0.0, %v3867
    %3869 = vdwg.mxu0
    %3870 = vmatpush.msra.mxu0 %v3848
    %3871 = vmatpush.msra.mxu0 %v3845
    %3872 = vmatpush.msra.mxu0 %v3842
    %3873 = vmatpush.msra.mxu0 %v3839
    %3874 = vmatpush.msra.mxu0 %v3836
    %3875 = vmatpush.msra.mxu0 %v3833
    %3876 = vmatpush.msra.mxu0 %v3830
    %3877 = vmatpush.msra.mxu0 %v3827
    %3878 = vmatpush.msra.mxu0 %v3824
    %3879 = vmatpush.msra.mxu0 %v3821
    %3880 = vmatpush.msra.mxu0 %v3818
    %3881 = vmatpush.msra.mxu0 %v3815
    %3882 = vmatpush.msra.mxu0 %v3812
    %3883 = vmatpush.msra.mxu0 %v3809
    %3884 = vmatpush.msra.mxu0 %v3806
    %3885 = vmatpush.msra.mxu0 %v3803
    %3886 = vmatmul.f32.gmra.mxu0 %v3799
    %v3887 = vpop.f32.mrf.mxu0
    %v3888 = vadd.f32 0.0, %v3887
    %3889 = vdwg.mxu0
    %3890 = vmatpush.msra.mxu0 %v3849
    %3891 = vmatpush.msra.mxu0 %v3846
    %3892 = vmatpush.msra.mxu0 %v3843
    %3893 = vmatpush.msra.mxu0 %v3840
    %3894 = vmatpush.msra.mxu0 %v3837
    %3895 = vmatpush.msra.mxu0 %v3834
    %3896 = vmatpush.msra.mxu0 %v3831
    %3897 = vmatpush.msra.mxu0 %v3828
    %3898 = vmatpush.msra.mxu0 %v3825
    %3899 = vmatpush.msra.mxu0 %v3822
    %3900 = vmatpush.msra.mxu0 %v3819
    %3901 = vmatpush.msra.mxu0 %v3816
    %3902 = vmatpush.msra.mxu0 %v3813
    %3903 = vmatpush.msra.mxu0 %v3810
    %3904 = vmatpush.msra.mxu0 %v3807
    %3905 = vmatpush.msra.mxu0 %v3804
    %3906 = vmatmul.f32.gmra.mxu0 %v3799
    %v3907 = vpop.f32.mrf.mxu0
    %v3908 = vadd.f32 0.0, %v3907
    %3909 = vdwg.mxu0
    %3910 = vmatpush.msra.mxu0 %v2254
    %3911 = vmatpush.msra.mxu0 %v2251
    %3912 = vmatpush.msra.mxu0 %v2248
    %3913 = vmatpush.msra.mxu0 %v2245
    %3914 = vmatpush.msra.mxu0 %v2242
    %3915 = vmatpush.msra.mxu0 %v2239
    %3916 = vmatpush.msra.mxu0 %v2236
    %3917 = vmatpush.msra.mxu0 %v2233
    %3918 = vmatpush.msra.mxu0 %v2230
    %3919 = vmatpush.msra.mxu0 %v2227
    %3920 = vmatpush.msra.mxu0 %v2224
    %3921 = vmatpush.msra.mxu0 %v2221
    %3922 = vmatpush.msra.mxu0 %v2218
    %3923 = vmatpush.msra.mxu0 %v2215
    %3924 = vmatpush.msra.mxu0 %v2212
    %3925 = vmatpush.msra.mxu0 %v2209
    %3926 = vmatmul.f32.gmra.mxu0 %v2207
    %v3927 = vpop.f32.mrf.mxu0
    %v3928 = vadd.f32 %v3868, %v3927
    %3929 = vdwg.mxu0
    %3930 = vmatpush.msra.mxu0 %v2255
    %3931 = vmatpush.msra.mxu0 %v2252
    %3932 = vmatpush.msra.mxu0 %v2249
    %3933 = vmatpush.msra.mxu0 %v2246
    %3934 = vmatpush.msra.mxu0 %v2243
    %3935 = vmatpush.msra.mxu0 %v2240
    %3936 = vmatpush.msra.mxu0 %v2237
    %3937 = vmatpush.msra.mxu0 %v2234
    %3938 = vmatpush.msra.mxu0 %v2231
    %3939 = vmatpush.msra.mxu0 %v2228
    %3940 = vmatpush.msra.mxu0 %v2225
    %3941 = vmatpush.msra.mxu0 %v2222
    %3942 = vmatpush.msra.mxu0 %v2219
    %3943 = vmatpush.msra.mxu0 %v2216
    %3944 = vmatpush.msra.mxu0 %v2213
    %3945 = vmatpush.msra.mxu0 %v2210
    %3946 = vmatmul.f32.gmra.mxu0 %v2207
    %v3947 = vpop.f32.mrf.mxu0
    %v3948 = vadd.f32 %v3888, %v3947
    %3949 = vdwg.mxu0
    %3950 = vmatpush.msra.mxu0 %v2256
    %3951 = vmatpush.msra.mxu0 %v2253
    %3952 = vmatpush.msra.mxu0 %v2250
    %3953 = vmatpush.msra.mxu0 %v2247
    %3954 = vmatpush.msra.mxu0 %v2244
    %3955 = vmatpush.msra.mxu0 %v2241
    %3956 = vmatpush.msra.mxu0 %v2238
    %3957 = vmatpush.msra.mxu0 %v2235
    %3958 = vmatpush.msra.mxu0 %v2232
    %3959 = vmatpush.msra.mxu0 %v2229
    %3960 = vmatpush.msra.mxu0 %v2226
    %3961 = vmatpush.msra.mxu0 %v2223
    %3962 = vmatpush.msra.mxu0 %v2220
    %3963 = vmatpush.msra.mxu0 %v2217
    %3964 = vmatpush.msra.mxu0 %v2214
    %3965 = vmatpush.msra.mxu0 %v2211
    %3966 = vmatmul.f32.gmra.mxu0 %v2207
    %v3967 = vpop.f32.mrf.mxu0
    %v3968 = vadd.f32 %v3908, %v3967
    %3969 = vdwg.mxu0
    %s3970 = scalar_lea.vmem %s0, 256
    %v3971 = vld [vmem:[%s3970] sm:$0xff]
    %v3972 = vld [vmem:[%s3970 + $0x8] sm:$0xff]
    %v3973 = vld [vmem:[%s3970 + $0x10] sm:$0xff]
    %v3974 = vld [vmem:[%s3970 + $0x18] sm:$0xff]
    %3975 = vmatpush.msra.mxu0 %v208
    %3976 = vmatpush.msra.mxu0 %v205
    %3977 = vmatpush.msra.mxu0 %v202
    %3978 = vmatpush.msra.mxu0 %v199
    %3979 = vmatpush.msra.mxu0 %v196
    %3980 = vmatpush.msra.mxu0 %v193
    %3981 = vmatpush.msra.mxu0 %v190
    %3982 = vmatpush.msra.mxu0 %v187
    %3983 = vmatpush.msra.mxu0 %v184
    %3984 = vmatpush.msra.mxu0 %v181
    %3985 = vmatpush.msra.mxu0 %v178
    %3986 = vmatpush.msra.mxu0 %v175
    %3987 = vmatpush.msra.mxu0 %v172
    %3988 = vmatpush.msra.mxu0 %v169
    %3989 = vmatpush.msra.mxu0 %v166
    %3990 = vmatpush.msra.mxu0 %v163
    %3991 = vmatmul.f32.gmra.mxu0 %v3971
    %v3992 = vpop.f32.mrf.mxu0
    %v3993 = vadd.f32 %v357, %v3992
    %3994 = vdwg.mxu0
    %3995 = vmatpush.msra.mxu0 %v256
    %3996 = vmatpush.msra.mxu0 %v253
    %3997 = vmatpush.msra.mxu0 %v250
    %3998 = vmatpush.msra.mxu0 %v247
    %3999 = vmatpush.msra.mxu0 %v244
    %4000 = vmatpush.msra.mxu0 %v241
    %4001 = vmatpush.msra.mxu0 %v238
    %4002 = vmatpush.msra.mxu0 %v235
    %4003 = vmatpush.msra.mxu0 %v232
    %4004 = vmatpush.msra.mxu0 %v229
    %4005 = vmatpush.msra.mxu0 %v226
    %4006 = vmatpush.msra.mxu0 %v223
    %4007 = vmatpush.msra.mxu0 %v220
    %4008 = vmatpush.msra.mxu0 %v217
    %4009 = vmatpush.msra.mxu0 %v214
    %4010 = vmatpush.msra.mxu0 %v211
    %4011 = vmatmul.f32.gmra.mxu0 %v3972
    %v4012 = vpop.f32.mrf.mxu0
    %v4013 = vadd.f32 %v3993, %v4012
    %4014 = vdwg.mxu0
    %4015 = vmatpush.msra.mxu0 %v304
    %4016 = vmatpush.msra.mxu0 %v301
    %4017 = vmatpush.msra.mxu0 %v298
    %4018 = vmatpush.msra.mxu0 %v295
    %4019 = vmatpush.msra.mxu0 %v292
    %4020 = vmatpush.msra.mxu0 %v289
    %4021 = vmatpush.msra.mxu0 %v286
    %4022 = vmatpush.msra.mxu0 %v283
    %4023 = vmatpush.msra.mxu0 %v280
    %4024 = vmatpush.msra.mxu0 %v277
    %4025 = vmatpush.msra.mxu0 %v274
    %4026 = vmatpush.msra.mxu0 %v271
    %4027 = vmatpush.msra.mxu0 %v268
    %4028 = vmatpush.msra.mxu0 %v265
    %4029 = vmatpush.msra.mxu0 %v262
    %4030 = vmatpush.msra.mxu0 %v259
    %4031 = vmatmul.f32.gmra.mxu0 %v3973
    %v4032 = vpop.f32.mrf.mxu0
    %v4033 = vadd.f32 %v4013, %v4032
    %4034 = vdwg.mxu0
    %4035 = vmatpush.msra.mxu0 %v352
    %4036 = vmatpush.msra.mxu0 %v349
    %4037 = vmatpush.msra.mxu0 %v346
    %4038 = vmatpush.msra.mxu0 %v343
    %4039 = vmatpush.msra.mxu0 %v340
    %4040 = vmatpush.msra.mxu0 %v337
    %4041 = vmatpush.msra.mxu0 %v334
    %4042 = vmatpush.msra.mxu0 %v331
    %4043 = vmatpush.msra.mxu0 %v328
    %4044 = vmatpush.msra.mxu0 %v325
    %4045 = vmatpush.msra.mxu0 %v322
    %4046 = vmatpush.msra.mxu0 %v319
    %4047 = vmatpush.msra.mxu0 %v316
    %4048 = vmatpush.msra.mxu0 %v313
    %4049 = vmatpush.msra.mxu0 %v310
    %4050 = vmatpush.msra.mxu0 %v307
    %4051 = vmatmul.f32.gmra.mxu0 %v3974
    %v4052 = vpop.f32.mrf.mxu0
    %v4053 = vadd.f32 %v4033, %v4052
    %4054 = vdwg.mxu0
    %4055 = vmatpush.msra.mxu0 %v209
    %4056 = vmatpush.msra.mxu0 %v206
    %4057 = vmatpush.msra.mxu0 %v203
    %4058 = vmatpush.msra.mxu0 %v200
    %4059 = vmatpush.msra.mxu0 %v197
    %4060 = vmatpush.msra.mxu0 %v194
    %4061 = vmatpush.msra.mxu0 %v191
    %4062 = vmatpush.msra.mxu0 %v188
    %4063 = vmatpush.msra.mxu0 %v185
    %4064 = vmatpush.msra.mxu0 %v182
    %4065 = vmatpush.msra.mxu0 %v179
    %4066 = vmatpush.msra.mxu0 %v176
    %4067 = vmatpush.msra.mxu0 %v173
    %4068 = vmatpush.msra.mxu0 %v170
    %4069 = vmatpush.msra.mxu0 %v167
    %4070 = vmatpush.msra.mxu0 %v164
    %4071 = vmatmul.f32.gmra.mxu0 %v3971
    %v4072 = vpop.f32.mrf.mxu0
    %v4073 = vadd.f32 %v358, %v4072
    %4074 = vdwg.mxu0
    %4075 = vmatpush.msra.mxu0 %v257
    %4076 = vmatpush.msra.mxu0 %v254
    %4077 = vmatpush.msra.mxu0 %v251
    %4078 = vmatpush.msra.mxu0 %v248
    %4079 = vmatpush.msra.mxu0 %v245
    %4080 = vmatpush.msra.mxu0 %v242
    %4081 = vmatpush.msra.mxu0 %v239
    %4082 = vmatpush.msra.mxu0 %v236
    %4083 = vmatpush.msra.mxu0 %v233
    %4084 = vmatpush.msra.mxu0 %v230
    %4085 = vmatpush.msra.mxu0 %v227
    %4086 = vmatpush.msra.mxu0 %v224
    %4087 = vmatpush.msra.mxu0 %v221
    %4088 = vmatpush.msra.mxu0 %v218
    %4089 = vmatpush.msra.mxu0 %v215
    %4090 = vmatpush.msra.mxu0 %v212
    %4091 = vmatmul.f32.gmra.mxu0 %v3972
    %v4092 = vpop.f32.mrf.mxu0
    %v4093 = vadd.f32 %v4073, %v4092
    %4094 = vdwg.mxu0
    %4095 = vmatpush.msra.mxu0 %v305
    %4096 = vmatpush.msra.mxu0 %v302
    %4097 = vmatpush.msra.mxu0 %v299
    %4098 = vmatpush.msra.mxu0 %v296
    %4099 = vmatpush.msra.mxu0 %v293
    %4100 = vmatpush.msra.mxu0 %v290
    %4101 = vmatpush.msra.mxu0 %v287
    %4102 = vmatpush.msra.mxu0 %v284
    %4103 = vmatpush.msra.mxu0 %v281
    %4104 = vmatpush.msra.mxu0 %v278
    %4105 = vmatpush.msra.mxu0 %v275
    %4106 = vmatpush.msra.mxu0 %v272
    %4107 = vmatpush.msra.mxu0 %v269
    %4108 = vmatpush.msra.mxu0 %v266
    %4109 = vmatpush.msra.mxu0 %v263
    %4110 = vmatpush.msra.mxu0 %v260
    %4111 = vmatmul.f32.gmra.mxu0 %v3973
    %v4112 = vpop.f32.mrf.mxu0
    %v4113 = vadd.f32 %v4093, %v4112
    %4114 = vdwg.mxu0
    %4115 = vmatpush.msra.mxu0 %v353
    %4116 = vmatpush.msra.mxu0 %v350
    %4117 = vmatpush.msra.mxu0 %v347
    %4118 = vmatpush.msra.mxu0 %v344
    %4119 = vmatpush.msra.mxu0 %v341
    %4120 = vmatpush.msra.mxu0 %v338
    %4121 = vmatpush.msra.mxu0 %v335
    %4122 = vmatpush.msra.mxu0 %v332
    %4123 = vmatpush.msra.mxu0 %v329
    %4124 = vmatpush.msra.mxu0 %v326
    %4125 = vmatpush.msra.mxu0 %v323
    %4126 = vmatpush.msra.mxu0 %v320
    %4127 = vmatpush.msra.mxu0 %v317
    %4128 = vmatpush.msra.mxu0 %v314
    %4129 = vmatpush.msra.mxu0 %v311
    %4130 = vmatpush.msra.mxu0 %v308
    %4131 = vmatmul.f32.gmra.mxu0 %v3974
    %v4132 = vpop.f32.mrf.mxu0
    %v4133 = vadd.f32 %v4113, %v4132
    %4134 = vdwg.mxu0
    %4135 = vmatpush.msra.mxu0 %v210
    %4136 = vmatpush.msra.mxu0 %v207
    %4137 = vmatpush.msra.mxu0 %v204
    %4138 = vmatpush.msra.mxu0 %v201
    %4139 = vmatpush.msra.mxu0 %v198
    %4140 = vmatpush.msra.mxu0 %v195
    %4141 = vmatpush.msra.mxu0 %v192
    %4142 = vmatpush.msra.mxu0 %v189
    %4143 = vmatpush.msra.mxu0 %v186
    %4144 = vmatpush.msra.mxu0 %v183
    %4145 = vmatpush.msra.mxu0 %v180
    %4146 = vmatpush.msra.mxu0 %v177
    %4147 = vmatpush.msra.mxu0 %v174
    %4148 = vmatpush.msra.mxu0 %v171
    %4149 = vmatpush.msra.mxu0 %v168
    %4150 = vmatpush.msra.mxu0 %v165
    %4151 = vmatmul.f32.gmra.mxu0 %v3971
    %v4152 = vpop.f32.mrf.mxu0
    %v4153 = vadd.f32 %v359, %v4152
    %4154 = vdwg.mxu0
    %4155 = vmatpush.msra.mxu0 %v258
    %4156 = vmatpush.msra.mxu0 %v255
    %4157 = vmatpush.msra.mxu0 %v252
    %4158 = vmatpush.msra.mxu0 %v249
    %4159 = vmatpush.msra.mxu0 %v246
    %4160 = vmatpush.msra.mxu0 %v243
    %4161 = vmatpush.msra.mxu0 %v240
    %4162 = vmatpush.msra.mxu0 %v237
    %4163 = vmatpush.msra.mxu0 %v234
    %4164 = vmatpush.msra.mxu0 %v231
    %4165 = vmatpush.msra.mxu0 %v228
    %4166 = vmatpush.msra.mxu0 %v225
    %4167 = vmatpush.msra.mxu0 %v222
    %4168 = vmatpush.msra.mxu0 %v219
    %4169 = vmatpush.msra.mxu0 %v216
    %4170 = vmatpush.msra.mxu0 %v213
    %4171 = vmatmul.f32.gmra.mxu0 %v3972
    %v4172 = vpop.f32.mrf.mxu0
    %v4173 = vadd.f32 %v4153, %v4172
    %4174 = vdwg.mxu0
    %4175 = vmatpush.msra.mxu0 %v306
    %4176 = vmatpush.msra.mxu0 %v303
    %4177 = vmatpush.msra.mxu0 %v300
    %4178 = vmatpush.msra.mxu0 %v297
    %4179 = vmatpush.msra.mxu0 %v294
    %4180 = vmatpush.msra.mxu0 %v291
    %4181 = vmatpush.msra.mxu0 %v288
    %4182 = vmatpush.msra.mxu0 %v285
    %4183 = vmatpush.msra.mxu0 %v282
    %4184 = vmatpush.msra.mxu0 %v279
    %4185 = vmatpush.msra.mxu0 %v276
    %4186 = vmatpush.msra.mxu0 %v273
    %4187 = vmatpush.msra.mxu0 %v270
    %4188 = vmatpush.msra.mxu0 %v267
    %4189 = vmatpush.msra.mxu0 %v264
    %4190 = vmatpush.msra.mxu0 %v261
    %4191 = vmatmul.f32.gmra.mxu0 %v3973
    %v4192 = vpop.f32.mrf.mxu0
    %v4193 = vadd.f32 %v4173, %v4192
    %4194 = vdwg.mxu0
    %4195 = vmatpush.msra.mxu0 %v354
    %4196 = vmatpush.msra.mxu0 %v351
    %4197 = vmatpush.msra.mxu0 %v348
    %4198 = vmatpush.msra.mxu0 %v345
    %4199 = vmatpush.msra.mxu0 %v342
    %4200 = vmatpush.msra.mxu0 %v339
    %4201 = vmatpush.msra.mxu0 %v336
    %4202 = vmatpush.msra.mxu0 %v333
    %4203 = vmatpush.msra.mxu0 %v330
    %4204 = vmatpush.msra.mxu0 %v327
    %4205 = vmatpush.msra.mxu0 %v324
    %4206 = vmatpush.msra.mxu0 %v321
    %4207 = vmatpush.msra.mxu0 %v318
    %4208 = vmatpush.msra.mxu0 %v315
    %4209 = vmatpush.msra.mxu0 %v312
    %4210 = vmatpush.msra.mxu0 %v309
    %4211 = vmatmul.f32.gmra.mxu0 %v3974
    %v4212 = vpop.f32.mrf.mxu0
    %v4213 = vadd.f32 %v4193, %v4212
    %4214 = vdwg.mxu0
    %v4215 = vtanh.pop %v4053
    %v4216 = vtanh.pop %v4133
    %v4217 = vtanh.pop %v4213
    %4218 = vmatpush.msra.mxu0 %v621
    %4219 = vmatpush.msra.mxu0 %v620
    %4220 = vmatpush.msra.mxu0 %v619
    %4221 = vmatpush.msra.mxu0 %v618
    %4222 = vmatpush.msra.mxu0 %v617
    %4223 = vmatpush.msra.mxu0 %v616
    %4224 = vmatpush.msra.mxu0 %v615
    %4225 = vmatpush.msra.mxu0 %v614
    %4226 = vmatpush.msra.mxu0 %v613
    %4227 = vmatpush.msra.mxu0 %v612
    %4228 = vmatpush.msra.mxu0 %v611
    %4229 = vmatpush.msra.mxu0 %v610
    %4230 = vmatpush.msra.mxu0 %v609
    %4231 = vmatpush.msra.mxu0 %v608
    %4232 = vmatpush.msra.mxu0 %v607
    %4233 = vmatpush.msra.mxu0 %v606
    %4234 = vmatmul.f32.gmra.mxu0 %v4215
    %v4235 = vpop.f32.mrf.mxu0
    %v4236 = vadd.f32 %v656, %v4235
    %4237 = vdwg.mxu0
    %4238 = vmatpush.msra.mxu0 %v637
    %4239 = vmatpush.msra.mxu0 %v636
    %4240 = vmatpush.msra.mxu0 %v635
    %4241 = vmatpush.msra.mxu0 %v634
    %4242 = vmatpush.msra.mxu0 %v633
    %4243 = vmatpush.msra.mxu0 %v632
    %4244 = vmatpush.msra.mxu0 %v631
    %4245 = vmatpush.msra.mxu0 %v630
    %4246 = vmatpush.msra.mxu0 %v629
    %4247 = vmatpush.msra.mxu0 %v628
    %4248 = vmatpush.msra.mxu0 %v627
    %4249 = vmatpush.msra.mxu0 %v626
    %4250 = vmatpush.msra.mxu0 %v625
    %4251 = vmatpush.msra.mxu0 %v624
    %4252 = vmatpush.msra.mxu0 %v623
    %4253 = vmatpush.msra.mxu0 %v622
    %4254 = vmatmul.f32.gmra.mxu0 %v4216
    %v4255 = vpop.f32.mrf.mxu0
    %v4256 = vadd.f32 %v4236, %v4255
    %4257 = vdwg.mxu0
    %4258 = vmatpush.msra.mxu0 %v653
    %4259 = vmatpush.msra.mxu0 %v652
    %4260 = vmatpush.msra.mxu0 %v651
    %4261 = vmatpush.msra.mxu0 %v650
    %4262 = vmatpush.msra.mxu0 %v649
    %4263 = vmatpush.msra.mxu0 %v648
    %4264 = vmatpush.msra.mxu0 %v647
    %4265 = vmatpush.msra.mxu0 %v646
    %4266 = vmatpush.msra.mxu0 %v645
    %4267 = vmatpush.msra.mxu0 %v644
    %4268 = vmatpush.msra.mxu0 %v643
    %4269 = vmatpush.msra.mxu0 %v642
    %4270 = vmatpush.msra.mxu0 %v641
    %4271 = vmatpush.msra.mxu0 %v640
    %4272 = vmatpush.msra.mxu0 %v639
    %4273 = vmatpush.msra.mxu0 %v638
    %4274 = vmatmul.f32.gmra.mxu0 %v4217
    %v4275 = vpop.f32.mrf.mxu0
    %v4276 = vadd.f32 %v4256, %v4275
    %4277 = vdwg.mxu0
    %s4278 = scalar_lea.vmem %s0, 288
    %v4279 = vld [vmem:[%s4278] sm:$0xff]
    %v4280 = vld [vmem:[%s4278 + $0x8] sm:$0xff]
    %v4281 = vld [vmem:[%s4278 + $0x10] sm:$0xff]
    %v4282 = vld [vmem:[%s4278 + $0x18] sm:$0xff]
    %4283 = vmatpush.msra.mxu0 %v208
    %4284 = vmatpush.msra.mxu0 %v205
    %4285 = vmatpush.msra.mxu0 %v202
    %4286 = vmatpush.msra.mxu0 %v199
    %4287 = vmatpush.msra.mxu0 %v196
    %4288 = vmatpush.msra.mxu0 %v193
    %4289 = vmatpush.msra.mxu0 %v190
    %4290 = vmatpush.msra.mxu0 %v187
    %4291 = vmatpush.msra.mxu0 %v184
    %4292 = vmatpush.msra.mxu0 %v181
    %4293 = vmatpush.msra.mxu0 %v178
    %4294 = vmatpush.msra.mxu0 %v175
    %4295 = vmatpush.msra.mxu0 %v172
    %4296 = vmatpush.msra.mxu0 %v169
    %4297 = vmatpush.msra.mxu0 %v166
    %4298 = vmatpush.msra.mxu0 %v163
    %4299 = vmatmul.f32.gmra.mxu0 %v4279
    %v4300 = vpop.f32.mrf.mxu0
    %v4301 = vadd.f32 %v357, %v4300
    %4302 = vdwg.mxu0
    %4303 = vmatpush.msra.mxu0 %v256
    %4304 = vmatpush.msra.mxu0 %v253
    %4305 = vmatpush.msra.mxu0 %v250
    %4306 = vmatpush.msra.mxu0 %v247
    %4307 = vmatpush.msra.mxu0 %v244
    %4308 = vmatpush.msra.mxu0 %v241
    %4309 = vmatpush.msra.mxu0 %v238
    %4310 = vmatpush.msra.mxu0 %v235
    %4311 = vmatpush.msra.mxu0 %v232
    %4312 = vmatpush.msra.mxu0 %v229
    %4313 = vmatpush.msra.mxu0 %v226
    %4314 = vmatpush.msra.mxu0 %v223
    %4315 = vmatpush.msra.mxu0 %v220
    %4316 = vmatpush.msra.mxu0 %v217
    %4317 = vmatpush.msra.mxu0 %v214
    %4318 = vmatpush.msra.mxu0 %v211
    %4319 = vmatmul.f32.gmra.mxu0 %v4280
    %v4320 = vpop.f32.mrf.mxu0
    %v4321 = vadd.f32 %v4301, %v4320
    %4322 = vdwg.mxu0
    %4323 = vmatpush.msra.mxu0 %v304
    %4324 = vmatpush.msra.mxu0 %v301
    %4325 = vmatpush.msra.mxu0 %v298
    %4326 = vmatpush.msra.mxu0 %v295
    %4327 = vmatpush.msra.mxu0 %v292
    %4328 = vmatpush.msra.mxu0 %v289
    %4329 = vmatpush.msra.mxu0 %v286
    %4330 = vmatpush.msra.mxu0 %v283
    %4331 = vmatpush.msra.mxu0 %v280
    %4332 = vmatpush.msra.mxu0 %v277
    %4333 = vmatpush.msra.mxu0 %v274
    %4334 = vmatpush.msra.mxu0 %v271
    %4335 = vmatpush.msra.mxu0 %v268
    %4336 = vmatpush.msra.mxu0 %v265
    %4337 = vmatpush.msra.mxu0 %v262
    %4338 = vmatpush.msra.mxu0 %v259
    %4339 = vmatmul.f32.gmra.mxu0 %v4281
    %v4340 = vpop.f32.mrf.mxu0
    %v4341 = vadd.f32 %v4321, %v4340
    %4342 = vdwg.mxu0
    %4343 = vmatpush.msra.mxu0 %v352
    %4344 = vmatpush.msra.mxu0 %v349
    %4345 = vmatpush.msra.mxu0 %v346
    %4346 = vmatpush.msra.mxu0 %v343
    %4347 = vmatpush.msra.mxu0 %v340
    %4348 = vmatpush.msra.mxu0 %v337
    %4349 = vmatpush.msra.mxu0 %v334
    %4350 = vmatpush.msra.mxu0 %v331
    %4351 = vmatpush.msra.mxu0 %v328
    %4352 = vmatpush.msra.mxu0 %v325
    %4353 = vmatpush.msra.mxu0 %v322
    %4354 = vmatpush.msra.mxu0 %v319
    %4355 = vmatpush.msra.mxu0 %v316
    %4356 = vmatpush.msra.mxu0 %v313
    %4357 = vmatpush.msra.mxu0 %v310
    %4358 = vmatpush.msra.mxu0 %v307
    %4359 = vmatmul.f32.gmra.mxu0 %v4282
    %v4360 = vpop.f32.mrf.mxu0
    %v4361 = vadd.f32 %v4341, %v4360
    %4362 = vdwg.mxu0
    %4363 = vmatpush.msra.mxu0 %v209
    %4364 = vmatpush.msra.mxu0 %v206
    %4365 = vmatpush.msra.mxu0 %v203
    %4366 = vmatpush.msra.mxu0 %v200
    %4367 = vmatpush.msra.mxu0 %v197
    %4368 = vmatpush.msra.mxu0 %v194
    %4369 = vmatpush.msra.mxu0 %v191
    %4370 = vmatpush.msra.mxu0 %v188
    %4371 = vmatpush.msra.mxu0 %v185
    %4372 = vmatpush.msra.mxu0 %v182
    %4373 = vmatpush.msra.mxu0 %v179
    %4374 = vmatpush.msra.mxu0 %v176
    %4375 = vmatpush.msra.mxu0 %v173
    %4376 = vmatpush.msra.mxu0 %v170
    %4377 = vmatpush.msra.mxu0 %v167
    %4378 = vmatpush.msra.mxu0 %v164
    %4379 = vmatmul.f32.gmra.mxu0 %v4279
    %v4380 = vpop.f32.mrf.mxu0
    %v4381 = vadd.f32 %v358, %v4380
    %4382 = vdwg.mxu0
    %4383 = vmatpush.msra.mxu0 %v257
    %4384 = vmatpush.msra.mxu0 %v254
    %4385 = vmatpush.msra.mxu0 %v251
    %4386 = vmatpush.msra.mxu0 %v248
    %4387 = vmatpush.msra.mxu0 %v245
    %4388 = vmatpush.msra.mxu0 %v242
    %4389 = vmatpush.msra.mxu0 %v239
    %4390 = vmatpush.msra.mxu0 %v236
    %4391 = vmatpush.msra.mxu0 %v233
    %4392 = vmatpush.msra.mxu0 %v230
    %4393 = vmatpush.msra.mxu0 %v227
    %4394 = vmatpush.msra.mxu0 %v224
    %4395 = vmatpush.msra.mxu0 %v221
    %4396 = vmatpush.msra.mxu0 %v218
    %4397 = vmatpush.msra.mxu0 %v215
    %4398 = vmatpush.msra.mxu0 %v212
    %4399 = vmatmul.f32.gmra.mxu0 %v4280
    %v4400 = vpop.f32.mrf.mxu0
    %v4401 = vadd.f32 %v4381, %v4400
    %4402 = vdwg.mxu0
    %4403 = vmatpush.msra.mxu0 %v305
    %4404 = vmatpush.msra.mxu0 %v302
    %4405 = vmatpush.msra.mxu0 %v299
    %4406 = vmatpush.msra.mxu0 %v296
    %4407 = vmatpush.msra.mxu0 %v293
    %4408 = vmatpush.msra.mxu0 %v290
    %4409 = vmatpush.msra.mxu0 %v287
    %4410 = vmatpush.msra.mxu0 %v284
    %4411 = vmatpush.msra.mxu0 %v281
    %4412 = vmatpush.msra.mxu0 %v278
    %4413 = vmatpush.msra.mxu0 %v275
    %4414 = vmatpush.msra.mxu0 %v272
    %4415 = vmatpush.msra.mxu0 %v269
    %4416 = vmatpush.msra.mxu0 %v266
    %4417 = vmatpush.msra.mxu0 %v263
    %4418 = vmatpush.msra.mxu0 %v260
    %4419 = vmatmul.f32.gmra.mxu0 %v4281
    %v4420 = vpop.f32.mrf.mxu0
    %v4421 = vadd.f32 %v4401, %v4420
    %4422 = vdwg.mxu0
    %4423 = vmatpush.msra.mxu0 %v353
    %4424 = vmatpush.msra.mxu0 %v350
    %4425 = vmatpush.msra.mxu0 %v347
    %4426 = vmatpush.msra.mxu0 %v344
    %4427 = vmatpush.msra.mxu0 %v341
    %4428 = vmatpush.msra.mxu0 %v338
    %4429 = vmatpush.msra.mxu0 %v335
    %4430 = vmatpush.msra.mxu0 %v332
    %4431 = vmatpush.msra.mxu0 %v329
    %4432 = vmatpush.msra.mxu0 %v326
    %4433 = vmatpush.msra.mxu0 %v323
    %4434 = vmatpush.msra.mxu0 %v320
    %4435 = vmatpush.msra.mxu0 %v317
    %4436 = vmatpush.msra.mxu0 %v314
    %4437 = vmatpush.msra.mxu0 %v311
    %4438 = vmatpush.msra.mxu0 %v308
    %4439 = vmatmul.f32.gmra.mxu0 %v4282
    %v4440 = vpop.f32.mrf.mxu0
    %v4441 = vadd.f32 %v4421, %v4440
    %4442 = vdwg.mxu0
    %4443 = vmatpush.msra.mxu0 %v210
    %4444 = vmatpush.msra.mxu0 %v207
    %4445 = vmatpush.msra.mxu0 %v204
    %4446 = vmatpush.msra.mxu0 %v201
    %4447 = vmatpush.msra.mxu0 %v198
    %4448 = vmatpush.msra.mxu0 %v195
    %4449 = vmatpush.msra.mxu0 %v192
    %4450 = vmatpush.msra.mxu0 %v189
    %4451 = vmatpush.msra.mxu0 %v186
    %4452 = vmatpush.msra.mxu0 %v183
    %4453 = vmatpush.msra.mxu0 %v180
    %4454 = vmatpush.msra.mxu0 %v177
    %4455 = vmatpush.msra.mxu0 %v174
    %4456 = vmatpush.msra.mxu0 %v171
    %4457 = vmatpush.msra.mxu0 %v168
    %4458 = vmatpush.msra.mxu0 %v165
    %4459 = vmatmul.f32.gmra.mxu0 %v4279
    %v4460 = vpop.f32.mrf.mxu0
    %v4461 = vadd.f32 %v359, %v4460
    %4462 = vdwg.mxu0
    %4463 = vmatpush.msra.mxu0 %v258
    %4464 = vmatpush.msra.mxu0 %v255
    %4465 = vmatpush.msra.mxu0 %v252
    %4466 = vmatpush.msra.mxu0 %v249
    %4467 = vmatpush.msra.mxu0 %v246
    %4468 = vmatpush.msra.mxu0 %v243
    %4469 = vmatpush.msra.mxu0 %v240
    %4470 = vmatpush.msra.mxu0 %v237
    %4471 = vmatpush.msra.mxu0 %v234
    %4472 = vmatpush.msra.mxu0 %v231
    %4473 = vmatpush.msra.mxu0 %v228
    %4474 = vmatpush.msra.mxu0 %v225
    %4475 = vmatpush.msra.mxu0 %v222
    %4476 = vmatpush.msra.mxu0 %v219
    %4477 = vmatpush.msra.mxu0 %v216
    %4478 = vmatpush.msra.mxu0 %v213
    %4479 = vmatmul.f32.gmra.mxu0 %v4280
    %v4480 = vpop.f32.mrf.mxu0
    %v4481 = vadd.f32 %v4461, %v4480
    %4482 = vdwg.mxu0
    %4483 = vmatpush.msra.mxu0 %v306
    %4484 = vmatpush.msra.mxu0 %v303
    %4485 = vmatpush.msra.mxu0 %v300
    %4486 = vmatpush.msra.mxu0 %v297
    %4487 = vmatpush.msra.mxu0 %v294
    %4488 = vmatpush.msra.mxu0 %v291
    %4489 = vmatpush.msra.mxu0 %v288
    %4490 = vmatpush.msra.mxu0 %v285
    %4491 = vmatpush.msra.mxu0 %v282
    %4492 = vmatpush.msra.mxu0 %v279
    %4493 = vmatpush.msra.mxu0 %v276
    %4494 = vmatpush.msra.mxu0 %v273
    %4495 = vmatpush.msra.mxu0 %v270
    %4496 = vmatpush.msra.mxu0 %v267
    %4497 = vmatpush.msra.mxu0 %v264
    %4498 = vmatpush.msra.mxu0 %v261
    %4499 = vmatmul.f32.gmra.mxu0 %v4281
    %v4500 = vpop.f32.mrf.mxu0
    %v4501 = vadd.f32 %v4481, %v4500
    %4502 = vdwg.mxu0
    %4503 = vmatpush.msra.mxu0 %v354
    %4504 = vmatpush.msra.mxu0 %v351
    %4505 = vmatpush.msra.mxu0 %v348
    %4506 = vmatpush.msra.mxu0 %v345
    %4507 = vmatpush.msra.mxu0 %v342
    %4508 = vmatpush.msra.mxu0 %v339
    %4509 = vmatpush.msra.mxu0 %v336
    %4510 = vmatpush.msra.mxu0 %v333
    %4511 = vmatpush.msra.mxu0 %v330
    %4512 = vmatpush.msra.mxu0 %v327
    %4513 = vmatpush.msra.mxu0 %v324
    %4514 = vmatpush.msra.mxu0 %v321
    %4515 = vmatpush.msra.mxu0 %v318
    %4516 = vmatpush.msra.mxu0 %v315
    %4517 = vmatpush.msra.mxu0 %v312
    %4518 = vmatpush.msra.mxu0 %v309
    %4519 = vmatmul.f32.gmra.mxu0 %v4282
    %v4520 = vpop.f32.mrf.mxu0
    %v4521 = vadd.f32 %v4501, %v4520
    %4522 = vdwg.mxu0
    %v4523 = vtanh.pop %v4361
    %v4524 = vtanh.pop %v4441
    %v4525 = vtanh.pop %v4521
    %4526 = vmatpush.msra.mxu0 %v621
    %4527 = vmatpush.msra.mxu0 %v620
    %4528 = vmatpush.msra.mxu0 %v619
    %4529 = vmatpush.msra.mxu0 %v618
    %4530 = vmatpush.msra.mxu0 %v617
    %4531 = vmatpush.msra.mxu0 %v616
    %4532 = vmatpush.msra.mxu0 %v615
    %4533 = vmatpush.msra.mxu0 %v614
    %4534 = vmatpush.msra.mxu0 %v613
    %4535 = vmatpush.msra.mxu0 %v612
    %4536 = vmatpush.msra.mxu0 %v611
    %4537 = vmatpush.msra.mxu0 %v610
    %4538 = vmatpush.msra.mxu0 %v609
    %4539 = vmatpush.msra.mxu0 %v608
    %4540 = vmatpush.msra.mxu0 %v607
    %4541 = vmatpush.msra.mxu0 %v606
    %4542 = vmatmul.f32.gmra.mxu0 %v4523
    %v4543 = vpop.f32.mrf.mxu0
    %v4544 = vadd.f32 %v656, %v4543
    %4545 = vdwg.mxu0
    %4546 = vmatpush.msra.mxu0 %v637
    %4547 = vmatpush.msra.mxu0 %v636
    %4548 = vmatpush.msra.mxu0 %v635
    %4549 = vmatpush.msra.mxu0 %v634
    %4550 = vmatpush.msra.mxu0 %v633
    %4551 = vmatpush.msra.mxu0 %v632
    %4552 = vmatpush.msra.mxu0 %v631
    %4553 = vmatpush.msra.mxu0 %v630
    %4554 = vmatpush.msra.mxu0 %v629
    %4555 = vmatpush.msra.mxu0 %v628
    %4556 = vmatpush.msra.mxu0 %v627
    %4557 = vmatpush.msra.mxu0 %v626
    %4558 = vmatpush.msra.mxu0 %v625
    %4559 = vmatpush.msra.mxu0 %v624
    %4560 = vmatpush.msra.mxu0 %v623
    %4561 = vmatpush.msra.mxu0 %v622
    %4562 = vmatmul.f32.gmra.mxu0 %v4524
    %v4563 = vpop.f32.mrf.mxu0
    %v4564 = vadd.f32 %v4544, %v4563
    %4565 = vdwg.mxu0
    %4566 = vmatpush.msra.mxu0 %v653
    %4567 = vmatpush.msra.mxu0 %v652
    %4568 = vmatpush.msra.mxu0 %v651
    %4569 = vmatpush.msra.mxu0 %v650
    %4570 = vmatpush.msra.mxu0 %v649
    %4571 = vmatpush.msra.mxu0 %v648
    %4572 = vmatpush.msra.mxu0 %v647
    %4573 = vmatpush.msra.mxu0 %v646
    %4574 = vmatpush.msra.mxu0 %v645
    %4575 = vmatpush.msra.mxu0 %v644
    %4576 = vmatpush.msra.mxu0 %v643
    %4577 = vmatpush.msra.mxu0 %v642
    %4578 = vmatpush.msra.mxu0 %v641
    %4579 = vmatpush.msra.mxu0 %v640
    %4580 = vmatpush.msra.mxu0 %v639
    %4581 = vmatpush.msra.mxu0 %v638
    %4582 = vmatmul.f32.gmra.mxu0 %v4525
    %v4583 = vpop.f32.mrf.mxu0
    %v4584 = vadd.f32 %v4564, %v4583
    %4585 = vdwg.mxu0
    %4586 = vmatpush.msra.mxu0 %v1120
    %4587 = vmatpush.msra.mxu0 %v1117
    %4588 = vmatpush.msra.mxu0 %v1114
    %4589 = vmatpush.msra.mxu0 %v1111
    %4590 = vmatpush.msra.mxu0 %v1108
    %4591 = vmatpush.msra.mxu0 %v1105
    %4592 = vmatpush.msra.mxu0 %v1102
    %4593 = vmatpush.msra.mxu0 %v1099
    %4594 = vmatpush.msra.mxu0 %v1096
    %4595 = vmatpush.msra.mxu0 %v1093
    %4596 = vmatpush.msra.mxu0 %v1090
    %4597 = vmatpush.msra.mxu0 %v1087
    %4598 = vmatpush.msra.mxu0 %v1084
    %4599 = vmatpush.msra.mxu0 %v1081
    %4600 = vmatpush.msra.mxu0 %v1078
    %4601 = vmatpush.msra.mxu0 %v1075
    %4602 = vmatmul.f32.gmra.mxu0 %v4584
    %v4603 = vpop.f32.mrf.mxu0
    %v4604 = vadd.f32 0.0, %v4603
    %4605 = vdwg.mxu0
    %4606 = vmatpush.msra.mxu0 %v1121
    %4607 = vmatpush.msra.mxu0 %v1118
    %4608 = vmatpush.msra.mxu0 %v1115
    %4609 = vmatpush.msra.mxu0 %v1112
    %4610 = vmatpush.msra.mxu0 %v1109
    %4611 = vmatpush.msra.mxu0 %v1106
    %4612 = vmatpush.msra.mxu0 %v1103
    %4613 = vmatpush.msra.mxu0 %v1100
    %4614 = vmatpush.msra.mxu0 %v1097
    %4615 = vmatpush.msra.mxu0 %v1094
    %4616 = vmatpush.msra.mxu0 %v1091
    %4617 = vmatpush.msra.mxu0 %v1088
    %4618 = vmatpush.msra.mxu0 %v1085
    %4619 = vmatpush.msra.mxu0 %v1082
    %4620 = vmatpush.msra.mxu0 %v1079
    %4621 = vmatpush.msra.mxu0 %v1076
    %4622 = vmatmul.f32.gmra.mxu0 %v4584
    %v4623 = vpop.f32.mrf.mxu0
    %v4624 = vadd.f32 0.0, %v4623
    %4625 = vdwg.mxu0
    %4626 = vmatpush.msra.mxu0 %v1122
    %4627 = vmatpush.msra.mxu0 %v1119
    %4628 = vmatpush.msra.mxu0 %v1116
    %4629 = vmatpush.msra.mxu0 %v1113
    %4630 = vmatpush.msra.mxu0 %v1110
    %4631 = vmatpush.msra.mxu0 %v1107
    %4632 = vmatpush.msra.mxu0 %v1104
    %4633 = vmatpush.msra.mxu0 %v1101
    %4634 = vmatpush.msra.mxu0 %v1098
    %4635 = vmatpush.msra.mxu0 %v1095
    %4636 = vmatpush.msra.mxu0 %v1092
    %4637 = vmatpush.msra.mxu0 %v1089
    %4638 = vmatpush.msra.mxu0 %v1086
    %4639 = vmatpush.msra.mxu0 %v1083
    %4640 = vmatpush.msra.mxu0 %v1080
    %4641 = vmatpush.msra.mxu0 %v1077
    %4642 = vmatmul.f32.gmra.mxu0 %v4584
    %v4643 = vpop.f32.mrf.mxu0
    %v4644 = vadd.f32 0.0, %v4643
    %4645 = vdwg.mxu0
    %4646 = vmatpush.msra.mxu0 %v763
    %4647 = vmatpush.msra.mxu0 %v760
    %4648 = vmatpush.msra.mxu0 %v757
    %4649 = vmatpush.msra.mxu0 %v754
    %4650 = vmatpush.msra.mxu0 %v751
    %4651 = vmatpush.msra.mxu0 %v748
    %4652 = vmatpush.msra.mxu0 %v745
    %4653 = vmatpush.msra.mxu0 %v742
    %4654 = vmatpush.msra.mxu0 %v739
    %4655 = vmatpush.msra.mxu0 %v736
    %4656 = vmatpush.msra.mxu0 %v733
    %4657 = vmatpush.msra.mxu0 %v730
    %4658 = vmatpush.msra.mxu0 %v727
    %4659 = vmatpush.msra.mxu0 %v724
    %4660 = vmatpush.msra.mxu0 %v721
    %4661 = vmatpush.msra.mxu0 %v718
    %4662 = vmatmul.f32.gmra.mxu0 %v4276
    %v4663 = vpop.f32.mrf.mxu0
    %v4664 = vadd.f32 %v4604, %v4663
    %4665 = vdwg.mxu0
    %4666 = vmatpush.msra.mxu0 %v764
    %4667 = vmatpush.msra.mxu0 %v761
    %4668 = vmatpush.msra.mxu0 %v758
    %4669 = vmatpush.msra.mxu0 %v755
    %4670 = vmatpush.msra.mxu0 %v752
    %4671 = vmatpush.msra.mxu0 %v749
    %4672 = vmatpush.msra.mxu0 %v746
    %4673 = vmatpush.msra.mxu0 %v743
    %4674 = vmatpush.msra.mxu0 %v740
    %4675 = vmatpush.msra.mxu0 %v737
    %4676 = vmatpush.msra.mxu0 %v734
    %4677 = vmatpush.msra.mxu0 %v731
    %4678 = vmatpush.msra.mxu0 %v728
    %4679 = vmatpush.msra.mxu0 %v725
    %4680 = vmatpush.msra.mxu0 %v722
    %4681 = vmatpush.msra.mxu0 %v719
    %4682 = vmatmul.f32.gmra.mxu0 %v4276
    %v4683 = vpop.f32.mrf.mxu0
    %v4684 = vadd.f32 %v4624, %v4683
    %4685 = vdwg.mxu0
    %4686 = vmatpush.msra.mxu0 %v765
    %4687 = vmatpush.msra.mxu0 %v762
    %4688 = vmatpush.msra.mxu0 %v759
    %4689 = vmatpush.msra.mxu0 %v756
    %4690 = vmatpush.msra.mxu0 %v753
    %4691 = vmatpush.msra.mxu0 %v750
    %4692 = vmatpush.msra.mxu0 %v747
    %4693 = vmatpush.msra.mxu0 %v744
    %4694 = vmatpush.msra.mxu0 %v741
    %4695 = vmatpush.msra.mxu0 %v738
    %4696 = vmatpush.msra.mxu0 %v735
    %4697 = vmatpush.msra.mxu0 %v732
    %4698 = vmatpush.msra.mxu0 %v729
    %4699 = vmatpush.msra.mxu0 %v726
    %4700 = vmatpush.msra.mxu0 %v723
    %4701 = vmatpush.msra.mxu0 %v720
    %4702 = vmatmul.f32.gmra.mxu0 %v4276
    %v4703 = vpop.f32.mrf.mxu0
    %v4704 = vadd.f32 %v4644, %v4703
    %4705 = vdwg.mxu0
    %s4706 = scalar_lea.vmem %s0, 320
    %v4707 = vld [vmem:[%s4706] sm:$0xff]
    %v4708 = vld [vmem:[%s4706 + $0x8] sm:$0xff]
    %v4709 = vld [vmem:[%s4706 + $0x10] sm:$0xff]
    %v4710 = vld [vmem:[%s4706 + $0x18] sm:$0xff]
    %4711 = vmatpush.msra.mxu0 %v208
    %4712 = vmatpush.msra.mxu0 %v205
    %4713 = vmatpush.msra.mxu0 %v202
    %4714 = vmatpush.msra.mxu0 %v199
    %4715 = vmatpush.msra.mxu0 %v196
    %4716 = vmatpush.msra.mxu0 %v193
    %4717 = vmatpush.msra.mxu0 %v190
    %4718 = vmatpush.msra.mxu0 %v187
    %4719 = vmatpush.msra.mxu0 %v184
    %4720 = vmatpush.msra.mxu0 %v181
    %4721 = vmatpush.msra.mxu0 %v178
    %4722 = vmatpush.msra.mxu0 %v175
    %4723 = vmatpush.msra.mxu0 %v172
    %4724 = vmatpush.msra.mxu0 %v169
    %4725 = vmatpush.msra.mxu0 %v166
    %4726 = vmatpush.msra.mxu0 %v163
    %4727 = vmatmul.f32.gmra.mxu0 %v4707
    %v4728 = vpop.f32.mrf.mxu0
    %v4729 = vadd.f32 %v357, %v4728
    %4730 = vdwg.mxu0
    %4731 = vmatpush.msra.mxu0 %v256
    %4732 = vmatpush.msra.mxu0 %v253
    %4733 = vmatpush.msra.mxu0 %v250
    %4734 = vmatpush.msra.mxu0 %v247
    %4735 = vmatpush.msra.mxu0 %v244
    %4736 = vmatpush.msra.mxu0 %v241
    %4737 = vmatpush.msra.mxu0 %v238
    %4738 = vmatpush.msra.mxu0 %v235
    %4739 = vmatpush.msra.mxu0 %v232
    %4740 = vmatpush.msra.mxu0 %v229
    %4741 = vmatpush.msra.mxu0 %v226
    %4742 = vmatpush.msra.mxu0 %v223
    %4743 = vmatpush.msra.mxu0 %v220
    %4744 = vmatpush.msra.mxu0 %v217
    %4745 = vmatpush.msra.mxu0 %v214
    %4746 = vmatpush.msra.mxu0 %v211
    %4747 = vmatmul.f32.gmra.mxu0 %v4708
    %v4748 = vpop.f32.mrf.mxu0
    %v4749 = vadd.f32 %v4729, %v4748
    %4750 = vdwg.mxu0
    %4751 = vmatpush.msra.mxu0 %v304
    %4752 = vmatpush.msra.mxu0 %v301
    %4753 = vmatpush.msra.mxu0 %v298
    %4754 = vmatpush.msra.mxu0 %v295
    %4755 = vmatpush.msra.mxu0 %v292
    %4756 = vmatpush.msra.mxu0 %v289
    %4757 = vmatpush.msra.mxu0 %v286
    %4758 = vmatpush.msra.mxu0 %v283
    %4759 = vmatpush.msra.mxu0 %v280
    %4760 = vmatpush.msra.mxu0 %v277
    %4761 = vmatpush.msra.mxu0 %v274
    %4762 = vmatpush.msra.mxu0 %v271
    %4763 = vmatpush.msra.mxu0 %v268
    %4764 = vmatpush.msra.mxu0 %v265
    %4765 = vmatpush.msra.mxu0 %v262
    %4766 = vmatpush.msra.mxu0 %v259
    %4767 = vmatmul.f32.gmra.mxu0 %v4709
    %v4768 = vpop.f32.mrf.mxu0
    %v4769 = vadd.f32 %v4749, %v4768
    %4770 = vdwg.mxu0
    %4771 = vmatpush.msra.mxu0 %v352
    %4772 = vmatpush.msra.mxu0 %v349
    %4773 = vmatpush.msra.mxu0 %v346
    %4774 = vmatpush.msra.mxu0 %v343
    %4775 = vmatpush.msra.mxu0 %v340
    %4776 = vmatpush.msra.mxu0 %v337
    %4777 = vmatpush.msra.mxu0 %v334
    %4778 = vmatpush.msra.mxu0 %v331
    %4779 = vmatpush.msra.mxu0 %v328
    %4780 = vmatpush.msra.mxu0 %v325
    %4781 = vmatpush.msra.mxu0 %v322
    %4782 = vmatpush.msra.mxu0 %v319
    %4783 = vmatpush.msra.mxu0 %v316
    %4784 = vmatpush.msra.mxu0 %v313
    %4785 = vmatpush.msra.mxu0 %v310
    %4786 = vmatpush.msra.mxu0 %v307
    %4787 = vmatmul.f32.gmra.mxu0 %v4710
    %v4788 = vpop.f32.mrf.mxu0
    %v4789 = vadd.f32 %v4769, %v4788
    %4790 = vdwg.mxu0
    %4791 = vmatpush.msra.mxu0 %v209
    %4792 = vmatpush.msra.mxu0 %v206
    %4793 = vmatpush.msra.mxu0 %v203
    %4794 = vmatpush.msra.mxu0 %v200
    %4795 = vmatpush.msra.mxu0 %v197
    %4796 = vmatpush.msra.mxu0 %v194
    %4797 = vmatpush.msra.mxu0 %v191
    %4798 = vmatpush.msra.mxu0 %v188
    %4799 = vmatpush.msra.mxu0 %v185
    %4800 = vmatpush.msra.mxu0 %v182
    %4801 = vmatpush.msra.mxu0 %v179
    %4802 = vmatpush.msra.mxu0 %v176
    %4803 = vmatpush.msra.mxu0 %v173
    %4804 = vmatpush.msra.mxu0 %v170
    %4805 = vmatpush.msra.mxu0 %v167
    %4806 = vmatpush.msra.mxu0 %v164
    %4807 = vmatmul.f32.gmra.mxu0 %v4707
    %v4808 = vpop.f32.mrf.mxu0
    %v4809 = vadd.f32 %v358, %v4808
    %4810 = vdwg.mxu0
    %4811 = vmatpush.msra.mxu0 %v257
    %4812 = vmatpush.msra.mxu0 %v254
    %4813 = vmatpush.msra.mxu0 %v251
    %4814 = vmatpush.msra.mxu0 %v248
    %4815 = vmatpush.msra.mxu0 %v245
    %4816 = vmatpush.msra.mxu0 %v242
    %4817 = vmatpush.msra.mxu0 %v239
    %4818 = vmatpush.msra.mxu0 %v236
    %4819 = vmatpush.msra.mxu0 %v233
    %4820 = vmatpush.msra.mxu0 %v230
    %4821 = vmatpush.msra.mxu0 %v227
    %4822 = vmatpush.msra.mxu0 %v224
    %4823 = vmatpush.msra.mxu0 %v221
    %4824 = vmatpush.msra.mxu0 %v218
    %4825 = vmatpush.msra.mxu0 %v215
    %4826 = vmatpush.msra.mxu0 %v212
    %4827 = vmatmul.f32.gmra.mxu0 %v4708
    %v4828 = vpop.f32.mrf.mxu0
    %v4829 = vadd.f32 %v4809, %v4828
    %4830 = vdwg.mxu0
    %4831 = vmatpush.msra.mxu0 %v305
    %4832 = vmatpush.msra.mxu0 %v302
    %4833 = vmatpush.msra.mxu0 %v299
    %4834 = vmatpush.msra.mxu0 %v296
    %4835 = vmatpush.msra.mxu0 %v293
    %4836 = vmatpush.msra.mxu0 %v290
    %4837 = vmatpush.msra.mxu0 %v287
    %4838 = vmatpush.msra.mxu0 %v284
    %4839 = vmatpush.msra.mxu0 %v281
    %4840 = vmatpush.msra.mxu0 %v278
    %4841 = vmatpush.msra.mxu0 %v275
    %4842 = vmatpush.msra.mxu0 %v272
    %4843 = vmatpush.msra.mxu0 %v269
    %4844 = vmatpush.msra.mxu0 %v266
    %4845 = vmatpush.msra.mxu0 %v263
    %4846 = vmatpush.msra.mxu0 %v260
    %4847 = vmatmul.f32.gmra.mxu0 %v4709
    %v4848 = vpop.f32.mrf.mxu0
    %v4849 = vadd.f32 %v4829, %v4848
    %4850 = vdwg.mxu0
    %4851 = vmatpush.msra.mxu0 %v353
    %4852 = vmatpush.msra.mxu0 %v350
    %4853 = vmatpush.msra.mxu0 %v347
    %4854 = vmatpush.msra.mxu0 %v344
    %4855 = vmatpush.msra.mxu0 %v341
    %4856 = vmatpush.msra.mxu0 %v338
    %4857 = vmatpush.msra.mxu0 %v335
    %4858 = vmatpush.msra.mxu0 %v332
    %4859 = vmatpush.msra.mxu0 %v329
    %4860 = vmatpush.msra.mxu0 %v326
    %4861 = vmatpush.msra.mxu0 %v323
    %4862 = vmatpush.msra.mxu0 %v320
    %4863 = vmatpush.msra.mxu0 %v317
    %4864 = vmatpush.msra.mxu0 %v314
    %4865 = vmatpush.msra.mxu0 %v311
    %4866 = vmatpush.msra.mxu0 %v308
    %4867 = vmatmul.f32.gmra.mxu0 %v4710
    %v4868 = vpop.f32.mrf.mxu0
    %v4869 = vadd.f32 %v4849, %v4868
    %4870 = vdwg.mxu0
    %4871 = vmatpush.msra.mxu0 %v210
    %4872 = vmatpush.msra.mxu0 %v207
    %4873 = vmatpush.msra.mxu0 %v204
    %4874 = vmatpush.msra.mxu0 %v201
    %4875 = vmatpush.msra.mxu0 %v198
    %4876 = vmatpush.msra.mxu0 %v195
    %4877 = vmatpush.msra.mxu0 %v192
    %4878 = vmatpush.msra.mxu0 %v189
    %4879 = vmatpush.msra.mxu0 %v186
    %4880 = vmatpush.msra.mxu0 %v183
    %4881 = vmatpush.msra.mxu0 %v180
    %4882 = vmatpush.msra.mxu0 %v177
    %4883 = vmatpush.msra.mxu0 %v174
    %4884 = vmatpush.msra.mxu0 %v171
    %4885 = vmatpush.msra.mxu0 %v168
    %4886 = vmatpush.msra.mxu0 %v165
    %4887 = vmatmul.f32.gmra.mxu0 %v4707
    %v4888 = vpop.f32.mrf.mxu0
    %v4889 = vadd.f32 %v359, %v4888
    %4890 = vdwg.mxu0
    %4891 = vmatpush.msra.mxu0 %v258
    %4892 = vmatpush.msra.mxu0 %v255
    %4893 = vmatpush.msra.mxu0 %v252
    %4894 = vmatpush.msra.mxu0 %v249
    %4895 = vmatpush.msra.mxu0 %v246
    %4896 = vmatpush.msra.mxu0 %v243
    %4897 = vmatpush.msra.mxu0 %v240
    %4898 = vmatpush.msra.mxu0 %v237
    %4899 = vmatpush.msra.mxu0 %v234
    %4900 = vmatpush.msra.mxu0 %v231
    %4901 = vmatpush.msra.mxu0 %v228
    %4902 = vmatpush.msra.mxu0 %v225
    %4903 = vmatpush.msra.mxu0 %v222
    %4904 = vmatpush.msra.mxu0 %v219
    %4905 = vmatpush.msra.mxu0 %v216
    %4906 = vmatpush.msra.mxu0 %v213
    %4907 = vmatmul.f32.gmra.mxu0 %v4708
    %v4908 = vpop.f32.mrf.mxu0
    %v4909 = vadd.f32 %v4889, %v4908
    %4910 = vdwg.mxu0
    %4911 = vmatpush.msra.mxu0 %v306
    %4912 = vmatpush.msra.mxu0 %v303
    %4913 = vmatpush.msra.mxu0 %v300
    %4914 = vmatpush.msra.mxu0 %v297
    %4915 = vmatpush.msra.mxu0 %v294
    %4916 = vmatpush.msra.mxu0 %v291
    %4917 = vmatpush.msra.mxu0 %v288
    %4918 = vmatpush.msra.mxu0 %v285
    %4919 = vmatpush.msra.mxu0 %v282
    %4920 = vmatpush.msra.mxu0 %v279
    %4921 = vmatpush.msra.mxu0 %v276
    %4922 = vmatpush.msra.mxu0 %v273
    %4923 = vmatpush.msra.mxu0 %v270
    %4924 = vmatpush.msra.mxu0 %v267
    %4925 = vmatpush.msra.mxu0 %v264
    %4926 = vmatpush.msra.mxu0 %v261
    %4927 = vmatmul.f32.gmra.mxu0 %v4709
    %v4928 = vpop.f32.mrf.mxu0
    %v4929 = vadd.f32 %v4909, %v4928
    %4930 = vdwg.mxu0
    %4931 = vmatpush.msra.mxu0 %v354
    %4932 = vmatpush.msra.mxu0 %v351
    %4933 = vmatpush.msra.mxu0 %v348
    %4934 = vmatpush.msra.mxu0 %v345
    %4935 = vmatpush.msra.mxu0 %v342
    %4936 = vmatpush.msra.mxu0 %v339
    %4937 = vmatpush.msra.mxu0 %v336
    %4938 = vmatpush.msra.mxu0 %v333
    %4939 = vmatpush.msra.mxu0 %v330
    %4940 = vmatpush.msra.mxu0 %v327
    %4941 = vmatpush.msra.mxu0 %v324
    %4942 = vmatpush.msra.mxu0 %v321
    %4943 = vmatpush.msra.mxu0 %v318
    %4944 = vmatpush.msra.mxu0 %v315
    %4945 = vmatpush.msra.mxu0 %v312
    %4946 = vmatpush.msra.mxu0 %v309
    %4947 = vmatmul.f32.gmra.mxu0 %v4710
    %v4948 = vpop.f32.mrf.mxu0
    %v4949 = vadd.f32 %v4929, %v4948
    %4950 = vdwg.mxu0
    %v4951 = vtanh.pop %v4789
    %v4952 = vtanh.pop %v4869
    %v4953 = vtanh.pop %v4949
    %4954 = vmatpush.msra.mxu0 %v621
    %4955 = vmatpush.msra.mxu0 %v620
    %4956 = vmatpush.msra.mxu0 %v619
    %4957 = vmatpush.msra.mxu0 %v618
    %4958 = vmatpush.msra.mxu0 %v617
    %4959 = vmatpush.msra.mxu0 %v616
    %4960 = vmatpush.msra.mxu0 %v615
    %4961 = vmatpush.msra.mxu0 %v614
    %4962 = vmatpush.msra.mxu0 %v613
    %4963 = vmatpush.msra.mxu0 %v612
    %4964 = vmatpush.msra.mxu0 %v611
    %4965 = vmatpush.msra.mxu0 %v610
    %4966 = vmatpush.msra.mxu0 %v609
    %4967 = vmatpush.msra.mxu0 %v608
    %4968 = vmatpush.msra.mxu0 %v607
    %4969 = vmatpush.msra.mxu0 %v606
    %4970 = vmatmul.f32.gmra.mxu0 %v4951
    %v4971 = vpop.f32.mrf.mxu0
    %v4972 = vadd.f32 %v656, %v4971
    %4973 = vdwg.mxu0
    %4974 = vmatpush.msra.mxu0 %v637
    %4975 = vmatpush.msra.mxu0 %v636
    %4976 = vmatpush.msra.mxu0 %v635
    %4977 = vmatpush.msra.mxu0 %v634
    %4978 = vmatpush.msra.mxu0 %v633
    %4979 = vmatpush.msra.mxu0 %v632
    %4980 = vmatpush.msra.mxu0 %v631
    %4981 = vmatpush.msra.mxu0 %v630
    %4982 = vmatpush.msra.mxu0 %v629
    %4983 = vmatpush.msra.mxu0 %v628
    %4984 = vmatpush.msra.mxu0 %v627
    %4985 = vmatpush.msra.mxu0 %v626
    %4986 = vmatpush.msra.mxu0 %v625
    %4987 = vmatpush.msra.mxu0 %v624
    %4988 = vmatpush.msra.mxu0 %v623
    %4989 = vmatpush.msra.mxu0 %v622
    %4990 = vmatmul.f32.gmra.mxu0 %v4952
    %v4991 = vpop.f32.mrf.mxu0
    %v4992 = vadd.f32 %v4972, %v4991
    %4993 = vdwg.mxu0
    %4994 = vmatpush.msra.mxu0 %v653
    %4995 = vmatpush.msra.mxu0 %v652
    %4996 = vmatpush.msra.mxu0 %v651
    %4997 = vmatpush.msra.mxu0 %v650
    %4998 = vmatpush.msra.mxu0 %v649
    %4999 = vmatpush.msra.mxu0 %v648
    %5000 = vmatpush.msra.mxu0 %v647
    %5001 = vmatpush.msra.mxu0 %v646
    %5002 = vmatpush.msra.mxu0 %v645
    %5003 = vmatpush.msra.mxu0 %v644
    %5004 = vmatpush.msra.mxu0 %v643
    %5005 = vmatpush.msra.mxu0 %v642
    %5006 = vmatpush.msra.mxu0 %v641
    %5007 = vmatpush.msra.mxu0 %v640
    %5008 = vmatpush.msra.mxu0 %v639
    %5009 = vmatpush.msra.mxu0 %v638
    %5010 = vmatmul.f32.gmra.mxu0 %v4953
    %v5011 = vpop.f32.mrf.mxu0
    %v5012 = vadd.f32 %v4992, %v5011
    %5013 = vdwg.mxu0
    %5014 = vmatpush.msra.mxu0 %v1597
    %5015 = vmatpush.msra.mxu0 %v1594
    %5016 = vmatpush.msra.mxu0 %v1591
    %5017 = vmatpush.msra.mxu0 %v1588
    %5018 = vmatpush.msra.mxu0 %v1585
    %5019 = vmatpush.msra.mxu0 %v1582
    %5020 = vmatpush.msra.mxu0 %v1579
    %5021 = vmatpush.msra.mxu0 %v1576
    %5022 = vmatpush.msra.mxu0 %v1573
    %5023 = vmatpush.msra.mxu0 %v1570
    %5024 = vmatpush.msra.mxu0 %v1567
    %5025 = vmatpush.msra.mxu0 %v1564
    %5026 = vmatpush.msra.mxu0 %v1561
    %5027 = vmatpush.msra.mxu0 %v1558
    %5028 = vmatpush.msra.mxu0 %v1555
    %5029 = vmatpush.msra.mxu0 %v1552
    %5030 = vmatmul.f32.gmra.mxu0 %v5012
    %v5031 = vpop.f32.mrf.mxu0
    %v5032 = vadd.f32 0.0, %v5031
    %5033 = vdwg.mxu0
    %5034 = vmatpush.msra.mxu0 %v1598
    %5035 = vmatpush.msra.mxu0 %v1595
    %5036 = vmatpush.msra.mxu0 %v1592
    %5037 = vmatpush.msra.mxu0 %v1589
    %5038 = vmatpush.msra.mxu0 %v1586
    %5039 = vmatpush.msra.mxu0 %v1583
    %5040 = vmatpush.msra.mxu0 %v1580
    %5041 = vmatpush.msra.mxu0 %v1577
    %5042 = vmatpush.msra.mxu0 %v1574
    %5043 = vmatpush.msra.mxu0 %v1571
    %5044 = vmatpush.msra.mxu0 %v1568
    %5045 = vmatpush.msra.mxu0 %v1565
    %5046 = vmatpush.msra.mxu0 %v1562
    %5047 = vmatpush.msra.mxu0 %v1559
    %5048 = vmatpush.msra.mxu0 %v1556
    %5049 = vmatpush.msra.mxu0 %v1553
    %5050 = vmatmul.f32.gmra.mxu0 %v5012
    %v5051 = vpop.f32.mrf.mxu0
    %v5052 = vadd.f32 0.0, %v5051
    %5053 = vdwg.mxu0
    %5054 = vmatpush.msra.mxu0 %v1599
    %5055 = vmatpush.msra.mxu0 %v1596
    %5056 = vmatpush.msra.mxu0 %v1593
    %5057 = vmatpush.msra.mxu0 %v1590
    %5058 = vmatpush.msra.mxu0 %v1587
    %5059 = vmatpush.msra.mxu0 %v1584
    %5060 = vmatpush.msra.mxu0 %v1581
    %5061 = vmatpush.msra.mxu0 %v1578
    %5062 = vmatpush.msra.mxu0 %v1575
    %5063 = vmatpush.msra.mxu0 %v1572
    %5064 = vmatpush.msra.mxu0 %v1569
    %5065 = vmatpush.msra.mxu0 %v1566
    %5066 = vmatpush.msra.mxu0 %v1563
    %5067 = vmatpush.msra.mxu0 %v1560
    %5068 = vmatpush.msra.mxu0 %v1557
    %5069 = vmatpush.msra.mxu0 %v1554
    %5070 = vmatmul.f32.gmra.mxu0 %v5012
    %v5071 = vpop.f32.mrf.mxu0
    %v5072 = vadd.f32 0.0, %v5071
    %5073 = vdwg.mxu0
    %v5074 = vadd.f32 %v4664, %v5032
    %v5075 = vadd.f32 %v4684, %v5052
    %v5076 = vadd.f32 %v4704, %v5072
    %s5077 = scalar_lea.vmem %s0, 352
    %v5078 = vld [vmem:[%s5077] sm:$0xff]
    %v5079 = vld [vmem:[%s5077 + $0x8] sm:$0xff]
    %v5080 = vld [vmem:[%s5077 + $0x10] sm:$0xff]
    %v5081 = vld [vmem:[%s5077 + $0x18] sm:$0xff]
    %5082 = vmatpush.msra.mxu0 %v208
    %5083 = vmatpush.msra.mxu0 %v205
    %5084 = vmatpush.msra.mxu0 %v202
    %5085 = vmatpush.msra.mxu0 %v199
    %5086 = vmatpush.msra.mxu0 %v196
    %5087 = vmatpush.msra.mxu0 %v193
    %5088 = vmatpush.msra.mxu0 %v190
    %5089 = vmatpush.msra.mxu0 %v187
    %5090 = vmatpush.msra.mxu0 %v184
    %5091 = vmatpush.msra.mxu0 %v181
    %5092 = vmatpush.msra.mxu0 %v178
    %5093 = vmatpush.msra.mxu0 %v175
    %5094 = vmatpush.msra.mxu0 %v172
    %5095 = vmatpush.msra.mxu0 %v169
    %5096 = vmatpush.msra.mxu0 %v166
    %5097 = vmatpush.msra.mxu0 %v163
    %5098 = vmatmul.f32.gmra.mxu0 %v5078
    %v5099 = vpop.f32.mrf.mxu0
    %v5100 = vadd.f32 %v357, %v5099
    %5101 = vdwg.mxu0
    %5102 = vmatpush.msra.mxu0 %v256
    %5103 = vmatpush.msra.mxu0 %v253
    %5104 = vmatpush.msra.mxu0 %v250
    %5105 = vmatpush.msra.mxu0 %v247
    %5106 = vmatpush.msra.mxu0 %v244
    %5107 = vmatpush.msra.mxu0 %v241
    %5108 = vmatpush.msra.mxu0 %v238
    %5109 = vmatpush.msra.mxu0 %v235
    %5110 = vmatpush.msra.mxu0 %v232
    %5111 = vmatpush.msra.mxu0 %v229
    %5112 = vmatpush.msra.mxu0 %v226
    %5113 = vmatpush.msra.mxu0 %v223
    %5114 = vmatpush.msra.mxu0 %v220
    %5115 = vmatpush.msra.mxu0 %v217
    %5116 = vmatpush.msra.mxu0 %v214
    %5117 = vmatpush.msra.mxu0 %v211
    %5118 = vmatmul.f32.gmra.mxu0 %v5079
    %v5119 = vpop.f32.mrf.mxu0
    %v5120 = vadd.f32 %v5100, %v5119
    %5121 = vdwg.mxu0
    %5122 = vmatpush.msra.mxu0 %v304
    %5123 = vmatpush.msra.mxu0 %v301
    %5124 = vmatpush.msra.mxu0 %v298
    %5125 = vmatpush.msra.mxu0 %v295
    %5126 = vmatpush.msra.mxu0 %v292
    %5127 = vmatpush.msra.mxu0 %v289
    %5128 = vmatpush.msra.mxu0 %v286
    %5129 = vmatpush.msra.mxu0 %v283
    %5130 = vmatpush.msra.mxu0 %v280
    %5131 = vmatpush.msra.mxu0 %v277
    %5132 = vmatpush.msra.mxu0 %v274
    %5133 = vmatpush.msra.mxu0 %v271
    %5134 = vmatpush.msra.mxu0 %v268
    %5135 = vmatpush.msra.mxu0 %v265
    %5136 = vmatpush.msra.mxu0 %v262
    %5137 = vmatpush.msra.mxu0 %v259
    %5138 = vmatmul.f32.gmra.mxu0 %v5080
    %v5139 = vpop.f32.mrf.mxu0
    %v5140 = vadd.f32 %v5120, %v5139
    %5141 = vdwg.mxu0
    %5142 = vmatpush.msra.mxu0 %v352
    %5143 = vmatpush.msra.mxu0 %v349
    %5144 = vmatpush.msra.mxu0 %v346
    %5145 = vmatpush.msra.mxu0 %v343
    %5146 = vmatpush.msra.mxu0 %v340
    %5147 = vmatpush.msra.mxu0 %v337
    %5148 = vmatpush.msra.mxu0 %v334
    %5149 = vmatpush.msra.mxu0 %v331
    %5150 = vmatpush.msra.mxu0 %v328
    %5151 = vmatpush.msra.mxu0 %v325
    %5152 = vmatpush.msra.mxu0 %v322
    %5153 = vmatpush.msra.mxu0 %v319
    %5154 = vmatpush.msra.mxu0 %v316
    %5155 = vmatpush.msra.mxu0 %v313
    %5156 = vmatpush.msra.mxu0 %v310
    %5157 = vmatpush.msra.mxu0 %v307
    %5158 = vmatmul.f32.gmra.mxu0 %v5081
    %v5159 = vpop.f32.mrf.mxu0
    %v5160 = vadd.f32 %v5140, %v5159
    %5161 = vdwg.mxu0
    %5162 = vmatpush.msra.mxu0 %v209
    %5163 = vmatpush.msra.mxu0 %v206
    %5164 = vmatpush.msra.mxu0 %v203
    %5165 = vmatpush.msra.mxu0 %v200
    %5166 = vmatpush.msra.mxu0 %v197
    %5167 = vmatpush.msra.mxu0 %v194
    %5168 = vmatpush.msra.mxu0 %v191
    %5169 = vmatpush.msra.mxu0 %v188
    %5170 = vmatpush.msra.mxu0 %v185
    %5171 = vmatpush.msra.mxu0 %v182
    %5172 = vmatpush.msra.mxu0 %v179
    %5173 = vmatpush.msra.mxu0 %v176
    %5174 = vmatpush.msra.mxu0 %v173
    %5175 = vmatpush.msra.mxu0 %v170
    %5176 = vmatpush.msra.mxu0 %v167
    %5177 = vmatpush.msra.mxu0 %v164
    %5178 = vmatmul.f32.gmra.mxu0 %v5078
    %v5179 = vpop.f32.mrf.mxu0
    %v5180 = vadd.f32 %v358, %v5179
    %5181 = vdwg.mxu0
    %5182 = vmatpush.msra.mxu0 %v257
    %5183 = vmatpush.msra.mxu0 %v254
    %5184 = vmatpush.msra.mxu0 %v251
    %5185 = vmatpush.msra.mxu0 %v248
    %5186 = vmatpush.msra.mxu0 %v245
    %5187 = vmatpush.msra.mxu0 %v242
    %5188 = vmatpush.msra.mxu0 %v239
    %5189 = vmatpush.msra.mxu0 %v236
    %5190 = vmatpush.msra.mxu0 %v233
    %5191 = vmatpush.msra.mxu0 %v230
    %5192 = vmatpush.msra.mxu0 %v227
    %5193 = vmatpush.msra.mxu0 %v224
    %5194 = vmatpush.msra.mxu0 %v221
    %5195 = vmatpush.msra.mxu0 %v218
    %5196 = vmatpush.msra.mxu0 %v215
    %5197 = vmatpush.msra.mxu0 %v212
    %5198 = vmatmul.f32.gmra.mxu0 %v5079
    %v5199 = vpop.f32.mrf.mxu0
    %v5200 = vadd.f32 %v5180, %v5199
    %5201 = vdwg.mxu0
    %5202 = vmatpush.msra.mxu0 %v305
    %5203 = vmatpush.msra.mxu0 %v302
    %5204 = vmatpush.msra.mxu0 %v299
    %5205 = vmatpush.msra.mxu0 %v296
    %5206 = vmatpush.msra.mxu0 %v293
    %5207 = vmatpush.msra.mxu0 %v290
    %5208 = vmatpush.msra.mxu0 %v287
    %5209 = vmatpush.msra.mxu0 %v284
    %5210 = vmatpush.msra.mxu0 %v281
    %5211 = vmatpush.msra.mxu0 %v278
    %5212 = vmatpush.msra.mxu0 %v275
    %5213 = vmatpush.msra.mxu0 %v272
    %5214 = vmatpush.msra.mxu0 %v269
    %5215 = vmatpush.msra.mxu0 %v266
    %5216 = vmatpush.msra.mxu0 %v263
    %5217 = vmatpush.msra.mxu0 %v260
    %5218 = vmatmul.f32.gmra.mxu0 %v5080
    %v5219 = vpop.f32.mrf.mxu0
    %v5220 = vadd.f32 %v5200, %v5219
    %5221 = vdwg.mxu0
    %5222 = vmatpush.msra.mxu0 %v353
    %5223 = vmatpush.msra.mxu0 %v350
    %5224 = vmatpush.msra.mxu0 %v347
    %5225 = vmatpush.msra.mxu0 %v344
    %5226 = vmatpush.msra.mxu0 %v341
    %5227 = vmatpush.msra.mxu0 %v338
    %5228 = vmatpush.msra.mxu0 %v335
    %5229 = vmatpush.msra.mxu0 %v332
    %5230 = vmatpush.msra.mxu0 %v329
    %5231 = vmatpush.msra.mxu0 %v326
    %5232 = vmatpush.msra.mxu0 %v323
    %5233 = vmatpush.msra.mxu0 %v320
    %5234 = vmatpush.msra.mxu0 %v317
    %5235 = vmatpush.msra.mxu0 %v314
    %5236 = vmatpush.msra.mxu0 %v311
    %5237 = vmatpush.msra.mxu0 %v308
    %5238 = vmatmul.f32.gmra.mxu0 %v5081
    %v5239 = vpop.f32.mrf.mxu0
    %v5240 = vadd.f32 %v5220, %v5239
    %5241 = vdwg.mxu0
    %5242 = vmatpush.msra.mxu0 %v210
    %5243 = vmatpush.msra.mxu0 %v207
    %5244 = vmatpush.msra.mxu0 %v204
    %5245 = vmatpush.msra.mxu0 %v201
    %5246 = vmatpush.msra.mxu0 %v198
    %5247 = vmatpush.msra.mxu0 %v195
    %5248 = vmatpush.msra.mxu0 %v192
    %5249 = vmatpush.msra.mxu0 %v189
    %5250 = vmatpush.msra.mxu0 %v186
    %5251 = vmatpush.msra.mxu0 %v183
    %5252 = vmatpush.msra.mxu0 %v180
    %5253 = vmatpush.msra.mxu0 %v177
    %5254 = vmatpush.msra.mxu0 %v174
    %5255 = vmatpush.msra.mxu0 %v171
    %5256 = vmatpush.msra.mxu0 %v168
    %5257 = vmatpush.msra.mxu0 %v165
    %5258 = vmatmul.f32.gmra.mxu0 %v5078
    %v5259 = vpop.f32.mrf.mxu0
    %v5260 = vadd.f32 %v359, %v5259
    %5261 = vdwg.mxu0
    %5262 = vmatpush.msra.mxu0 %v258
    %5263 = vmatpush.msra.mxu0 %v255
    %5264 = vmatpush.msra.mxu0 %v252
    %5265 = vmatpush.msra.mxu0 %v249
    %5266 = vmatpush.msra.mxu0 %v246
    %5267 = vmatpush.msra.mxu0 %v243
    %5268 = vmatpush.msra.mxu0 %v240
    %5269 = vmatpush.msra.mxu0 %v237
    %5270 = vmatpush.msra.mxu0 %v234
    %5271 = vmatpush.msra.mxu0 %v231
    %5272 = vmatpush.msra.mxu0 %v228
    %5273 = vmatpush.msra.mxu0 %v225
    %5274 = vmatpush.msra.mxu0 %v222
    %5275 = vmatpush.msra.mxu0 %v219
    %5276 = vmatpush.msra.mxu0 %v216
    %5277 = vmatpush.msra.mxu0 %v213
    %5278 = vmatmul.f32.gmra.mxu0 %v5079
    %v5279 = vpop.f32.mrf.mxu0
    %v5280 = vadd.f32 %v5260, %v5279
    %5281 = vdwg.mxu0
    %5282 = vmatpush.msra.mxu0 %v306
    %5283 = vmatpush.msra.mxu0 %v303
    %5284 = vmatpush.msra.mxu0 %v300
    %5285 = vmatpush.msra.mxu0 %v297
    %5286 = vmatpush.msra.mxu0 %v294
    %5287 = vmatpush.msra.mxu0 %v291
    %5288 = vmatpush.msra.mxu0 %v288
    %5289 = vmatpush.msra.mxu0 %v285
    %5290 = vmatpush.msra.mxu0 %v282
    %5291 = vmatpush.msra.mxu0 %v279
    %5292 = vmatpush.msra.mxu0 %v276
    %5293 = vmatpush.msra.mxu0 %v273
    %5294 = vmatpush.msra.mxu0 %v270
    %5295 = vmatpush.msra.mxu0 %v267
    %5296 = vmatpush.msra.mxu0 %v264
    %5297 = vmatpush.msra.mxu0 %v261
    %5298 = vmatmul.f32.gmra.mxu0 %v5080
    %v5299 = vpop.f32.mrf.mxu0
    %v5300 = vadd.f32 %v5280, %v5299
    %5301 = vdwg.mxu0
    %5302 = vmatpush.msra.mxu0 %v354
    %5303 = vmatpush.msra.mxu0 %v351
    %5304 = vmatpush.msra.mxu0 %v348
    %5305 = vmatpush.msra.mxu0 %v345
    %5306 = vmatpush.msra.mxu0 %v342
    %5307 = vmatpush.msra.mxu0 %v339
    %5308 = vmatpush.msra.mxu0 %v336
    %5309 = vmatpush.msra.mxu0 %v333
    %5310 = vmatpush.msra.mxu0 %v330
    %5311 = vmatpush.msra.mxu0 %v327
    %5312 = vmatpush.msra.mxu0 %v324
    %5313 = vmatpush.msra.mxu0 %v321
    %5314 = vmatpush.msra.mxu0 %v318
    %5315 = vmatpush.msra.mxu0 %v315
    %5316 = vmatpush.msra.mxu0 %v312
    %5317 = vmatpush.msra.mxu0 %v309
    %5318 = vmatmul.f32.gmra.mxu0 %v5081
    %v5319 = vpop.f32.mrf.mxu0
    %v5320 = vadd.f32 %v5300, %v5319
    %5321 = vdwg.mxu0
    %v5322 = vtanh.pop %v5160
    %v5323 = vtanh.pop %v5240
    %v5324 = vtanh.pop %v5320
    %5325 = vmatpush.msra.mxu0 %v621
    %5326 = vmatpush.msra.mxu0 %v620
    %5327 = vmatpush.msra.mxu0 %v619
    %5328 = vmatpush.msra.mxu0 %v618
    %5329 = vmatpush.msra.mxu0 %v617
    %5330 = vmatpush.msra.mxu0 %v616
    %5331 = vmatpush.msra.mxu0 %v615
    %5332 = vmatpush.msra.mxu0 %v614
    %5333 = vmatpush.msra.mxu0 %v613
    %5334 = vmatpush.msra.mxu0 %v612
    %5335 = vmatpush.msra.mxu0 %v611
    %5336 = vmatpush.msra.mxu0 %v610
    %5337 = vmatpush.msra.mxu0 %v609
    %5338 = vmatpush.msra.mxu0 %v608
    %5339 = vmatpush.msra.mxu0 %v607
    %5340 = vmatpush.msra.mxu0 %v606
    %5341 = vmatmul.f32.gmra.mxu0 %v5322
    %v5342 = vpop.f32.mrf.mxu0
    %v5343 = vadd.f32 %v656, %v5342
    %5344 = vdwg.mxu0
    %5345 = vmatpush.msra.mxu0 %v637
    %5346 = vmatpush.msra.mxu0 %v636
    %5347 = vmatpush.msra.mxu0 %v635
    %5348 = vmatpush.msra.mxu0 %v634
    %5349 = vmatpush.msra.mxu0 %v633
    %5350 = vmatpush.msra.mxu0 %v632
    %5351 = vmatpush.msra.mxu0 %v631
    %5352 = vmatpush.msra.mxu0 %v630
    %5353 = vmatpush.msra.mxu0 %v629
    %5354 = vmatpush.msra.mxu0 %v628
    %5355 = vmatpush.msra.mxu0 %v627
    %5356 = vmatpush.msra.mxu0 %v626
    %5357 = vmatpush.msra.mxu0 %v625
    %5358 = vmatpush.msra.mxu0 %v624
    %5359 = vmatpush.msra.mxu0 %v623
    %5360 = vmatpush.msra.mxu0 %v622
    %5361 = vmatmul.f32.gmra.mxu0 %v5323
    %v5362 = vpop.f32.mrf.mxu0
    %v5363 = vadd.f32 %v5343, %v5362
    %5364 = vdwg.mxu0
    %5365 = vmatpush.msra.mxu0 %v653
    %5366 = vmatpush.msra.mxu0 %v652
    %5367 = vmatpush.msra.mxu0 %v651
    %5368 = vmatpush.msra.mxu0 %v650
    %5369 = vmatpush.msra.mxu0 %v649
    %5370 = vmatpush.msra.mxu0 %v648
    %5371 = vmatpush.msra.mxu0 %v647
    %5372 = vmatpush.msra.mxu0 %v646
    %5373 = vmatpush.msra.mxu0 %v645
    %5374 = vmatpush.msra.mxu0 %v644
    %5375 = vmatpush.msra.mxu0 %v643
    %5376 = vmatpush.msra.mxu0 %v642
    %5377 = vmatpush.msra.mxu0 %v641
    %5378 = vmatpush.msra.mxu0 %v640
    %5379 = vmatpush.msra.mxu0 %v639
    %5380 = vmatpush.msra.mxu0 %v638
    %5381 = vmatmul.f32.gmra.mxu0 %v5324
    %v5382 = vpop.f32.mrf.mxu0
    %v5383 = vadd.f32 %v5363, %v5382
    %5384 = vdwg.mxu0
    %5385 = vmatpush.msra.mxu0 %v2017
    %5386 = vmatpush.msra.mxu0 %v2014
    %5387 = vmatpush.msra.mxu0 %v2011
    %5388 = vmatpush.msra.mxu0 %v2008
    %5389 = vmatpush.msra.mxu0 %v2005
    %5390 = vmatpush.msra.mxu0 %v2002
    %5391 = vmatpush.msra.mxu0 %v1999
    %5392 = vmatpush.msra.mxu0 %v1996
    %5393 = vmatpush.msra.mxu0 %v1993
    %5394 = vmatpush.msra.mxu0 %v1990
    %5395 = vmatpush.msra.mxu0 %v1987
    %5396 = vmatpush.msra.mxu0 %v1984
    %5397 = vmatpush.msra.mxu0 %v1981
    %5398 = vmatpush.msra.mxu0 %v1978
    %5399 = vmatpush.msra.mxu0 %v1975
    %5400 = vmatpush.msra.mxu0 %v1972
    %5401 = vmatmul.f32.gmra.mxu0 %v5383
    %v5402 = vpop.f32.mrf.mxu0
    %v5403 = vadd.f32 0.0, %v5402
    %5404 = vdwg.mxu0
    %5405 = vmatpush.msra.mxu0 %v2018
    %5406 = vmatpush.msra.mxu0 %v2015
    %5407 = vmatpush.msra.mxu0 %v2012
    %5408 = vmatpush.msra.mxu0 %v2009
    %5409 = vmatpush.msra.mxu0 %v2006
    %5410 = vmatpush.msra.mxu0 %v2003
    %5411 = vmatpush.msra.mxu0 %v2000
    %5412 = vmatpush.msra.mxu0 %v1997
    %5413 = vmatpush.msra.mxu0 %v1994
    %5414 = vmatpush.msra.mxu0 %v1991
    %5415 = vmatpush.msra.mxu0 %v1988
    %5416 = vmatpush.msra.mxu0 %v1985
    %5417 = vmatpush.msra.mxu0 %v1982
    %5418 = vmatpush.msra.mxu0 %v1979
    %5419 = vmatpush.msra.mxu0 %v1976
    %5420 = vmatpush.msra.mxu0 %v1973
    %5421 = vmatmul.f32.gmra.mxu0 %v5383
    %v5422 = vpop.f32.mrf.mxu0
    %v5423 = vadd.f32 0.0, %v5422
    %5424 = vdwg.mxu0
    %5425 = vmatpush.msra.mxu0 %v2019
    %5426 = vmatpush.msra.mxu0 %v2016
    %5427 = vmatpush.msra.mxu0 %v2013
    %5428 = vmatpush.msra.mxu0 %v2010
    %5429 = vmatpush.msra.mxu0 %v2007
    %5430 = vmatpush.msra.mxu0 %v2004
    %5431 = vmatpush.msra.mxu0 %v2001
    %5432 = vmatpush.msra.mxu0 %v1998
    %5433 = vmatpush.msra.mxu0 %v1995
    %5434 = vmatpush.msra.mxu0 %v1992
    %5435 = vmatpush.msra.mxu0 %v1989
    %5436 = vmatpush.msra.mxu0 %v1986
    %5437 = vmatpush.msra.mxu0 %v1983
    %5438 = vmatpush.msra.mxu0 %v1980
    %5439 = vmatpush.msra.mxu0 %v1977
    %5440 = vmatpush.msra.mxu0 %v1974
    %5441 = vmatmul.f32.gmra.mxu0 %v5383
    %v5442 = vpop.f32.mrf.mxu0
    %v5443 = vadd.f32 0.0, %v5442
    %5444 = vdwg.mxu0
    %v5445 = vadd.f32 %v5074, %v5403
    %v5446 = vadd.f32 %v5075, %v5423
    %v5447 = vadd.f32 %v5076, %v5443
    %v5448 = vadd.f32 %v5445, %v2085
    %v5449 = vadd.f32 %v5446, %v2086
    %v5450 = vadd.f32 %v5447, %v2087
    %v5451 = vtanh.pop %v5448
    %v5452 = vtanh.pop %v5449
    %v5453 = vtanh.pop %v5450
    %5454 = vmatpush.msra.mxu0 %v2112
    %5455 = vmatpush.msra.mxu0 %v2111
    %5456 = vmatpush.msra.mxu0 %v2110
    %5457 = vmatpush.msra.mxu0 %v2109
    %5458 = vmatpush.msra.mxu0 %v2108
    %5459 = vmatpush.msra.mxu0 %v2107
    %5460 = vmatpush.msra.mxu0 %v2106
    %5461 = vmatpush.msra.mxu0 %v2105
    %5462 = vmatpush.msra.mxu0 %v2104
    %5463 = vmatpush.msra.mxu0 %v2103
    %5464 = vmatpush.msra.mxu0 %v2102
    %5465 = vmatpush.msra.mxu0 %v2101
    %5466 = vmatpush.msra.mxu0 %v2100
    %5467 = vmatpush.msra.mxu0 %v2099
    %5468 = vmatpush.msra.mxu0 %v2098
    %5469 = vmatpush.msra.mxu0 %v2097
    %5470 = vmatmul.f32.gmra.mxu0 %v5451
    %v5471 = vpop.f32.mrf.mxu0
    %v5472 = vadd.f32 %v2147, %v5471
    %5473 = vdwg.mxu0
    %5474 = vmatpush.msra.mxu0 %v2128
    %5475 = vmatpush.msra.mxu0 %v2127
    %5476 = vmatpush.msra.mxu0 %v2126
    %5477 = vmatpush.msra.mxu0 %v2125
    %5478 = vmatpush.msra.mxu0 %v2124
    %5479 = vmatpush.msra.mxu0 %v2123
    %5480 = vmatpush.msra.mxu0 %v2122
    %5481 = vmatpush.msra.mxu0 %v2121
    %5482 = vmatpush.msra.mxu0 %v2120
    %5483 = vmatpush.msra.mxu0 %v2119
    %5484 = vmatpush.msra.mxu0 %v2118
    %5485 = vmatpush.msra.mxu0 %v2117
    %5486 = vmatpush.msra.mxu0 %v2116
    %5487 = vmatpush.msra.mxu0 %v2115
    %5488 = vmatpush.msra.mxu0 %v2114
    %5489 = vmatpush.msra.mxu0 %v2113
    %5490 = vmatmul.f32.gmra.mxu0 %v5452
    %v5491 = vpop.f32.mrf.mxu0
    %v5492 = vadd.f32 %v5472, %v5491
    %5493 = vdwg.mxu0
    %5494 = vmatpush.msra.mxu0 %v2144
    %5495 = vmatpush.msra.mxu0 %v2143
    %5496 = vmatpush.msra.mxu0 %v2142
    %5497 = vmatpush.msra.mxu0 %v2141
    %5498 = vmatpush.msra.mxu0 %v2140
    %5499 = vmatpush.msra.mxu0 %v2139
    %5500 = vmatpush.msra.mxu0 %v2138
    %5501 = vmatpush.msra.mxu0 %v2137
    %5502 = vmatpush.msra.mxu0 %v2136
    %5503 = vmatpush.msra.mxu0 %v2135
    %5504 = vmatpush.msra.mxu0 %v2134
    %5505 = vmatpush.msra.mxu0 %v2133
    %5506 = vmatpush.msra.mxu0 %v2132
    %5507 = vmatpush.msra.mxu0 %v2131
    %5508 = vmatpush.msra.mxu0 %v2130
    %5509 = vmatpush.msra.mxu0 %v2129
    %5510 = vmatmul.f32.gmra.mxu0 %v5453
    %v5511 = vpop.f32.mrf.mxu0
    %v5512 = vadd.f32 %v5492, %v5511
    %5513 = vdwg.mxu0
    %s5514 = scalar_lea.vmem [#allocation10], 768
    %v5515 = vld [vmem:[%s5514] sm:$0xff]
    %v5516 = vld [vmem:[%s5514 + $0x8] sm:$0xff]
    %v5517 = vld [vmem:[%s5514 + $0x10] sm:$0xff]
    %v5518 = vld [vmem:[%s5514 + $0x18] sm:$0xff]
    %v5519 = vld [vmem:[%s5514 + $0x20] sm:$0xff]
    %v5520 = vld [vmem:[%s5514 + $0x28] sm:$0xff]
    %v5521 = vld [vmem:[%s5514 + $0x30] sm:$0xff]
    %v5522 = vld [vmem:[%s5514 + $0x38] sm:$0xff]
    %v5523 = vld [vmem:[%s5514 + $0x40] sm:$0xff]
    %v5524 = vld [vmem:[%s5514 + $0x48] sm:$0xff]
    %v5525 = vld [vmem:[%s5514 + $0x50] sm:$0xff]
    %v5526 = vld [vmem:[%s5514 + $0x58] sm:$0xff]
    %v5527 = vld [vmem:[%s5514 + $0x60] sm:$0xff]
    %v5528 = vld [vmem:[%s5514 + $0x68] sm:$0xff]
    %v5529 = vld [vmem:[%s5514 + $0x70] sm:$0xff]
    %v5530 = vld [vmem:[%s5514 + $0x78] sm:$0xff]
    %v5531 = vld [vmem:[%s5514 + $0x80] sm:$0xff]
    %v5532 = vld [vmem:[%s5514 + $0x88] sm:$0xff]
    %v5533 = vld [vmem:[%s5514 + $0x90] sm:$0xff]
    %v5534 = vld [vmem:[%s5514 + $0x98] sm:$0xff]
    %v5535 = vld [vmem:[%s5514 + $0xa0] sm:$0xff]
    %v5536 = vld [vmem:[%s5514 + $0xa8] sm:$0xff]
    %v5537 = vld [vmem:[%s5514 + $0xb0] sm:$0xff]
    %v5538 = vld [vmem:[%s5514 + $0xb8] sm:$0xff]
    %v5539 = vld [vmem:[%s5514 + $0xc0] sm:$0xff]
    %v5540 = vld [vmem:[%s5514 + $0xc8] sm:$0xff]
    %v5541 = vld [vmem:[%s5514 + $0xd0] sm:$0xff]
    %v5542 = vld [vmem:[%s5514 + $0xd8] sm:$0xff]
    %v5543 = vld [vmem:[%s5514 + $0xe0] sm:$0xff]
    %v5544 = vld [vmem:[%s5514 + $0xe8] sm:$0xff]
    %v5545 = vld [vmem:[%s5514 + $0xf0] sm:$0xff]
    %v5546 = vld [vmem:[%s5514 + $0xf8] sm:$0xff]
    %v5547 = vld [vmem:[%s5514 + $0x100] sm:$0xff]
    %v5548 = vld [vmem:[%s5514 + $0x108] sm:$0xff]
    %v5549 = vld [vmem:[%s5514 + $0x110] sm:$0xff]
    %v5550 = vld [vmem:[%s5514 + $0x118] sm:$0xff]
    %v5551 = vld [vmem:[%s5514 + $0x120] sm:$0xff]
    %v5552 = vld [vmem:[%s5514 + $0x128] sm:$0xff]
    %v5553 = vld [vmem:[%s5514 + $0x130] sm:$0xff]
    %v5554 = vld [vmem:[%s5514 + $0x138] sm:$0xff]
    %v5555 = vld [vmem:[%s5514 + $0x140] sm:$0xff]
    %v5556 = vld [vmem:[%s5514 + $0x148] sm:$0xff]
    %v5557 = vld [vmem:[%s5514 + $0x150] sm:$0xff]
    %v5558 = vld [vmem:[%s5514 + $0x158] sm:$0xff]
    %v5559 = vld [vmem:[%s5514 + $0x160] sm:$0xff]
    %v5560 = vld [vmem:[%s5514 + $0x168] sm:$0xff]
    %v5561 = vld [vmem:[%s5514 + $0x170] sm:$0xff]
    %v5562 = vld [vmem:[%s5514 + $0x178] sm:$0xff]
    %5563 = vmatpush.msra.mxu0 %v5560
    %5564 = vmatpush.msra.mxu0 %v5557
    %5565 = vmatpush.msra.mxu0 %v5554
    %5566 = vmatpush.msra.mxu0 %v5551
    %5567 = vmatpush.msra.mxu0 %v5548
    %5568 = vmatpush.msra.mxu0 %v5545
    %5569 = vmatpush.msra.mxu0 %v5542
    %5570 = vmatpush.msra.mxu0 %v5539
    %5571 = vmatpush.msra.mxu0 %v5536
    %5572 = vmatpush.msra.mxu0 %v5533
    %5573 = vmatpush.msra.mxu0 %v5530
    %5574 = vmatpush.msra.mxu0 %v5527
    %5575 = vmatpush.msra.mxu0 %v5524
    %5576 = vmatpush.msra.mxu0 %v5521
    %5577 = vmatpush.msra.mxu0 %v5518
    %5578 = vmatpush.msra.mxu0 %v5515
    %5579 = vmatmul.f32.gmra.mxu0 %v5512
    %v5580 = vpop.f32.mrf.mxu0
    %v5581 = vadd.f32 0.0, %v5580
    %5582 = vdwg.mxu0
    %5583 = vmatpush.msra.mxu0 %v5561
    %5584 = vmatpush.msra.mxu0 %v5558
    %5585 = vmatpush.msra.mxu0 %v5555
    %5586 = vmatpush.msra.mxu0 %v5552
    %5587 = vmatpush.msra.mxu0 %v5549
    %5588 = vmatpush.msra.mxu0 %v5546
    %5589 = vmatpush.msra.mxu0 %v5543
    %5590 = vmatpush.msra.mxu0 %v5540
    %5591 = vmatpush.msra.mxu0 %v5537
    %5592 = vmatpush.msra.mxu0 %v5534
    %5593 = vmatpush.msra.mxu0 %v5531
    %5594 = vmatpush.msra.mxu0 %v5528
    %5595 = vmatpush.msra.mxu0 %v5525
    %5596 = vmatpush.msra.mxu0 %v5522
    %5597 = vmatpush.msra.mxu0 %v5519
    %5598 = vmatpush.msra.mxu0 %v5516
    %5599 = vmatmul.f32.gmra.mxu0 %v5512
    %v5600 = vpop.f32.mrf.mxu0
    %v5601 = vadd.f32 0.0, %v5600
    %5602 = vdwg.mxu0
    %5603 = vmatpush.msra.mxu0 %v5562
    %5604 = vmatpush.msra.mxu0 %v5559
    %5605 = vmatpush.msra.mxu0 %v5556
    %5606 = vmatpush.msra.mxu0 %v5553
    %5607 = vmatpush.msra.mxu0 %v5550
    %5608 = vmatpush.msra.mxu0 %v5547
    %5609 = vmatpush.msra.mxu0 %v5544
    %5610 = vmatpush.msra.mxu0 %v5541
    %5611 = vmatpush.msra.mxu0 %v5538
    %5612 = vmatpush.msra.mxu0 %v5535
    %5613 = vmatpush.msra.mxu0 %v5532
    %5614 = vmatpush.msra.mxu0 %v5529
    %5615 = vmatpush.msra.mxu0 %v5526
    %5616 = vmatpush.msra.mxu0 %v5523
    %5617 = vmatpush.msra.mxu0 %v5520
    %5618 = vmatpush.msra.mxu0 %v5517
    %5619 = vmatmul.f32.gmra.mxu0 %v5512
    %v5620 = vpop.f32.mrf.mxu0
    %v5621 = vadd.f32 0.0, %v5620
    %5622 = vdwg.mxu0
    %v5623 = vadd.f32 %v3928, %v5581
    %v5624 = vadd.f32 %v3948, %v5601
    %v5625 = vadd.f32 %v3968, %v5621
    %s5626 = scalar_lea.vmem %s0, 384
    %v5627 = vld [vmem:[%s5626] sm:$0xff]
    %v5628 = vld [vmem:[%s5626 + $0x8] sm:$0xff]
    %v5629 = vld [vmem:[%s5626 + $0x10] sm:$0xff]
    %v5630 = vld [vmem:[%s5626 + $0x18] sm:$0xff]
    %5631 = vmatpush.msra.mxu0 %v208
    %5632 = vmatpush.msra.mxu0 %v205
    %5633 = vmatpush.msra.mxu0 %v202
    %5634 = vmatpush.msra.mxu0 %v199
    %5635 = vmatpush.msra.mxu0 %v196
    %5636 = vmatpush.msra.mxu0 %v193
    %5637 = vmatpush.msra.mxu0 %v190
    %5638 = vmatpush.msra.mxu0 %v187
    %5639 = vmatpush.msra.mxu0 %v184
    %5640 = vmatpush.msra.mxu0 %v181
    %5641 = vmatpush.msra.mxu0 %v178
    %5642 = vmatpush.msra.mxu0 %v175
    %5643 = vmatpush.msra.mxu0 %v172
    %5644 = vmatpush.msra.mxu0 %v169
    %5645 = vmatpush.msra.mxu0 %v166
    %5646 = vmatpush.msra.mxu0 %v163
    %5647 = vmatmul.f32.gmra.mxu0 %v5627
    %v5648 = vpop.f32.mrf.mxu0
    %v5649 = vadd.f32 %v357, %v5648
    %5650 = vdwg.mxu0
    %5651 = vmatpush.msra.mxu0 %v256
    %5652 = vmatpush.msra.mxu0 %v253
    %5653 = vmatpush.msra.mxu0 %v250
    %5654 = vmatpush.msra.mxu0 %v247
    %5655 = vmatpush.msra.mxu0 %v244
    %5656 = vmatpush.msra.mxu0 %v241
    %5657 = vmatpush.msra.mxu0 %v238
    %5658 = vmatpush.msra.mxu0 %v235
    %5659 = vmatpush.msra.mxu0 %v232
    %5660 = vmatpush.msra.mxu0 %v229
    %5661 = vmatpush.msra.mxu0 %v226
    %5662 = vmatpush.msra.mxu0 %v223
    %5663 = vmatpush.msra.mxu0 %v220
    %5664 = vmatpush.msra.mxu0 %v217
    %5665 = vmatpush.msra.mxu0 %v214
    %5666 = vmatpush.msra.mxu0 %v211
    %5667 = vmatmul.f32.gmra.mxu0 %v5628
    %v5668 = vpop.f32.mrf.mxu0
    %v5669 = vadd.f32 %v5649, %v5668
    %5670 = vdwg.mxu0
    %5671 = vmatpush.msra.mxu0 %v304
    %5672 = vmatpush.msra.mxu0 %v301
    %5673 = vmatpush.msra.mxu0 %v298
    %5674 = vmatpush.msra.mxu0 %v295
    %5675 = vmatpush.msra.mxu0 %v292
    %5676 = vmatpush.msra.mxu0 %v289
    %5677 = vmatpush.msra.mxu0 %v286
    %5678 = vmatpush.msra.mxu0 %v283
    %5679 = vmatpush.msra.mxu0 %v280
    %5680 = vmatpush.msra.mxu0 %v277
    %5681 = vmatpush.msra.mxu0 %v274
    %5682 = vmatpush.msra.mxu0 %v271
    %5683 = vmatpush.msra.mxu0 %v268
    %5684 = vmatpush.msra.mxu0 %v265
    %5685 = vmatpush.msra.mxu0 %v262
    %5686 = vmatpush.msra.mxu0 %v259
    %5687 = vmatmul.f32.gmra.mxu0 %v5629
    %v5688 = vpop.f32.mrf.mxu0
    %v5689 = vadd.f32 %v5669, %v5688
    %5690 = vdwg.mxu0
    %5691 = vmatpush.msra.mxu0 %v352
    %5692 = vmatpush.msra.mxu0 %v349
    %5693 = vmatpush.msra.mxu0 %v346
    %5694 = vmatpush.msra.mxu0 %v343
    %5695 = vmatpush.msra.mxu0 %v340
    %5696 = vmatpush.msra.mxu0 %v337
    %5697 = vmatpush.msra.mxu0 %v334
    %5698 = vmatpush.msra.mxu0 %v331
    %5699 = vmatpush.msra.mxu0 %v328
    %5700 = vmatpush.msra.mxu0 %v325
    %5701 = vmatpush.msra.mxu0 %v322
    %5702 = vmatpush.msra.mxu0 %v319
    %5703 = vmatpush.msra.mxu0 %v316
    %5704 = vmatpush.msra.mxu0 %v313
    %5705 = vmatpush.msra.mxu0 %v310
    %5706 = vmatpush.msra.mxu0 %v307
    %5707 = vmatmul.f32.gmra.mxu0 %v5630
    %v5708 = vpop.f32.mrf.mxu0
    %v5709 = vadd.f32 %v5689, %v5708
    %5710 = vdwg.mxu0
    %5711 = vmatpush.msra.mxu0 %v209
    %5712 = vmatpush.msra.mxu0 %v206
    %5713 = vmatpush.msra.mxu0 %v203
    %5714 = vmatpush.msra.mxu0 %v200
    %5715 = vmatpush.msra.mxu0 %v197
    %5716 = vmatpush.msra.mxu0 %v194
    %5717 = vmatpush.msra.mxu0 %v191
    %5718 = vmatpush.msra.mxu0 %v188
    %5719 = vmatpush.msra.mxu0 %v185
    %5720 = vmatpush.msra.mxu0 %v182
    %5721 = vmatpush.msra.mxu0 %v179
    %5722 = vmatpush.msra.mxu0 %v176
    %5723 = vmatpush.msra.mxu0 %v173
    %5724 = vmatpush.msra.mxu0 %v170
    %5725 = vmatpush.msra.mxu0 %v167
    %5726 = vmatpush.msra.mxu0 %v164
    %5727 = vmatmul.f32.gmra.mxu0 %v5627
    %v5728 = vpop.f32.mrf.mxu0
    %v5729 = vadd.f32 %v358, %v5728
    %5730 = vdwg.mxu0
    %5731 = vmatpush.msra.mxu0 %v257
    %5732 = vmatpush.msra.mxu0 %v254
    %5733 = vmatpush.msra.mxu0 %v251
    %5734 = vmatpush.msra.mxu0 %v248
    %5735 = vmatpush.msra.mxu0 %v245
    %5736 = vmatpush.msra.mxu0 %v242
    %5737 = vmatpush.msra.mxu0 %v239
    %5738 = vmatpush.msra.mxu0 %v236
    %5739 = vmatpush.msra.mxu0 %v233
    %5740 = vmatpush.msra.mxu0 %v230
    %5741 = vmatpush.msra.mxu0 %v227
    %5742 = vmatpush.msra.mxu0 %v224
    %5743 = vmatpush.msra.mxu0 %v221
    %5744 = vmatpush.msra.mxu0 %v218
    %5745 = vmatpush.msra.mxu0 %v215
    %5746 = vmatpush.msra.mxu0 %v212
    %5747 = vmatmul.f32.gmra.mxu0 %v5628
    %v5748 = vpop.f32.mrf.mxu0
    %v5749 = vadd.f32 %v5729, %v5748
    %5750 = vdwg.mxu0
    %5751 = vmatpush.msra.mxu0 %v305
    %5752 = vmatpush.msra.mxu0 %v302
    %5753 = vmatpush.msra.mxu0 %v299
    %5754 = vmatpush.msra.mxu0 %v296
    %5755 = vmatpush.msra.mxu0 %v293
    %5756 = vmatpush.msra.mxu0 %v290
    %5757 = vmatpush.msra.mxu0 %v287
    %5758 = vmatpush.msra.mxu0 %v284
    %5759 = vmatpush.msra.mxu0 %v281
    %5760 = vmatpush.msra.mxu0 %v278
    %5761 = vmatpush.msra.mxu0 %v275
    %5762 = vmatpush.msra.mxu0 %v272
    %5763 = vmatpush.msra.mxu0 %v269
    %5764 = vmatpush.msra.mxu0 %v266
    %5765 = vmatpush.msra.mxu0 %v263
    %5766 = vmatpush.msra.mxu0 %v260
    %5767 = vmatmul.f32.gmra.mxu0 %v5629
    %v5768 = vpop.f32.mrf.mxu0
    %v5769 = vadd.f32 %v5749, %v5768
    %5770 = vdwg.mxu0
    %5771 = vmatpush.msra.mxu0 %v353
    %5772 = vmatpush.msra.mxu0 %v350
    %5773 = vmatpush.msra.mxu0 %v347
    %5774 = vmatpush.msra.mxu0 %v344
    %5775 = vmatpush.msra.mxu0 %v341
    %5776 = vmatpush.msra.mxu0 %v338
    %5777 = vmatpush.msra.mxu0 %v335
    %5778 = vmatpush.msra.mxu0 %v332
    %5779 = vmatpush.msra.mxu0 %v329
    %5780 = vmatpush.msra.mxu0 %v326
    %5781 = vmatpush.msra.mxu0 %v323
    %5782 = vmatpush.msra.mxu0 %v320
    %5783 = vmatpush.msra.mxu0 %v317
    %5784 = vmatpush.msra.mxu0 %v314
    %5785 = vmatpush.msra.mxu0 %v311
    %5786 = vmatpush.msra.mxu0 %v308
    %5787 = vmatmul.f32.gmra.mxu0 %v5630
    %v5788 = vpop.f32.mrf.mxu0
    %v5789 = vadd.f32 %v5769, %v5788
    %5790 = vdwg.mxu0
    %5791 = vmatpush.msra.mxu0 %v210
    %5792 = vmatpush.msra.mxu0 %v207
    %5793 = vmatpush.msra.mxu0 %v204
    %5794 = vmatpush.msra.mxu0 %v201
    %5795 = vmatpush.msra.mxu0 %v198
    %5796 = vmatpush.msra.mxu0 %v195
    %5797 = vmatpush.msra.mxu0 %v192
    %5798 = vmatpush.msra.mxu0 %v189
    %5799 = vmatpush.msra.mxu0 %v186
    %5800 = vmatpush.msra.mxu0 %v183
    %5801 = vmatpush.msra.mxu0 %v180
    %5802 = vmatpush.msra.mxu0 %v177
    %5803 = vmatpush.msra.mxu0 %v174
    %5804 = vmatpush.msra.mxu0 %v171
    %5805 = vmatpush.msra.mxu0 %v168
    %5806 = vmatpush.msra.mxu0 %v165
    %5807 = vmatmul.f32.gmra.mxu0 %v5627
    %v5808 = vpop.f32.mrf.mxu0
    %v5809 = vadd.f32 %v359, %v5808
    %5810 = vdwg.mxu0
    %5811 = vmatpush.msra.mxu0 %v258
    %5812 = vmatpush.msra.mxu0 %v255
    %5813 = vmatpush.msra.mxu0 %v252
    %5814 = vmatpush.msra.mxu0 %v249
    %5815 = vmatpush.msra.mxu0 %v246
    %5816 = vmatpush.msra.mxu0 %v243
    %5817 = vmatpush.msra.mxu0 %v240
    %5818 = vmatpush.msra.mxu0 %v237
    %5819 = vmatpush.msra.mxu0 %v234
    %5820 = vmatpush.msra.mxu0 %v231
    %5821 = vmatpush.msra.mxu0 %v228
    %5822 = vmatpush.msra.mxu0 %v225
    %5823 = vmatpush.msra.mxu0 %v222
    %5824 = vmatpush.msra.mxu0 %v219
    %5825 = vmatpush.msra.mxu0 %v216
    %5826 = vmatpush.msra.mxu0 %v213
    %5827 = vmatmul.f32.gmra.mxu0 %v5628
    %v5828 = vpop.f32.mrf.mxu0
    %v5829 = vadd.f32 %v5809, %v5828
    %5830 = vdwg.mxu0
    %5831 = vmatpush.msra.mxu0 %v306
    %5832 = vmatpush.msra.mxu0 %v303
    %5833 = vmatpush.msra.mxu0 %v300
    %5834 = vmatpush.msra.mxu0 %v297
    %5835 = vmatpush.msra.mxu0 %v294
    %5836 = vmatpush.msra.mxu0 %v291
    %5837 = vmatpush.msra.mxu0 %v288
    %5838 = vmatpush.msra.mxu0 %v285
    %5839 = vmatpush.msra.mxu0 %v282
    %5840 = vmatpush.msra.mxu0 %v279
    %5841 = vmatpush.msra.mxu0 %v276
    %5842 = vmatpush.msra.mxu0 %v273
    %5843 = vmatpush.msra.mxu0 %v270
    %5844 = vmatpush.msra.mxu0 %v267
    %5845 = vmatpush.msra.mxu0 %v264
    %5846 = vmatpush.msra.mxu0 %v261
    %5847 = vmatmul.f32.gmra.mxu0 %v5629
    %v5848 = vpop.f32.mrf.mxu0
    %v5849 = vadd.f32 %v5829, %v5848
    %5850 = vdwg.mxu0
    %5851 = vmatpush.msra.mxu0 %v354
    %5852 = vmatpush.msra.mxu0 %v351
    %5853 = vmatpush.msra.mxu0 %v348
    %5854 = vmatpush.msra.mxu0 %v345
    %5855 = vmatpush.msra.mxu0 %v342
    %5856 = vmatpush.msra.mxu0 %v339
    %5857 = vmatpush.msra.mxu0 %v336
    %5858 = vmatpush.msra.mxu0 %v333
    %5859 = vmatpush.msra.mxu0 %v330
    %5860 = vmatpush.msra.mxu0 %v327
    %5861 = vmatpush.msra.mxu0 %v324
    %5862 = vmatpush.msra.mxu0 %v321
    %5863 = vmatpush.msra.mxu0 %v318
    %5864 = vmatpush.msra.mxu0 %v315
    %5865 = vmatpush.msra.mxu0 %v312
    %5866 = vmatpush.msra.mxu0 %v309
    %5867 = vmatmul.f32.gmra.mxu0 %v5630
    %v5868 = vpop.f32.mrf.mxu0
    %v5869 = vadd.f32 %v5849, %v5868
    %5870 = vdwg.mxu0
    %v5871 = vtanh.pop %v5709
    %v5872 = vtanh.pop %v5789
    %v5873 = vtanh.pop %v5869
    %5874 = vmatpush.msra.mxu0 %v621
    %5875 = vmatpush.msra.mxu0 %v620
    %5876 = vmatpush.msra.mxu0 %v619
    %5877 = vmatpush.msra.mxu0 %v618
    %5878 = vmatpush.msra.mxu0 %v617
    %5879 = vmatpush.msra.mxu0 %v616
    %5880 = vmatpush.msra.mxu0 %v615
    %5881 = vmatpush.msra.mxu0 %v614
    %5882 = vmatpush.msra.mxu0 %v613
    %5883 = vmatpush.msra.mxu0 %v612
    %5884 = vmatpush.msra.mxu0 %v611
    %5885 = vmatpush.msra.mxu0 %v610
    %5886 = vmatpush.msra.mxu0 %v609
    %5887 = vmatpush.msra.mxu0 %v608
    %5888 = vmatpush.msra.mxu0 %v607
    %5889 = vmatpush.msra.mxu0 %v606
    %5890 = vmatmul.f32.gmra.mxu0 %v5871
    %v5891 = vpop.f32.mrf.mxu0
    %v5892 = vadd.f32 %v656, %v5891
    %5893 = vdwg.mxu0
    %5894 = vmatpush.msra.mxu0 %v637
    %5895 = vmatpush.msra.mxu0 %v636
    %5896 = vmatpush.msra.mxu0 %v635
    %5897 = vmatpush.msra.mxu0 %v634
    %5898 = vmatpush.msra.mxu0 %v633
    %5899 = vmatpush.msra.mxu0 %v632
    %5900 = vmatpush.msra.mxu0 %v631
    %5901 = vmatpush.msra.mxu0 %v630
    %5902 = vmatpush.msra.mxu0 %v629
    %5903 = vmatpush.msra.mxu0 %v628
    %5904 = vmatpush.msra.mxu0 %v627
    %5905 = vmatpush.msra.mxu0 %v626
    %5906 = vmatpush.msra.mxu0 %v625
    %5907 = vmatpush.msra.mxu0 %v624
    %5908 = vmatpush.msra.mxu0 %v623
    %5909 = vmatpush.msra.mxu0 %v622
    %5910 = vmatmul.f32.gmra.mxu0 %v5872
    %v5911 = vpop.f32.mrf.mxu0
    %v5912 = vadd.f32 %v5892, %v5911
    %5913 = vdwg.mxu0
    %5914 = vmatpush.msra.mxu0 %v653
    %5915 = vmatpush.msra.mxu0 %v652
    %5916 = vmatpush.msra.mxu0 %v651
    %5917 = vmatpush.msra.mxu0 %v650
    %5918 = vmatpush.msra.mxu0 %v649
    %5919 = vmatpush.msra.mxu0 %v648
    %5920 = vmatpush.msra.mxu0 %v647
    %5921 = vmatpush.msra.mxu0 %v646
    %5922 = vmatpush.msra.mxu0 %v645
    %5923 = vmatpush.msra.mxu0 %v644
    %5924 = vmatpush.msra.mxu0 %v643
    %5925 = vmatpush.msra.mxu0 %v642
    %5926 = vmatpush.msra.mxu0 %v641
    %5927 = vmatpush.msra.mxu0 %v640
    %5928 = vmatpush.msra.mxu0 %v639
    %5929 = vmatpush.msra.mxu0 %v638
    %5930 = vmatmul.f32.gmra.mxu0 %v5873
    %v5931 = vpop.f32.mrf.mxu0
    %v5932 = vadd.f32 %v5912, %v5931
    %5933 = vdwg.mxu0
    %s5934 = scalar_lea.vmem %s0, 416
    %v5935 = vld [vmem:[%s5934] sm:$0xff]
    %v5936 = vld [vmem:[%s5934 + $0x8] sm:$0xff]
    %v5937 = vld [vmem:[%s5934 + $0x10] sm:$0xff]
    %v5938 = vld [vmem:[%s5934 + $0x18] sm:$0xff]
    %5939 = vmatpush.msra.mxu0 %v208
    %5940 = vmatpush.msra.mxu0 %v205
    %5941 = vmatpush.msra.mxu0 %v202
    %5942 = vmatpush.msra.mxu0 %v199
    %5943 = vmatpush.msra.mxu0 %v196
    %5944 = vmatpush.msra.mxu0 %v193
    %5945 = vmatpush.msra.mxu0 %v190
    %5946 = vmatpush.msra.mxu0 %v187
    %5947 = vmatpush.msra.mxu0 %v184
    %5948 = vmatpush.msra.mxu0 %v181
    %5949 = vmatpush.msra.mxu0 %v178
    %5950 = vmatpush.msra.mxu0 %v175
    %5951 = vmatpush.msra.mxu0 %v172
    %5952 = vmatpush.msra.mxu0 %v169
    %5953 = vmatpush.msra.mxu0 %v166
    %5954 = vmatpush.msra.mxu0 %v163
    %5955 = vmatmul.f32.gmra.mxu0 %v5935
    %v5956 = vpop.f32.mrf.mxu0
    %v5957 = vadd.f32 %v357, %v5956
    %5958 = vdwg.mxu0
    %5959 = vmatpush.msra.mxu0 %v256
    %5960 = vmatpush.msra.mxu0 %v253
    %5961 = vmatpush.msra.mxu0 %v250
    %5962 = vmatpush.msra.mxu0 %v247
    %5963 = vmatpush.msra.mxu0 %v244
    %5964 = vmatpush.msra.mxu0 %v241
    %5965 = vmatpush.msra.mxu0 %v238
    %5966 = vmatpush.msra.mxu0 %v235
    %5967 = vmatpush.msra.mxu0 %v232
    %5968 = vmatpush.msra.mxu0 %v229
    %5969 = vmatpush.msra.mxu0 %v226
    %5970 = vmatpush.msra.mxu0 %v223
    %5971 = vmatpush.msra.mxu0 %v220
    %5972 = vmatpush.msra.mxu0 %v217
    %5973 = vmatpush.msra.mxu0 %v214
    %5974 = vmatpush.msra.mxu0 %v211
    %5975 = vmatmul.f32.gmra.mxu0 %v5936
    %v5976 = vpop.f32.mrf.mxu0
    %v5977 = vadd.f32 %v5957, %v5976
    %5978 = vdwg.mxu0
    %5979 = vmatpush.msra.mxu0 %v304
    %5980 = vmatpush.msra.mxu0 %v301
    %5981 = vmatpush.msra.mxu0 %v298
    %5982 = vmatpush.msra.mxu0 %v295
    %5983 = vmatpush.msra.mxu0 %v292
    %5984 = vmatpush.msra.mxu0 %v289
    %5985 = vmatpush.msra.mxu0 %v286
    %5986 = vmatpush.msra.mxu0 %v283
    %5987 = vmatpush.msra.mxu0 %v280
    %5988 = vmatpush.msra.mxu0 %v277
    %5989 = vmatpush.msra.mxu0 %v274
    %5990 = vmatpush.msra.mxu0 %v271
    %5991 = vmatpush.msra.mxu0 %v268
    %5992 = vmatpush.msra.mxu0 %v265
    %5993 = vmatpush.msra.mxu0 %v262
    %5994 = vmatpush.msra.mxu0 %v259
    %5995 = vmatmul.f32.gmra.mxu0 %v5937
    %v5996 = vpop.f32.mrf.mxu0
    %v5997 = vadd.f32 %v5977, %v5996
    %5998 = vdwg.mxu0
    %5999 = vmatpush.msra.mxu0 %v352
    %6000 = vmatpush.msra.mxu0 %v349
    %6001 = vmatpush.msra.mxu0 %v346
    %6002 = vmatpush.msra.mxu0 %v343
    %6003 = vmatpush.msra.mxu0 %v340
    %6004 = vmatpush.msra.mxu0 %v337
    %6005 = vmatpush.msra.mxu0 %v334
    %6006 = vmatpush.msra.mxu0 %v331
    %6007 = vmatpush.msra.mxu0 %v328
    %6008 = vmatpush.msra.mxu0 %v325
    %6009 = vmatpush.msra.mxu0 %v322
    %6010 = vmatpush.msra.mxu0 %v319
    %6011 = vmatpush.msra.mxu0 %v316
    %6012 = vmatpush.msra.mxu0 %v313
    %6013 = vmatpush.msra.mxu0 %v310
    %6014 = vmatpush.msra.mxu0 %v307
    %6015 = vmatmul.f32.gmra.mxu0 %v5938
    %v6016 = vpop.f32.mrf.mxu0
    %v6017 = vadd.f32 %v5997, %v6016
    %6018 = vdwg.mxu0
    %6019 = vmatpush.msra.mxu0 %v209
    %6020 = vmatpush.msra.mxu0 %v206
    %6021 = vmatpush.msra.mxu0 %v203
    %6022 = vmatpush.msra.mxu0 %v200
    %6023 = vmatpush.msra.mxu0 %v197
    %6024 = vmatpush.msra.mxu0 %v194
    %6025 = vmatpush.msra.mxu0 %v191
    %6026 = vmatpush.msra.mxu0 %v188
    %6027 = vmatpush.msra.mxu0 %v185
    %6028 = vmatpush.msra.mxu0 %v182
    %6029 = vmatpush.msra.mxu0 %v179
    %6030 = vmatpush.msra.mxu0 %v176
    %6031 = vmatpush.msra.mxu0 %v173
    %6032 = vmatpush.msra.mxu0 %v170
    %6033 = vmatpush.msra.mxu0 %v167
    %6034 = vmatpush.msra.mxu0 %v164
    %6035 = vmatmul.f32.gmra.mxu0 %v5935
    %v6036 = vpop.f32.mrf.mxu0
    %v6037 = vadd.f32 %v358, %v6036
    %6038 = vdwg.mxu0
    %6039 = vmatpush.msra.mxu0 %v257
    %6040 = vmatpush.msra.mxu0 %v254
    %6041 = vmatpush.msra.mxu0 %v251
    %6042 = vmatpush.msra.mxu0 %v248
    %6043 = vmatpush.msra.mxu0 %v245
    %6044 = vmatpush.msra.mxu0 %v242
    %6045 = vmatpush.msra.mxu0 %v239
    %6046 = vmatpush.msra.mxu0 %v236
    %6047 = vmatpush.msra.mxu0 %v233
    %6048 = vmatpush.msra.mxu0 %v230
    %6049 = vmatpush.msra.mxu0 %v227
    %6050 = vmatpush.msra.mxu0 %v224
    %6051 = vmatpush.msra.mxu0 %v221
    %6052 = vmatpush.msra.mxu0 %v218
    %6053 = vmatpush.msra.mxu0 %v215
    %6054 = vmatpush.msra.mxu0 %v212
    %6055 = vmatmul.f32.gmra.mxu0 %v5936
    %v6056 = vpop.f32.mrf.mxu0
    %v6057 = vadd.f32 %v6037, %v6056
    %6058 = vdwg.mxu0
    %6059 = vmatpush.msra.mxu0 %v305
    %6060 = vmatpush.msra.mxu0 %v302
    %6061 = vmatpush.msra.mxu0 %v299
    %6062 = vmatpush.msra.mxu0 %v296
    %6063 = vmatpush.msra.mxu0 %v293
    %6064 = vmatpush.msra.mxu0 %v290
    %6065 = vmatpush.msra.mxu0 %v287
    %6066 = vmatpush.msra.mxu0 %v284
    %6067 = vmatpush.msra.mxu0 %v281
    %6068 = vmatpush.msra.mxu0 %v278
    %6069 = vmatpush.msra.mxu0 %v275
    %6070 = vmatpush.msra.mxu0 %v272
    %6071 = vmatpush.msra.mxu0 %v269
    %6072 = vmatpush.msra.mxu0 %v266
    %6073 = vmatpush.msra.mxu0 %v263
    %6074 = vmatpush.msra.mxu0 %v260
    %6075 = vmatmul.f32.gmra.mxu0 %v5937
    %v6076 = vpop.f32.mrf.mxu0
    %v6077 = vadd.f32 %v6057, %v6076
    %6078 = vdwg.mxu0
    %6079 = vmatpush.msra.mxu0 %v353
    %6080 = vmatpush.msra.mxu0 %v350
    %6081 = vmatpush.msra.mxu0 %v347
    %6082 = vmatpush.msra.mxu0 %v344
    %6083 = vmatpush.msra.mxu0 %v341
    %6084 = vmatpush.msra.mxu0 %v338
    %6085 = vmatpush.msra.mxu0 %v335
    %6086 = vmatpush.msra.mxu0 %v332
    %6087 = vmatpush.msra.mxu0 %v329
    %6088 = vmatpush.msra.mxu0 %v326
    %6089 = vmatpush.msra.mxu0 %v323
    %6090 = vmatpush.msra.mxu0 %v320
    %6091 = vmatpush.msra.mxu0 %v317
    %6092 = vmatpush.msra.mxu0 %v314
    %6093 = vmatpush.msra.mxu0 %v311
    %6094 = vmatpush.msra.mxu0 %v308
    %6095 = vmatmul.f32.gmra.mxu0 %v5938
    %v6096 = vpop.f32.mrf.mxu0
    %v6097 = vadd.f32 %v6077, %v6096
    %6098 = vdwg.mxu0
    %6099 = vmatpush.msra.mxu0 %v210
    %6100 = vmatpush.msra.mxu0 %v207
    %6101 = vmatpush.msra.mxu0 %v204
    %6102 = vmatpush.msra.mxu0 %v201
    %6103 = vmatpush.msra.mxu0 %v198
    %6104 = vmatpush.msra.mxu0 %v195
    %6105 = vmatpush.msra.mxu0 %v192
    %6106 = vmatpush.msra.mxu0 %v189
    %6107 = vmatpush.msra.mxu0 %v186
    %6108 = vmatpush.msra.mxu0 %v183
    %6109 = vmatpush.msra.mxu0 %v180
    %6110 = vmatpush.msra.mxu0 %v177
    %6111 = vmatpush.msra.mxu0 %v174
    %6112 = vmatpush.msra.mxu0 %v171
    %6113 = vmatpush.msra.mxu0 %v168
    %6114 = vmatpush.msra.mxu0 %v165
    %6115 = vmatmul.f32.gmra.mxu0 %v5935
    %v6116 = vpop.f32.mrf.mxu0
    %v6117 = vadd.f32 %v359, %v6116
    %6118 = vdwg.mxu0
    %6119 = vmatpush.msra.mxu0 %v258
    %6120 = vmatpush.msra.mxu0 %v255
    %6121 = vmatpush.msra.mxu0 %v252
    %6122 = vmatpush.msra.mxu0 %v249
    %6123 = vmatpush.msra.mxu0 %v246
    %6124 = vmatpush.msra.mxu0 %v243
    %6125 = vmatpush.msra.mxu0 %v240
    %6126 = vmatpush.msra.mxu0 %v237
    %6127 = vmatpush.msra.mxu0 %v234
    %6128 = vmatpush.msra.mxu0 %v231
    %6129 = vmatpush.msra.mxu0 %v228
    %6130 = vmatpush.msra.mxu0 %v225
    %6131 = vmatpush.msra.mxu0 %v222
    %6132 = vmatpush.msra.mxu0 %v219
    %6133 = vmatpush.msra.mxu0 %v216
    %6134 = vmatpush.msra.mxu0 %v213
    %6135 = vmatmul.f32.gmra.mxu0 %v5936
    %v6136 = vpop.f32.mrf.mxu0
    %v6137 = vadd.f32 %v6117, %v6136
    %6138 = vdwg.mxu0
    %6139 = vmatpush.msra.mxu0 %v306
    %6140 = vmatpush.msra.mxu0 %v303
    %6141 = vmatpush.msra.mxu0 %v300
    %6142 = vmatpush.msra.mxu0 %v297
    %6143 = vmatpush.msra.mxu0 %v294
    %6144 = vmatpush.msra.mxu0 %v291
    %6145 = vmatpush.msra.mxu0 %v288
    %6146 = vmatpush.msra.mxu0 %v285
    %6147 = vmatpush.msra.mxu0 %v282
    %6148 = vmatpush.msra.mxu0 %v279
    %6149 = vmatpush.msra.mxu0 %v276
    %6150 = vmatpush.msra.mxu0 %v273
    %6151 = vmatpush.msra.mxu0 %v270
    %6152 = vmatpush.msra.mxu0 %v267
    %6153 = vmatpush.msra.mxu0 %v264
    %6154 = vmatpush.msra.mxu0 %v261
    %6155 = vmatmul.f32.gmra.mxu0 %v5937
    %v6156 = vpop.f32.mrf.mxu0
    %v6157 = vadd.f32 %v6137, %v6156
    %6158 = vdwg.mxu0
    %6159 = vmatpush.msra.mxu0 %v354
    %6160 = vmatpush.msra.mxu0 %v351
    %6161 = vmatpush.msra.mxu0 %v348
    %6162 = vmatpush.msra.mxu0 %v345
    %6163 = vmatpush.msra.mxu0 %v342
    %6164 = vmatpush.msra.mxu0 %v339
    %6165 = vmatpush.msra.mxu0 %v336
    %6166 = vmatpush.msra.mxu0 %v333
    %6167 = vmatpush.msra.mxu0 %v330
    %6168 = vmatpush.msra.mxu0 %v327
    %6169 = vmatpush.msra.mxu0 %v324
    %6170 = vmatpush.msra.mxu0 %v321
    %6171 = vmatpush.msra.mxu0 %v318
    %6172 = vmatpush.msra.mxu0 %v315
    %6173 = vmatpush.msra.mxu0 %v312
    %6174 = vmatpush.msra.mxu0 %v309
    %6175 = vmatmul.f32.gmra.mxu0 %v5938
    %v6176 = vpop.f32.mrf.mxu0
    %v6177 = vadd.f32 %v6157, %v6176
    %6178 = vdwg.mxu0
    %v6179 = vtanh.pop %v6017
    %v6180 = vtanh.pop %v6097
    %v6181 = vtanh.pop %v6177
    %6182 = vmatpush.msra.mxu0 %v621
    %6183 = vmatpush.msra.mxu0 %v620
    %6184 = vmatpush.msra.mxu0 %v619
    %6185 = vmatpush.msra.mxu0 %v618
    %6186 = vmatpush.msra.mxu0 %v617
    %6187 = vmatpush.msra.mxu0 %v616
    %6188 = vmatpush.msra.mxu0 %v615
    %6189 = vmatpush.msra.mxu0 %v614
    %6190 = vmatpush.msra.mxu0 %v613
    %6191 = vmatpush.msra.mxu0 %v612
    %6192 = vmatpush.msra.mxu0 %v611
    %6193 = vmatpush.msra.mxu0 %v610
    %6194 = vmatpush.msra.mxu0 %v609
    %6195 = vmatpush.msra.mxu0 %v608
    %6196 = vmatpush.msra.mxu0 %v607
    %6197 = vmatpush.msra.mxu0 %v606
    %6198 = vmatmul.f32.gmra.mxu0 %v6179
    %v6199 = vpop.f32.mrf.mxu0
    %v6200 = vadd.f32 %v656, %v6199
    %6201 = vdwg.mxu0
    %6202 = vmatpush.msra.mxu0 %v637
    %6203 = vmatpush.msra.mxu0 %v636
    %6204 = vmatpush.msra.mxu0 %v635
    %6205 = vmatpush.msra.mxu0 %v634
    %6206 = vmatpush.msra.mxu0 %v633
    %6207 = vmatpush.msra.mxu0 %v632
    %6208 = vmatpush.msra.mxu0 %v631
    %6209 = vmatpush.msra.mxu0 %v630
    %6210 = vmatpush.msra.mxu0 %v629
    %6211 = vmatpush.msra.mxu0 %v628
    %6212 = vmatpush.msra.mxu0 %v627
    %6213 = vmatpush.msra.mxu0 %v626
    %6214 = vmatpush.msra.mxu0 %v625
    %6215 = vmatpush.msra.mxu0 %v624
    %6216 = vmatpush.msra.mxu0 %v623
    %6217 = vmatpush.msra.mxu0 %v622
    %6218 = vmatmul.f32.gmra.mxu0 %v6180
    %v6219 = vpop.f32.mrf.mxu0
    %v6220 = vadd.f32 %v6200, %v6219
    %6221 = vdwg.mxu0
    %6222 = vmatpush.msra.mxu0 %v653
    %6223 = vmatpush.msra.mxu0 %v652
    %6224 = vmatpush.msra.mxu0 %v651
    %6225 = vmatpush.msra.mxu0 %v650
    %6226 = vmatpush.msra.mxu0 %v649
    %6227 = vmatpush.msra.mxu0 %v648
    %6228 = vmatpush.msra.mxu0 %v647
    %6229 = vmatpush.msra.mxu0 %v646
    %6230 = vmatpush.msra.mxu0 %v645
    %6231 = vmatpush.msra.mxu0 %v644
    %6232 = vmatpush.msra.mxu0 %v643
    %6233 = vmatpush.msra.mxu0 %v642
    %6234 = vmatpush.msra.mxu0 %v641
    %6235 = vmatpush.msra.mxu0 %v640
    %6236 = vmatpush.msra.mxu0 %v639
    %6237 = vmatpush.msra.mxu0 %v638
    %6238 = vmatmul.f32.gmra.mxu0 %v6181
    %v6239 = vpop.f32.mrf.mxu0
    %v6240 = vadd.f32 %v6220, %v6239
    %6241 = vdwg.mxu0
    %6242 = vmatpush.msra.mxu0 %v1120
    %6243 = vmatpush.msra.mxu0 %v1117
    %6244 = vmatpush.msra.mxu0 %v1114
    %6245 = vmatpush.msra.mxu0 %v1111
    %6246 = vmatpush.msra.mxu0 %v1108
    %6247 = vmatpush.msra.mxu0 %v1105
    %6248 = vmatpush.msra.mxu0 %v1102
    %6249 = vmatpush.msra.mxu0 %v1099
    %6250 = vmatpush.msra.mxu0 %v1096
    %6251 = vmatpush.msra.mxu0 %v1093
    %6252 = vmatpush.msra.mxu0 %v1090
    %6253 = vmatpush.msra.mxu0 %v1087
    %6254 = vmatpush.msra.mxu0 %v1084
    %6255 = vmatpush.msra.mxu0 %v1081
    %6256 = vmatpush.msra.mxu0 %v1078
    %6257 = vmatpush.msra.mxu0 %v1075
    %6258 = vmatmul.f32.gmra.mxu0 %v6240
    %v6259 = vpop.f32.mrf.mxu0
    %v6260 = vadd.f32 0.0, %v6259
    %6261 = vdwg.mxu0
    %6262 = vmatpush.msra.mxu0 %v1121
    %6263 = vmatpush.msra.mxu0 %v1118
    %6264 = vmatpush.msra.mxu0 %v1115
    %6265 = vmatpush.msra.mxu0 %v1112
    %6266 = vmatpush.msra.mxu0 %v1109
    %6267 = vmatpush.msra.mxu0 %v1106
    %6268 = vmatpush.msra.mxu0 %v1103
    %6269 = vmatpush.msra.mxu0 %v1100
    %6270 = vmatpush.msra.mxu0 %v1097
    %6271 = vmatpush.msra.mxu0 %v1094
    %6272 = vmatpush.msra.mxu0 %v1091
    %6273 = vmatpush.msra.mxu0 %v1088
    %6274 = vmatpush.msra.mxu0 %v1085
    %6275 = vmatpush.msra.mxu0 %v1082
    %6276 = vmatpush.msra.mxu0 %v1079
    %6277 = vmatpush.msra.mxu0 %v1076
    %6278 = vmatmul.f32.gmra.mxu0 %v6240
    %v6279 = vpop.f32.mrf.mxu0
    %v6280 = vadd.f32 0.0, %v6279
    %6281 = vdwg.mxu0
    %6282 = vmatpush.msra.mxu0 %v1122
    %6283 = vmatpush.msra.mxu0 %v1119
    %6284 = vmatpush.msra.mxu0 %v1116
    %6285 = vmatpush.msra.mxu0 %v1113
    %6286 = vmatpush.msra.mxu0 %v1110
    %6287 = vmatpush.msra.mxu0 %v1107
    %6288 = vmatpush.msra.mxu0 %v1104
    %6289 = vmatpush.msra.mxu0 %v1101
    %6290 = vmatpush.msra.mxu0 %v1098
    %6291 = vmatpush.msra.mxu0 %v1095
    %6292 = vmatpush.msra.mxu0 %v1092
    %6293 = vmatpush.msra.mxu0 %v1089
    %6294 = vmatpush.msra.mxu0 %v1086
    %6295 = vmatpush.msra.mxu0 %v1083
    %6296 = vmatpush.msra.mxu0 %v1080
    %6297 = vmatpush.msra.mxu0 %v1077
    %6298 = vmatmul.f32.gmra.mxu0 %v6240
    %v6299 = vpop.f32.mrf.mxu0
    %v6300 = vadd.f32 0.0, %v6299
    %6301 = vdwg.mxu0
    %6302 = vmatpush.msra.mxu0 %v763
    %6303 = vmatpush.msra.mxu0 %v760
    %6304 = vmatpush.msra.mxu0 %v757
    %6305 = vmatpush.msra.mxu0 %v754
    %6306 = vmatpush.msra.mxu0 %v751
    %6307 = vmatpush.msra.mxu0 %v748
    %6308 = vmatpush.msra.mxu0 %v745
    %6309 = vmatpush.msra.mxu0 %v742
    %6310 = vmatpush.msra.mxu0 %v739
    %6311 = vmatpush.msra.mxu0 %v736
    %6312 = vmatpush.msra.mxu0 %v733
    %6313 = vmatpush.msra.mxu0 %v730
    %6314 = vmatpush.msra.mxu0 %v727
    %6315 = vmatpush.msra.mxu0 %v724
    %6316 = vmatpush.msra.mxu0 %v721
    %6317 = vmatpush.msra.mxu0 %v718
    %6318 = vmatmul.f32.gmra.mxu0 %v5932
    %v6319 = vpop.f32.mrf.mxu0
    %v6320 = vadd.f32 %v6260, %v6319
    %6321 = vdwg.mxu0
    %6322 = vmatpush.msra.mxu0 %v764
    %6323 = vmatpush.msra.mxu0 %v761
    %6324 = vmatpush.msra.mxu0 %v758
    %6325 = vmatpush.msra.mxu0 %v755
    %6326 = vmatpush.msra.mxu0 %v752
    %6327 = vmatpush.msra.mxu0 %v749
    %6328 = vmatpush.msra.mxu0 %v746
    %6329 = vmatpush.msra.mxu0 %v743
    %6330 = vmatpush.msra.mxu0 %v740
    %6331 = vmatpush.msra.mxu0 %v737
    %6332 = vmatpush.msra.mxu0 %v734
    %6333 = vmatpush.msra.mxu0 %v731
    %6334 = vmatpush.msra.mxu0 %v728
    %6335 = vmatpush.msra.mxu0 %v725
    %6336 = vmatpush.msra.mxu0 %v722
    %6337 = vmatpush.msra.mxu0 %v719
    %6338 = vmatmul.f32.gmra.mxu0 %v5932
    %v6339 = vpop.f32.mrf.mxu0
    %v6340 = vadd.f32 %v6280, %v6339
    %6341 = vdwg.mxu0
    %6342 = vmatpush.msra.mxu0 %v765
    %6343 = vmatpush.msra.mxu0 %v762
    %6344 = vmatpush.msra.mxu0 %v759
    %6345 = vmatpush.msra.mxu0 %v756
    %6346 = vmatpush.msra.mxu0 %v753
    %6347 = vmatpush.msra.mxu0 %v750
    %6348 = vmatpush.msra.mxu0 %v747
    %6349 = vmatpush.msra.mxu0 %v744
    %6350 = vmatpush.msra.mxu0 %v741
    %6351 = vmatpush.msra.mxu0 %v738
    %6352 = vmatpush.msra.mxu0 %v735
    %6353 = vmatpush.msra.mxu0 %v732
    %6354 = vmatpush.msra.mxu0 %v729
    %6355 = vmatpush.msra.mxu0 %v726
    %6356 = vmatpush.msra.mxu0 %v723
    %6357 = vmatpush.msra.mxu0 %v720
    %6358 = vmatmul.f32.gmra.mxu0 %v5932
    %v6359 = vpop.f32.mrf.mxu0
    %v6360 = vadd.f32 %v6300, %v6359
    %6361 = vdwg.mxu0
    %s6362 = scalar_lea.vmem %s0, 448
    %v6363 = vld [vmem:[%s6362] sm:$0xff]
    %v6364 = vld [vmem:[%s6362 + $0x8] sm:$0xff]
    %v6365 = vld [vmem:[%s6362 + $0x10] sm:$0xff]
    %v6366 = vld [vmem:[%s6362 + $0x18] sm:$0xff]
    %6367 = vmatpush.msra.mxu0 %v208
    %6368 = vmatpush.msra.mxu0 %v205
    %6369 = vmatpush.msra.mxu0 %v202
    %6370 = vmatpush.msra.mxu0 %v199
    %6371 = vmatpush.msra.mxu0 %v196
    %6372 = vmatpush.msra.mxu0 %v193
    %6373 = vmatpush.msra.mxu0 %v190
    %6374 = vmatpush.msra.mxu0 %v187
    %6375 = vmatpush.msra.mxu0 %v184
    %6376 = vmatpush.msra.mxu0 %v181
    %6377 = vmatpush.msra.mxu0 %v178
    %6378 = vmatpush.msra.mxu0 %v175
    %6379 = vmatpush.msra.mxu0 %v172
    %6380 = vmatpush.msra.mxu0 %v169
    %6381 = vmatpush.msra.mxu0 %v166
    %6382 = vmatpush.msra.mxu0 %v163
    %6383 = vmatmul.f32.gmra.mxu0 %v6363
    %v6384 = vpop.f32.mrf.mxu0
    %v6385 = vadd.f32 %v357, %v6384
    %6386 = vdwg.mxu0
    %6387 = vmatpush.msra.mxu0 %v256
    %6388 = vmatpush.msra.mxu0 %v253
    %6389 = vmatpush.msra.mxu0 %v250
    %6390 = vmatpush.msra.mxu0 %v247
    %6391 = vmatpush.msra.mxu0 %v244
    %6392 = vmatpush.msra.mxu0 %v241
    %6393 = vmatpush.msra.mxu0 %v238
    %6394 = vmatpush.msra.mxu0 %v235
    %6395 = vmatpush.msra.mxu0 %v232
    %6396 = vmatpush.msra.mxu0 %v229
    %6397 = vmatpush.msra.mxu0 %v226
    %6398 = vmatpush.msra.mxu0 %v223
    %6399 = vmatpush.msra.mxu0 %v220
    %6400 = vmatpush.msra.mxu0 %v217
    %6401 = vmatpush.msra.mxu0 %v214
    %6402 = vmatpush.msra.mxu0 %v211
    %6403 = vmatmul.f32.gmra.mxu0 %v6364
    %v6404 = vpop.f32.mrf.mxu0
    %v6405 = vadd.f32 %v6385, %v6404
    %6406 = vdwg.mxu0
    %6407 = vmatpush.msra.mxu0 %v304
    %6408 = vmatpush.msra.mxu0 %v301
    %6409 = vmatpush.msra.mxu0 %v298
    %6410 = vmatpush.msra.mxu0 %v295
    %6411 = vmatpush.msra.mxu0 %v292
    %6412 = vmatpush.msra.mxu0 %v289
    %6413 = vmatpush.msra.mxu0 %v286
    %6414 = vmatpush.msra.mxu0 %v283
    %6415 = vmatpush.msra.mxu0 %v280
    %6416 = vmatpush.msra.mxu0 %v277
    %6417 = vmatpush.msra.mxu0 %v274
    %6418 = vmatpush.msra.mxu0 %v271
    %6419 = vmatpush.msra.mxu0 %v268
    %6420 = vmatpush.msra.mxu0 %v265
    %6421 = vmatpush.msra.mxu0 %v262
    %6422 = vmatpush.msra.mxu0 %v259
    %6423 = vmatmul.f32.gmra.mxu0 %v6365
    %v6424 = vpop.f32.mrf.mxu0
    %v6425 = vadd.f32 %v6405, %v6424
    %6426 = vdwg.mxu0
    %6427 = vmatpush.msra.mxu0 %v352
    %6428 = vmatpush.msra.mxu0 %v349
    %6429 = vmatpush.msra.mxu0 %v346
    %6430 = vmatpush.msra.mxu0 %v343
    %6431 = vmatpush.msra.mxu0 %v340
    %6432 = vmatpush.msra.mxu0 %v337
    %6433 = vmatpush.msra.mxu0 %v334
    %6434 = vmatpush.msra.mxu0 %v331
    %6435 = vmatpush.msra.mxu0 %v328
    %6436 = vmatpush.msra.mxu0 %v325
    %6437 = vmatpush.msra.mxu0 %v322
    %6438 = vmatpush.msra.mxu0 %v319
    %6439 = vmatpush.msra.mxu0 %v316
    %6440 = vmatpush.msra.mxu0 %v313
    %6441 = vmatpush.msra.mxu0 %v310
    %6442 = vmatpush.msra.mxu0 %v307
    %6443 = vmatmul.f32.gmra.mxu0 %v6366
    %v6444 = vpop.f32.mrf.mxu0
    %v6445 = vadd.f32 %v6425, %v6444
    %6446 = vdwg.mxu0
    %6447 = vmatpush.msra.mxu0 %v209
    %6448 = vmatpush.msra.mxu0 %v206
    %6449 = vmatpush.msra.mxu0 %v203
    %6450 = vmatpush.msra.mxu0 %v200
    %6451 = vmatpush.msra.mxu0 %v197
    %6452 = vmatpush.msra.mxu0 %v194
    %6453 = vmatpush.msra.mxu0 %v191
    %6454 = vmatpush.msra.mxu0 %v188
    %6455 = vmatpush.msra.mxu0 %v185
    %6456 = vmatpush.msra.mxu0 %v182
    %6457 = vmatpush.msra.mxu0 %v179
    %6458 = vmatpush.msra.mxu0 %v176
    %6459 = vmatpush.msra.mxu0 %v173
    %6460 = vmatpush.msra.mxu0 %v170
    %6461 = vmatpush.msra.mxu0 %v167
    %6462 = vmatpush.msra.mxu0 %v164
    %6463 = vmatmul.f32.gmra.mxu0 %v6363
    %v6464 = vpop.f32.mrf.mxu0
    %v6465 = vadd.f32 %v358, %v6464
    %6466 = vdwg.mxu0
    %6467 = vmatpush.msra.mxu0 %v257
    %6468 = vmatpush.msra.mxu0 %v254
    %6469 = vmatpush.msra.mxu0 %v251
    %6470 = vmatpush.msra.mxu0 %v248
    %6471 = vmatpush.msra.mxu0 %v245
    %6472 = vmatpush.msra.mxu0 %v242
    %6473 = vmatpush.msra.mxu0 %v239
    %6474 = vmatpush.msra.mxu0 %v236
    %6475 = vmatpush.msra.mxu0 %v233
    %6476 = vmatpush.msra.mxu0 %v230
    %6477 = vmatpush.msra.mxu0 %v227
    %6478 = vmatpush.msra.mxu0 %v224
    %6479 = vmatpush.msra.mxu0 %v221
    %6480 = vmatpush.msra.mxu0 %v218
    %6481 = vmatpush.msra.mxu0 %v215
    %6482 = vmatpush.msra.mxu0 %v212
    %6483 = vmatmul.f32.gmra.mxu0 %v6364
    %v6484 = vpop.f32.mrf.mxu0
    %v6485 = vadd.f32 %v6465, %v6484
    %6486 = vdwg.mxu0
    %6487 = vmatpush.msra.mxu0 %v305
    %6488 = vmatpush.msra.mxu0 %v302
    %6489 = vmatpush.msra.mxu0 %v299
    %6490 = vmatpush.msra.mxu0 %v296
    %6491 = vmatpush.msra.mxu0 %v293
    %6492 = vmatpush.msra.mxu0 %v290
    %6493 = vmatpush.msra.mxu0 %v287
    %6494 = vmatpush.msra.mxu0 %v284
    %6495 = vmatpush.msra.mxu0 %v281
    %6496 = vmatpush.msra.mxu0 %v278
    %6497 = vmatpush.msra.mxu0 %v275
    %6498 = vmatpush.msra.mxu0 %v272
    %6499 = vmatpush.msra.mxu0 %v269
    %6500 = vmatpush.msra.mxu0 %v266
    %6501 = vmatpush.msra.mxu0 %v263
    %6502 = vmatpush.msra.mxu0 %v260
    %6503 = vmatmul.f32.gmra.mxu0 %v6365
    %v6504 = vpop.f32.mrf.mxu0
    %v6505 = vadd.f32 %v6485, %v6504
    %6506 = vdwg.mxu0
    %6507 = vmatpush.msra.mxu0 %v353
    %6508 = vmatpush.msra.mxu0 %v350
    %6509 = vmatpush.msra.mxu0 %v347
    %6510 = vmatpush.msra.mxu0 %v344
    %6511 = vmatpush.msra.mxu0 %v341
    %6512 = vmatpush.msra.mxu0 %v338
    %6513 = vmatpush.msra.mxu0 %v335
    %6514 = vmatpush.msra.mxu0 %v332
    %6515 = vmatpush.msra.mxu0 %v329
    %6516 = vmatpush.msra.mxu0 %v326
    %6517 = vmatpush.msra.mxu0 %v323
    %6518 = vmatpush.msra.mxu0 %v320
    %6519 = vmatpush.msra.mxu0 %v317
    %6520 = vmatpush.msra.mxu0 %v314
    %6521 = vmatpush.msra.mxu0 %v311
    %6522 = vmatpush.msra.mxu0 %v308
    %6523 = vmatmul.f32.gmra.mxu0 %v6366
    %v6524 = vpop.f32.mrf.mxu0
    %v6525 = vadd.f32 %v6505, %v6524
    %6526 = vdwg.mxu0
    %6527 = vmatpush.msra.mxu0 %v210
    %6528 = vmatpush.msra.mxu0 %v207
    %6529 = vmatpush.msra.mxu0 %v204
    %6530 = vmatpush.msra.mxu0 %v201
    %6531 = vmatpush.msra.mxu0 %v198
    %6532 = vmatpush.msra.mxu0 %v195
    %6533 = vmatpush.msra.mxu0 %v192
    %6534 = vmatpush.msra.mxu0 %v189
    %6535 = vmatpush.msra.mxu0 %v186
    %6536 = vmatpush.msra.mxu0 %v183
    %6537 = vmatpush.msra.mxu0 %v180
    %6538 = vmatpush.msra.mxu0 %v177
    %6539 = vmatpush.msra.mxu0 %v174
    %6540 = vmatpush.msra.mxu0 %v171
    %6541 = vmatpush.msra.mxu0 %v168
    %6542 = vmatpush.msra.mxu0 %v165
    %6543 = vmatmul.f32.gmra.mxu0 %v6363
    %v6544 = vpop.f32.mrf.mxu0
    %v6545 = vadd.f32 %v359, %v6544
    %6546 = vdwg.mxu0
    %6547 = vmatpush.msra.mxu0 %v258
    %6548 = vmatpush.msra.mxu0 %v255
    %6549 = vmatpush.msra.mxu0 %v252
    %6550 = vmatpush.msra.mxu0 %v249
    %6551 = vmatpush.msra.mxu0 %v246
    %6552 = vmatpush.msra.mxu0 %v243
    %6553 = vmatpush.msra.mxu0 %v240
    %6554 = vmatpush.msra.mxu0 %v237
    %6555 = vmatpush.msra.mxu0 %v234
    %6556 = vmatpush.msra.mxu0 %v231
    %6557 = vmatpush.msra.mxu0 %v228
    %6558 = vmatpush.msra.mxu0 %v225
    %6559 = vmatpush.msra.mxu0 %v222
    %6560 = vmatpush.msra.mxu0 %v219
    %6561 = vmatpush.msra.mxu0 %v216
    %6562 = vmatpush.msra.mxu0 %v213
    %6563 = vmatmul.f32.gmra.mxu0 %v6364
    %v6564 = vpop.f32.mrf.mxu0
    %v6565 = vadd.f32 %v6545, %v6564
    %6566 = vdwg.mxu0
    %6567 = vmatpush.msra.mxu0 %v306
    %6568 = vmatpush.msra.mxu0 %v303
    %6569 = vmatpush.msra.mxu0 %v300
    %6570 = vmatpush.msra.mxu0 %v297
    %6571 = vmatpush.msra.mxu0 %v294
    %6572 = vmatpush.msra.mxu0 %v291
    %6573 = vmatpush.msra.mxu0 %v288
    %6574 = vmatpush.msra.mxu0 %v285
    %6575 = vmatpush.msra.mxu0 %v282
    %6576 = vmatpush.msra.mxu0 %v279
    %6577 = vmatpush.msra.mxu0 %v276
    %6578 = vmatpush.msra.mxu0 %v273
    %6579 = vmatpush.msra.mxu0 %v270
    %6580 = vmatpush.msra.mxu0 %v267
    %6581 = vmatpush.msra.mxu0 %v264
    %6582 = vmatpush.msra.mxu0 %v261
    %6583 = vmatmul.f32.gmra.mxu0 %v6365
    %v6584 = vpop.f32.mrf.mxu0
    %v6585 = vadd.f32 %v6565, %v6584
    %6586 = vdwg.mxu0
    %6587 = vmatpush.msra.mxu0 %v354
    %6588 = vmatpush.msra.mxu0 %v351
    %6589 = vmatpush.msra.mxu0 %v348
    %6590 = vmatpush.msra.mxu0 %v345
    %6591 = vmatpush.msra.mxu0 %v342
    %6592 = vmatpush.msra.mxu0 %v339
    %6593 = vmatpush.msra.mxu0 %v336
    %6594 = vmatpush.msra.mxu0 %v333
    %6595 = vmatpush.msra.mxu0 %v330
    %6596 = vmatpush.msra.mxu0 %v327
    %6597 = vmatpush.msra.mxu0 %v324
    %6598 = vmatpush.msra.mxu0 %v321
    %6599 = vmatpush.msra.mxu0 %v318
    %6600 = vmatpush.msra.mxu0 %v315
    %6601 = vmatpush.msra.mxu0 %v312
    %6602 = vmatpush.msra.mxu0 %v309
    %6603 = vmatmul.f32.gmra.mxu0 %v6366
    %v6604 = vpop.f32.mrf.mxu0
    %v6605 = vadd.f32 %v6585, %v6604
    %6606 = vdwg.mxu0
    %v6607 = vtanh.pop %v6445
    %v6608 = vtanh.pop %v6525
    %v6609 = vtanh.pop %v6605
    %6610 = vmatpush.msra.mxu0 %v621
    %6611 = vmatpush.msra.mxu0 %v620
    %6612 = vmatpush.msra.mxu0 %v619
    %6613 = vmatpush.msra.mxu0 %v618
    %6614 = vmatpush.msra.mxu0 %v617
    %6615 = vmatpush.msra.mxu0 %v616
    %6616 = vmatpush.msra.mxu0 %v615
    %6617 = vmatpush.msra.mxu0 %v614
    %6618 = vmatpush.msra.mxu0 %v613
    %6619 = vmatpush.msra.mxu0 %v612
    %6620 = vmatpush.msra.mxu0 %v611
    %6621 = vmatpush.msra.mxu0 %v610
    %6622 = vmatpush.msra.mxu0 %v609
    %6623 = vmatpush.msra.mxu0 %v608
    %6624 = vmatpush.msra.mxu0 %v607
    %6625 = vmatpush.msra.mxu0 %v606
    %6626 = vmatmul.f32.gmra.mxu0 %v6607
    %v6627 = vpop.f32.mrf.mxu0
    %v6628 = vadd.f32 %v656, %v6627
    %6629 = vdwg.mxu0
    %6630 = vmatpush.msra.mxu0 %v637
    %6631 = vmatpush.msra.mxu0 %v636
    %6632 = vmatpush.msra.mxu0 %v635
    %6633 = vmatpush.msra.mxu0 %v634
    %6634 = vmatpush.msra.mxu0 %v633
    %6635 = vmatpush.msra.mxu0 %v632
    %6636 = vmatpush.msra.mxu0 %v631
    %6637 = vmatpush.msra.mxu0 %v630
    %6638 = vmatpush.msra.mxu0 %v629
    %6639 = vmatpush.msra.mxu0 %v628
    %6640 = vmatpush.msra.mxu0 %v627
    %6641 = vmatpush.msra.mxu0 %v626
    %6642 = vmatpush.msra.mxu0 %v625
    %6643 = vmatpush.msra.mxu0 %v624
    %6644 = vmatpush.msra.mxu0 %v623
    %6645 = vmatpush.msra.mxu0 %v622
    %6646 = vmatmul.f32.gmra.mxu0 %v6608
    %v6647 = vpop.f32.mrf.mxu0
    %v6648 = vadd.f32 %v6628, %v6647
    %6649 = vdwg.mxu0
    %6650 = vmatpush.msra.mxu0 %v653
    %6651 = vmatpush.msra.mxu0 %v652
    %6652 = vmatpush.msra.mxu0 %v651
    %6653 = vmatpush.msra.mxu0 %v650
    %6654 = vmatpush.msra.mxu0 %v649
    %6655 = vmatpush.msra.mxu0 %v648
    %6656 = vmatpush.msra.mxu0 %v647
    %6657 = vmatpush.msra.mxu0 %v646
    %6658 = vmatpush.msra.mxu0 %v645
    %6659 = vmatpush.msra.mxu0 %v644
    %6660 = vmatpush.msra.mxu0 %v643
    %6661 = vmatpush.msra.mxu0 %v642
    %6662 = vmatpush.msra.mxu0 %v641
    %6663 = vmatpush.msra.mxu0 %v640
    %6664 = vmatpush.msra.mxu0 %v639
    %6665 = vmatpush.msra.mxu0 %v638
    %6666 = vmatmul.f32.gmra.mxu0 %v6609
    %v6667 = vpop.f32.mrf.mxu0
    %v6668 = vadd.f32 %v6648, %v6667
    %6669 = vdwg.mxu0
    %6670 = vmatpush.msra.mxu0 %v1597
    %6671 = vmatpush.msra.mxu0 %v1594
    %6672 = vmatpush.msra.mxu0 %v1591
    %6673 = vmatpush.msra.mxu0 %v1588
    %6674 = vmatpush.msra.mxu0 %v1585
    %6675 = vmatpush.msra.mxu0 %v1582
    %6676 = vmatpush.msra.mxu0 %v1579
    %6677 = vmatpush.msra.mxu0 %v1576
    %6678 = vmatpush.msra.mxu0 %v1573
    %6679 = vmatpush.msra.mxu0 %v1570
    %6680 = vmatpush.msra.mxu0 %v1567
    %6681 = vmatpush.msra.mxu0 %v1564
    %6682 = vmatpush.msra.mxu0 %v1561
    %6683 = vmatpush.msra.mxu0 %v1558
    %6684 = vmatpush.msra.mxu0 %v1555
    %6685 = vmatpush.msra.mxu0 %v1552
    %6686 = vmatmul.f32.gmra.mxu0 %v6668
    %v6687 = vpop.f32.mrf.mxu0
    %v6688 = vadd.f32 0.0, %v6687
    %6689 = vdwg.mxu0
    %6690 = vmatpush.msra.mxu0 %v1598
    %6691 = vmatpush.msra.mxu0 %v1595
    %6692 = vmatpush.msra.mxu0 %v1592
    %6693 = vmatpush.msra.mxu0 %v1589
    %6694 = vmatpush.msra.mxu0 %v1586
    %6695 = vmatpush.msra.mxu0 %v1583
    %6696 = vmatpush.msra.mxu0 %v1580
    %6697 = vmatpush.msra.mxu0 %v1577
    %6698 = vmatpush.msra.mxu0 %v1574
    %6699 = vmatpush.msra.mxu0 %v1571
    %6700 = vmatpush.msra.mxu0 %v1568
    %6701 = vmatpush.msra.mxu0 %v1565
    %6702 = vmatpush.msra.mxu0 %v1562
    %6703 = vmatpush.msra.mxu0 %v1559
    %6704 = vmatpush.msra.mxu0 %v1556
    %6705 = vmatpush.msra.mxu0 %v1553
    %6706 = vmatmul.f32.gmra.mxu0 %v6668
    %v6707 = vpop.f32.mrf.mxu0
    %v6708 = vadd.f32 0.0, %v6707
    %6709 = vdwg.mxu0
    %6710 = vmatpush.msra.mxu0 %v1599
    %6711 = vmatpush.msra.mxu0 %v1596
    %6712 = vmatpush.msra.mxu0 %v1593
    %6713 = vmatpush.msra.mxu0 %v1590
    %6714 = vmatpush.msra.mxu0 %v1587
    %6715 = vmatpush.msra.mxu0 %v1584
    %6716 = vmatpush.msra.mxu0 %v1581
    %6717 = vmatpush.msra.mxu0 %v1578
    %6718 = vmatpush.msra.mxu0 %v1575
    %6719 = vmatpush.msra.mxu0 %v1572
    %6720 = vmatpush.msra.mxu0 %v1569
    %6721 = vmatpush.msra.mxu0 %v1566
    %6722 = vmatpush.msra.mxu0 %v1563
    %6723 = vmatpush.msra.mxu0 %v1560
    %6724 = vmatpush.msra.mxu0 %v1557
    %6725 = vmatpush.msra.mxu0 %v1554
    %6726 = vmatmul.f32.gmra.mxu0 %v6668
    %v6727 = vpop.f32.mrf.mxu0
    %v6728 = vadd.f32 0.0, %v6727
    %6729 = vdwg.mxu0
    %v6730 = vadd.f32 %v6320, %v6688
    %v6731 = vadd.f32 %v6340, %v6708
    %v6732 = vadd.f32 %v6360, %v6728
    %s6733 = scalar_lea.vmem %s0, 480
    %v6734 = vld [vmem:[%s6733] sm:$0xff]
    %v6735 = vld [vmem:[%s6733 + $0x8] sm:$0xff]
    %v6736 = vld [vmem:[%s6733 + $0x10] sm:$0xff]
    %v6737 = vld [vmem:[%s6733 + $0x18] sm:$0xff]
    %6738 = vmatpush.msra.mxu0 %v208
    %6739 = vmatpush.msra.mxu0 %v205
    %6740 = vmatpush.msra.mxu0 %v202
    %6741 = vmatpush.msra.mxu0 %v199
    %6742 = vmatpush.msra.mxu0 %v196
    %6743 = vmatpush.msra.mxu0 %v193
    %6744 = vmatpush.msra.mxu0 %v190
    %6745 = vmatpush.msra.mxu0 %v187
    %6746 = vmatpush.msra.mxu0 %v184
    %6747 = vmatpush.msra.mxu0 %v181
    %6748 = vmatpush.msra.mxu0 %v178
    %6749 = vmatpush.msra.mxu0 %v175
    %6750 = vmatpush.msra.mxu0 %v172
    %6751 = vmatpush.msra.mxu0 %v169
    %6752 = vmatpush.msra.mxu0 %v166
    %6753 = vmatpush.msra.mxu0 %v163
    %6754 = vmatmul.f32.gmra.mxu0 %v6734
    %v6755 = vpop.f32.mrf.mxu0
    %v6756 = vadd.f32 %v357, %v6755
    %6757 = vdwg.mxu0
    %6758 = vmatpush.msra.mxu0 %v256
    %6759 = vmatpush.msra.mxu0 %v253
    %6760 = vmatpush.msra.mxu0 %v250
    %6761 = vmatpush.msra.mxu0 %v247
    %6762 = vmatpush.msra.mxu0 %v244
    %6763 = vmatpush.msra.mxu0 %v241
    %6764 = vmatpush.msra.mxu0 %v238
    %6765 = vmatpush.msra.mxu0 %v235
    %6766 = vmatpush.msra.mxu0 %v232
    %6767 = vmatpush.msra.mxu0 %v229
    %6768 = vmatpush.msra.mxu0 %v226
    %6769 = vmatpush.msra.mxu0 %v223
    %6770 = vmatpush.msra.mxu0 %v220
    %6771 = vmatpush.msra.mxu0 %v217
    %6772 = vmatpush.msra.mxu0 %v214
    %6773 = vmatpush.msra.mxu0 %v211
    %6774 = vmatmul.f32.gmra.mxu0 %v6735
    %v6775 = vpop.f32.mrf.mxu0
    %v6776 = vadd.f32 %v6756, %v6775
    %6777 = vdwg.mxu0
    %6778 = vmatpush.msra.mxu0 %v304
    %6779 = vmatpush.msra.mxu0 %v301
    %6780 = vmatpush.msra.mxu0 %v298
    %6781 = vmatpush.msra.mxu0 %v295
    %6782 = vmatpush.msra.mxu0 %v292
    %6783 = vmatpush.msra.mxu0 %v289
    %6784 = vmatpush.msra.mxu0 %v286
    %6785 = vmatpush.msra.mxu0 %v283
    %6786 = vmatpush.msra.mxu0 %v280
    %6787 = vmatpush.msra.mxu0 %v277
    %6788 = vmatpush.msra.mxu0 %v274
    %6789 = vmatpush.msra.mxu0 %v271
    %6790 = vmatpush.msra.mxu0 %v268
    %6791 = vmatpush.msra.mxu0 %v265
    %6792 = vmatpush.msra.mxu0 %v262
    %6793 = vmatpush.msra.mxu0 %v259
    %6794 = vmatmul.f32.gmra.mxu0 %v6736
    %v6795 = vpop.f32.mrf.mxu0
    %v6796 = vadd.f32 %v6776, %v6795
    %6797 = vdwg.mxu0
    %6798 = vmatpush.msra.mxu0 %v352
    %6799 = vmatpush.msra.mxu0 %v349
    %6800 = vmatpush.msra.mxu0 %v346
    %6801 = vmatpush.msra.mxu0 %v343
    %6802 = vmatpush.msra.mxu0 %v340
    %6803 = vmatpush.msra.mxu0 %v337
    %6804 = vmatpush.msra.mxu0 %v334
    %6805 = vmatpush.msra.mxu0 %v331
    %6806 = vmatpush.msra.mxu0 %v328
    %6807 = vmatpush.msra.mxu0 %v325
    %6808 = vmatpush.msra.mxu0 %v322
    %6809 = vmatpush.msra.mxu0 %v319
    %6810 = vmatpush.msra.mxu0 %v316
    %6811 = vmatpush.msra.mxu0 %v313
    %6812 = vmatpush.msra.mxu0 %v310
    %6813 = vmatpush.msra.mxu0 %v307
    %6814 = vmatmul.f32.gmra.mxu0 %v6737
    %v6815 = vpop.f32.mrf.mxu0
    %v6816 = vadd.f32 %v6796, %v6815
    %6817 = vdwg.mxu0
    %6818 = vmatpush.msra.mxu0 %v209
    %6819 = vmatpush.msra.mxu0 %v206
    %6820 = vmatpush.msra.mxu0 %v203
    %6821 = vmatpush.msra.mxu0 %v200
    %6822 = vmatpush.msra.mxu0 %v197
    %6823 = vmatpush.msra.mxu0 %v194
    %6824 = vmatpush.msra.mxu0 %v191
    %6825 = vmatpush.msra.mxu0 %v188
    %6826 = vmatpush.msra.mxu0 %v185
    %6827 = vmatpush.msra.mxu0 %v182
    %6828 = vmatpush.msra.mxu0 %v179
    %6829 = vmatpush.msra.mxu0 %v176
    %6830 = vmatpush.msra.mxu0 %v173
    %6831 = vmatpush.msra.mxu0 %v170
    %6832 = vmatpush.msra.mxu0 %v167
    %6833 = vmatpush.msra.mxu0 %v164
    %6834 = vmatmul.f32.gmra.mxu0 %v6734
    %v6835 = vpop.f32.mrf.mxu0
    %v6836 = vadd.f32 %v358, %v6835
    %6837 = vdwg.mxu0
    %6838 = vmatpush.msra.mxu0 %v257
    %6839 = vmatpush.msra.mxu0 %v254
    %6840 = vmatpush.msra.mxu0 %v251
    %6841 = vmatpush.msra.mxu0 %v248
    %6842 = vmatpush.msra.mxu0 %v245
    %6843 = vmatpush.msra.mxu0 %v242
    %6844 = vmatpush.msra.mxu0 %v239
    %6845 = vmatpush.msra.mxu0 %v236
    %6846 = vmatpush.msra.mxu0 %v233
    %6847 = vmatpush.msra.mxu0 %v230
    %6848 = vmatpush.msra.mxu0 %v227
    %6849 = vmatpush.msra.mxu0 %v224
    %6850 = vmatpush.msra.mxu0 %v221
    %6851 = vmatpush.msra.mxu0 %v218
    %6852 = vmatpush.msra.mxu0 %v215
    %6853 = vmatpush.msra.mxu0 %v212
    %6854 = vmatmul.f32.gmra.mxu0 %v6735
    %v6855 = vpop.f32.mrf.mxu0
    %v6856 = vadd.f32 %v6836, %v6855
    %6857 = vdwg.mxu0
    %6858 = vmatpush.msra.mxu0 %v305
    %6859 = vmatpush.msra.mxu0 %v302
    %6860 = vmatpush.msra.mxu0 %v299
    %6861 = vmatpush.msra.mxu0 %v296
    %6862 = vmatpush.msra.mxu0 %v293
    %6863 = vmatpush.msra.mxu0 %v290
    %6864 = vmatpush.msra.mxu0 %v287
    %6865 = vmatpush.msra.mxu0 %v284
    %6866 = vmatpush.msra.mxu0 %v281
    %6867 = vmatpush.msra.mxu0 %v278
    %6868 = vmatpush.msra.mxu0 %v275
    %6869 = vmatpush.msra.mxu0 %v272
    %6870 = vmatpush.msra.mxu0 %v269
    %6871 = vmatpush.msra.mxu0 %v266
    %6872 = vmatpush.msra.mxu0 %v263
    %6873 = vmatpush.msra.mxu0 %v260
    %6874 = vmatmul.f32.gmra.mxu0 %v6736
    %v6875 = vpop.f32.mrf.mxu0
    %v6876 = vadd.f32 %v6856, %v6875
    %6877 = vdwg.mxu0
    %6878 = vmatpush.msra.mxu0 %v353
    %6879 = vmatpush.msra.mxu0 %v350
    %6880 = vmatpush.msra.mxu0 %v347
    %6881 = vmatpush.msra.mxu0 %v344
    %6882 = vmatpush.msra.mxu0 %v341
    %6883 = vmatpush.msra.mxu0 %v338
    %6884 = vmatpush.msra.mxu0 %v335
    %6885 = vmatpush.msra.mxu0 %v332
    %6886 = vmatpush.msra.mxu0 %v329
    %6887 = vmatpush.msra.mxu0 %v326
    %6888 = vmatpush.msra.mxu0 %v323
    %6889 = vmatpush.msra.mxu0 %v320
    %6890 = vmatpush.msra.mxu0 %v317
    %6891 = vmatpush.msra.mxu0 %v314
    %6892 = vmatpush.msra.mxu0 %v311
    %6893 = vmatpush.msra.mxu0 %v308
    %6894 = vmatmul.f32.gmra.mxu0 %v6737
    %v6895 = vpop.f32.mrf.mxu0
    %v6896 = vadd.f32 %v6876, %v6895
    %6897 = vdwg.mxu0
    %6898 = vmatpush.msra.mxu0 %v210
    %6899 = vmatpush.msra.mxu0 %v207
    %6900 = vmatpush.msra.mxu0 %v204
    %6901 = vmatpush.msra.mxu0 %v201
    %6902 = vmatpush.msra.mxu0 %v198
    %6903 = vmatpush.msra.mxu0 %v195
    %6904 = vmatpush.msra.mxu0 %v192
    %6905 = vmatpush.msra.mxu0 %v189
    %6906 = vmatpush.msra.mxu0 %v186
    %6907 = vmatpush.msra.mxu0 %v183
    %6908 = vmatpush.msra.mxu0 %v180
    %6909 = vmatpush.msra.mxu0 %v177
    %6910 = vmatpush.msra.mxu0 %v174
    %6911 = vmatpush.msra.mxu0 %v171
    %6912 = vmatpush.msra.mxu0 %v168
    %6913 = vmatpush.msra.mxu0 %v165
    %6914 = vmatmul.f32.gmra.mxu0 %v6734
    %v6915 = vpop.f32.mrf.mxu0
    %v6916 = vadd.f32 %v359, %v6915
    %6917 = vdwg.mxu0
    %6918 = vmatpush.msra.mxu0 %v258
    %6919 = vmatpush.msra.mxu0 %v255
    %6920 = vmatpush.msra.mxu0 %v252
    %6921 = vmatpush.msra.mxu0 %v249
    %6922 = vmatpush.msra.mxu0 %v246
    %6923 = vmatpush.msra.mxu0 %v243
    %6924 = vmatpush.msra.mxu0 %v240
    %6925 = vmatpush.msra.mxu0 %v237
    %6926 = vmatpush.msra.mxu0 %v234
    %6927 = vmatpush.msra.mxu0 %v231
    %6928 = vmatpush.msra.mxu0 %v228
    %6929 = vmatpush.msra.mxu0 %v225
    %6930 = vmatpush.msra.mxu0 %v222
    %6931 = vmatpush.msra.mxu0 %v219
    %6932 = vmatpush.msra.mxu0 %v216
    %6933 = vmatpush.msra.mxu0 %v213
    %6934 = vmatmul.f32.gmra.mxu0 %v6735
    %v6935 = vpop.f32.mrf.mxu0
    %v6936 = vadd.f32 %v6916, %v6935
    %6937 = vdwg.mxu0
    %6938 = vmatpush.msra.mxu0 %v306
    %6939 = vmatpush.msra.mxu0 %v303
    %6940 = vmatpush.msra.mxu0 %v300
    %6941 = vmatpush.msra.mxu0 %v297
    %6942 = vmatpush.msra.mxu0 %v294
    %6943 = vmatpush.msra.mxu0 %v291
    %6944 = vmatpush.msra.mxu0 %v288
    %6945 = vmatpush.msra.mxu0 %v285
    %6946 = vmatpush.msra.mxu0 %v282
    %6947 = vmatpush.msra.mxu0 %v279
    %6948 = vmatpush.msra.mxu0 %v276
    %6949 = vmatpush.msra.mxu0 %v273
    %6950 = vmatpush.msra.mxu0 %v270
    %6951 = vmatpush.msra.mxu0 %v267
    %6952 = vmatpush.msra.mxu0 %v264
    %6953 = vmatpush.msra.mxu0 %v261
    %6954 = vmatmul.f32.gmra.mxu0 %v6736
    %v6955 = vpop.f32.mrf.mxu0
    %v6956 = vadd.f32 %v6936, %v6955
    %6957 = vdwg.mxu0
    %6958 = vmatpush.msra.mxu0 %v354
    %6959 = vmatpush.msra.mxu0 %v351
    %6960 = vmatpush.msra.mxu0 %v348
    %6961 = vmatpush.msra.mxu0 %v345
    %6962 = vmatpush.msra.mxu0 %v342
    %6963 = vmatpush.msra.mxu0 %v339
    %6964 = vmatpush.msra.mxu0 %v336
    %6965 = vmatpush.msra.mxu0 %v333
    %6966 = vmatpush.msra.mxu0 %v330
    %6967 = vmatpush.msra.mxu0 %v327
    %6968 = vmatpush.msra.mxu0 %v324
    %6969 = vmatpush.msra.mxu0 %v321
    %6970 = vmatpush.msra.mxu0 %v318
    %6971 = vmatpush.msra.mxu0 %v315
    %6972 = vmatpush.msra.mxu0 %v312
    %6973 = vmatpush.msra.mxu0 %v309
    %6974 = vmatmul.f32.gmra.mxu0 %v6737
    %v6975 = vpop.f32.mrf.mxu0
    %v6976 = vadd.f32 %v6956, %v6975
    %6977 = vdwg.mxu0
    %v6978 = vtanh.pop %v6816
    %v6979 = vtanh.pop %v6896
    %v6980 = vtanh.pop %v6976
    %6981 = vmatpush.msra.mxu0 %v621
    %6982 = vmatpush.msra.mxu0 %v620
    %6983 = vmatpush.msra.mxu0 %v619
    %6984 = vmatpush.msra.mxu0 %v618
    %6985 = vmatpush.msra.mxu0 %v617
    %6986 = vmatpush.msra.mxu0 %v616
    %6987 = vmatpush.msra.mxu0 %v615
    %6988 = vmatpush.msra.mxu0 %v614
    %6989 = vmatpush.msra.mxu0 %v613
    %6990 = vmatpush.msra.mxu0 %v612
    %6991 = vmatpush.msra.mxu0 %v611
    %6992 = vmatpush.msra.mxu0 %v610
    %6993 = vmatpush.msra.mxu0 %v609
    %6994 = vmatpush.msra.mxu0 %v608
    %6995 = vmatpush.msra.mxu0 %v607
    %6996 = vmatpush.msra.mxu0 %v606
    %6997 = vmatmul.f32.gmra.mxu0 %v6978
    %v6998 = vpop.f32.mrf.mxu0
    %v6999 = vadd.f32 %v656, %v6998
    %7000 = vdwg.mxu0
    %7001 = vmatpush.msra.mxu0 %v637
    %7002 = vmatpush.msra.mxu0 %v636
    %7003 = vmatpush.msra.mxu0 %v635
    %7004 = vmatpush.msra.mxu0 %v634
    %7005 = vmatpush.msra.mxu0 %v633
    %7006 = vmatpush.msra.mxu0 %v632
    %7007 = vmatpush.msra.mxu0 %v631
    %7008 = vmatpush.msra.mxu0 %v630
    %7009 = vmatpush.msra.mxu0 %v629
    %7010 = vmatpush.msra.mxu0 %v628
    %7011 = vmatpush.msra.mxu0 %v627
    %7012 = vmatpush.msra.mxu0 %v626
    %7013 = vmatpush.msra.mxu0 %v625
    %7014 = vmatpush.msra.mxu0 %v624
    %7015 = vmatpush.msra.mxu0 %v623
    %7016 = vmatpush.msra.mxu0 %v622
    %7017 = vmatmul.f32.gmra.mxu0 %v6979
    %v7018 = vpop.f32.mrf.mxu0
    %v7019 = vadd.f32 %v6999, %v7018
    %7020 = vdwg.mxu0
    %7021 = vmatpush.msra.mxu0 %v653
    %7022 = vmatpush.msra.mxu0 %v652
    %7023 = vmatpush.msra.mxu0 %v651
    %7024 = vmatpush.msra.mxu0 %v650
    %7025 = vmatpush.msra.mxu0 %v649
    %7026 = vmatpush.msra.mxu0 %v648
    %7027 = vmatpush.msra.mxu0 %v647
    %7028 = vmatpush.msra.mxu0 %v646
    %7029 = vmatpush.msra.mxu0 %v645
    %7030 = vmatpush.msra.mxu0 %v644
    %7031 = vmatpush.msra.mxu0 %v643
    %7032 = vmatpush.msra.mxu0 %v642
    %7033 = vmatpush.msra.mxu0 %v641
    %7034 = vmatpush.msra.mxu0 %v640
    %7035 = vmatpush.msra.mxu0 %v639
    %7036 = vmatpush.msra.mxu0 %v638
    %7037 = vmatmul.f32.gmra.mxu0 %v6980
    %v7038 = vpop.f32.mrf.mxu0
    %v7039 = vadd.f32 %v7019, %v7038
    %7040 = vdwg.mxu0
    %7041 = vmatpush.msra.mxu0 %v2017
    %7042 = vmatpush.msra.mxu0 %v2014
    %7043 = vmatpush.msra.mxu0 %v2011
    %7044 = vmatpush.msra.mxu0 %v2008
    %7045 = vmatpush.msra.mxu0 %v2005
    %7046 = vmatpush.msra.mxu0 %v2002
    %7047 = vmatpush.msra.mxu0 %v1999
    %7048 = vmatpush.msra.mxu0 %v1996
    %7049 = vmatpush.msra.mxu0 %v1993
    %7050 = vmatpush.msra.mxu0 %v1990
    %7051 = vmatpush.msra.mxu0 %v1987
    %7052 = vmatpush.msra.mxu0 %v1984
    %7053 = vmatpush.msra.mxu0 %v1981
    %7054 = vmatpush.msra.mxu0 %v1978
    %7055 = vmatpush.msra.mxu0 %v1975
    %7056 = vmatpush.msra.mxu0 %v1972
    %7057 = vmatmul.f32.gmra.mxu0 %v7039
    %v7058 = vpop.f32.mrf.mxu0
    %v7059 = vadd.f32 0.0, %v7058
    %7060 = vdwg.mxu0
    %7061 = vmatpush.msra.mxu0 %v2018
    %7062 = vmatpush.msra.mxu0 %v2015
    %7063 = vmatpush.msra.mxu0 %v2012
    %7064 = vmatpush.msra.mxu0 %v2009
    %7065 = vmatpush.msra.mxu0 %v2006
    %7066 = vmatpush.msra.mxu0 %v2003
    %7067 = vmatpush.msra.mxu0 %v2000
    %7068 = vmatpush.msra.mxu0 %v1997
    %7069 = vmatpush.msra.mxu0 %v1994
    %7070 = vmatpush.msra.mxu0 %v1991
    %7071 = vmatpush.msra.mxu0 %v1988
    %7072 = vmatpush.msra.mxu0 %v1985
    %7073 = vmatpush.msra.mxu0 %v1982
    %7074 = vmatpush.msra.mxu0 %v1979
    %7075 = vmatpush.msra.mxu0 %v1976
    %7076 = vmatpush.msra.mxu0 %v1973
    %7077 = vmatmul.f32.gmra.mxu0 %v7039
    %v7078 = vpop.f32.mrf.mxu0
    %v7079 = vadd.f32 0.0, %v7078
    %7080 = vdwg.mxu0
    %7081 = vmatpush.msra.mxu0 %v2019
    %7082 = vmatpush.msra.mxu0 %v2016
    %7083 = vmatpush.msra.mxu0 %v2013
    %7084 = vmatpush.msra.mxu0 %v2010
    %7085 = vmatpush.msra.mxu0 %v2007
    %7086 = vmatpush.msra.mxu0 %v2004
    %7087 = vmatpush.msra.mxu0 %v2001
    %7088 = vmatpush.msra.mxu0 %v1998
    %7089 = vmatpush.msra.mxu0 %v1995
    %7090 = vmatpush.msra.mxu0 %v1992
    %7091 = vmatpush.msra.mxu0 %v1989
    %7092 = vmatpush.msra.mxu0 %v1986
    %7093 = vmatpush.msra.mxu0 %v1983
    %7094 = vmatpush.msra.mxu0 %v1980
    %7095 = vmatpush.msra.mxu0 %v1977
    %7096 = vmatpush.msra.mxu0 %v1974
    %7097 = vmatmul.f32.gmra.mxu0 %v7039
    %v7098 = vpop.f32.mrf.mxu0
    %v7099 = vadd.f32 0.0, %v7098
    %7100 = vdwg.mxu0
    %v7101 = vadd.f32 %v6730, %v7059
    %v7102 = vadd.f32 %v6731, %v7079
    %v7103 = vadd.f32 %v6732, %v7099
    %v7104 = vadd.f32 %v7101, %v2085
    %v7105 = vadd.f32 %v7102, %v2086
    %v7106 = vadd.f32 %v7103, %v2087
    %v7107 = vtanh.pop %v7104
    %v7108 = vtanh.pop %v7105
    %v7109 = vtanh.pop %v7106
    %7110 = vmatpush.msra.mxu0 %v2112
    %7111 = vmatpush.msra.mxu0 %v2111
    %7112 = vmatpush.msra.mxu0 %v2110
    %7113 = vmatpush.msra.mxu0 %v2109
    %7114 = vmatpush.msra.mxu0 %v2108
    %7115 = vmatpush.msra.mxu0 %v2107
    %7116 = vmatpush.msra.mxu0 %v2106
    %7117 = vmatpush.msra.mxu0 %v2105
    %7118 = vmatpush.msra.mxu0 %v2104
    %7119 = vmatpush.msra.mxu0 %v2103
    %7120 = vmatpush.msra.mxu0 %v2102
    %7121 = vmatpush.msra.mxu0 %v2101
    %7122 = vmatpush.msra.mxu0 %v2100
    %7123 = vmatpush.msra.mxu0 %v2099
    %7124 = vmatpush.msra.mxu0 %v2098
    %7125 = vmatpush.msra.mxu0 %v2097
    %7126 = vmatmul.f32.gmra.mxu0 %v7107
    %v7127 = vpop.f32.mrf.mxu0
    %v7128 = vadd.f32 %v2147, %v7127
    %7129 = vdwg.mxu0
    %7130 = vmatpush.msra.mxu0 %v2128
    %7131 = vmatpush.msra.mxu0 %v2127
    %7132 = vmatpush.msra.mxu0 %v2126
    %7133 = vmatpush.msra.mxu0 %v2125
    %7134 = vmatpush.msra.mxu0 %v2124
    %7135 = vmatpush.msra.mxu0 %v2123
    %7136 = vmatpush.msra.mxu0 %v2122
    %7137 = vmatpush.msra.mxu0 %v2121
    %7138 = vmatpush.msra.mxu0 %v2120
    %7139 = vmatpush.msra.mxu0 %v2119
    %7140 = vmatpush.msra.mxu0 %v2118
    %7141 = vmatpush.msra.mxu0 %v2117
    %7142 = vmatpush.msra.mxu0 %v2116
    %7143 = vmatpush.msra.mxu0 %v2115
    %7144 = vmatpush.msra.mxu0 %v2114
    %7145 = vmatpush.msra.mxu0 %v2113
    %7146 = vmatmul.f32.gmra.mxu0 %v7108
    %v7147 = vpop.f32.mrf.mxu0
    %v7148 = vadd.f32 %v7128, %v7147
    %7149 = vdwg.mxu0
    %7150 = vmatpush.msra.mxu0 %v2144
    %7151 = vmatpush.msra.mxu0 %v2143
    %7152 = vmatpush.msra.mxu0 %v2142
    %7153 = vmatpush.msra.mxu0 %v2141
    %7154 = vmatpush.msra.mxu0 %v2140
    %7155 = vmatpush.msra.mxu0 %v2139
    %7156 = vmatpush.msra.mxu0 %v2138
    %7157 = vmatpush.msra.mxu0 %v2137
    %7158 = vmatpush.msra.mxu0 %v2136
    %7159 = vmatpush.msra.mxu0 %v2135
    %7160 = vmatpush.msra.mxu0 %v2134
    %7161 = vmatpush.msra.mxu0 %v2133
    %7162 = vmatpush.msra.mxu0 %v2132
    %7163 = vmatpush.msra.mxu0 %v2131
    %7164 = vmatpush.msra.mxu0 %v2130
    %7165 = vmatpush.msra.mxu0 %v2129
    %7166 = vmatmul.f32.gmra.mxu0 %v7109
    %v7167 = vpop.f32.mrf.mxu0
    %v7168 = vadd.f32 %v7148, %v7167
    %7169 = vdwg.mxu0
    %s7170 = scalar_lea.vmem [#allocation10], 1152
    %v7171 = vld [vmem:[%s7170] sm:$0xff]
    %v7172 = vld [vmem:[%s7170 + $0x8] sm:$0xff]
    %v7173 = vld [vmem:[%s7170 + $0x10] sm:$0xff]
    %v7174 = vld [vmem:[%s7170 + $0x18] sm:$0xff]
    %v7175 = vld [vmem:[%s7170 + $0x20] sm:$0xff]
    %v7176 = vld [vmem:[%s7170 + $0x28] sm:$0xff]
    %v7177 = vld [vmem:[%s7170 + $0x30] sm:$0xff]
    %v7178 = vld [vmem:[%s7170 + $0x38] sm:$0xff]
    %v7179 = vld [vmem:[%s7170 + $0x40] sm:$0xff]
    %v7180 = vld [vmem:[%s7170 + $0x48] sm:$0xff]
    %v7181 = vld [vmem:[%s7170 + $0x50] sm:$0xff]
    %v7182 = vld [vmem:[%s7170 + $0x58] sm:$0xff]
    %v7183 = vld [vmem:[%s7170 + $0x60] sm:$0xff]
    %v7184 = vld [vmem:[%s7170 + $0x68] sm:$0xff]
    %v7185 = vld [vmem:[%s7170 + $0x70] sm:$0xff]
    %v7186 = vld [vmem:[%s7170 + $0x78] sm:$0xff]
    %v7187 = vld [vmem:[%s7170 + $0x80] sm:$0xff]
    %v7188 = vld [vmem:[%s7170 + $0x88] sm:$0xff]
    %v7189 = vld [vmem:[%s7170 + $0x90] sm:$0xff]
    %v7190 = vld [vmem:[%s7170 + $0x98] sm:$0xff]
    %v7191 = vld [vmem:[%s7170 + $0xa0] sm:$0xff]
    %v7192 = vld [vmem:[%s7170 + $0xa8] sm:$0xff]
    %v7193 = vld [vmem:[%s7170 + $0xb0] sm:$0xff]
    %v7194 = vld [vmem:[%s7170 + $0xb8] sm:$0xff]
    %v7195 = vld [vmem:[%s7170 + $0xc0] sm:$0xff]
    %v7196 = vld [vmem:[%s7170 + $0xc8] sm:$0xff]
    %v7197 = vld [vmem:[%s7170 + $0xd0] sm:$0xff]
    %v7198 = vld [vmem:[%s7170 + $0xd8] sm:$0xff]
    %v7199 = vld [vmem:[%s7170 + $0xe0] sm:$0xff]
    %v7200 = vld [vmem:[%s7170 + $0xe8] sm:$0xff]
    %v7201 = vld [vmem:[%s7170 + $0xf0] sm:$0xff]
    %v7202 = vld [vmem:[%s7170 + $0xf8] sm:$0xff]
    %v7203 = vld [vmem:[%s7170 + $0x100] sm:$0xff]
    %v7204 = vld [vmem:[%s7170 + $0x108] sm:$0xff]
    %v7205 = vld [vmem:[%s7170 + $0x110] sm:$0xff]
    %v7206 = vld [vmem:[%s7170 + $0x118] sm:$0xff]
    %v7207 = vld [vmem:[%s7170 + $0x120] sm:$0xff]
    %v7208 = vld [vmem:[%s7170 + $0x128] sm:$0xff]
    %v7209 = vld [vmem:[%s7170 + $0x130] sm:$0xff]
    %v7210 = vld [vmem:[%s7170 + $0x138] sm:$0xff]
    %v7211 = vld [vmem:[%s7170 + $0x140] sm:$0xff]
    %v7212 = vld [vmem:[%s7170 + $0x148] sm:$0xff]
    %v7213 = vld [vmem:[%s7170 + $0x150] sm:$0xff]
    %v7214 = vld [vmem:[%s7170 + $0x158] sm:$0xff]
    %v7215 = vld [vmem:[%s7170 + $0x160] sm:$0xff]
    %v7216 = vld [vmem:[%s7170 + $0x168] sm:$0xff]
    %v7217 = vld [vmem:[%s7170 + $0x170] sm:$0xff]
    %v7218 = vld [vmem:[%s7170 + $0x178] sm:$0xff]
    %7219 = vmatpush.msra.mxu0 %v7216
    %7220 = vmatpush.msra.mxu0 %v7213
    %7221 = vmatpush.msra.mxu0 %v7210
    %7222 = vmatpush.msra.mxu0 %v7207
    %7223 = vmatpush.msra.mxu0 %v7204
    %7224 = vmatpush.msra.mxu0 %v7201
    %7225 = vmatpush.msra.mxu0 %v7198
    %7226 = vmatpush.msra.mxu0 %v7195
    %7227 = vmatpush.msra.mxu0 %v7192
    %7228 = vmatpush.msra.mxu0 %v7189
    %7229 = vmatpush.msra.mxu0 %v7186
    %7230 = vmatpush.msra.mxu0 %v7183
    %7231 = vmatpush.msra.mxu0 %v7180
    %7232 = vmatpush.msra.mxu0 %v7177
    %7233 = vmatpush.msra.mxu0 %v7174
    %7234 = vmatpush.msra.mxu0 %v7171
    %7235 = vmatmul.f32.gmra.mxu0 %v7168
    %v7236 = vpop.f32.mrf.mxu0
    %v7237 = vadd.f32 0.0, %v7236
    %7238 = vdwg.mxu0
    %7239 = vmatpush.msra.mxu0 %v7217
    %7240 = vmatpush.msra.mxu0 %v7214
    %7241 = vmatpush.msra.mxu0 %v7211
    %7242 = vmatpush.msra.mxu0 %v7208
    %7243 = vmatpush.msra.mxu0 %v7205
    %7244 = vmatpush.msra.mxu0 %v7202
    %7245 = vmatpush.msra.mxu0 %v7199
    %7246 = vmatpush.msra.mxu0 %v7196
    %7247 = vmatpush.msra.mxu0 %v7193
    %7248 = vmatpush.msra.mxu0 %v7190
    %7249 = vmatpush.msra.mxu0 %v7187
    %7250 = vmatpush.msra.mxu0 %v7184
    %7251 = vmatpush.msra.mxu0 %v7181
    %7252 = vmatpush.msra.mxu0 %v7178
    %7253 = vmatpush.msra.mxu0 %v7175
    %7254 = vmatpush.msra.mxu0 %v7172
    %7255 = vmatmul.f32.gmra.mxu0 %v7168
    %v7256 = vpop.f32.mrf.mxu0
    %v7257 = vadd.f32 0.0, %v7256
    %7258 = vdwg.mxu0
    %7259 = vmatpush.msra.mxu0 %v7218
    %7260 = vmatpush.msra.mxu0 %v7215
    %7261 = vmatpush.msra.mxu0 %v7212
    %7262 = vmatpush.msra.mxu0 %v7209
    %7263 = vmatpush.msra.mxu0 %v7206
    %7264 = vmatpush.msra.mxu0 %v7203
    %7265 = vmatpush.msra.mxu0 %v7200
    %7266 = vmatpush.msra.mxu0 %v7197
    %7267 = vmatpush.msra.mxu0 %v7194
    %7268 = vmatpush.msra.mxu0 %v7191
    %7269 = vmatpush.msra.mxu0 %v7188
    %7270 = vmatpush.msra.mxu0 %v7185
    %7271 = vmatpush.msra.mxu0 %v7182
    %7272 = vmatpush.msra.mxu0 %v7179
    %7273 = vmatpush.msra.mxu0 %v7176
    %7274 = vmatpush.msra.mxu0 %v7173
    %7275 = vmatmul.f32.gmra.mxu0 %v7168
    %v7276 = vpop.f32.mrf.mxu0
    %v7277 = vadd.f32 0.0, %v7276
    %7278 = vdwg.mxu0
    %v7279 = vadd.f32 %v5623, %v7237
    %v7280 = vadd.f32 %v5624, %v7257
    %v7281 = vadd.f32 %v5625, %v7277
    %v7282 = vld [vmem:[#allocation12] sm:$0x7]
    %v7284 = vperm.slane %v7282, 0
    %v7285 = vperm.slane %v7282, 1
    %v7286 = vperm.slane %v7282, 2
    %v7290 = vadd.f32 %v7279, %v7284
    %v7291 = vadd.f32 %v7280, %v7285
    %v7292 = vadd.f32 %v7281, %v7286
    %v7293 = vtanh.pop %v7290
    %v7294 = vtanh.pop %v7291
    %v7295 = vtanh.pop %v7292
    %v7296 = vld [vmem:[%s11] sm:$0xff]
    %v7297 = vld [vmem:[%s11 + $0x8] sm:$0xff]
    %v7298 = vld [vmem:[%s11 + $0x10] sm:$0xff]
    %v7299 = vld [vmem:[%s11 + $0x18] sm:$0xff]
    %v7300 = vld [vmem:[%s11 + $0x20] sm:$0xff]
    %v7301 = vld [vmem:[%s11 + $0x28] sm:$0xff]
    %v7302 = vld [vmem:[%s11 + $0x30] sm:$0xff]
    %v7303 = vld [vmem:[%s11 + $0x38] sm:$0xff]
    %v7304 = vld [vmem:[%s11 + $0x40] sm:$0xff]
    %v7305 = vld [vmem:[%s11 + $0x48] sm:$0xff]
    %v7306 = vld [vmem:[%s11 + $0x50] sm:$0xff]
    %v7307 = vld [vmem:[%s11 + $0x58] sm:$0xff]
    %v7308 = vld [vmem:[%s11 + $0x60] sm:$0xff]
    %v7309 = vld [vmem:[%s11 + $0x68] sm:$0xff]
    %v7310 = vld [vmem:[%s11 + $0x70] sm:$0xff]
    %v7311 = vld [vmem:[%s11 + $0x78] sm:$0xff]
    %v7312 = vld [vmem:[%s11 + $0x80] sm:$0xff]
    %v7313 = vld [vmem:[%s11 + $0x88] sm:$0xff]
    %v7314 = vld [vmem:[%s11 + $0x90] sm:$0xff]
    %v7315 = vld [vmem:[%s11 + $0x98] sm:$0xff]
    %v7316 = vld [vmem:[%s11 + $0xa0] sm:$0xff]
    %v7317 = vld [vmem:[%s11 + $0xa8] sm:$0xff]
    %v7318 = vld [vmem:[%s11 + $0xb0] sm:$0xff]
    %v7319 = vld [vmem:[%s11 + $0xb8] sm:$0xff]
    %v7320 = vld [vmem:[%s11 + $0xc0] sm:$0xff]
    %v7321 = vld [vmem:[%s11 + $0xc8] sm:$0xff]
    %v7322 = vld [vmem:[%s11 + $0xd0] sm:$0xff]
    %v7323 = vld [vmem:[%s11 + $0xd8] sm:$0xff]
    %v7324 = vld [vmem:[%s11 + $0xe0] sm:$0xff]
    %v7325 = vld [vmem:[%s11 + $0xe8] sm:$0xff]
    %v7326 = vld [vmem:[%s11 + $0xf0] sm:$0xff]
    %v7327 = vld [vmem:[%s11 + $0xf8] sm:$0xff]
    %v7328 = vld [vmem:[%s11 + $0x100] sm:$0xff]
    %v7329 = vld [vmem:[%s11 + $0x108] sm:$0xff]
    %v7330 = vld [vmem:[%s11 + $0x110] sm:$0xff]
    %v7331 = vld [vmem:[%s11 + $0x118] sm:$0xff]
    %v7332 = vld [vmem:[%s11 + $0x120] sm:$0xff]
    %v7333 = vld [vmem:[%s11 + $0x128] sm:$0xff]
    %v7334 = vld [vmem:[%s11 + $0x130] sm:$0xff]
    %v7335 = vld [vmem:[%s11 + $0x138] sm:$0xff]
    %v7336 = vld [vmem:[%s11 + $0x140] sm:$0xff]
    %v7337 = vld [vmem:[%s11 + $0x148] sm:$0xff]
    %v7338 = vld [vmem:[%s11 + $0x150] sm:$0xff]
    %v7339 = vld [vmem:[%s11 + $0x158] sm:$0xff]
    %v7340 = vld [vmem:[%s11 + $0x160] sm:$0xff]
    %v7341 = vld [vmem:[%s11 + $0x168] sm:$0xff]
    %v7342 = vld [vmem:[%s11 + $0x170] sm:$0xff]
    %v7343 = vld [vmem:[%s11 + $0x178] sm:$0xff]
    %v7344 = vld [vmem:[#allocation13] sm:$0x1]
    %v7346 = vperm.slane %v7344, 0
    %7348 = vmatpush.msra.mxu0 %v7311
    %7349 = vmatpush.msra.mxu0 %v7310
    %7350 = vmatpush.msra.mxu0 %v7309
    %7351 = vmatpush.msra.mxu0 %v7308
    %7352 = vmatpush.msra.mxu0 %v7307
    %7353 = vmatpush.msra.mxu0 %v7306
    %7354 = vmatpush.msra.mxu0 %v7305
    %7355 = vmatpush.msra.mxu0 %v7304
    %7356 = vmatpush.msra.mxu0 %v7303
    %7357 = vmatpush.msra.mxu0 %v7302
    %7358 = vmatpush.msra.mxu0 %v7301
    %7359 = vmatpush.msra.mxu0 %v7300
    %7360 = vmatpush.msra.mxu0 %v7299
    %7361 = vmatpush.msra.mxu0 %v7298
    %7362 = vmatpush.msra.mxu0 %v7297
    %7363 = vmatpush.msra.mxu0 %v7296
    %7364 = vmatmul.f32.gmra.mxu0 %v7293
    %v7365 = vpop.f32.mrf.mxu0
    %v7366 = vadd.f32 %v7346, %v7365
    %7367 = vdwg.mxu0
    %7368 = vmatpush.msra.mxu0 %v7327
    %7369 = vmatpush.msra.mxu0 %v7326
    %7370 = vmatpush.msra.mxu0 %v7325
    %7371 = vmatpush.msra.mxu0 %v7324
    %7372 = vmatpush.msra.mxu0 %v7323
    %7373 = vmatpush.msra.mxu0 %v7322
    %7374 = vmatpush.msra.mxu0 %v7321
    %7375 = vmatpush.msra.mxu0 %v7320
    %7376 = vmatpush.msra.mxu0 %v7319
    %7377 = vmatpush.msra.mxu0 %v7318
    %7378 = vmatpush.msra.mxu0 %v7317
    %7379 = vmatpush.msra.mxu0 %v7316
    %7380 = vmatpush.msra.mxu0 %v7315
    %7381 = vmatpush.msra.mxu0 %v7314
    %7382 = vmatpush.msra.mxu0 %v7313
    %7383 = vmatpush.msra.mxu0 %v7312
    %7384 = vmatmul.f32.gmra.mxu0 %v7294
    %v7385 = vpop.f32.mrf.mxu0
    %v7386 = vadd.f32 %v7366, %v7385
    %7387 = vdwg.mxu0
    %7388 = vmatpush.msra.mxu0 %v7343
    %7389 = vmatpush.msra.mxu0 %v7342
    %7390 = vmatpush.msra.mxu0 %v7341
    %7391 = vmatpush.msra.mxu0 %v7340
    %7392 = vmatpush.msra.mxu0 %v7339
    %7393 = vmatpush.msra.mxu0 %v7338
    %7394 = vmatpush.msra.mxu0 %v7337
    %7395 = vmatpush.msra.mxu0 %v7336
    %7396 = vmatpush.msra.mxu0 %v7335
    %7397 = vmatpush.msra.mxu0 %v7334
    %7398 = vmatpush.msra.mxu0 %v7333
    %7399 = vmatpush.msra.mxu0 %v7332
    %7400 = vmatpush.msra.mxu0 %v7331
    %7401 = vmatpush.msra.mxu0 %v7330
    %7402 = vmatpush.msra.mxu0 %v7329
    %7403 = vmatpush.msra.mxu0 %v7328
    %7404 = vmatmul.f32.gmra.mxu0 %v7295
    %v7405 = vpop.f32.mrf.mxu0
    %v7406 = vadd.f32 %v7386, %v7405
    %7407 = vdwg.mxu0
    %7408 = vst [vmem:[%s13] sm:$0xff] %v7406
    // Predicated region
    $region86: #{_fused_forward.1} parent=1 // pred_check
      _
    $region87: #{_fused_forward.1} parent=1 // pred_check_branch
      %7410 = sbr.rel (0) target = $region89
    $region88: #{_fused_forward.1} parent=1 // pred_region
      _
    $region89: #{_fused_forward.1} parent=1 // pred_fallthru
      _
    // Predicated region
    $region90: #{_fused_forward.1} parent=1 // pred_check
      _
    $region91: #{_fused_forward.1} parent=1 // pred_check_branch
      %7412 = sbr.rel (0) target = $region93
    $region92: #{_fused_forward.1} parent=1 // pred_region
      _
    $region93: #{_fused_forward.1} parent=1 // pred_fallthru
      _
    %7413 = vsyncpa [#allocation3], 1
    %7414 = vsyncpa [#allocation5], 1
    %7415 = vsyncpa [#allocation8], 1
    %7416 = vsyncpa [#allocation11], 1
    %7417 = vsyncpa [#allocation14], 1

</llo_original>
